<compile_context>
chip_gen: v5e
topology: v5e:2x2
jax: 0.10.0
libtpu: 0.0.40
codegen_flags: <defaults>
</compile_context>

<pallas_src>
import functools
import numpy as np

import jax
import jax.numpy as jnp
from jax.experimental import pallas as pl
from jax.experimental.pallas import tpu as pltpu

# ----- scaled-down DenseNet config (same op graph as torchvision densenet201.features) -----
# TODO(synk): real DenseNet201 uses growth_rate=32, init_features=64, blocks=(6,12,48,32)
# with pretrained IMAGENET1K_V1 weights; we keep the exact layer topology but shrink it and
# use deterministic synthetic weights (no checkpoint loading).
GROWTH_RATE = 8
INIT_FEATURES = 16
BN_SIZE = 4
BLOCK_CONFIG = (2, 2, 2, 2)
BN_EPS = 1e-5
OUTPUT_SIZE = 4  # adaptive-pool target (real module default: 14; same output>input "upsample" case)


def _pick_tile(m, cap=512):
    for cand in (512, 256, 128, 64, 32, 16, 8):
        if cand <= cap and m % cand == 0:
            return cand
    return m  # full-extent block (always legal)


# ------------------------------ fused matmul kernels ------------------------------

def _mm_kernel_single(*refs, pro, pro_relu, epi, epi_relu):
    """Single-K-step path: out = epi(pro(A) @ B), no accumulator scratch."""
    it = iter(refs)
    a_ref = next(it)
    b_ref = next(it)
    ps_ref = pb_ref = es_ref = eb_ref = None
    if pro:
        ps_ref = next(it)
        pb_ref = next(it)
    if epi:
        es_ref = next(it)
        eb_ref = next(it)
    o_ref = next(it)

    a = a_ref[...]
    if pro:  # per-input-channel BatchNorm + ReLU, in f32 (v5e has no bf16 VPU path)
        a = a.astype(jnp.float32) * ps_ref[...] + pb_ref[...]
        if pro_relu:
            a = jnp.maximum(a, 0.0)
    a = a.astype(jnp.bfloat16)
    y = jnp.dot(a, b_ref[...], preferred_element_type=jnp.float32)
    if epi:  # per-output-channel BatchNorm (+ ReLU), in f32
        y = y * es_ref[...] + eb_ref[...]
        if epi_relu:
            y = jnp.maximum(y, 0.0)
    o_ref[...] = y.astype(o_ref.dtype)


def _mm_kernel_multi(*refs, nk, pro, pro_relu, epi, epi_relu):
    """General K-tiled path with an f32 VMEM accumulator (unused at this toy config's sizes)."""
    it = iter(refs)
    a_ref = next(it)
    b_ref = next(it)
    ps_ref = pb_ref = es_ref = eb_ref = None
    if pro:
        ps_ref = next(it)
        pb_ref = next(it)
    if epi:
        es_ref = next(it)
        eb_ref = next(it)
    o_ref = next(it)
    acc_ref = next(it)

    k = pl.program_id(2)

    @pl.when(k == 0)
    def _init():
        acc_ref[...] = jnp.zeros_like(acc_ref)

    a = a_ref[...]
    if pro:
        a = a.astype(jnp.float32) * ps_ref[...] + pb_ref[...]
        if pro_relu:
            a = jnp.maximum(a, 0.0)
    a = a.astype(jnp.bfloat16)
    acc_ref[...] += jnp.dot(a, b_ref[...], preferred_element_type=jnp.float32)

    @pl.when(k == nk - 1)
    def _finish():
        y = acc_ref[...]
        if epi:
            y = y * es_ref[...] + eb_ref[...]
            if epi_relu:
                y = jnp.maximum(y, 0.0)
        o_ref[...] = y.astype(o_ref.dtype)


def fused_matmul(a, b, prologue=None, epilogue=None, out_dtype=jnp.bfloat16):
    """out = epi( pro(a) @ b ); pro/epi are optional (scale, bias, relu) affine+ReLU stages.

    a: (M, K), b: (K, N). bf16 MXU operands, f32 accumulation. N is padded to a multiple of
    128 inside the call (lane-dense unmasked output stores) and sliced back afterwards.
    """
    m, kdim = a.shape
    k2, n = b.shape
    assert kdim == k2
    npad = (-n) % 128
    np_ = n + npad

    b = b.astype(jnp.bfloat16)
    if npad:
        b = jnp.pad(b, ((0, 0), (0, npad)))  # zero columns -> zero (then sliced-off) outputs

    tm = _pick_tile(m, 512)
    tn = 256 if np_ % 256 == 0 else 128      # 128 everywhere in the toy config (v5e-friendly)
    if kdim % 128 == 0:
        tk = next(c for c in (512, 384, 256, 128) if kdim % c == 0)
    else:
        tk = kdim                            # small K: single full-extent K step
    nk = kdim // tk

    pro = prologue is not None
    epi = epilogue is not None
    pro_relu = bool(prologue[2]) if pro else False
    epi_relu = bool(epilogue[2]) if epi else False

    if nk == 1:
        # Fast path: every matmul in this config lands here (K <= 512).
        in_specs = [pl.BlockSpec((tm, tk), lambda i, j: (i, 0)),
                    pl.BlockSpec((tk, tn), lambda i, j: (0, j))]
        args = [a, b]
        if pro:
            ps, pb, _ = prologue
            in_specs += [pl.BlockSpec((1, tk), lambda i, j: (0, 0)),
                         pl.BlockSpec((1, tk), lambda i, j: (0, 0))]
            args += [ps.astype(jnp.float32).reshape(1, kdim),
                     pb.astype(jnp.float32).reshape(1, kdim)]
        if epi:
            es, eb, _ = epilogue
            es = jnp.pad(es.astype(jnp.float32), (0, npad))
            eb = jnp.pad(eb.astype(jnp.float32), (0, npad))
            in_specs += [pl.BlockSpec((1, tn), lambda i, j: (0, j)),
                         pl.BlockSpec((1, tn), lambda i, j: (0, j))]
            args += [es.reshape(1, np_), eb.reshape(1, np_)]
        kernel = functools.partial(_mm_kernel_single, pro=pro, pro_relu=pro_relu,
                                   epi=epi, epi_relu=epi_relu)
        out = pl.pallas_call(
            kernel,
            out_shape=jax.ShapeDtypeStruct((m, np_), out_dtype),
            grid=(m // tm, np_ // tn),
            in_specs=in_specs,
            out_specs=pl.BlockSpec((tm, tn), lambda i, j: (i, j)),
            compiler_params=pltpu.CompilerParams(
                dimension_semantics=("parallel", "parallel")),
        )(*args)
    else:
        in_specs = [pl.BlockSpec((tm, tk), lambda i, j, k: (i, k)),
                    pl.BlockSpec((tk, tn), lambda i, j, k: (k, j))]
        args = [a, b]
        if pro:
            ps, pb, _ = prologue
            in_specs += [pl.BlockSpec((1, tk), lambda i, j, k: (0, k)),
                         pl.BlockSpec((1, tk), lambda i, j, k: (0, k))]
            args += [ps.astype(jnp.float32).reshape(1, kdim),
                     pb.astype(jnp.float32).reshape(1, kdim)]
        if epi:
            es, eb, _ = epilogue
            es = jnp.pad(es.astype(jnp.float32), (0, npad))
            eb = jnp.pad(eb.astype(jnp.float32), (0, npad))
            in_specs += [pl.BlockSpec((1, tn), lambda i, j, k: (0, j)),
                         pl.BlockSpec((1, tn), lambda i, j, k: (0, j))]
            args += [es.reshape(1, np_), eb.reshape(1, np_)]
        kernel = functools.partial(_mm_kernel_multi, nk=nk, pro=pro, pro_relu=pro_relu,
                                   epi=epi, epi_relu=epi_relu)
        out = pl.pallas_call(
            kernel,
            out_shape=jax.ShapeDtypeStruct((m, np_), out_dtype),
            grid=(m // tm, np_ // tn, nk),
            in_specs=in_specs,
            out_specs=pl.BlockSpec((tm, tn), lambda i, j, k: (i, j)),
            scratch_shapes=[pltpu.VMEM((tm, tn), jnp.float32)],
            compiler_params=pltpu.CompilerParams(
                dimension_semantics=("parallel", "parallel", "arbitrary")),
        )(*args)
    return out[:, :n] if npad else out


# ------------------------------ pooling kernels ------------------------------

def _tap_max_kernel(x_ref, o_ref):
    o_ref[...] = jnp.max(x_ref[...].astype(jnp.float32), axis=0).astype(o_ref.dtype)


def max_pool2d(x, k, stride, pad):
    """MaxPool2d (floor mode); -inf padding so padded taps never win."""
    n, h, w, c = x.shape
    ho = (h + 2 * pad - k) // stride + 1
    wo = (w + 2 * pad - k) // stride + 1
    xp = jnp.pad(x, ((0, 0), (pad, pad), (pad, pad), (0, 0)), constant_values=-jnp.inf)
    m = n * ho * wo
    taps = jnp.stack(
        [xp[:, i:i + stride * ho:stride, j:j + stride * wo:stride, :].reshape(m, c)
         for i in range(k) for j in range(k)], axis=0)                  # (k*k, M, C)
    # TODO(synk): for production sizes read the padded map in-kernel (strided pl.ds taps)
    # instead of materializing the k*k tap stack in HBM (stem-only, small here).
    if (m * c) % 128 == 0:
        taps = taps.reshape(k * k, (m * c) // 128, 128)                 # lane-dense view
    t, mm, cc = taps.shape
    tm = _pick_tile(mm)
    out = pl.pallas_call(
        _tap_max_kernel,
        out_shape=jax.ShapeDtypeStruct((mm, cc), x.dtype),
        grid=(mm // tm,),
        in_specs=[pl.BlockSpec((t, tm, cc), lambda i: (0, i, 0))],
        out_specs=pl.BlockSpec((tm, cc), lambda i: (i, 0)),
        compiler_params=pltpu.CompilerParams(dimension_semantics=("parallel",)),
    )(taps)
    return out.reshape(n, ho, wo, c)


def _avg_pool_2x2_kernel(x_ref, o_ref):
    # x_ref: (tm, 2, wo, 2*c)  ->  o_ref: (tm, wo, c); mean over the H-pair (axis 1) and the
    # W-pair (the two c-wide halves of the lane axis), computed in f32.
    c = o_ref.shape[-1]
    x = x_ref[...].astype(jnp.float32)
    s = x[:, 0] + x[:, 1]                                   # (tm, wo, 2*c): H-pair sum
    o_ref[...] = (0.25 * (s[..., :c] + s[..., c:])).astype(o_ref.dtype)


def avg_pool_2x2(x):
    """AvgPool2d(2, 2) as ONE pair-mean kernel over a FREE (n*ho, 2, wo, 2*c) reshape."""
    n, h, w, c = x.shape
    ho, wo = h // 2, w // 2
    m = n * ho
    xv = x.reshape(m, 2, wo, 2 * c)                         # pure row-major reshape, no copy
    tm = _pick_tile(m, 256)
    out = pl.pallas_call(
        _avg_pool_2x2_kernel,
        out_shape=jax.ShapeDtypeStruct((m, wo, c), x.dtype),
        grid=(m // tm,),
        in_specs=[pl.BlockSpec((tm, 2, wo, 2 * c), lambda i: (i, 0, 0, 0))],
        out_specs=pl.BlockSpec((tm, wo, c), lambda i: (i, 0, 0)),
        compiler_params=pltpu.CompilerParams(dimension_semantics=("parallel",)),
    )(xv)
    return out.reshape(n, ho, wo, c)


# ------------------------------ layer wrappers (glue) ------------------------------

def bn_affine(bn, relu):
    scale = bn["gamma"] / jnp.sqrt(bn["var"] + BN_EPS)
    bias = bn["beta"] - bn["mean"] * scale
    return scale, bias, relu


def conv2d(x, w, stride, pad, prologue=None, epilogue=None):
    """x: NHWC bf16, w: PyTorch layout (Cout, Cin, kh, kw), bias=False.

    prologue = fused per-input-channel BN(+ReLU) applied BEFORE the conv (only legal with
    pad == 0, otherwise BN would corrupt the zero padding — true for all fused convs here).
    epilogue = fused per-output-channel BN(+ReLU) applied AFTER the conv.
    """
    n, h, wd, cin = x.shape
    cout, cin2, kh, kw = w.shape
    assert cin == cin2
    if prologue is not None:
        assert pad == 0, "prologue BN fusion requires pad == 0"
    ho = (h + 2 * pad - kh) // stride + 1
    wo = (wd + 2 * pad - kw) // stride + 1

    if kh == 1 and kw == 1 and stride == 1 and pad == 0:
        patches = x.reshape(n * h * wd, cin)                  # free reshape, no im2col blow-up
    else:
        xp = jnp.pad(x, ((0, 0), (pad, pad), (pad, pad), (0, 0)))
        cols = [xp[:, i:i + stride * ho:stride, j:j + stride * wo:stride, :]
                for i in range(kh) for j in range(kw)]
        patches = jnp.concatenate(cols, axis=-1).reshape(n * ho * wo, kh * kw * cin)
        # TODO(synk): replace im2col materialization with in-kernel tap accumulation for the
        # 3x3/7x7 convs (tiny at these shapes; needs overlapping-window blocks or manual DMA).

    wmat = jnp.transpose(w, (2, 3, 1, 0)).reshape(kh * kw * cin, cout)

    pro = None
    if prologue is not None:
        ps, pb, prelu = prologue
        if kh * kw > 1:                                       # match patch column ordering
            ps = jnp.tile(ps, kh * kw)
            pb = jnp.tile(pb, kh * kw)
        pro = (ps, pb, prelu)

    out = fused_matmul(patches, wmat, prologue=pro, epilogue=epilogue,
                       out_dtype=jnp.bfloat16)
    return out.reshape(n, ho, wo, cout)


def _pool_matrix(out_size, in_size):
    """AdaptiveAvgPool window weights, exact PyTorch semantics (incl. output > input case)."""
    p = np.zeros((out_size, in_size), np.float32)
    for o in range(out_size):
        s = (o * in_size) // out_size
        e = -(-((o + 1) * in_size) // out_size)   # ceil
        p[o, s:e] = 1.0 / (e - s)
    return jnp.asarray(p)


def adaptive_avg_pool_norm(x, out_size, epilogue):
    """norm5 + AdaptiveAvgPool2d fused into ONE matmul (BN commutes with average pooling)."""
    n, h, w, c = x.shape
    ph = _pool_matrix(out_size, h)                              # (OH, H)
    pw = _pool_matrix(out_size, w)                              # (OW, W)
    pmat = (ph[:, None, :, None] * pw[None, :, None, :]).reshape(out_size * out_size, h * w)
    xm = jnp.transpose(x, (1, 2, 0, 3)).reshape(h * w, n * c)   # tiny tensor relayout
    es, eb, erelu = epilogue
    out = fused_matmul(pmat, xm, prologue=None,
                       epilogue=(jnp.tile(es, n), jnp.tile(eb, n), erelu),
                       out_dtype=jnp.float32)                   # (OH*OW, N*C)
    out = out.reshape(out_size, out_size, n, c)
    return jnp.transpose(out, (2, 0, 1, 3))                     # (N, OH, OW, C)


# ------------------------------ parameters ------------------------------

def init_params(key):
    params = {}
    keys = iter(jax.random.split(key, 1024))

    def conv_w(cout, cin, kh, kw):
        fan_in = cin * kh * kw
        return jax.random.normal(next(keys), (cout, cin, kh, kw), jnp.float32) / np.sqrt(fan_in)

    def bn_p(c):
        return {
            "gamma": 1.0 + 0.1 * jax.random.normal(next(keys), (c,), jnp.float32),
            "beta": 0.1 * jax.random.normal(next(keys), (c,), jnp.float32),
            "mean": 0.1 * jax.random.normal(next(keys), (c,), jnp.float32),
            "var": 1.0 + 0.1 * jax.random.uniform(next(keys), (c,), jnp.float32),
        }

    params["conv0"] = conv_w(INIT_FEATURES, 3, 7, 7)
    params["norm0"] = bn_p(INIT_FEATURES)
    nfeat = INIT_FEATURES
    blocks = []
    for bi, nlayers in enumerate(BLOCK_CONFIG):
        layers = []
        for li in range(nlayers):
            cin = nfeat + li * GROWTH_RATE
            layers.append({
                "norm1": bn_p(cin),
                "conv1": conv_w(BN_SIZE * GROWTH_RATE, cin, 1, 1),
                "norm2": bn_p(BN_SIZE * GROWTH_RATE),
                "conv2": conv_w(GROWTH_RATE, BN_SIZE * GROWTH_RATE, 3, 3),
            })
        nfeat = nfeat + nlayers * GROWTH_RATE
        block = {"layers": layers}
        if bi != len(BLOCK_CONFIG) - 1:
            block["transition"] = {"norm": bn_p(nfeat), "conv": conv_w(nfeat // 2, nfeat, 1, 1)}
            nfeat //= 2
        blocks.append(block)
    params["blocks"] = blocks
    params["norm5"] = bn_p(nfeat)
    params["final_channels"] = nfeat
    return params


# ------------------------------ forward (ImageEncoder.forward) ------------------------------

def image_encoder_forward(x_nchw, params, output_size=OUTPUT_SIZE):
    x = jnp.transpose(x_nchw, (0, 2, 3, 1)).astype(jnp.bfloat16)        # NCHW -> NHWC, bf16
    # stem: conv0 -> norm0 -> relu0 (fused epilogue) -> MaxPool2d(3,2,1)
    x = conv2d(x, params["conv0"], stride=2, pad=3,
               epilogue=bn_affine(params["norm0"], relu=True))
    x = max_pool2d(x, k=3, stride=2, pad=1)
    # dense blocks + transitions
    for block in params["blocks"]:
        for lp in block["layers"]:
            # norm1+relu (prologue) -> conv1 1x1 -> norm2+relu (epilogue): one pallas_call
            y = conv2d(x, lp["conv1"], stride=1, pad=0,
                       prologue=bn_affine(lp["norm1"], relu=True),
                       epilogue=bn_affine(lp["norm2"], relu=True))
            y = conv2d(y, lp["conv2"], stride=1, pad=1)                 # 3x3, no pro/epi
            x = jnp.concatenate([x, y], axis=-1)                        # dense connectivity
            # TODO(synk): preallocate the block's full-channel buffer + write conv2 output
            # slices in place (input_output_aliases) to avoid O(L^2) concat traffic.
        if "transition" in block:
            # transition norm+relu fused as prologue of the 1x1 conv, then one-call avg pool
            x = conv2d(x, block["transition"]["conv"], stride=1, pad=0,
                       prologue=bn_affine(block["transition"]["norm"], relu=True))
            x = avg_pool_2x2(x)
    # norm5 (no ReLU: classifier dropped) fused into the adaptive avg pool matmul
    x = adaptive_avg_pool_norm(x, output_size, bn_affine(params["norm5"], relu=False))
    # torch: out.permute(0, 2, 3, 1) -> already NHWC here.
    return x


if __name__ == "__main__":
    key = jax.random.PRNGKey(0)
    pkey, xkey = jax.random.split(key)
    params = init_params(pkey)
    final_c = params.pop("final_channels")

    # NCHW input, like the PyTorch module (small synthetic shape).
    x = jax.random.normal(xkey, (2, 3, 64, 64), jnp.float32)

    fwd = jax.jit(image_encoder_forward)
    out = jax.block_until_ready(fwd(x, params))

    assert out.shape == (2, OUTPUT_SIZE, OUTPUT_SIZE, final_c), out.shape
    assert out.dtype == jnp.float32
    assert bool(jnp.all(jnp.isfinite(out)))
    print("KERNEL_OK")
</pallas_src>

<mosaic_0001>
module attributes {stable_mosaic.version = 11 : i64} {
  func.func @_mm_kernel_single(%arg0: i32, %arg1: i32, %arg2: memref<512x147xbf16, #tpu.memory_space<vmem>>, %arg3: memref<147x128xbf16, #tpu.memory_space<vmem>>, %arg4: memref<1x128xf32, #tpu.memory_space<vmem>>, %arg5: memref<1x128xf32, #tpu.memory_space<vmem>>, %arg6: memref<512x128xbf16, #tpu.memory_space<vmem>>) attributes {dimension_semantics = [#tpu.dimension_semantics<parallel>, #tpu.dimension_semantics<parallel>], iteration_bounds = array<i64: 4, 1>, scalar_prefetch = 0 : i64, scratch_operands = 0 : i64, tpu.core_type = #tpu.core_type<tc>, window_params = [{transform_indices = @transform_0, window_bounds = array<i64: 512, 147>}, {transform_indices = @transform_1, window_bounds = array<i64: 147, 128>}, {transform_indices = @transform_2, window_bounds = array<i64: 1, 128>}, {transform_indices = @transform_3, window_bounds = array<i64: 1, 128>}, {transform_indices = @transform_4, window_bounds = array<i64: 512, 128>}]} {
    %c0 = arith.constant 0 : index
    %c0_0 = arith.constant 0 : index
    %0 = vector.load %arg2[%c0, %c0_0] : memref<512x147xbf16, #tpu.memory_space<vmem>>, vector<512x147xbf16>
    %c0_1 = arith.constant 0 : index
    %c0_2 = arith.constant 0 : index
    %1 = vector.load %arg3[%c0_1, %c0_2] : memref<147x128xbf16, #tpu.memory_space<vmem>>, vector<147x128xbf16>
    %cst = arith.constant dense<0.000000e+00> : vector<512x128xf32>
    %2 = tpu.matmul %0, %1, %cst {dimension_numbers = #tpu.dot_dimension_numbers<[1], [0], [0], [1], [0, 0, 1, 1], [], []>} : vector<512x147xbf16>, vector<147x128xbf16>, vector<512x128xf32> -> vector<512x128xf32>
    %c0_3 = arith.constant 0 : index
    %c0_4 = arith.constant 0 : index
    %3 = vector.load %arg4[%c0_3, %c0_4] : memref<1x128xf32, #tpu.memory_space<vmem>>, vector<1x128xf32>
    %4 = vector.broadcast %3 : vector<1x128xf32> to vector<512x128xf32>
    %5 = arith.mulf %2, %4 : vector<512x128xf32>
    %c0_5 = arith.constant 0 : index
    %c0_6 = arith.constant 0 : index
    %6 = vector.load %arg5[%c0_5, %c0_6] : memref<1x128xf32, #tpu.memory_space<vmem>>, vector<1x128xf32>
    %7 = vector.broadcast %6 : vector<1x128xf32> to vector<512x128xf32>
    %8 = arith.addf %5, %7 : vector<512x128xf32>
    %cst_7 = arith.constant 0.000000e+00 : f32
    %9 = vector.broadcast %cst_7 : f32 to vector<512x128xf32>
    %10 = arith.maximumf %8, %9 : vector<512x128xf32>
    %11 = arith.truncf %10 : vector<512x128xf32> to vector<512x128xbf16>
    %c0_8 = arith.constant 0 : index
    %c0_9 = arith.constant 0 : index
    %12 = vector.load %arg6[%c0_8, %c0_9] : memref<512x128xbf16, #tpu.memory_space<vmem>>, vector<512x128xbf16>
    tpu.vector_store %arg6[%c0_8, %c0_9], %11 {strides = array<i32>} : memref<512x128xbf16, #tpu.memory_space<vmem>>, vector<512x128xbf16>,
    return
  }
  func.func @transform_0(%arg0: i32, %arg1: i32) -> (i32, i32) {
    %c0_i32 = arith.constant 0 : i32
    %c0_i32_0 = arith.constant 0 : i32
    return %arg0, %c0_i32 : i32, i32
  }
  func.func @transform_1(%arg0: i32, %arg1: i32) -> (i32, i32) {
    %c0_i32 = arith.constant 0 : i32
    %c0_i32_0 = arith.constant 0 : i32
    return %c0_i32, %arg1 : i32, i32
  }
  func.func @transform_2(%arg0: i32, %arg1: i32) -> (i32, i32) {
    %c0_i32 = arith.constant 0 : i32
    %c0_i32_0 = arith.constant 0 : i32
    return %c0_i32, %arg1 : i32, i32
  }
  func.func @transform_3(%arg0: i32, %arg1: i32) -> (i32, i32) {
    %c0_i32 = arith.constant 0 : i32
    %c0_i32_0 = arith.constant 0 : i32
    return %c0_i32, %arg1 : i32, i32
  }
  func.func @transform_4(%arg0: i32, %arg1: i32) -> (i32, i32) {
    %c0_i32 = arith.constant 0 : i32
    return %arg0, %arg1 : i32, i32
  }
}

module attributes {stable_mosaic.version = 11 : i64} {
  func.func @_tap_max_kernel(%arg0: i32, %arg1: memref<9x64x128xbf16, #tpu.memory_space<vmem>>, %arg2: memref<64x128xbf16, #tpu.memory_space<vmem>>) attributes {dimension_semantics = [#tpu.dimension_semantics<parallel>], iteration_bounds = array<i64: 1>, scalar_prefetch = 0 : i64, scratch_operands = 0 : i64, tpu.core_type = #tpu.core_type<tc>, window_params = [{transform_indices = @transform_0, window_bounds = array<i64: 9, 64, 128>}, {transform_indices = @transform_1, window_bounds = array<i64: 64, 128>}]} {
    %c0 = arith.constant 0 : index
    %c0_0 = arith.constant 0 : index
    %c0_1 = arith.constant 0 : index
    %0 = vector.load %arg1[%c0, %c0_0, %c0_1] : memref<9x64x128xbf16, #tpu.memory_space<vmem>>, vector<9x64x128xbf16>
    %1 = arith.extf %0 : vector<9x64x128xbf16> to vector<9x64x128xf32>
    %cst = arith.constant dense<0xFF800000> : vector<64x128xf32>
    %2 = vector.multi_reduction <maximumf>, %1, %cst [0] : vector<9x64x128xf32> to vector<64x128xf32>
    %3 = arith.truncf %2 : vector<64x128xf32> to vector<64x128xbf16>
    %c0_2 = arith.constant 0 : index
    %c0_3 = arith.constant 0 : index
    %4 = vector.load %arg2[%c0_2, %c0_3] : memref<64x128xbf16, #tpu.memory_space<vmem>>, vector<64x128xbf16>
    tpu.vector_store %arg2[%c0_2, %c0_3], %3 {strides = array<i32>} : memref<64x128xbf16, #tpu.memory_space<vmem>>, vector<64x128xbf16>,
    return
  }
  func.func @transform_0(%arg0: i32) -> (i32, i32, i32) {
    %c0_i32 = arith.constant 0 : i32
    %c0_i32_0 = arith.constant 0 : i32
    %c0_i32_1 = arith.constant 0 : i32
    return %c0_i32, %arg0, %c0_i32_0 : i32, i32, i32
  }
  func.func @transform_1(%arg0: i32) -> (i32, i32) {
    %c0_i32 = arith.constant 0 : i32
    %c0_i32_0 = arith.constant 0 : i32
    return %arg0, %c0_i32 : i32, i32
  }
}

module attributes {stable_mosaic.version = 11 : i64} {
  func.func @_mm_kernel_single(%arg0: i32, %arg1: i32, %arg2: memref<512x16xbf16, #tpu.memory_space<vmem>>, %arg3: memref<16x128xbf16, #tpu.memory_space<vmem>>, %arg4: memref<1x16xf32, #tpu.memory_space<vmem>>, %arg5: memref<1x16xf32, #tpu.memory_space<vmem>>, %arg6: memref<1x128xf32, #tpu.memory_space<vmem>>, %arg7: memref<1x128xf32, #tpu.memory_space<vmem>>, %arg8: memref<512x128xbf16, #tpu.memory_space<vmem>>) attributes {dimension_semantics = [#tpu.dimension_semantics<parallel>, #tpu.dimension_semantics<parallel>], iteration_bounds = array<i64: 1, 1>, scalar_prefetch = 0 : i64, scratch_operands = 0 : i64, tpu.core_type = #tpu.core_type<tc>, window_params = [{transform_indices = @transform_0, window_bounds = array<i64: 512, 16>}, {transform_indices = @transform_1, window_bounds = array<i64: 16, 128>}, {pipeline_mode = #tpu.pipeline_mode<synchronous>, transform_indices = @transform_2, window_bounds = array<i64: 1, 16>}, {pipeline_mode = #tpu.pipeline_mode<synchronous>, transform_indices = @transform_3, window_bounds = array<i64: 1, 16>}, {transform_indices = @transform_4, window_bounds = array<i64: 1, 128>}, {transform_indices = @transform_5, window_bounds = array<i64: 1, 128>}, {transform_indices = @transform_6, window_bounds = array<i64: 512, 128>}]} {
    %c0 = arith.constant 0 : index
    %c0_0 = arith.constant 0 : index
    %0 = vector.load %arg2[%c0, %c0_0] : memref<512x16xbf16, #tpu.memory_space<vmem>>, vector<512x16xbf16>
    %1 = arith.extf %0 : vector<512x16xbf16> to vector<512x16xf32>
    %c0_1 = arith.constant 0 : index
    %c0_2 = arith.constant 0 : index
    %2 = vector.load %arg4[%c0_1, %c0_2] : memref<1x16xf32, #tpu.memory_space<vmem>>, vector<1x16xf32>
    %3 = vector.broadcast %2 : vector<1x16xf32> to vector<512x16xf32>
    %4 = arith.mulf %1, %3 : vector<512x16xf32>
    %c0_3 = arith.constant 0 : index
    %c0_4 = arith.constant 0 : index
    %5 = vector.load %arg5[%c0_3, %c0_4] : memref<1x16xf32, #tpu.memory_space<vmem>>, vector<1x16xf32>
    %6 = vector.broadcast %5 : vector<1x16xf32> to vector<512x16xf32>
    %7 = arith.addf %4, %6 : vector<512x16xf32>
    %cst = arith.constant 0.000000e+00 : f32
    %8 = vector.broadcast %cst : f32 to vector<512x16xf32>
    %9 = arith.maximumf %7, %8 : vector<512x16xf32>
    %10 = arith.truncf %9 : vector<512x16xf32> to vector<512x16xbf16>
    %c0_5 = arith.constant 0 : index
    %c0_6 = arith.constant 0 : index
    %11 = vector.load %arg3[%c0_5, %c0_6] : memref<16x128xbf16, #tpu.memory_space<vmem>>, vector<16x128xbf16>
    %cst_7 = arith.constant dense<0.000000e+00> : vector<512x128xf32>
    %12 = tpu.matmul %10, %11, %cst_7 {dimension_numbers = #tpu.dot_dimension_numbers<[1], [0], [0], [1], [0, 0, 1, 1], [], []>} : vector<512x16xbf16>, vector<16x128xbf16>, vector<512x128xf32> -> vector<512x128xf32>
    %c0_8 = arith.constant 0 : index
    %c0_9 = arith.constant 0 : index
    %13 = vector.load %arg6[%c0_8, %c0_9] : memref<1x128xf32, #tpu.memory_space<vmem>>, vector<1x128xf32>
    %14 = vector.broadcast %13 : vector<1x128xf32> to vector<512x128xf32>
    %15 = arith.mulf %12, %14 : vector<512x128xf32>
    %c0_10 = arith.constant 0 : index
    %c0_11 = arith.constant 0 : index
    %16 = vector.load %arg7[%c0_10, %c0_11] : memref<1x128xf32, #tpu.memory_space<vmem>>, vector<1x128xf32>
    %17 = vector.broadcast %16 : vector<1x128xf32> to vector<512x128xf32>
    %18 = arith.addf %15, %17 : vector<512x128xf32>
    %cst_12 = arith.constant 0.000000e+00 : f32
    %19 = vector.broadcast %cst_12 : f32 to vector<512x128xf32>
    %20 = arith.maximumf %18, %19 : vector<512x128xf32>
    %21 = arith.truncf %20 : vector<512x128xf32> to vector<512x128xbf16>
    %c0_13 = arith.constant 0 : index
    %c0_14 = arith.constant 0 : index
    %22 = vector.load %arg8[%c0_13, %c0_14] : memref<512x128xbf16, #tpu.memory_space<vmem>>, vector<512x128xbf16>
    tpu.vector_store %arg8[%c0_13, %c0_14], %21 {strides = array<i32>} : memref<512x128xbf16, #tpu.memory_space<vmem>>, vector<512x128xbf16>,
    return
  }
  func.func @transform_0(%arg0: i32, %arg1: i32) -> (i32, i32) {
    %c0_i32 = arith.constant 0 : i32
    %c0_i32_0 = arith.constant 0 : i32
    return %arg0, %c0_i32 : i32, i32
  }
  func.func @transform_1(%arg0: i32, %arg1: i32) -> (i32, i32) {
    %c0_i32 = arith.constant 0 : i32
    %c0_i32_0 = arith.constant 0 : i32
    return %c0_i32, %arg1 : i32, i32
  }
  func.func @transform_2(%arg0: i32, %arg1: i32) -> (i32, i32) {
    %c0_i32 = arith.constant 0 : i32
    %c0_i32_0 = arith.constant 0 : i32
    %c0_i32_1 = arith.constant 0 : i32
    return %c0_i32, %c0_i32_0 : i32, i32
  }
  func.func @transform_3(%arg0: i32, %arg1: i32) -> (i32, i32) {
    %c0_i32 = arith.constant 0 : i32
    %c0_i32_0 = arith.constant 0 : i32
    %c0_i32_1 = arith.constant 0 : i32
    return %c0_i32, %c0_i32_0 : i32, i32
  }
  func.func @transform_4(%arg0: i32, %arg1: i32) -> (i32, i32) {
    %c0_i32 = arith.constant 0 : i32
    %c0_i32_0 = arith.constant 0 : i32
    return %c0_i32, %arg1 : i32, i32
  }
  func.func @transform_5(%arg0: i32, %arg1: i32) -> (i32, i32) {
    %c0_i32 = arith.constant 0 : i32
    %c0_i32_0 = arith.constant 0 : i32
    return %c0_i32, %arg1 : i32, i32
  }
  func.func @transform_6(%arg0: i32, %arg1: i32) -> (i32, i32) {
    %c0_i32 = arith.constant 0 : i32
    return %arg0, %arg1 : i32, i32
  }
}

module attributes {stable_mosaic.version = 11 : i64} {
  func.func @_mm_kernel_single(%arg0: i32, %arg1: i32, %arg2: memref<512x288xbf16, #tpu.memory_space<vmem>>, %arg3: memref<288x128xbf16, #tpu.memory_space<vmem>>, %arg4: memref<512x128xbf16, #tpu.memory_space<vmem>>) attributes {dimension_semantics = [#tpu.dimension_semantics<parallel>, #tpu.dimension_semantics<parallel>], iteration_bounds = array<i64: 1, 1>, scalar_prefetch = 0 : i64, scratch_operands = 0 : i64, tpu.core_type = #tpu.core_type<tc>, window_params = [{transform_indices = @transform_0, window_bounds = array<i64: 512, 288>}, {transform_indices = @transform_1, window_bounds = array<i64: 288, 128>}, {transform_indices = @transform_2, window_bounds = array<i64: 512, 128>}]} {
    %c0 = arith.constant 0 : index
    %c0_0 = arith.constant 0 : index
    %0 = vector.load %arg2[%c0, %c0_0] : memref<512x288xbf16, #tpu.memory_space<vmem>>, vector<512x288xbf16>
    %c0_1 = arith.constant 0 : index
    %c0_2 = arith.constant 0 : index
    %1 = vector.load %arg3[%c0_1, %c0_2] : memref<288x128xbf16, #tpu.memory_space<vmem>>, vector<288x128xbf16>
    %cst = arith.constant dense<0.000000e+00> : vector<512x128xf32>
    %2 = tpu.matmul %0, %1, %cst {dimension_numbers = #tpu.dot_dimension_numbers<[1], [0], [0], [1], [0, 0, 1, 1], [], []>} : vector<512x288xbf16>, vector<288x128xbf16>, vector<512x128xf32> -> vector<512x128xf32>
    %3 = arith.truncf %2 : vector<512x128xf32> to vector<512x128xbf16>
    %c0_3 = arith.constant 0 : index
    %c0_4 = arith.constant 0 : index
    %4 = vector.load %arg4[%c0_3, %c0_4] : memref<512x128xbf16, #tpu.memory_space<vmem>>, vector<512x128xbf16>
    tpu.vector_store %arg4[%c0_3, %c0_4], %3 {strides = array<i32>} : memref<512x128xbf16, #tpu.memory_space<vmem>>, vector<512x128xbf16>,
    return
  }
  func.func @transform_0(%arg0: i32, %arg1: i32) -> (i32, i32) {
    %c0_i32 = arith.constant 0 : i32
    %c0_i32_0 = arith.constant 0 : i32
    return %arg0, %c0_i32 : i32, i32
  }
  func.func @transform_1(%arg0: i32, %arg1: i32) -> (i32, i32) {
    %c0_i32 = arith.constant 0 : i32
    %c0_i32_0 = arith.constant 0 : i32
    return %c0_i32, %arg1 : i32, i32
  }
  func.func @transform_2(%arg0: i32, %arg1: i32) -> (i32, i32) {
    %c0_i32 = arith.constant 0 : i32
    return %arg0, %arg1 : i32, i32
  }
}

module attributes {stable_mosaic.version = 11 : i64} {
  func.func @_mm_kernel_single(%arg0: i32, %arg1: i32, %arg2: memref<512x24xbf16, #tpu.memory_space<vmem>>, %arg3: memref<24x128xbf16, #tpu.memory_space<vmem>>, %arg4: memref<1x24xf32, #tpu.memory_space<vmem>>, %arg5: memref<1x24xf32, #tpu.memory_space<vmem>>, %arg6: memref<1x128xf32, #tpu.memory_space<vmem>>, %arg7: memref<1x128xf32, #tpu.memory_space<vmem>>, %arg8: memref<512x128xbf16, #tpu.memory_space<vmem>>) attributes {dimension_semantics = [#tpu.dimension_semantics<parallel>, #tpu.dimension_semantics<parallel>], iteration_bounds = array<i64: 1, 1>, scalar_prefetch = 0 : i64, scratch_operands = 0 : i64, tpu.core_type = #tpu.core_type<tc>, window_params = [{transform_indices = @transform_0, window_bounds = array<i64: 512, 24>}, {transform_indices = @transform_1, window_bounds = array<i64: 24, 128>}, {pipeline_mode = #tpu.pipeline_mode<synchronous>, transform_indices = @transform_2, window_bounds = array<i64: 1, 24>}, {pipeline_mode = #tpu.pipeline_mode<synchronous>, transform_indices = @transform_3, window_bounds = array<i64: 1, 24>}, {transform_indices = @transform_4, window_bounds = array<i64: 1, 128>}, {transform_indices = @transform_5, window_bounds = array<i64: 1, 128>}, {transform_indices = @transform_6, window_bounds = array<i64: 512, 128>}]} {
    %c0 = arith.constant 0 : index
    %c0_0 = arith.constant 0 : index
    %0 = vector.load %arg2[%c0, %c0_0] : memref<512x24xbf16, #tpu.memory_space<vmem>>, vector<512x24xbf16>
    %1 = arith.extf %0 : vector<512x24xbf16> to vector<512x24xf32>
    %c0_1 = arith.constant 0 : index
    %c0_2 = arith.constant 0 : index
    %2 = vector.load %arg4[%c0_1, %c0_2] : memref<1x24xf32, #tpu.memory_space<vmem>>, vector<1x24xf32>
    %3 = vector.broadcast %2 : vector<1x24xf32> to vector<512x24xf32>
    %4 = arith.mulf %1, %3 : vector<512x24xf32>
    %c0_3 = arith.constant 0 : index
    %c0_4 = arith.constant 0 : index
    %5 = vector.load %arg5[%c0_3, %c0_4] : memref<1x24xf32, #tpu.memory_space<vmem>>, vector<1x24xf32>
    %6 = vector.broadcast %5 : vector<1x24xf32> to vector<512x24xf32>
    %7 = arith.addf %4, %6 : vector<512x24xf32>
    %cst = arith.constant 0.000000e+00 : f32
    %8 = vector.broadcast %cst : f32 to vector<512x24xf32>
    %9 = arith.maximumf %7, %8 : vector<512x24xf32>
    %10 = arith.truncf %9 : vector<512x24xf32> to vector<512x24xbf16>
    %c0_5 = arith.constant 0 : index
    %c0_6 = arith.constant 0 : index
    %11 = vector.load %arg3[%c0_5, %c0_6] : memref<24x128xbf16, #tpu.memory_space<vmem>>, vector<24x128xbf16>
    %cst_7 = arith.constant dense<0.000000e+00> : vector<512x128xf32>
    %12 = tpu.matmul %10, %11, %cst_7 {dimension_numbers = #tpu.dot_dimension_numbers<[1], [0], [0], [1], [0, 0, 1, 1], [], []>} : vector<512x24xbf16>, vector<24x128xbf16>, vector<512x128xf32> -> vector<512x128xf32>
    %c0_8 = arith.constant 0 : index
    %c0_9 = arith.constant 0 : index
    %13 = vector.load %arg6[%c0_8, %c0_9] : memref<1x128xf32, #tpu.memory_space<vmem>>, vector<1x128xf32>
    %14 = vector.broadcast %13 : vector<1x128xf32> to vector<512x128xf32>
    %15 = arith.mulf %12, %14 : vector<512x128xf32>
    %c0_10 = arith.constant 0 : index
    %c0_11 = arith.constant 0 : index
    %16 = vector.load %arg7[%c0_10, %c0_11] : memref<1x128xf32, #tpu.memory_space<vmem>>, vector<1x128xf32>
    %17 = vector.broadcast %16 : vector<1x128xf32> to vector<512x128xf32>
    %18 = arith.addf %15, %17 : vector<512x128xf32>
    %cst_12 = arith.constant 0.000000e+00 : f32
    %19 = vector.broadcast %cst_12 : f32 to vector<512x128xf32>
    %20 = arith.maximumf %18, %19 : vector<512x128xf32>
    %21 = arith.truncf %20 : vector<512x128xf32> to vector<512x128xbf16>
    %c0_13 = arith.constant 0 : index
    %c0_14 = arith.constant 0 : index
    %22 = vector.load %arg8[%c0_13, %c0_14] : memref<512x128xbf16, #tpu.memory_space<vmem>>, vector<512x128xbf16>
    tpu.vector_store %arg8[%c0_13, %c0_14], %21 {strides = array<i32>} : memref<512x128xbf16, #tpu.memory_space<vmem>>, vector<512x128xbf16>,
    return
  }
  func.func @transform_0(%arg0: i32, %arg1: i32) -> (i32, i32) {
    %c0_i32 = arith.constant 0 : i32
    %c0_i32_0 = arith.constant 0 : i32
    return %arg0, %c0_i32 : i32, i32
  }
  func.func @transform_1(%arg0: i32, %arg1: i32) -> (i32, i32) {
    %c0_i32 = arith.constant 0 : i32
    %c0_i32_0 = arith.constant 0 : i32
    return %c0_i32, %arg1 : i32, i32
  }
  func.func @transform_2(%arg0: i32, %arg1: i32) -> (i32, i32) {
    %c0_i32 = arith.constant 0 : i32
    %c0_i32_0 = arith.constant 0 : i32
    %c0_i32_1 = arith.constant 0 : i32
    return %c0_i32, %c0_i32_0 : i32, i32
  }
  func.func @transform_3(%arg0: i32, %arg1: i32) -> (i32, i32) {
    %c0_i32 = arith.constant 0 : i32
    %c0_i32_0 = arith.constant 0 : i32
    %c0_i32_1 = arith.constant 0 : i32
    return %c0_i32, %c0_i32_0 : i32, i32
  }
  func.func @transform_4(%arg0: i32, %arg1: i32) -> (i32, i32) {
    %c0_i32 = arith.constant 0 : i32
    %c0_i32_0 = arith.constant 0 : i32
    return %c0_i32, %arg1 : i32, i32
  }
  func.func @transform_5(%arg0: i32, %arg1: i32) -> (i32, i32) {
    %c0_i32 = arith.constant 0 : i32
    %c0_i32_0 = arith.constant 0 : i32
    return %c0_i32, %arg1 : i32, i32
  }
  func.func @transform_6(%arg0: i32, %arg1: i32) -> (i32, i32) {
    %c0_i32 = arith.constant 0 : i32
    return %arg0, %arg1 : i32, i32
  }
}

module attributes {stable_mosaic.version = 11 : i64} {
  func.func @_mm_kernel_single(%arg0: i32, %arg1: i32, %arg2: memref<512x32xbf16, #tpu.memory_space<vmem>>, %arg3: memref<32x128xbf16, #tpu.memory_space<vmem>>, %arg4: memref<1x32xf32, #tpu.memory_space<vmem>>, %arg5: memref<1x32xf32, #tpu.memory_space<vmem>>, %arg6: memref<512x128xbf16, #tpu.memory_space<vmem>>) attributes {dimension_semantics = [#tpu.dimension_semantics<parallel>, #tpu.dimension_semantics<parallel>], iteration_bounds = array<i64: 1, 1>, scalar_prefetch = 0 : i64, scratch_operands = 0 : i64, tpu.core_type = #tpu.core_type<tc>, window_params = [{transform_indices = @transform_0, window_bounds = array<i64: 512, 32>}, {transform_indices = @transform_1, window_bounds = array<i64: 32, 128>}, {pipeline_mode = #tpu.pipeline_mode<synchronous>, transform_indices = @transform_2, window_bounds = array<i64: 1, 32>}, {pipeline_mode = #tpu.pipeline_mode<synchronous>, transform_indices = @transform_3, window_bounds = array<i64: 1, 32>}, {transform_indices = @transform_4, window_bounds = array<i64: 512, 128>}]} {
    %c0 = arith.constant 0 : index
    %c0_0 = arith.constant 0 : index
    %0 = vector.load %arg2[%c0, %c0_0] : memref<512x32xbf16, #tpu.memory_space<vmem>>, vector<512x32xbf16>
    %1 = arith.extf %0 : vector<512x32xbf16> to vector<512x32xf32>
    %c0_1 = arith.constant 0 : index
    %c0_2 = arith.constant 0 : index
    %2 = vector.load %arg4[%c0_1, %c0_2] : memref<1x32xf32, #tpu.memory_space<vmem>>, vector<1x32xf32>
    %3 = vector.broadcast %2 : vector<1x32xf32> to vector<512x32xf32>
    %4 = arith.mulf %1, %3 : vector<512x32xf32>
    %c0_3 = arith.constant 0 : index
    %c0_4 = arith.constant 0 : index
    %5 = vector.load %arg5[%c0_3, %c0_4] : memref<1x32xf32, #tpu.memory_space<vmem>>, vector<1x32xf32>
    %6 = vector.broadcast %5 : vector<1x32xf32> to vector<512x32xf32>
    %7 = arith.addf %4, %6 : vector<512x32xf32>
    %cst = arith.constant 0.000000e+00 : f32
    %8 = vector.broadcast %cst : f32 to vector<512x32xf32>
    %9 = arith.maximumf %7, %8 : vector<512x32xf32>
    %10 = arith.truncf %9 : vector<512x32xf32> to vector<512x32xbf16>
    %c0_5 = arith.constant 0 : index
    %c0_6 = arith.constant 0 : index
    %11 = vector.load %arg3[%c0_5, %c0_6] : memref<32x128xbf16, #tpu.memory_space<vmem>>, vector<32x128xbf16>
    %cst_7 = arith.constant dense<0.000000e+00> : vector<512x128xf32>
    %12 = tpu.matmul %10, %11, %cst_7 {dimension_numbers = #tpu.dot_dimension_numbers<[1], [0], [0], [1], [0, 0, 1, 1], [], []>} : vector<512x32xbf16>, vector<32x128xbf16>, vector<512x128xf32> -> vector<512x128xf32>
    %13 = arith.truncf %12 : vector<512x128xf32> to vector<512x128xbf16>
    %c0_8 = arith.constant 0 : index
    %c0_9 = arith.constant 0 : index
    %14 = vector.load %arg6[%c0_8, %c0_9] : memref<512x128xbf16, #tpu.memory_space<vmem>>, vector<512x128xbf16>
    tpu.vector_store %arg6[%c0_8, %c0_9], %13 {strides = array<i32>} : memref<512x128xbf16, #tpu.memory_space<vmem>>, vector<512x128xbf16>,
    return
  }
  func.func @transform_0(%arg0: i32, %arg1: i32) -> (i32, i32) {
    %c0_i32 = arith.constant 0 : i32
    %c0_i32_0 = arith.constant 0 : i32
    return %arg0, %c0_i32 : i32, i32
  }
  func.func @transform_1(%arg0: i32, %arg1: i32) -> (i32, i32) {
    %c0_i32 = arith.constant 0 : i32
    %c0_i32_0 = arith.constant 0 : i32
    return %c0_i32, %arg1 : i32, i32
  }
  func.func @transform_2(%arg0: i32, %arg1: i32) -> (i32, i32) {
    %c0_i32 = arith.constant 0 : i32
    %c0_i32_0 = arith.constant 0 : i32
    %c0_i32_1 = arith.constant 0 : i32
    return %c0_i32, %c0_i32_0 : i32, i32
  }
  func.func @transform_3(%arg0: i32, %arg1: i32) -> (i32, i32) {
    %c0_i32 = arith.constant 0 : i32
    %c0_i32_0 = arith.constant 0 : i32
    %c0_i32_1 = arith.constant 0 : i32
    return %c0_i32, %c0_i32_0 : i32, i32
  }
  func.func @transform_4(%arg0: i32, %arg1: i32) -> (i32, i32) {
    %c0_i32 = arith.constant 0 : i32
    return %arg0, %arg1 : i32, i32
  }
}

module attributes {stable_mosaic.version = 11 : i64} {
  func.func @_avg_pool_2x2_kernel(%arg0: i32, %arg1: memref<16x2x8x32xbf16, #tpu.memory_space<vmem>>, %arg2: memref<16x8x16xbf16, #tpu.memory_space<vmem>>) attributes {dimension_semantics = [#tpu.dimension_semantics<parallel>], iteration_bounds = array<i64: 1>, scalar_prefetch = 0 : i64, scratch_operands = 0 : i64, tpu.core_type = #tpu.core_type<tc>, window_params = [{transform_indices = @transform_0, window_bounds = array<i64: 16, 2, 8, 32>}, {transform_indices = @transform_1, window_bounds = array<i64: 16, 8, 16>}]} {
    %c0 = arith.constant 0 : index
    %c0_0 = arith.constant 0 : index
    %c0_1 = arith.constant 0 : index
    %c0_2 = arith.constant 0 : index
    %0 = vector.load %arg1[%c0, %c0_0, %c0_1, %c0_2] : memref<16x2x8x32xbf16, #tpu.memory_space<vmem>>, vector<16x2x8x32xbf16>
    %1 = arith.extf %0 : vector<16x2x8x32xbf16> to vector<16x2x8x32xf32>
    %2 = vector.extract_strided_slice %1 {offsets = [0, 0, 0, 0], sizes = [16, 1, 8, 32], strides = [1, 1, 1, 1]} : vector<16x2x8x32xf32> to vector<16x1x8x32xf32>
    %3 = vector.shape_cast %2 : vector<16x1x8x32xf32> to vector<16x8x32xf32>
    %4 = vector.extract_strided_slice %1 {offsets = [0, 1, 0, 0], sizes = [16, 1, 8, 32], strides = [1, 1, 1, 1]} : vector<16x2x8x32xf32> to vector<16x1x8x32xf32>
    %5 = vector.shape_cast %4 : vector<16x1x8x32xf32> to vector<16x8x32xf32>
    %6 = arith.addf %3, %5 : vector<16x8x32xf32>
    %7 = vector.extract_strided_slice %6 {offsets = [0, 0, 0], sizes = [16, 8, 16], strides = [1, 1, 1]} : vector<16x8x32xf32> to vector<16x8x16xf32>
    %8 = vector.extract_strided_slice %6 {offsets = [0, 0, 16], sizes = [16, 8, 16], strides = [1, 1, 1]} : vector<16x8x32xf32> to vector<16x8x16xf32>
    %9 = arith.addf %7, %8 : vector<16x8x16xf32>
    %cst = arith.constant 2.500000e-01 : f32
    %10 = vector.broadcast %cst : f32 to vector<16x8x16xf32>
    %11 = arith.mulf %10, %9 : vector<16x8x16xf32>
    %12 = arith.truncf %11 : vector<16x8x16xf32> to vector<16x8x16xbf16>
    %c0_3 = arith.constant 0 : index
    %c0_4 = arith.constant 0 : index
    %c0_5 = arith.constant 0 : index
    %13 = vector.load %arg2[%c0_3, %c0_4, %c0_5] : memref<16x8x16xbf16, #tpu.memory_space<vmem>>, vector<16x8x16xbf16>
    tpu.vector_store %arg2[%c0_3, %c0_4, %c0_5], %12 {strides = array<i32>} : memref<16x8x16xbf16, #tpu.memory_space<vmem>>, vector<16x8x16xbf16>,
    return
  }
  func.func @transform_0(%arg0: i32) -> (i32, i32, i32, i32) {
    %c0_i32 = arith.constant 0 : i32
    %c0_i32_0 = arith.constant 0 : i32
    %c0_i32_1 = arith.constant 0 : i32
    %c0_i32_2 = arith.constant 0 : i32
    return %arg0, %c0_i32, %c0_i32_0, %c0_i32_1 : i32, i32, i32, i32
  }
  func.func @transform_1(%arg0: i32) -> (i32, i32, i32) {
    %c0_i32 = arith.constant 0 : i32
    %c0_i32_0 = arith.constant 0 : i32
    %c0_i32_1 = arith.constant 0 : i32
    return %arg0, %c0_i32, %c0_i32_0 : i32, i32, i32
  }
}

module attributes {stable_mosaic.version = 11 : i64} {
  func.func @_mm_kernel_single(%arg0: i32, %arg1: i32, %arg2: memref<128x16xbf16, #tpu.memory_space<vmem>>, %arg3: memref<16x128xbf16, #tpu.memory_space<vmem>>, %arg4: memref<1x16xf32, #tpu.memory_space<vmem>>, %arg5: memref<1x16xf32, #tpu.memory_space<vmem>>, %arg6: memref<1x128xf32, #tpu.memory_space<vmem>>, %arg7: memref<1x128xf32, #tpu.memory_space<vmem>>, %arg8: memref<128x128xbf16, #tpu.memory_space<vmem>>) attributes {dimension_semantics = [#tpu.dimension_semantics<parallel>, #tpu.dimension_semantics<parallel>], iteration_bounds = array<i64: 1, 1>, scalar_prefetch = 0 : i64, scratch_operands = 0 : i64, tpu.core_type = #tpu.core_type<tc>, window_params = [{transform_indices = @transform_0, window_bounds = array<i64: 128, 16>}, {transform_indices = @transform_1, window_bounds = array<i64: 16, 128>}, {pipeline_mode = #tpu.pipeline_mode<synchronous>, transform_indices = @transform_2, window_bounds = array<i64: 1, 16>}, {pipeline_mode = #tpu.pipeline_mode<synchronous>, transform_indices = @transform_3, window_bounds = array<i64: 1, 16>}, {transform_indices = @transform_4, window_bounds = array<i64: 1, 128>}, {transform_indices = @transform_5, window_bounds = array<i64: 1, 128>}, {transform_indices = @transform_6, window_bounds = array<i64: 128, 128>}]} {
    %c0 = arith.constant 0 : index
    %c0_0 = arith.constant 0 : index
    %0 = vector.load %arg2[%c0, %c0_0] : memref<128x16xbf16, #tpu.memory_space<vmem>>, vector<128x16xbf16>
    %1 = arith.extf %0 : vector<128x16xbf16> to vector<128x16xf32>
    %c0_1 = arith.constant 0 : index
    %c0_2 = arith.constant 0 : index
    %2 = vector.load %arg4[%c0_1, %c0_2] : memref<1x16xf32, #tpu.memory_space<vmem>>, vector<1x16xf32>
    %3 = vector.broadcast %2 : vector<1x16xf32> to vector<128x16xf32>
    %4 = arith.mulf %1, %3 : vector<128x16xf32>
    %c0_3 = arith.constant 0 : index
    %c0_4 = arith.constant 0 : index
    %5 = vector.load %arg5[%c0_3, %c0_4] : memref<1x16xf32, #tpu.memory_space<vmem>>, vector<1x16xf32>
    %6 = vector.broadcast %5 : vector<1x16xf32> to vector<128x16xf32>
    %7 = arith.addf %4, %6 : vector<128x16xf32>
    %cst = arith.constant 0.000000e+00 : f32
    %8 = vector.broadcast %cst : f32 to vector<128x16xf32>
    %9 = arith.maximumf %7, %8 : vector<128x16xf32>
    %10 = arith.truncf %9 : vector<128x16xf32> to vector<128x16xbf16>
    %c0_5 = arith.constant 0 : index
    %c0_6 = arith.constant 0 : index
    %11 = vector.load %arg3[%c0_5, %c0_6] : memref<16x128xbf16, #tpu.memory_space<vmem>>, vector<16x128xbf16>
    %cst_7 = arith.constant dense<0.000000e+00> : vector<128x128xf32>
    %12 = tpu.matmul %10, %11, %cst_7 {dimension_numbers = #tpu.dot_dimension_numbers<[1], [0], [0], [1], [0, 0, 1, 1], [], []>} : vector<128x16xbf16>, vector<16x128xbf16>, vector<128x128xf32> -> vector<128x128xf32>
    %c0_8 = arith.constant 0 : index
    %c0_9 = arith.constant 0 : index
    %13 = vector.load %arg6[%c0_8, %c0_9] : memref<1x128xf32, #tpu.memory_space<vmem>>, vector<1x128xf32>
    %14 = vector.broadcast %13 : vector<1x128xf32> to vector<128x128xf32>
    %15 = arith.mulf %12, %14 : vector<128x128xf32>
    %c0_10 = arith.constant 0 : index
    %c0_11 = arith.constant 0 : index
    %16 = vector.load %arg7[%c0_10, %c0_11] : memref<1x128xf32, #tpu.memory_space<vmem>>, vector<1x128xf32>
    %17 = vector.broadcast %16 : vector<1x128xf32> to vector<128x128xf32>
    %18 = arith.addf %15, %17 : vector<128x128xf32>
    %cst_12 = arith.constant 0.000000e+00 : f32
    %19 = vector.broadcast %cst_12 : f32 to vector<128x128xf32>
    %20 = arith.maximumf %18, %19 : vector<128x128xf32>
    %21 = arith.truncf %20 : vector<128x128xf32> to vector<128x128xbf16>
    %c0_13 = arith.constant 0 : index
    %c0_14 = arith.constant 0 : index
    %22 = vector.load %arg8[%c0_13, %c0_14] : memref<128x128xbf16, #tpu.memory_space<vmem>>, vector<128x128xbf16>
    tpu.vector_store %arg8[%c0_13, %c0_14], %21 {strides = array<i32>} : memref<128x128xbf16, #tpu.memory_space<vmem>>, vector<128x128xbf16>,
    return
  }
  func.func @transform_0(%arg0: i32, %arg1: i32) -> (i32, i32) {
    %c0_i32 = arith.constant 0 : i32
    %c0_i32_0 = arith.constant 0 : i32
    return %arg0, %c0_i32 : i32, i32
  }
  func.func @transform_1(%arg0: i32, %arg1: i32) -> (i32, i32) {
    %c0_i32 = arith.constant 0 : i32
    %c0_i32_0 = arith.constant 0 : i32
    return %c0_i32, %arg1 : i32, i32
  }
  func.func @transform_2(%arg0: i32, %arg1: i32) -> (i32, i32) {
    %c0_i32 = arith.constant 0 : i32
    %c0_i32_0 = arith.constant 0 : i32
    %c0_i32_1 = arith.constant 0 : i32
    return %c0_i32, %c0_i32_0 : i32, i32
  }
  func.func @transform_3(%arg0: i32, %arg1: i32) -> (i32, i32) {
    %c0_i32 = arith.constant 0 : i32
    %c0_i32_0 = arith.constant 0 : i32
    %c0_i32_1 = arith.constant 0 : i32
    return %c0_i32, %c0_i32_0 : i32, i32
  }
  func.func @transform_4(%arg0: i32, %arg1: i32) -> (i32, i32) {
    %c0_i32 = arith.constant 0 : i32
    %c0_i32_0 = arith.constant 0 : i32
    return %c0_i32, %arg1 : i32, i32
  }
  func.func @transform_5(%arg0: i32, %arg1: i32) -> (i32, i32) {
    %c0_i32 = arith.constant 0 : i32
    %c0_i32_0 = arith.constant 0 : i32
    return %c0_i32, %arg1 : i32, i32
  }
  func.func @transform_6(%arg0: i32, %arg1: i32) -> (i32, i32) {
    %c0_i32 = arith.constant 0 : i32
    return %arg0, %arg1 : i32, i32
  }
}

module attributes {stable_mosaic.version = 11 : i64} {
  func.func @_mm_kernel_single(%arg0: i32, %arg1: i32, %arg2: memref<128x288xbf16, #tpu.memory_space<vmem>>, %arg3: memref<288x128xbf16, #tpu.memory_space<vmem>>, %arg4: memref<128x128xbf16, #tpu.memory_space<vmem>>) attributes {dimension_semantics = [#tpu.dimension_semantics<parallel>, #tpu.dimension_semantics<parallel>], iteration_bounds = array<i64: 1, 1>, scalar_prefetch = 0 : i64, scratch_operands = 0 : i64, tpu.core_type = #tpu.core_type<tc>, window_params = [{transform_indices = @transform_0, window_bounds = array<i64: 128, 288>}, {transform_indices = @transform_1, window_bounds = array<i64: 288, 128>}, {transform_indices = @transform_2, window_bounds = array<i64: 128, 128>}]} {
    %c0 = arith.constant 0 : index
    %c0_0 = arith.constant 0 : index
    %0 = vector.load %arg2[%c0, %c0_0] : memref<128x288xbf16, #tpu.memory_space<vmem>>, vector<128x288xbf16>
    %c0_1 = arith.constant 0 : index
    %c0_2 = arith.constant 0 : index
    %1 = vector.load %arg3[%c0_1, %c0_2] : memref<288x128xbf16, #tpu.memory_space<vmem>>, vector<288x128xbf16>
    %cst = arith.constant dense<0.000000e+00> : vector<128x128xf32>
    %2 = tpu.matmul %0, %1, %cst {dimension_numbers = #tpu.dot_dimension_numbers<[1], [0], [0], [1], [0, 0, 1, 1], [], []>} : vector<128x288xbf16>, vector<288x128xbf16>, vector<128x128xf32> -> vector<128x128xf32>
    %3 = arith.truncf %2 : vector<128x128xf32> to vector<128x128xbf16>
    %c0_3 = arith.constant 0 : index
    %c0_4 = arith.constant 0 : index
    %4 = vector.load %arg4[%c0_3, %c0_4] : memref<128x128xbf16, #tpu.memory_space<vmem>>, vector<128x128xbf16>
    tpu.vector_store %arg4[%c0_3, %c0_4], %3 {strides = array<i32>} : memref<128x128xbf16, #tpu.memory_space<vmem>>, vector<128x128xbf16>,
    return
  }
  func.func @transform_0(%arg0: i32, %arg1: i32) -> (i32, i32) {
    %c0_i32 = arith.constant 0 : i32
    %c0_i32_0 = arith.constant 0 : i32
    return %arg0, %c0_i32 : i32, i32
  }
  func.func @transform_1(%arg0: i32, %arg1: i32) -> (i32, i32) {
    %c0_i32 = arith.constant 0 : i32
    %c0_i32_0 = arith.constant 0 : i32
    return %c0_i32, %arg1 : i32, i32
  }
  func.func @transform_2(%arg0: i32, %arg1: i32) -> (i32, i32) {
    %c0_i32 = arith.constant 0 : i32
    return %arg0, %arg1 : i32, i32
  }
}

module attributes {stable_mosaic.version = 11 : i64} {
  func.func @_mm_kernel_single(%arg0: i32, %arg1: i32, %arg2: memref<128x24xbf16, #tpu.memory_space<vmem>>, %arg3: memref<24x128xbf16, #tpu.memory_space<vmem>>, %arg4: memref<1x24xf32, #tpu.memory_space<vmem>>, %arg5: memref<1x24xf32, #tpu.memory_space<vmem>>, %arg6: memref<1x128xf32, #tpu.memory_space<vmem>>, %arg7: memref<1x128xf32, #tpu.memory_space<vmem>>, %arg8: memref<128x128xbf16, #tpu.memory_space<vmem>>) attributes {dimension_semantics = [#tpu.dimension_semantics<parallel>, #tpu.dimension_semantics<parallel>], iteration_bounds = array<i64: 1, 1>, scalar_prefetch = 0 : i64, scratch_operands = 0 : i64, tpu.core_type = #tpu.core_type<tc>, window_params = [{transform_indices = @transform_0, window_bounds = array<i64: 128, 24>}, {transform_indices = @transform_1, window_bounds = array<i64: 24, 128>}, {pipeline_mode = #tpu.pipeline_mode<synchronous>, transform_indices = @transform_2, window_bounds = array<i64: 1, 24>}, {pipeline_mode = #tpu.pipeline_mode<synchronous>, transform_indices = @transform_3, window_bounds = array<i64: 1, 24>}, {transform_indices = @transform_4, window_bounds = array<i64: 1, 128>}, {transform_indices = @transform_5, window_bounds = array<i64: 1, 128>}, {transform_indices = @transform_6, window_bounds = array<i64: 128, 128>}]} {
    %c0 = arith.constant 0 : index
    %c0_0 = arith.constant 0 : index
    %0 = vector.load %arg2[%c0, %c0_0] : memref<128x24xbf16, #tpu.memory_space<vmem>>, vector<128x24xbf16>
    %1 = arith.extf %0 : vector<128x24xbf16> to vector<128x24xf32>
    %c0_1 = arith.constant 0 : index
    %c0_2 = arith.constant 0 : index
    %2 = vector.load %arg4[%c0_1, %c0_2] : memref<1x24xf32, #tpu.memory_space<vmem>>, vector<1x24xf32>
    %3 = vector.broadcast %2 : vector<1x24xf32> to vector<128x24xf32>
    %4 = arith.mulf %1, %3 : vector<128x24xf32>
    %c0_3 = arith.constant 0 : index
    %c0_4 = arith.constant 0 : index
    %5 = vector.load %arg5[%c0_3, %c0_4] : memref<1x24xf32, #tpu.memory_space<vmem>>, vector<1x24xf32>
    %6 = vector.broadcast %5 : vector<1x24xf32> to vector<128x24xf32>
    %7 = arith.addf %4, %6 : vector<128x24xf32>
    %cst = arith.constant 0.000000e+00 : f32
    %8 = vector.broadcast %cst : f32 to vector<128x24xf32>
    %9 = arith.maximumf %7, %8 : vector<128x24xf32>
    %10 = arith.truncf %9 : vector<128x24xf32> to vector<128x24xbf16>
    %c0_5 = arith.constant 0 : index
    %c0_6 = arith.constant 0 : index
    %11 = vector.load %arg3[%c0_5, %c0_6] : memref<24x128xbf16, #tpu.memory_space<vmem>>, vector<24x128xbf16>
    %cst_7 = arith.constant dense<0.000000e+00> : vector<128x128xf32>
    %12 = tpu.matmul %10, %11, %cst_7 {dimension_numbers = #tpu.dot_dimension_numbers<[1], [0], [0], [1], [0, 0, 1, 1], [], []>} : vector<128x24xbf16>, vector<24x128xbf16>, vector<128x128xf32> -> vector<128x128xf32>
    %c0_8 = arith.constant 0 : index
    %c0_9 = arith.constant 0 : index
    %13 = vector.load %arg6[%c0_8, %c0_9] : memref<1x128xf32, #tpu.memory_space<vmem>>, vector<1x128xf32>
    %14 = vector.broadcast %13 : vector<1x128xf32> to vector<128x128xf32>
    %15 = arith.mulf %12, %14 : vector<128x128xf32>
    %c0_10 = arith.constant 0 : index
    %c0_11 = arith.constant 0 : index
    %16 = vector.load %arg7[%c0_10, %c0_11] : memref<1x128xf32, #tpu.memory_space<vmem>>, vector<1x128xf32>
    %17 = vector.broadcast %16 : vector<1x128xf32> to vector<128x128xf32>
    %18 = arith.addf %15, %17 : vector<128x128xf32>
    %cst_12 = arith.constant 0.000000e+00 : f32
    %19 = vector.broadcast %cst_12 : f32 to vector<128x128xf32>
    %20 = arith.maximumf %18, %19 : vector<128x128xf32>
    %21 = arith.truncf %20 : vector<128x128xf32> to vector<128x128xbf16>
    %c0_13 = arith.constant 0 : index
    %c0_14 = arith.constant 0 : index
    %22 = vector.load %arg8[%c0_13, %c0_14] : memref<128x128xbf16, #tpu.memory_space<vmem>>, vector<128x128xbf16>
    tpu.vector_store %arg8[%c0_13, %c0_14], %21 {strides = array<i32>} : memref<128x128xbf16, #tpu.memory_space<vmem>>, vector<128x128xbf16>,
    return
  }
  func.func @transform_0(%arg0: i32, %arg1: i32) -> (i32, i32) {
    %c0_i32 = arith.constant 0 : i32
    %c0_i32_0 = arith.constant 0 : i32
    return %arg0, %c0_i32 : i32, i32
  }
  func.func @transform_1(%arg0: i32, %arg1: i32) -> (i32, i32) {
    %c0_i32 = arith.constant 0 : i32
    %c0_i32_0 = arith.constant 0 : i32
    return %c0_i32, %arg1 : i32, i32
  }
  func.func @transform_2(%arg0: i32, %arg1: i32) -> (i32, i32) {
    %c0_i32 = arith.constant 0 : i32
    %c0_i32_0 = arith.constant 0 : i32
    %c0_i32_1 = arith.constant 0 : i32
    return %c0_i32, %c0_i32_0 : i32, i32
  }
  func.func @transform_3(%arg0: i32, %arg1: i32) -> (i32, i32) {
    %c0_i32 = arith.constant 0 : i32
    %c0_i32_0 = arith.constant 0 : i32
    %c0_i32_1 = arith.constant 0 : i32
    return %c0_i32, %c0_i32_0 : i32, i32
  }
  func.func @transform_4(%arg0: i32, %arg1: i32) -> (i32, i32) {
    %c0_i32 = arith.constant 0 : i32
    %c0_i32_0 = arith.constant 0 : i32
    return %c0_i32, %arg1 : i32, i32
  }
  func.func @transform_5(%arg0: i32, %arg1: i32) -> (i32, i32) {
    %c0_i32 = arith.constant 0 : i32
    %c0_i32_0 = arith.constant 0 : i32
    return %c0_i32, %arg1 : i32, i32
  }
  func.func @transform_6(%arg0: i32, %arg1: i32) -> (i32, i32) {
    %c0_i32 = arith.constant 0 : i32
    return %arg0, %arg1 : i32, i32
  }
}

module attributes {stable_mosaic.version = 11 : i64} {
  func.func @_mm_kernel_single(%arg0: i32, %arg1: i32, %arg2: memref<128x32xbf16, #tpu.memory_space<vmem>>, %arg3: memref<32x128xbf16, #tpu.memory_space<vmem>>, %arg4: memref<1x32xf32, #tpu.memory_space<vmem>>, %arg5: memref<1x32xf32, #tpu.memory_space<vmem>>, %arg6: memref<128x128xbf16, #tpu.memory_space<vmem>>) attributes {dimension_semantics = [#tpu.dimension_semantics<parallel>, #tpu.dimension_semantics<parallel>], iteration_bounds = array<i64: 1, 1>, scalar_prefetch = 0 : i64, scratch_operands = 0 : i64, tpu.core_type = #tpu.core_type<tc>, window_params = [{transform_indices = @transform_0, window_bounds = array<i64: 128, 32>}, {transform_indices = @transform_1, window_bounds = array<i64: 32, 128>}, {pipeline_mode = #tpu.pipeline_mode<synchronous>, transform_indices = @transform_2, window_bounds = array<i64: 1, 32>}, {pipeline_mode = #tpu.pipeline_mode<synchronous>, transform_indices = @transform_3, window_bounds = array<i64: 1, 32>}, {transform_indices = @transform_4, window_bounds = array<i64: 128, 128>}]} {
    %c0 = arith.constant 0 : index
    %c0_0 = arith.constant 0 : index
    %0 = vector.load %arg2[%c0, %c0_0] : memref<128x32xbf16, #tpu.memory_space<vmem>>, vector<128x32xbf16>
    %1 = arith.extf %0 : vector<128x32xbf16> to vector<128x32xf32>
    %c0_1 = arith.constant 0 : index
    %c0_2 = arith.constant 0 : index
    %2 = vector.load %arg4[%c0_1, %c0_2] : memref<1x32xf32, #tpu.memory_space<vmem>>, vector<1x32xf32>
    %3 = vector.broadcast %2 : vector<1x32xf32> to vector<128x32xf32>
    %4 = arith.mulf %1, %3 : vector<128x32xf32>
    %c0_3 = arith.constant 0 : index
    %c0_4 = arith.constant 0 : index
    %5 = vector.load %arg5[%c0_3, %c0_4] : memref<1x32xf32, #tpu.memory_space<vmem>>, vector<1x32xf32>
    %6 = vector.broadcast %5 : vector<1x32xf32> to vector<128x32xf32>
    %7 = arith.addf %4, %6 : vector<128x32xf32>
    %cst = arith.constant 0.000000e+00 : f32
    %8 = vector.broadcast %cst : f32 to vector<128x32xf32>
    %9 = arith.maximumf %7, %8 : vector<128x32xf32>
    %10 = arith.truncf %9 : vector<128x32xf32> to vector<128x32xbf16>
    %c0_5 = arith.constant 0 : index
    %c0_6 = arith.constant 0 : index
    %11 = vector.load %arg3[%c0_5, %c0_6] : memref<32x128xbf16, #tpu.memory_space<vmem>>, vector<32x128xbf16>
    %cst_7 = arith.constant dense<0.000000e+00> : vector<128x128xf32>
    %12 = tpu.matmul %10, %11, %cst_7 {dimension_numbers = #tpu.dot_dimension_numbers<[1], [0], [0], [1], [0, 0, 1, 1], [], []>} : vector<128x32xbf16>, vector<32x128xbf16>, vector<128x128xf32> -> vector<128x128xf32>
    %13 = arith.truncf %12 : vector<128x128xf32> to vector<128x128xbf16>
    %c0_8 = arith.constant 0 : index
    %c0_9 = arith.constant 0 : index
    %14 = vector.load %arg6[%c0_8, %c0_9] : memref<128x128xbf16, #tpu.memory_space<vmem>>, vector<128x128xbf16>
    tpu.vector_store %arg6[%c0_8, %c0_9], %13 {strides = array<i32>} : memref<128x128xbf16, #tpu.memory_space<vmem>>, vector<128x128xbf16>,
    return
  }
  func.func @transform_0(%arg0: i32, %arg1: i32) -> (i32, i32) {
    %c0_i32 = arith.constant 0 : i32
    %c0_i32_0 = arith.constant 0 : i32
    return %arg0, %c0_i32 : i32, i32
  }
  func.func @transform_1(%arg0: i32, %arg1: i32) -> (i32, i32) {
    %c0_i32 = arith.constant 0 : i32
    %c0_i32_0 = arith.constant 0 : i32
    return %c0_i32, %arg1 : i32, i32
  }
  func.func @transform_2(%arg0: i32, %arg1: i32) -> (i32, i32) {
    %c0_i32 = arith.constant 0 : i32
    %c0_i32_0 = arith.constant 0 : i32
    %c0_i32_1 = arith.constant 0 : i32
    return %c0_i32, %c0_i32_0 : i32, i32
  }
  func.func @transform_3(%arg0: i32, %arg1: i32) -> (i32, i32) {
    %c0_i32 = arith.constant 0 : i32
    %c0_i32_0 = arith.constant 0 : i32
    %c0_i32_1 = arith.constant 0 : i32
    return %c0_i32, %c0_i32_0 : i32, i32
  }
  func.func @transform_4(%arg0: i32, %arg1: i32) -> (i32, i32) {
    %c0_i32 = arith.constant 0 : i32
    return %arg0, %arg1 : i32, i32
  }
}

module attributes {stable_mosaic.version = 11 : i64} {
  func.func @_mm_kernel_single(%arg0: i32, %arg1: i32, %arg2: memref<32x16xbf16, #tpu.memory_space<vmem>>, %arg3: memref<16x128xbf16, #tpu.memory_space<vmem>>, %arg4: memref<1x16xf32, #tpu.memory_space<vmem>>, %arg5: memref<1x16xf32, #tpu.memory_space<vmem>>, %arg6: memref<1x128xf32, #tpu.memory_space<vmem>>, %arg7: memref<1x128xf32, #tpu.memory_space<vmem>>, %arg8: memref<32x128xbf16, #tpu.memory_space<vmem>>) attributes {dimension_semantics = [#tpu.dimension_semantics<parallel>, #tpu.dimension_semantics<parallel>], iteration_bounds = array<i64: 1, 1>, scalar_prefetch = 0 : i64, scratch_operands = 0 : i64, tpu.core_type = #tpu.core_type<tc>, window_params = [{transform_indices = @transform_0, window_bounds = array<i64: 32, 16>}, {transform_indices = @transform_1, window_bounds = array<i64: 16, 128>}, {pipeline_mode = #tpu.pipeline_mode<synchronous>, transform_indices = @transform_2, window_bounds = array<i64: 1, 16>}, {pipeline_mode = #tpu.pipeline_mode<synchronous>, transform_indices = @transform_3, window_bounds = array<i64: 1, 16>}, {transform_indices = @transform_4, window_bounds = array<i64: 1, 128>}, {transform_indices = @transform_5, window_bounds = array<i64: 1, 128>}, {transform_indices = @transform_6, window_bounds = array<i64: 32, 128>}]} {
    %c0 = arith.constant 0 : index
    %c0_0 = arith.constant 0 : index
    %0 = vector.load %arg2[%c0, %c0_0] : memref<32x16xbf16, #tpu.memory_space<vmem>>, vector<32x16xbf16>
    %1 = arith.extf %0 : vector<32x16xbf16> to vector<32x16xf32>
    %c0_1 = arith.constant 0 : index
    %c0_2 = arith.constant 0 : index
    %2 = vector.load %arg4[%c0_1, %c0_2] : memref<1x16xf32, #tpu.memory_space<vmem>>, vector<1x16xf32>
    %3 = vector.broadcast %2 : vector<1x16xf32> to vector<32x16xf32>
    %4 = arith.mulf %1, %3 : vector<32x16xf32>
    %c0_3 = arith.constant 0 : index
    %c0_4 = arith.constant 0 : index
    %5 = vector.load %arg5[%c0_3, %c0_4] : memref<1x16xf32, #tpu.memory_space<vmem>>, vector<1x16xf32>
    %6 = vector.broadcast %5 : vector<1x16xf32> to vector<32x16xf32>
    %7 = arith.addf %4, %6 : vector<32x16xf32>
    %cst = arith.constant 0.000000e+00 : f32
    %8 = vector.broadcast %cst : f32 to vector<32x16xf32>
    %9 = arith.maximumf %7, %8 : vector<32x16xf32>
    %10 = arith.truncf %9 : vector<32x16xf32> to vector<32x16xbf16>
    %c0_5 = arith.constant 0 : index
    %c0_6 = arith.constant 0 : index
    %11 = vector.load %arg3[%c0_5, %c0_6] : memref<16x128xbf16, #tpu.memory_space<vmem>>, vector<16x128xbf16>
    %cst_7 = arith.constant dense<0.000000e+00> : vector<32x128xf32>
    %12 = tpu.matmul %10, %11, %cst_7 {dimension_numbers = #tpu.dot_dimension_numbers<[1], [0], [0], [1], [0, 0, 1, 1], [], []>} : vector<32x16xbf16>, vector<16x128xbf16>, vector<32x128xf32> -> vector<32x128xf32>
    %c0_8 = arith.constant 0 : index
    %c0_9 = arith.constant 0 : index
    %13 = vector.load %arg6[%c0_8, %c0_9] : memref<1x128xf32, #tpu.memory_space<vmem>>, vector<1x128xf32>
    %14 = vector.broadcast %13 : vector<1x128xf32> to vector<32x128xf32>
    %15 = arith.mulf %12, %14 : vector<32x128xf32>
    %c0_10 = arith.constant 0 : index
    %c0_11 = arith.constant 0 : index
    %16 = vector.load %arg7[%c0_10, %c0_11] : memref<1x128xf32, #tpu.memory_space<vmem>>, vector<1x128xf32>
    %17 = vector.broadcast %16 : vector<1x128xf32> to vector<32x128xf32>
    %18 = arith.addf %15, %17 : vector<32x128xf32>
    %cst_12 = arith.constant 0.000000e+00 : f32
    %19 = vector.broadcast %cst_12 : f32 to vector<32x128xf32>
    %20 = arith.maximumf %18, %19 : vector<32x128xf32>
    %21 = arith.truncf %20 : vector<32x128xf32> to vector<32x128xbf16>
    %c0_13 = arith.constant 0 : index
    %c0_14 = arith.constant 0 : index
    %22 = vector.load %arg8[%c0_13, %c0_14] : memref<32x128xbf16, #tpu.memory_space<vmem>>, vector<32x128xbf16>
    tpu.vector_store %arg8[%c0_13, %c0_14], %21 {strides = array<i32>} : memref<32x128xbf16, #tpu.memory_space<vmem>>, vector<32x128xbf16>,
    return
  }
  func.func @transform_0(%arg0: i32, %arg1: i32) -> (i32, i32) {
    %c0_i32 = arith.constant 0 : i32
    %c0_i32_0 = arith.constant 0 : i32
    return %arg0, %c0_i32 : i32, i32
  }
  func.func @transform_1(%arg0: i32, %arg1: i32) -> (i32, i32) {
    %c0_i32 = arith.constant 0 : i32
    %c0_i32_0 = arith.constant 0 : i32
    return %c0_i32, %arg1 : i32, i32
  }
  func.func @transform_2(%arg0: i32, %arg1: i32) -> (i32, i32) {
    %c0_i32 = arith.constant 0 : i32
    %c0_i32_0 = arith.constant 0 : i32
    %c0_i32_1 = arith.constant 0 : i32
    return %c0_i32, %c0_i32_0 : i32, i32
  }
  func.func @transform_3(%arg0: i32, %arg1: i32) -> (i32, i32) {
    %c0_i32 = arith.constant 0 : i32
    %c0_i32_0 = arith.constant 0 : i32
    %c0_i32_1 = arith.constant 0 : i32
    return %c0_i32, %c0_i32_0 : i32, i32
  }
  func.func @transform_4(%arg0: i32, %arg1: i32) -> (i32, i32) {
    %c0_i32 = arith.constant 0 : i32
    %c0_i32_0 = arith.constant 0 : i32
    return %c0_i32, %arg1 : i32, i32
  }
  func.func @transform_5(%arg0: i32, %arg1: i32) -> (i32, i32) {
    %c0_i32 = arith.constant 0 : i32
    %c0_i32_0 = arith.constant 0 : i32
    return %c0_i32, %arg1 : i32, i32
  }
  func.func @transform_6(%arg0: i32, %arg1: i32) -> (i32, i32) {
    %c0_i32 = arith.constant 0 : i32
    return %arg0, %arg1 : i32, i32
  }
}

module attributes {stable_mosaic.version = 11 : i64} {
  func.func @_avg_pool_2x2_kernel(%arg0: i32, %arg1: memref<8x2x4x32xbf16, #tpu.memory_space<vmem>>, %arg2: memref<8x4x16xbf16, #tpu.memory_space<vmem>>) attributes {dimension_semantics = [#tpu.dimension_semantics<parallel>], iteration_bounds = array<i64: 1>, scalar_prefetch = 0 : i64, scratch_operands = 0 : i64, tpu.core_type = #tpu.core_type<tc>, window_params = [{transform_indices = @transform_0, window_bounds = array<i64: 8, 2, 4, 32>}, {transform_indices = @transform_1, window_bounds = array<i64: 8, 4, 16>}]} {
    %c0 = arith.constant 0 : index
    %c0_0 = arith.constant 0 : index
    %c0_1 = arith.constant 0 : index
    %c0_2 = arith.constant 0 : index
    %0 = vector.load %arg1[%c0, %c0_0, %c0_1, %c0_2] : memref<8x2x4x32xbf16, #tpu.memory_space<vmem>>, vector<8x2x4x32xbf16>
    %1 = arith.extf %0 : vector<8x2x4x32xbf16> to vector<8x2x4x32xf32>
    %2 = vector.extract_strided_slice %1 {offsets = [0, 0, 0, 0], sizes = [8, 1, 4, 32], strides = [1, 1, 1, 1]} : vector<8x2x4x32xf32> to vector<8x1x4x32xf32>
    %3 = vector.shape_cast %2 : vector<8x1x4x32xf32> to vector<8x4x32xf32>
    %4 = vector.extract_strided_slice %1 {offsets = [0, 1, 0, 0], sizes = [8, 1, 4, 32], strides = [1, 1, 1, 1]} : vector<8x2x4x32xf32> to vector<8x1x4x32xf32>
    %5 = vector.shape_cast %4 : vector<8x1x4x32xf32> to vector<8x4x32xf32>
    %6 = arith.addf %3, %5 : vector<8x4x32xf32>
    %7 = vector.extract_strided_slice %6 {offsets = [0, 0, 0], sizes = [8, 4, 16], strides = [1, 1, 1]} : vector<8x4x32xf32> to vector<8x4x16xf32>
    %8 = vector.extract_strided_slice %6 {offsets = [0, 0, 16], sizes = [8, 4, 16], strides = [1, 1, 1]} : vector<8x4x32xf32> to vector<8x4x16xf32>
    %9 = arith.addf %7, %8 : vector<8x4x16xf32>
    %cst = arith.constant 2.500000e-01 : f32
    %10 = vector.broadcast %cst : f32 to vector<8x4x16xf32>
    %11 = arith.mulf %10, %9 : vector<8x4x16xf32>
    %12 = arith.truncf %11 : vector<8x4x16xf32> to vector<8x4x16xbf16>
    %c0_3 = arith.constant 0 : index
    %c0_4 = arith.constant 0 : index
    %c0_5 = arith.constant 0 : index
    %13 = vector.load %arg2[%c0_3, %c0_4, %c0_5] : memref<8x4x16xbf16, #tpu.memory_space<vmem>>, vector<8x4x16xbf16>
    tpu.vector_store %arg2[%c0_3, %c0_4, %c0_5], %12 {strides = array<i32>} : memref<8x4x16xbf16, #tpu.memory_space<vmem>>, vector<8x4x16xbf16>,
    return
  }
  func.func @transform_0(%arg0: i32) -> (i32, i32, i32, i32) {
    %c0_i32 = arith.constant 0 : i32
    %c0_i32_0 = arith.constant 0 : i32
    %c0_i32_1 = arith.constant 0 : i32
    %c0_i32_2 = arith.constant 0 : i32
    return %arg0, %c0_i32, %c0_i32_0, %c0_i32_1 : i32, i32, i32, i32
  }
  func.func @transform_1(%arg0: i32) -> (i32, i32, i32) {
    %c0_i32 = arith.constant 0 : i32
    %c0_i32_0 = arith.constant 0 : i32
    %c0_i32_1 = arith.constant 0 : i32
    return %arg0, %c0_i32, %c0_i32_0 : i32, i32, i32
  }
}

module attributes {stable_mosaic.version = 11 : i64} {
  func.func @_mm_kernel_single(%arg0: i32, %arg1: i32, %arg2: memref<32x288xbf16, #tpu.memory_space<vmem>>, %arg3: memref<288x128xbf16, #tpu.memory_space<vmem>>, %arg4: memref<32x128xbf16, #tpu.memory_space<vmem>>) attributes {dimension_semantics = [#tpu.dimension_semantics<parallel>, #tpu.dimension_semantics<parallel>], iteration_bounds = array<i64: 1, 1>, scalar_prefetch = 0 : i64, scratch_operands = 0 : i64, tpu.core_type = #tpu.core_type<tc>, window_params = [{transform_indices = @transform_0, window_bounds = array<i64: 32, 288>}, {transform_indices = @transform_1, window_bounds = array<i64: 288, 128>}, {transform_indices = @transform_2, window_bounds = array<i64: 32, 128>}]} {
    %c0 = arith.constant 0 : index
    %c0_0 = arith.constant 0 : index
    %0 = vector.load %arg2[%c0, %c0_0] : memref<32x288xbf16, #tpu.memory_space<vmem>>, vector<32x288xbf16>
    %c0_1 = arith.constant 0 : index
    %c0_2 = arith.constant 0 : index
    %1 = vector.load %arg3[%c0_1, %c0_2] : memref<288x128xbf16, #tpu.memory_space<vmem>>, vector<288x128xbf16>
    %cst = arith.constant dense<0.000000e+00> : vector<32x128xf32>
    %2 = tpu.matmul %0, %1, %cst {dimension_numbers = #tpu.dot_dimension_numbers<[1], [0], [0], [1], [0, 0, 1, 1], [], []>} : vector<32x288xbf16>, vector<288x128xbf16>, vector<32x128xf32> -> vector<32x128xf32>
    %3 = arith.truncf %2 : vector<32x128xf32> to vector<32x128xbf16>
    %c0_3 = arith.constant 0 : index
    %c0_4 = arith.constant 0 : index
    %4 = vector.load %arg4[%c0_3, %c0_4] : memref<32x128xbf16, #tpu.memory_space<vmem>>, vector<32x128xbf16>
    tpu.vector_store %arg4[%c0_3, %c0_4], %3 {strides = array<i32>} : memref<32x128xbf16, #tpu.memory_space<vmem>>, vector<32x128xbf16>,
    return
  }
  func.func @transform_0(%arg0: i32, %arg1: i32) -> (i32, i32) {
    %c0_i32 = arith.constant 0 : i32
    %c0_i32_0 = arith.constant 0 : i32
    return %arg0, %c0_i32 : i32, i32
  }
  func.func @transform_1(%arg0: i32, %arg1: i32) -> (i32, i32) {
    %c0_i32 = arith.constant 0 : i32
    %c0_i32_0 = arith.constant 0 : i32
    return %c0_i32, %arg1 : i32, i32
  }
  func.func @transform_2(%arg0: i32, %arg1: i32) -> (i32, i32) {
    %c0_i32 = arith.constant 0 : i32
    return %arg0, %arg1 : i32, i32
  }
}

module attributes {stable_mosaic.version = 11 : i64} {
  func.func @_mm_kernel_single(%arg0: i32, %arg1: i32, %arg2: memref<32x24xbf16, #tpu.memory_space<vmem>>, %arg3: memref<24x128xbf16, #tpu.memory_space<vmem>>, %arg4: memref<1x24xf32, #tpu.memory_space<vmem>>, %arg5: memref<1x24xf32, #tpu.memory_space<vmem>>, %arg6: memref<1x128xf32, #tpu.memory_space<vmem>>, %arg7: memref<1x128xf32, #tpu.memory_space<vmem>>, %arg8: memref<32x128xbf16, #tpu.memory_space<vmem>>) attributes {dimension_semantics = [#tpu.dimension_semantics<parallel>, #tpu.dimension_semantics<parallel>], iteration_bounds = array<i64: 1, 1>, scalar_prefetch = 0 : i64, scratch_operands = 0 : i64, tpu.core_type = #tpu.core_type<tc>, window_params = [{transform_indices = @transform_0, window_bounds = array<i64: 32, 24>}, {transform_indices = @transform_1, window_bounds = array<i64: 24, 128>}, {pipeline_mode = #tpu.pipeline_mode<synchronous>, transform_indices = @transform_2, window_bounds = array<i64: 1, 24>}, {pipeline_mode = #tpu.pipeline_mode<synchronous>, transform_indices = @transform_3, window_bounds = array<i64: 1, 24>}, {transform_indices = @transform_4, window_bounds = array<i64: 1, 128>}, {transform_indices = @transform_5, window_bounds = array<i64: 1, 128>}, {transform_indices = @transform_6, window_bounds = array<i64: 32, 128>}]} {
    %c0 = arith.constant 0 : index
    %c0_0 = arith.constant 0 : index
    %0 = vector.load %arg2[%c0, %c0_0] : memref<32x24xbf16, #tpu.memory_space<vmem>>, vector<32x24xbf16>
    %1 = arith.extf %0 : vector<32x24xbf16> to vector<32x24xf32>
    %c0_1 = arith.constant 0 : index
    %c0_2 = arith.constant 0 : index
    %2 = vector.load %arg4[%c0_1, %c0_2] : memref<1x24xf32, #tpu.memory_space<vmem>>, vector<1x24xf32>
    %3 = vector.broadcast %2 : vector<1x24xf32> to vector<32x24xf32>
    %4 = arith.mulf %1, %3 : vector<32x24xf32>
    %c0_3 = arith.constant 0 : index
    %c0_4 = arith.constant 0 : index
    %5 = vector.load %arg5[%c0_3, %c0_4] : memref<1x24xf32, #tpu.memory_space<vmem>>, vector<1x24xf32>
    %6 = vector.broadcast %5 : vector<1x24xf32> to vector<32x24xf32>
    %7 = arith.addf %4, %6 : vector<32x24xf32>
    %cst = arith.constant 0.000000e+00 : f32
    %8 = vector.broadcast %cst : f32 to vector<32x24xf32>
    %9 = arith.maximumf %7, %8 : vector<32x24xf32>
    %10 = arith.truncf %9 : vector<32x24xf32> to vector<32x24xbf16>
    %c0_5 = arith.constant 0 : index
    %c0_6 = arith.constant 0 : index
    %11 = vector.load %arg3[%c0_5, %c0_6] : memref<24x128xbf16, #tpu.memory_space<vmem>>, vector<24x128xbf16>
    %cst_7 = arith.constant dense<0.000000e+00> : vector<32x128xf32>
    %12 = tpu.matmul %10, %11, %cst_7 {dimension_numbers = #tpu.dot_dimension_numbers<[1], [0], [0], [1], [0, 0, 1, 1], [], []>} : vector<32x24xbf16>, vector<24x128xbf16>, vector<32x128xf32> -> vector<32x128xf32>
    %c0_8 = arith.constant 0 : index
    %c0_9 = arith.constant 0 : index
    %13 = vector.load %arg6[%c0_8, %c0_9] : memref<1x128xf32, #tpu.memory_space<vmem>>, vector<1x128xf32>
    %14 = vector.broadcast %13 : vector<1x128xf32> to vector<32x128xf32>
    %15 = arith.mulf %12, %14 : vector<32x128xf32>
    %c0_10 = arith.constant 0 : index
    %c0_11 = arith.constant 0 : index
    %16 = vector.load %arg7[%c0_10, %c0_11] : memref<1x128xf32, #tpu.memory_space<vmem>>, vector<1x128xf32>
    %17 = vector.broadcast %16 : vector<1x128xf32> to vector<32x128xf32>
    %18 = arith.addf %15, %17 : vector<32x128xf32>
    %cst_12 = arith.constant 0.000000e+00 : f32
    %19 = vector.broadcast %cst_12 : f32 to vector<32x128xf32>
    %20 = arith.maximumf %18, %19 : vector<32x128xf32>
    %21 = arith.truncf %20 : vector<32x128xf32> to vector<32x128xbf16>
    %c0_13 = arith.constant 0 : index
    %c0_14 = arith.constant 0 : index
    %22 = vector.load %arg8[%c0_13, %c0_14] : memref<32x128xbf16, #tpu.memory_space<vmem>>, vector<32x128xbf16>
    tpu.vector_store %arg8[%c0_13, %c0_14], %21 {strides = array<i32>} : memref<32x128xbf16, #tpu.memory_space<vmem>>, vector<32x128xbf16>,
    return
  }
  func.func @transform_0(%arg0: i32, %arg1: i32) -> (i32, i32) {
    %c0_i32 = arith.constant 0 : i32
    %c0_i32_0 = arith.constant 0 : i32
    return %arg0, %c0_i32 : i32, i32
  }
  func.func @transform_1(%arg0: i32, %arg1: i32) -> (i32, i32) {
    %c0_i32 = arith.constant 0 : i32
    %c0_i32_0 = arith.constant 0 : i32
    return %c0_i32, %arg1 : i32, i32
  }
  func.func @transform_2(%arg0: i32, %arg1: i32) -> (i32, i32) {
    %c0_i32 = arith.constant 0 : i32
    %c0_i32_0 = arith.constant 0 : i32
    %c0_i32_1 = arith.constant 0 : i32
    return %c0_i32, %c0_i32_0 : i32, i32
  }
  func.func @transform_3(%arg0: i32, %arg1: i32) -> (i32, i32) {
    %c0_i32 = arith.constant 0 : i32
    %c0_i32_0 = arith.constant 0 : i32
    %c0_i32_1 = arith.constant 0 : i32
    return %c0_i32, %c0_i32_0 : i32, i32
  }
  func.func @transform_4(%arg0: i32, %arg1: i32) -> (i32, i32) {
    %c0_i32 = arith.constant 0 : i32
    %c0_i32_0 = arith.constant 0 : i32
    return %c0_i32, %arg1 : i32, i32
  }
  func.func @transform_5(%arg0: i32, %arg1: i32) -> (i32, i32) {
    %c0_i32 = arith.constant 0 : i32
    %c0_i32_0 = arith.constant 0 : i32
    return %c0_i32, %arg1 : i32, i32
  }
  func.func @transform_6(%arg0: i32, %arg1: i32) -> (i32, i32) {
    %c0_i32 = arith.constant 0 : i32
    return %arg0, %arg1 : i32, i32
  }
}

module attributes {stable_mosaic.version = 11 : i64} {
  func.func @_avg_pool_2x2_kernel(%arg0: i32, %arg1: memref<4x2x2x32xbf16, #tpu.memory_space<vmem>>, %arg2: memref<4x2x16xbf16, #tpu.memory_space<vmem>>) attributes {dimension_semantics = [#tpu.dimension_semantics<parallel>], iteration_bounds = array<i64: 1>, scalar_prefetch = 0 : i64, scratch_operands = 0 : i64, tpu.core_type = #tpu.core_type<tc>, window_params = [{transform_indices = @transform_0, window_bounds = array<i64: 4, 2, 2, 32>}, {transform_indices = @transform_1, window_bounds = array<i64: 4, 2, 16>}]} {
    %c0 = arith.constant 0 : index
    %c0_0 = arith.constant 0 : index
    %c0_1 = arith.constant 0 : index
    %c0_2 = arith.constant 0 : index
    %0 = vector.load %arg1[%c0, %c0_0, %c0_1, %c0_2] : memref<4x2x2x32xbf16, #tpu.memory_space<vmem>>, vector<4x2x2x32xbf16>
    %1 = arith.extf %0 : vector<4x2x2x32xbf16> to vector<4x2x2x32xf32>
    %2 = vector.extract_strided_slice %1 {offsets = [0, 0, 0, 0], sizes = [4, 1, 2, 32], strides = [1, 1, 1, 1]} : vector<4x2x2x32xf32> to vector<4x1x2x32xf32>
    %3 = vector.shape_cast %2 : vector<4x1x2x32xf32> to vector<4x2x32xf32>
    %4 = vector.extract_strided_slice %1 {offsets = [0, 1, 0, 0], sizes = [4, 1, 2, 32], strides = [1, 1, 1, 1]} : vector<4x2x2x32xf32> to vector<4x1x2x32xf32>
    %5 = vector.shape_cast %4 : vector<4x1x2x32xf32> to vector<4x2x32xf32>
    %6 = arith.addf %3, %5 : vector<4x2x32xf32>
    %7 = vector.extract_strided_slice %6 {offsets = [0, 0, 0], sizes = [4, 2, 16], strides = [1, 1, 1]} : vector<4x2x32xf32> to vector<4x2x16xf32>
    %8 = vector.extract_strided_slice %6 {offsets = [0, 0, 16], sizes = [4, 2, 16], strides = [1, 1, 1]} : vector<4x2x32xf32> to vector<4x2x16xf32>
    %9 = arith.addf %7, %8 : vector<4x2x16xf32>
    %cst = arith.constant 2.500000e-01 : f32
    %10 = vector.broadcast %cst : f32 to vector<4x2x16xf32>
    %11 = arith.mulf %10, %9 : vector<4x2x16xf32>
    %12 = arith.truncf %11 : vector<4x2x16xf32> to vector<4x2x16xbf16>
    %c0_3 = arith.constant 0 : index
    %c0_4 = arith.constant 0 : index
    %c0_5 = arith.constant 0 : index
    %13 = vector.load %arg2[%c0_3, %c0_4, %c0_5] : memref<4x2x16xbf16, #tpu.memory_space<vmem>>, vector<4x2x16xbf16>
    tpu.vector_store %arg2[%c0_3, %c0_4, %c0_5], %12 {strides = array<i32>} : memref<4x2x16xbf16, #tpu.memory_space<vmem>>, vector<4x2x16xbf16>,
    return
  }
  func.func @transform_0(%arg0: i32) -> (i32, i32, i32, i32) {
    %c0_i32 = arith.constant 0 : i32
    %c0_i32_0 = arith.constant 0 : i32
    %c0_i32_1 = arith.constant 0 : i32
    %c0_i32_2 = arith.constant 0 : i32
    return %arg0, %c0_i32, %c0_i32_0, %c0_i32_1 : i32, i32, i32, i32
  }
  func.func @transform_1(%arg0: i32) -> (i32, i32, i32) {
    %c0_i32 = arith.constant 0 : i32
    %c0_i32_0 = arith.constant 0 : i32
    %c0_i32_1 = arith.constant 0 : i32
    return %arg0, %c0_i32, %c0_i32_0 : i32, i32, i32
  }
}

module attributes {stable_mosaic.version = 11 : i64} {
  func.func @_mm_kernel_single(%arg0: i32, %arg1: i32, %arg2: memref<32x32xbf16, #tpu.memory_space<vmem>>, %arg3: memref<32x128xbf16, #tpu.memory_space<vmem>>, %arg4: memref<1x32xf32, #tpu.memory_space<vmem>>, %arg5: memref<1x32xf32, #tpu.memory_space<vmem>>, %arg6: memref<32x128xbf16, #tpu.memory_space<vmem>>) attributes {dimension_semantics = [#tpu.dimension_semantics<parallel>, #tpu.dimension_semantics<parallel>], iteration_bounds = array<i64: 1, 1>, scalar_prefetch = 0 : i64, scratch_operands = 0 : i64, tpu.core_type = #tpu.core_type<tc>, window_params = [{transform_indices = @transform_0, window_bounds = array<i64: 32, 32>}, {transform_indices = @transform_1, window_bounds = array<i64: 32, 128>}, {pipeline_mode = #tpu.pipeline_mode<synchronous>, transform_indices = @transform_2, window_bounds = array<i64: 1, 32>}, {pipeline_mode = #tpu.pipeline_mode<synchronous>, transform_indices = @transform_3, window_bounds = array<i64: 1, 32>}, {transform_indices = @transform_4, window_bounds = array<i64: 32, 128>}]} {
    %c0 = arith.constant 0 : index
    %c0_0 = arith.constant 0 : index
    %0 = vector.load %arg2[%c0, %c0_0] : memref<32x32xbf16, #tpu.memory_space<vmem>>, vector<32x32xbf16>
    %1 = arith.extf %0 : vector<32x32xbf16> to vector<32x32xf32>
    %c0_1 = arith.constant 0 : index
    %c0_2 = arith.constant 0 : index
    %2 = vector.load %arg4[%c0_1, %c0_2] : memref<1x32xf32, #tpu.memory_space<vmem>>, vector<1x32xf32>
    %3 = vector.broadcast %2 : vector<1x32xf32> to vector<32x32xf32>
    %4 = arith.mulf %1, %3 : vector<32x32xf32>
    %c0_3 = arith.constant 0 : index
    %c0_4 = arith.constant 0 : index
    %5 = vector.load %arg5[%c0_3, %c0_4] : memref<1x32xf32, #tpu.memory_space<vmem>>, vector<1x32xf32>
    %6 = vector.broadcast %5 : vector<1x32xf32> to vector<32x32xf32>
    %7 = arith.addf %4, %6 : vector<32x32xf32>
    %cst = arith.constant 0.000000e+00 : f32
    %8 = vector.broadcast %cst : f32 to vector<32x32xf32>
    %9 = arith.maximumf %7, %8 : vector<32x32xf32>
    %10 = arith.truncf %9 : vector<32x32xf32> to vector<32x32xbf16>
    %c0_5 = arith.constant 0 : index
    %c0_6 = arith.constant 0 : index
    %11 = vector.load %arg3[%c0_5, %c0_6] : memref<32x128xbf16, #tpu.memory_space<vmem>>, vector<32x128xbf16>
    %cst_7 = arith.constant dense<0.000000e+00> : vector<32x128xf32>
    %12 = tpu.matmul %10, %11, %cst_7 {dimension_numbers = #tpu.dot_dimension_numbers<[1], [0], [0], [1], [0, 0, 1, 1], [], []>} : vector<32x32xbf16>, vector<32x128xbf16>, vector<32x128xf32> -> vector<32x128xf32>
    %13 = arith.truncf %12 : vector<32x128xf32> to vector<32x128xbf16>
    %c0_8 = arith.constant 0 : index
    %c0_9 = arith.constant 0 : index
    %14 = vector.load %arg6[%c0_8, %c0_9] : memref<32x128xbf16, #tpu.memory_space<vmem>>, vector<32x128xbf16>
    tpu.vector_store %arg6[%c0_8, %c0_9], %13 {strides = array<i32>} : memref<32x128xbf16, #tpu.memory_space<vmem>>, vector<32x128xbf16>,
    return
  }
  func.func @transform_0(%arg0: i32, %arg1: i32) -> (i32, i32) {
    %c0_i32 = arith.constant 0 : i32
    %c0_i32_0 = arith.constant 0 : i32
    return %arg0, %c0_i32 : i32, i32
  }
  func.func @transform_1(%arg0: i32, %arg1: i32) -> (i32, i32) {
    %c0_i32 = arith.constant 0 : i32
    %c0_i32_0 = arith.constant 0 : i32
    return %c0_i32, %arg1 : i32, i32
  }
  func.func @transform_2(%arg0: i32, %arg1: i32) -> (i32, i32) {
    %c0_i32 = arith.constant 0 : i32
    %c0_i32_0 = arith.constant 0 : i32
    %c0_i32_1 = arith.constant 0 : i32
    return %c0_i32, %c0_i32_0 : i32, i32
  }
  func.func @transform_3(%arg0: i32, %arg1: i32) -> (i32, i32) {
    %c0_i32 = arith.constant 0 : i32
    %c0_i32_0 = arith.constant 0 : i32
    %c0_i32_1 = arith.constant 0 : i32
    return %c0_i32, %c0_i32_0 : i32, i32
  }
  func.func @transform_4(%arg0: i32, %arg1: i32) -> (i32, i32) {
    %c0_i32 = arith.constant 0 : i32
    return %arg0, %arg1 : i32, i32
  }
}

module attributes {stable_mosaic.version = 11 : i64} {
  func.func @_mm_kernel_single(%arg0: i32, %arg1: i32, %arg2: memref<8x16xbf16, #tpu.memory_space<vmem>>, %arg3: memref<16x128xbf16, #tpu.memory_space<vmem>>, %arg4: memref<1x16xf32, #tpu.memory_space<vmem>>, %arg5: memref<1x16xf32, #tpu.memory_space<vmem>>, %arg6: memref<1x128xf32, #tpu.memory_space<vmem>>, %arg7: memref<1x128xf32, #tpu.memory_space<vmem>>, %arg8: memref<8x128xbf16, #tpu.memory_space<vmem>>) attributes {dimension_semantics = [#tpu.dimension_semantics<parallel>, #tpu.dimension_semantics<parallel>], iteration_bounds = array<i64: 1, 1>, scalar_prefetch = 0 : i64, scratch_operands = 0 : i64, tpu.core_type = #tpu.core_type<tc>, window_params = [{transform_indices = @transform_0, window_bounds = array<i64: 8, 16>}, {transform_indices = @transform_1, window_bounds = array<i64: 16, 128>}, {pipeline_mode = #tpu.pipeline_mode<synchronous>, transform_indices = @transform_2, window_bounds = array<i64: 1, 16>}, {pipeline_mode = #tpu.pipeline_mode<synchronous>, transform_indices = @transform_3, window_bounds = array<i64: 1, 16>}, {transform_indices = @transform_4, window_bounds = array<i64: 1, 128>}, {transform_indices = @transform_5, window_bounds = array<i64: 1, 128>}, {transform_indices = @transform_6, window_bounds = array<i64: 8, 128>}]} {
    %c0 = arith.constant 0 : index
    %c0_0 = arith.constant 0 : index
    %0 = vector.load %arg2[%c0, %c0_0] : memref<8x16xbf16, #tpu.memory_space<vmem>>, vector<8x16xbf16>
    %1 = arith.extf %0 : vector<8x16xbf16> to vector<8x16xf32>
    %c0_1 = arith.constant 0 : index
    %c0_2 = arith.constant 0 : index
    %2 = vector.load %arg4[%c0_1, %c0_2] : memref<1x16xf32, #tpu.memory_space<vmem>>, vector<1x16xf32>
    %3 = vector.broadcast %2 : vector<1x16xf32> to vector<8x16xf32>
    %4 = arith.mulf %1, %3 : vector<8x16xf32>
    %c0_3 = arith.constant 0 : index
    %c0_4 = arith.constant 0 : index
    %5 = vector.load %arg5[%c0_3, %c0_4] : memref<1x16xf32, #tpu.memory_space<vmem>>, vector<1x16xf32>
    %6 = vector.broadcast %5 : vector<1x16xf32> to vector<8x16xf32>
    %7 = arith.addf %4, %6 : vector<8x16xf32>
    %cst = arith.constant 0.000000e+00 : f32
    %8 = vector.broadcast %cst : f32 to vector<8x16xf32>
    %9 = arith.maximumf %7, %8 : vector<8x16xf32>
    %10 = arith.truncf %9 : vector<8x16xf32> to vector<8x16xbf16>
    %c0_5 = arith.constant 0 : index
    %c0_6 = arith.constant 0 : index
    %11 = vector.load %arg3[%c0_5, %c0_6] : memref<16x128xbf16, #tpu.memory_space<vmem>>, vector<16x128xbf16>
    %cst_7 = arith.constant dense<0.000000e+00> : vector<8x128xf32>
    %12 = tpu.matmul %10, %11, %cst_7 {dimension_numbers = #tpu.dot_dimension_numbers<[1], [0], [0], [1], [0, 0, 1, 1], [], []>} : vector<8x16xbf16>, vector<16x128xbf16>, vector<8x128xf32> -> vector<8x128xf32>
    %c0_8 = arith.constant 0 : index
    %c0_9 = arith.constant 0 : index
    %13 = vector.load %arg6[%c0_8, %c0_9] : memref<1x128xf32, #tpu.memory_space<vmem>>, vector<1x128xf32>
    %14 = vector.broadcast %13 : vector<1x128xf32> to vector<8x128xf32>
    %15 = arith.mulf %12, %14 : vector<8x128xf32>
    %c0_10 = arith.constant 0 : index
    %c0_11 = arith.constant 0 : index
    %16 = vector.load %arg7[%c0_10, %c0_11] : memref<1x128xf32, #tpu.memory_space<vmem>>, vector<1x128xf32>
    %17 = vector.broadcast %16 : vector<1x128xf32> to vector<8x128xf32>
    %18 = arith.addf %15, %17 : vector<8x128xf32>
    %cst_12 = arith.constant 0.000000e+00 : f32
    %19 = vector.broadcast %cst_12 : f32 to vector<8x128xf32>
    %20 = arith.maximumf %18, %19 : vector<8x128xf32>
    %21 = arith.truncf %20 : vector<8x128xf32> to vector<8x128xbf16>
    %c0_13 = arith.constant 0 : index
    %c0_14 = arith.constant 0 : index
    %22 = vector.load %arg8[%c0_13, %c0_14] : memref<8x128xbf16, #tpu.memory_space<vmem>>, vector<8x128xbf16>
    tpu.vector_store %arg8[%c0_13, %c0_14], %21 {strides = array<i32>} : memref<8x128xbf16, #tpu.memory_space<vmem>>, vector<8x128xbf16>,
    return
  }
  func.func @transform_0(%arg0: i32, %arg1: i32) -> (i32, i32) {
    %c0_i32 = arith.constant 0 : i32
    %c0_i32_0 = arith.constant 0 : i32
    return %arg0, %c0_i32 : i32, i32
  }
  func.func @transform_1(%arg0: i32, %arg1: i32) -> (i32, i32) {
    %c0_i32 = arith.constant 0 : i32
    %c0_i32_0 = arith.constant 0 : i32
    return %c0_i32, %arg1 : i32, i32
  }
  func.func @transform_2(%arg0: i32, %arg1: i32) -> (i32, i32) {
    %c0_i32 = arith.constant 0 : i32
    %c0_i32_0 = arith.constant 0 : i32
    %c0_i32_1 = arith.constant 0 : i32
    return %c0_i32, %c0_i32_0 : i32, i32
  }
  func.func @transform_3(%arg0: i32, %arg1: i32) -> (i32, i32) {
    %c0_i32 = arith.constant 0 : i32
    %c0_i32_0 = arith.constant 0 : i32
    %c0_i32_1 = arith.constant 0 : i32
    return %c0_i32, %c0_i32_0 : i32, i32
  }
  func.func @transform_4(%arg0: i32, %arg1: i32) -> (i32, i32) {
    %c0_i32 = arith.constant 0 : i32
    %c0_i32_0 = arith.constant 0 : i32
    return %c0_i32, %arg1 : i32, i32
  }
  func.func @transform_5(%arg0: i32, %arg1: i32) -> (i32, i32) {
    %c0_i32 = arith.constant 0 : i32
    %c0_i32_0 = arith.constant 0 : i32
    return %c0_i32, %arg1 : i32, i32
  }
  func.func @transform_6(%arg0: i32, %arg1: i32) -> (i32, i32) {
    %c0_i32 = arith.constant 0 : i32
    return %arg0, %arg1 : i32, i32
  }
}

module attributes {stable_mosaic.version = 11 : i64} {
  func.func @_mm_kernel_single(%arg0: i32, %arg1: i32, %arg2: memref<8x288xbf16, #tpu.memory_space<vmem>>, %arg3: memref<288x128xbf16, #tpu.memory_space<vmem>>, %arg4: memref<8x128xbf16, #tpu.memory_space<vmem>>) attributes {dimension_semantics = [#tpu.dimension_semantics<parallel>, #tpu.dimension_semantics<parallel>], iteration_bounds = array<i64: 1, 1>, scalar_prefetch = 0 : i64, scratch_operands = 0 : i64, tpu.core_type = #tpu.core_type<tc>, window_params = [{transform_indices = @transform_0, window_bounds = array<i64: 8, 288>}, {transform_indices = @transform_1, window_bounds = array<i64: 288, 128>}, {transform_indices = @transform_2, window_bounds = array<i64: 8, 128>}]} {
    %c0 = arith.constant 0 : index
    %c0_0 = arith.constant 0 : index
    %0 = vector.load %arg2[%c0, %c0_0] : memref<8x288xbf16, #tpu.memory_space<vmem>>, vector<8x288xbf16>
    %c0_1 = arith.constant 0 : index
    %c0_2 = arith.constant 0 : index
    %1 = vector.load %arg3[%c0_1, %c0_2] : memref<288x128xbf16, #tpu.memory_space<vmem>>, vector<288x128xbf16>
    %cst = arith.constant dense<0.000000e+00> : vector<8x128xf32>
    %2 = tpu.matmul %0, %1, %cst {dimension_numbers = #tpu.dot_dimension_numbers<[1], [0], [0], [1], [0, 0, 1, 1], [], []>} : vector<8x288xbf16>, vector<288x128xbf16>, vector<8x128xf32> -> vector<8x128xf32>
    %3 = arith.truncf %2 : vector<8x128xf32> to vector<8x128xbf16>
    %c0_3 = arith.constant 0 : index
    %c0_4 = arith.constant 0 : index
    %4 = vector.load %arg4[%c0_3, %c0_4] : memref<8x128xbf16, #tpu.memory_space<vmem>>, vector<8x128xbf16>
    tpu.vector_store %arg4[%c0_3, %c0_4], %3 {strides = array<i32>} : memref<8x128xbf16, #tpu.memory_space<vmem>>, vector<8x128xbf16>,
    return
  }
  func.func @transform_0(%arg0: i32, %arg1: i32) -> (i32, i32) {
    %c0_i32 = arith.constant 0 : i32
    %c0_i32_0 = arith.constant 0 : i32
    return %arg0, %c0_i32 : i32, i32
  }
  func.func @transform_1(%arg0: i32, %arg1: i32) -> (i32, i32) {
    %c0_i32 = arith.constant 0 : i32
    %c0_i32_0 = arith.constant 0 : i32
    return %c0_i32, %arg1 : i32, i32
  }
  func.func @transform_2(%arg0: i32, %arg1: i32) -> (i32, i32) {
    %c0_i32 = arith.constant 0 : i32
    return %arg0, %arg1 : i32, i32
  }
}

module attributes {stable_mosaic.version = 11 : i64} {
  func.func @_mm_kernel_single(%arg0: i32, %arg1: i32, %arg2: memref<8x24xbf16, #tpu.memory_space<vmem>>, %arg3: memref<24x128xbf16, #tpu.memory_space<vmem>>, %arg4: memref<1x24xf32, #tpu.memory_space<vmem>>, %arg5: memref<1x24xf32, #tpu.memory_space<vmem>>, %arg6: memref<1x128xf32, #tpu.memory_space<vmem>>, %arg7: memref<1x128xf32, #tpu.memory_space<vmem>>, %arg8: memref<8x128xbf16, #tpu.memory_space<vmem>>) attributes {dimension_semantics = [#tpu.dimension_semantics<parallel>, #tpu.dimension_semantics<parallel>], iteration_bounds = array<i64: 1, 1>, scalar_prefetch = 0 : i64, scratch_operands = 0 : i64, tpu.core_type = #tpu.core_type<tc>, window_params = [{transform_indices = @transform_0, window_bounds = array<i64: 8, 24>}, {transform_indices = @transform_1, window_bounds = array<i64: 24, 128>}, {pipeline_mode = #tpu.pipeline_mode<synchronous>, transform_indices = @transform_2, window_bounds = array<i64: 1, 24>}, {pipeline_mode = #tpu.pipeline_mode<synchronous>, transform_indices = @transform_3, window_bounds = array<i64: 1, 24>}, {transform_indices = @transform_4, window_bounds = array<i64: 1, 128>}, {transform_indices = @transform_5, window_bounds = array<i64: 1, 128>}, {transform_indices = @transform_6, window_bounds = array<i64: 8, 128>}]} {
    %c0 = arith.constant 0 : index
    %c0_0 = arith.constant 0 : index
    %0 = vector.load %arg2[%c0, %c0_0] : memref<8x24xbf16, #tpu.memory_space<vmem>>, vector<8x24xbf16>
    %1 = arith.extf %0 : vector<8x24xbf16> to vector<8x24xf32>
    %c0_1 = arith.constant 0 : index
    %c0_2 = arith.constant 0 : index
    %2 = vector.load %arg4[%c0_1, %c0_2] : memref<1x24xf32, #tpu.memory_space<vmem>>, vector<1x24xf32>
    %3 = vector.broadcast %2 : vector<1x24xf32> to vector<8x24xf32>
    %4 = arith.mulf %1, %3 : vector<8x24xf32>
    %c0_3 = arith.constant 0 : index
    %c0_4 = arith.constant 0 : index
    %5 = vector.load %arg5[%c0_3, %c0_4] : memref<1x24xf32, #tpu.memory_space<vmem>>, vector<1x24xf32>
    %6 = vector.broadcast %5 : vector<1x24xf32> to vector<8x24xf32>
    %7 = arith.addf %4, %6 : vector<8x24xf32>
    %cst = arith.constant 0.000000e+00 : f32
    %8 = vector.broadcast %cst : f32 to vector<8x24xf32>
    %9 = arith.maximumf %7, %8 : vector<8x24xf32>
    %10 = arith.truncf %9 : vector<8x24xf32> to vector<8x24xbf16>
    %c0_5 = arith.constant 0 : index
    %c0_6 = arith.constant 0 : index
    %11 = vector.load %arg3[%c0_5, %c0_6] : memref<24x128xbf16, #tpu.memory_space<vmem>>, vector<24x128xbf16>
    %cst_7 = arith.constant dense<0.000000e+00> : vector<8x128xf32>
    %12 = tpu.matmul %10, %11, %cst_7 {dimension_numbers = #tpu.dot_dimension_numbers<[1], [0], [0], [1], [0, 0, 1, 1], [], []>} : vector<8x24xbf16>, vector<24x128xbf16>, vector<8x128xf32> -> vector<8x128xf32>
    %c0_8 = arith.constant 0 : index
    %c0_9 = arith.constant 0 : index
    %13 = vector.load %arg6[%c0_8, %c0_9] : memref<1x128xf32, #tpu.memory_space<vmem>>, vector<1x128xf32>
    %14 = vector.broadcast %13 : vector<1x128xf32> to vector<8x128xf32>
    %15 = arith.mulf %12, %14 : vector<8x128xf32>
    %c0_10 = arith.constant 0 : index
    %c0_11 = arith.constant 0 : index
    %16 = vector.load %arg7[%c0_10, %c0_11] : memref<1x128xf32, #tpu.memory_space<vmem>>, vector<1x128xf32>
    %17 = vector.broadcast %16 : vector<1x128xf32> to vector<8x128xf32>
    %18 = arith.addf %15, %17 : vector<8x128xf32>
    %cst_12 = arith.constant 0.000000e+00 : f32
    %19 = vector.broadcast %cst_12 : f32 to vector<8x128xf32>
    %20 = arith.maximumf %18, %19 : vector<8x128xf32>
    %21 = arith.truncf %20 : vector<8x128xf32> to vector<8x128xbf16>
    %c0_13 = arith.constant 0 : index
    %c0_14 = arith.constant 0 : index
    %22 = vector.load %arg8[%c0_13, %c0_14] : memref<8x128xbf16, #tpu.memory_space<vmem>>, vector<8x128xbf16>
    tpu.vector_store %arg8[%c0_13, %c0_14], %21 {strides = array<i32>} : memref<8x128xbf16, #tpu.memory_space<vmem>>, vector<8x128xbf16>,
    return
  }
  func.func @transform_0(%arg0: i32, %arg1: i32) -> (i32, i32) {
    %c0_i32 = arith.constant 0 : i32
    %c0_i32_0 = arith.constant 0 : i32
    return %arg0, %c0_i32 : i32, i32
  }
  func.func @transform_1(%arg0: i32, %arg1: i32) -> (i32, i32) {
    %c0_i32 = arith.constant 0 : i32
    %c0_i32_0 = arith.constant 0 : i32
    return %c0_i32, %arg1 : i32, i32
  }
  func.func @transform_2(%arg0: i32, %arg1: i32) -> (i32, i32) {
    %c0_i32 = arith.constant 0 : i32
    %c0_i32_0 = arith.constant 0 : i32
    %c0_i32_1 = arith.constant 0 : i32
    return %c0_i32, %c0_i32_0 : i32, i32
  }
  func.func @transform_3(%arg0: i32, %arg1: i32) -> (i32, i32) {
    %c0_i32 = arith.constant 0 : i32
    %c0_i32_0 = arith.constant 0 : i32
    %c0_i32_1 = arith.constant 0 : i32
    return %c0_i32, %c0_i32_0 : i32, i32
  }
  func.func @transform_4(%arg0: i32, %arg1: i32) -> (i32, i32) {
    %c0_i32 = arith.constant 0 : i32
    %c0_i32_0 = arith.constant 0 : i32
    return %c0_i32, %arg1 : i32, i32
  }
  func.func @transform_5(%arg0: i32, %arg1: i32) -> (i32, i32) {
    %c0_i32 = arith.constant 0 : i32
    %c0_i32_0 = arith.constant 0 : i32
    return %c0_i32, %arg1 : i32, i32
  }
  func.func @transform_6(%arg0: i32, %arg1: i32) -> (i32, i32) {
    %c0_i32 = arith.constant 0 : i32
    return %arg0, %arg1 : i32, i32
  }
}

module attributes {stable_mosaic.version = 11 : i64} {
  func.func @_mm_kernel_single(%arg0: i32, %arg1: i32, %arg2: memref<16x4xf32, #tpu.memory_space<vmem>>, %arg3: memref<4x128xbf16, #tpu.memory_space<vmem>>, %arg4: memref<1x128xf32, #tpu.memory_space<vmem>>, %arg5: memref<1x128xf32, #tpu.memory_space<vmem>>, %arg6: memref<16x128xf32, #tpu.memory_space<vmem>>) attributes {dimension_semantics = [#tpu.dimension_semantics<parallel>, #tpu.dimension_semantics<parallel>], iteration_bounds = array<i64: 1, 1>, scalar_prefetch = 0 : i64, scratch_operands = 0 : i64, tpu.core_type = #tpu.core_type<tc>, window_params = [{transform_indices = @transform_0, window_bounds = array<i64: 16, 4>}, {transform_indices = @transform_1, window_bounds = array<i64: 4, 128>}, {transform_indices = @transform_2, window_bounds = array<i64: 1, 128>}, {transform_indices = @transform_3, window_bounds = array<i64: 1, 128>}, {transform_indices = @transform_4, window_bounds = array<i64: 16, 128>}]} {
    %c0 = arith.constant 0 : index
    %c0_0 = arith.constant 0 : index
    %0 = vector.load %arg2[%c0, %c0_0] : memref<16x4xf32, #tpu.memory_space<vmem>>, vector<16x4xf32>
    %1 = arith.truncf %0 : vector<16x4xf32> to vector<16x4xbf16>
    %c0_1 = arith.constant 0 : index
    %c0_2 = arith.constant 0 : index
    %2 = vector.load %arg3[%c0_1, %c0_2] : memref<4x128xbf16, #tpu.memory_space<vmem>>, vector<4x128xbf16>
    %cst = arith.constant dense<0.000000e+00> : vector<16x128xf32>
    %3 = tpu.matmul %1, %2, %cst {dimension_numbers = #tpu.dot_dimension_numbers<[1], [0], [0], [1], [0, 0, 1, 1], [], []>} : vector<16x4xbf16>, vector<4x128xbf16>, vector<16x128xf32> -> vector<16x128xf32>
    %c0_3 = arith.constant 0 : index
    %c0_4 = arith.constant 0 : index
    %4 = vector.load %arg4[%c0_3, %c0_4] : memref<1x128xf32, #tpu.memory_space<vmem>>, vector<1x128xf32>
    %5 = vector.broadcast %4 : vector<1x128xf32> to vector<16x128xf32>
    %6 = arith.mulf %3, %5 : vector<16x128xf32>
    %c0_5 = arith.constant 0 : index
    %c0_6 = arith.constant 0 : index
    %7 = vector.load %arg5[%c0_5, %c0_6] : memref<1x128xf32, #tpu.memory_space<vmem>>, vector<1x128xf32>
    %8 = vector.broadcast %7 : vector<1x128xf32> to vector<16x128xf32>
    %9 = arith.addf %6, %8 : vector<16x128xf32>
    %c0_7 = arith.constant 0 : index
    %c0_8 = arith.constant 0 : index
    %10 = vector.load %arg6[%c0_7, %c0_8] : memref<16x128xf32, #tpu.memory_space<vmem>>, vector<16x128xf32>
    tpu.vector_store %arg6[%c0_7, %c0_8], %9 {strides = array<i32>} : memref<16x128xf32, #tpu.memory_space<vmem>>, vector<16x128xf32>,
    return
  }
  func.func @transform_0(%arg0: i32, %arg1: i32) -> (i32, i32) {
    %c0_i32 = arith.constant 0 : i32
    %c0_i32_0 = arith.constant 0 : i32
    return %arg0, %c0_i32 : i32, i32
  }
  func.func @transform_1(%arg0: i32, %arg1: i32) -> (i32, i32) {
    %c0_i32 = arith.constant 0 : i32
    %c0_i32_0 = arith.constant 0 : i32
    return %c0_i32, %arg1 : i32, i32
  }
  func.func @transform_2(%arg0: i32, %arg1: i32) -> (i32, i32) {
    %c0_i32 = arith.constant 0 : i32
    %c0_i32_0 = arith.constant 0 : i32
    return %c0_i32, %arg1 : i32, i32
  }
  func.func @transform_3(%arg0: i32, %arg1: i32) -> (i32, i32) {
    %c0_i32 = arith.constant 0 : i32
    %c0_i32_0 = arith.constant 0 : i32
    return %c0_i32, %arg1 : i32, i32
  }
  func.func @transform_4(%arg0: i32, %arg1: i32) -> (i32, i32) {
    %c0_i32 = arith.constant 0 : i32
    return %arg0, %arg1 : i32, i32
  }
}

</mosaic_0001>

<llo_original>
// kernel: image_encoder_forward.25
$region0: #{image_encoder_forward.25}
  #allocation0 [shape = 'u32[]', space=smem, size = 0x4, offset = 0x4, fixed_abs, tag = 'smem constant byte address 0x4 - core index']
  #allocation1 [shape = 'u32[72,128]{1,0:T(1,128)}', space=vmem, size = 0x9000, scoped, tag = 'internal scratch']
  %s0 = inlined_call_operand.vmem [shape: bf16[2048,147], index: 0, kind: input, shape index: {}]
  %s1 = inlined_call_operand.vmem [shape: bf16[147,128], index: 1, kind: input, shape index: {}]
  %s2 = inlined_call_operand.vmem [shape: f32[1,128], index: 2, kind: input, shape index: {}]
  %s3 = inlined_call_operand.vmem [shape: f32[1,128], index: 3, kind: input, shape index: {}]
  %s4 = inlined_call_operand.vmem [shape: bf16[2048,128], index: 4, kind: output, shape index: {}]
  %s5 = sld [smem:[#allocation0]]
  $region49: #{image_encoder_forward.25} parent=0
    _
  %s7 = ssub.s32 1, %s5
  %s8 = scalar_select 0, %s7, %s5
  loop: start=0, step=1, limit=6
  $region2: #{image_encoder_forward.25} parent=0 // loop_pre_header
    _
  $region3: #{image_encoder_forward.25} parent=0 // loop_header
    %s10 = sphi 0, %s14
    %p11 = scmp.ge.s32.totalorder %s10, 6
    %s17 = sphi 0, %s29
    %s18 = sphi 0, %s25
    %s19 = sphi 0, %s17
    %s20 = sphi 0, %s18
    %s21 = sphi 0, %s19
    %s22 = sphi 0, %s20
    %s32 = sphi 0, %s34
    %s35 = sphi 0, %s32
    %s36 = sphi 0, %s35
    %s52 = sphi 0, %s36
    %s58 = sphi 0, %s60
    %s61 = sphi 0, %s58
    %s62 = sphi 0, %s61
    %s78 = sphi 0, %s62
    %s84 = sphi 0, %s86
    %s87 = sphi 0, %s84
    %s88 = sphi 0, %s87
    %s104 = sphi 0, %s88
    %s110 = sphi 0, %s112
    %s113 = sphi 0, %s110
    %s114 = sphi 0, %s113
    %s130 = sphi 0, %s114
    %s138 = sphi 0, %s140
    %s141 = sphi 0, %s138
    %s142 = sphi 0, %s141
    %s158 = sphi 0, %s142
  $region4: #{image_encoder_forward.25} parent=0 // loop_header_branch
    %13 = sbr.rel (%p11) target = $region8
  $region5: #{image_encoder_forward.25} parent=0 // loop_body
    %s15 = ssub.s32 %s10, 1
    %s16 = ssub.s32 %s10, 2
    %s23 = sadd.s32 1, %s18
    %p24 = scmp.ge.s32.totalorder %s23, 1
    %s25 = scalar_select %p24, 0, %s23
    %s26 = sadd.s32 1, %s17
    %s27 = scalar_select %p24, %s26, %s17
    %p28 = scmp.ge.s32.totalorder %s27, 4
    %s29 = scalar_select %p28, 0, %s27
    %s30 = ssub.s32 %s17, %s29
    %p31 = scmp.eq.s32.totalorder %s30, 0
    %s33 = sadd.s32 %s32, 1
    %s34 = scalar_select %p31, %s32, %s33
    %p37 = pneg %p31
    %p38 = scmp.eq.s32.totalorder %s10, 3
    %p39 = por %p37, %p38
    %p40 = scmp.ne.s32.totalorder %s32, %s35
    %p41 = scmp.eq.s32.totalorder %s10, 0
    %p42 = por %p40, %p41
    %p43 = scmp.ne.s32.totalorder %s32, %s35
    %p44 = scmp.eq.s32.totalorder %s15, 3
    %p45 = por %p43, %p44
    %p46 = scmp.ne.s32.totalorder %s35, %s36
    %p47 = scmp.eq.s32.totalorder %s15, 0
    %p48 = por %p46, %p47
    %p49 = scmp.ne.s32.totalorder %s35, %s36
    %p50 = scmp.eq.s32.totalorder %s16, 3
    %p51 = por %p49, %p50
    %p53 = scmp.ne.s32.totalorder %s36, %s52
    %p54 = scmp.eq.s32.totalorder %s16, 0
    %p55 = por %p53, %p54
    %s56 = ssub.s32 %s18, %s25
    %p57 = scmp.eq.s32.totalorder %s56, 0
    %s59 = sadd.s32 %s58, 1
    %s60 = scalar_select %p57, %s58, %s59
    %p63 = pneg %p57
    %p64 = scmp.eq.s32.totalorder %s10, 3
    %p65 = por %p63, %p64
    %p66 = scmp.ne.s32.totalorder %s58, %s61
    %p67 = scmp.eq.s32.totalorder %s10, 0
    %p68 = por %p66, %p67
    %p69 = scmp.ne.s32.totalorder %s58, %s61
    %p70 = scmp.eq.s32.totalorder %s15, 3
    %p71 = por %p69, %p70
    %p72 = scmp.ne.s32.totalorder %s61, %s62
    %p73 = scmp.eq.s32.totalorder %s15, 0
    %p74 = por %p72, %p73
    %p75 = scmp.ne.s32.totalorder %s61, %s62
    %p76 = scmp.eq.s32.totalorder %s16, 3
    %p77 = por %p75, %p76
    %p79 = scmp.ne.s32.totalorder %s62, %s78
    %p80 = scmp.eq.s32.totalorder %s16, 0
    %p81 = por %p79, %p80
    %s82 = ssub.s32 %s18, %s25
    %p83 = scmp.eq.s32.totalorder %s82, 0
    %s85 = sadd.s32 %s84, 1
    %s86 = scalar_select %p83, %s84, %s85
    %p89 = pneg %p83
    %p90 = scmp.eq.s32.totalorder %s10, 3
    %p91 = por %p89, %p90
    %p92 = scmp.ne.s32.totalorder %s84, %s87
    %p93 = scmp.eq.s32.totalorder %s10, 0
    %p94 = por %p92, %p93
    %p95 = scmp.ne.s32.totalorder %s84, %s87
    %p96 = scmp.eq.s32.totalorder %s15, 3
    %p97 = por %p95, %p96
    %p98 = scmp.ne.s32.totalorder %s87, %s88
    %p99 = scmp.eq.s32.totalorder %s15, 0
    %p100 = por %p98, %p99
    %p101 = scmp.ne.s32.totalorder %s87, %s88
    %p102 = scmp.eq.s32.totalorder %s16, 3
    %p103 = por %p101, %p102
    %p105 = scmp.ne.s32.totalorder %s88, %s104
    %p106 = scmp.eq.s32.totalorder %s16, 0
    %p107 = por %p105, %p106
    %s108 = ssub.s32 %s18, %s25
    %p109 = scmp.eq.s32.totalorder %s108, 0
    %s111 = sadd.s32 %s110, 1
    %s112 = scalar_select %p109, %s110, %s111
    %p115 = pneg %p109
    %p116 = scmp.eq.s32.totalorder %s10, 3
    %p117 = por %p115, %p116
    %p118 = scmp.ne.s32.totalorder %s110, %s113
    %p119 = scmp.eq.s32.totalorder %s10, 0
    %p120 = por %p118, %p119
    %p121 = scmp.ne.s32.totalorder %s110, %s113
    %p122 = scmp.eq.s32.totalorder %s15, 3
    %p123 = por %p121, %p122
    %p124 = scmp.ne.s32.totalorder %s113, %s114
    %p125 = scmp.eq.s32.totalorder %s15, 0
    %p126 = por %p124, %p125
    %p127 = scmp.ne.s32.totalorder %s113, %s114
    %p128 = scmp.eq.s32.totalorder %s16, 3
    %p129 = por %p127, %p128
    %p131 = scmp.ne.s32.totalorder %s114, %s130
    %p132 = scmp.eq.s32.totalorder %s16, 0
    %p133 = por %p131, %p132
    %s134 = ssub.s32 %s17, %s29
    %s135 = ssub.s32 %s18, %s25
    %s136 = sor.u32 %s134, %s135
    %p137 = scmp.eq.s32.totalorder %s136, 0
    %s139 = sadd.s32 %s138, 1
    %s140 = scalar_select %p137, %s138, %s139
    %p143 = pneg %p137
    %p144 = scmp.eq.s32.totalorder %s10, 3
    %p145 = por %p143, %p144
    %p146 = scmp.ne.s32.totalorder %s138, %s141
    %p147 = scmp.eq.s32.totalorder %s10, 0
    %p148 = por %p146, %p147
    %p149 = scmp.ne.s32.totalorder %s138, %s141
    %p150 = scmp.eq.s32.totalorder %s15, 3
    %p151 = por %p149, %p150
    %p152 = scmp.ne.s32.totalorder %s141, %s142
    %p153 = scmp.eq.s32.totalorder %s15, 0
    %p154 = por %p152, %p153
    %p155 = scmp.ne.s32.totalorder %s141, %s142
    %p156 = scmp.eq.s32.totalorder %s16, 3
    %p157 = por %p155, %p156
    %p159 = scmp.ne.s32.totalorder %s142, %s158
    %p160 = scmp.eq.s32.totalorder %s16, 0
    %p161 = por %p159, %p160
    %p162 = scmp.le.s32.totalorder 1, %s10
    %p163 = scmp.lt.s32.totalorder %s10, 5
    %p164 = pnand %p162, %p163
    %p165 = pneg %p164
    // Predicated region
    $region9: #{image_encoder_forward.25} parent=5 // pred_check
      _
    $region10: #{image_encoder_forward.25} parent=5 // pred_check_branch
      %167 = sbr.rel (%p164) target = $region12
    $region11: #{image_encoder_forward.25} parent=5 // pred_region
      %s168 = ssub.s32 %s10, 1
      // Predicated region
      $region13: #{image_encoder_forward.25} parent=11 // pred_check
        %p169 = pneg %p74
      $region14: #{image_encoder_forward.25} parent=11 // pred_check_branch
        %171 = sbr.rel (%p169) target = $region16
      $region15: #{image_encoder_forward.25} parent=11 // pred_region
        %p172 = scmp.lt.s32.totalorder %s20, 0
        %s173 = scalar_select %p172, %s20, 0
        %s174 = smul.addr %s173, 4
        %s175 = scalar_lea.vmem %s1, %s174
      $region16: #{image_encoder_forward.25} parent=11 // pred_fallthru
        _
      // Predicated region
      $region17: #{image_encoder_forward.25} parent=11 // pred_check
        %p176 = pneg %p100
      $region18: #{image_encoder_forward.25} parent=11 // pred_check_branch
        %178 = sbr.rel (%p176) target = $region20
      $region19: #{image_encoder_forward.25} parent=11 // pred_region
        %p179 = scmp.lt.s32.totalorder %s20, 0
        %s180 = scalar_select %p179, %s20, 0
        %s181 = scalar_lea.vmem %s2, %s180
      $region20: #{image_encoder_forward.25} parent=11 // pred_fallthru
        _
      // Predicated region
      $region21: #{image_encoder_forward.25} parent=11 // pred_check
        %p182 = pneg %p126
      $region22: #{image_encoder_forward.25} parent=11 // pred_check_branch
        %184 = sbr.rel (%p182) target = $region24
      $region23: #{image_encoder_forward.25} parent=11 // pred_region
        %p185 = scmp.lt.s32.totalorder %s20, 0
        %s186 = scalar_select %p185, %s20, 0
        %s187 = scalar_lea.vmem %s3, %s186
      $region24: #{image_encoder_forward.25} parent=11 // pred_fallthru
        _
    $region12: #{image_encoder_forward.25} parent=5 // pred_fallthru
      _
    %p188 = scmp.lt.s32.totalorder %s10, 4
    // Predicated region
    $region25: #{image_encoder_forward.25} parent=5 // pred_check
      %p189 = pneg %p188
    $region26: #{image_encoder_forward.25} parent=5 // pred_check_branch
      %191 = sbr.rel (%p189) target = $region28
    $region27: #{image_encoder_forward.25} parent=5 // pred_region
      // Predicated region
      $region29: #{image_encoder_forward.25} parent=27 // pred_check
        %p192 = pneg %p42
      $region30: #{image_encoder_forward.25} parent=27 // pred_check_branch
        %194 = sbr.rel (%p192) target = $region32
      $region31: #{image_encoder_forward.25} parent=27 // pred_region
        %s195 = smul.u32 64, %s17
        %p196 = scmp.lt.s32.totalorder %s195, 255
        %s197 = scalar_select %p196, %s195, 255
        %s198 = smul.addr %s197, 2
        %s199 = smul.addr %s198, 4
        %s200 = scalar_lea.vmem %s0, %s199
        %s201 = smul.u32 64, %s17
      $region32: #{image_encoder_forward.25} parent=27 // pred_fallthru
        _
    $region28: #{image_encoder_forward.25} parent=5 // pred_fallthru
      _
    %p202 = scmp.le.s32.totalorder 1, %s10
    %p203 = scmp.lt.s32.totalorder %s10, 5
    %p204 = pnand %p202, %p203
    %p205 = pneg %p204
    // Predicated region
    $region33: #{image_encoder_forward.25} parent=5 // pred_check
      _
    $region34: #{image_encoder_forward.25} parent=5 // pred_check_branch
      %207 = sbr.rel (%p204) target = $region36
    $region35: #{image_encoder_forward.25} parent=5 // pred_region
      %s208 = ssub.s32 %s10, 1
      %s209 = smul.u32 64, %s19
      %p210 = scmp.lt.s32.totalorder %s209, 255
      %s211 = scalar_select %p210, %s209, 255
      %s212 = smul.addr %s211, 2
      %s213 = smul.addr %s212, 4
      %s214 = scalar_lea.vmem %s0, %s213
      %p215 = pneg %p48
      %p216 = pneg %p45
      %p217 = scmp.lt.s32.totalorder %s20, 0
      %s218 = scalar_select %p217, %s20, 0
      %s219 = smul.addr %s218, 4
      %s220 = scalar_lea.vmem %s1, %s219
      %p221 = pneg %p74
      %p222 = pneg %p71
      %p223 = scmp.lt.s32.totalorder %s20, 0
      %s224 = scalar_select %p223, %s20, 0
      %s225 = scalar_lea.vmem %s2, %s224
      %p226 = pneg %p100
      %p227 = pneg %p97
      %p228 = scmp.lt.s32.totalorder %s20, 0
      %s229 = scalar_select %p228, %s20, 0
      %s230 = scalar_lea.vmem %s3, %s229
      %p231 = pneg %p126
      %p232 = pneg %p123
      %p233 = pneg %p154
      %p234 = pneg %p151
      %s235 = smul.u32 64, %s19
      %p236 = scmp.lt.s32.totalorder %s235, 255
      %s237 = scalar_select %p236, %s235, 255
      %p238 = scmp.lt.s32.totalorder %s20, 0
      %s239 = scalar_select %p238, %s20, 0
      %s240 = sadd.s32 %s239, %s237
      %s241 = smul.addr %s240, 4
      %s242 = scalar_lea.vmem %s4, %s241
      %s243 = smul.u32 64, %s19
      %p244 = scmp.lt.s32.totalorder %s243, 255
      %s245 = scalar_select %p244, %s243, 255
      %s246 = smul.addr %s245, 2
      %s247 = smul.addr %s246, 4
      %s248 = scalar_lea.vmem %s0, %s247
      %s249 = smul.u32 64, %s19
      %p250 = scmp.lt.s32.totalorder %s20, 0
      %s251 = scalar_select %p250, %s20, 0
      %s252 = smul.addr %s251, 4
      %s253 = scalar_lea.vmem %s1, %s252
      %p254 = scmp.lt.s32.totalorder %s20, 0
      %s255 = scalar_select %p254, %s20, 0
      %s256 = scalar_lea.vmem %s2, %s255
      %p257 = scmp.lt.s32.totalorder %s20, 0
      %s258 = scalar_select %p257, %s20, 0
      %s259 = scalar_lea.vmem %s3, %s258
      %s260 = smul.u32 64, %s19
      %p261 = scmp.lt.s32.totalorder %s260, 255
      %s262 = scalar_select %p261, %s260, 255
      %p263 = scmp.lt.s32.totalorder %s20, 0
      %s264 = scalar_select %p263, %s20, 0
      %s265 = sadd.s32 %s264, %s262
      %s266 = smul.addr %s265, 4
      %s267 = scalar_lea.vmem %s4, %s266
      %s268 = smul.u32 64, %s19
      %v270 = vld [vmem:[%s248] sm:$0xff]
      %v271 = vld [vmem:[%s248 + $0x8] sm:$0xff]
      %v272 = vld [vmem:[%s248 + $0x10] sm:$0xff]
      %v273 = vld [vmem:[%s248 + $0x18] sm:$0xff]
      %v274 = vld [vmem:[%s248 + $0x20] sm:$0xff]
      %v275 = vld [vmem:[%s248 + $0x28] sm:$0xff]
      %v276 = vld [vmem:[%s248 + $0x30] sm:$0xff]
      %v277 = vld [vmem:[%s248 + $0x38] sm:$0xff]
      %v278 = vld [vmem:[%s248 + $0x40] sm:$0xff]
      %v279 = vld [vmem:[%s248 + $0x48] sm:$0xff]
      %v280 = vld [vmem:[%s248 + $0x50] sm:$0xff]
      %v281 = vld [vmem:[%s248 + $0x58] sm:$0xff]
      %v282 = vld [vmem:[%s248 + $0x60] sm:$0xff]
      %v283 = vld [vmem:[%s248 + $0x68] sm:$0xff]
      %v284 = vld [vmem:[%s248 + $0x70] sm:$0xff]
      %v285 = vld [vmem:[%s248 + $0x78] sm:$0xff]
      %v286 = vld [vmem:[%s248 + $0x80] sm:$0xff]
      %v287 = vld [vmem:[%s248 + $0x88] sm:$0xff]
      %v288 = vld [vmem:[%s248 + $0x90] sm:$0xff]
      %v289 = vld [vmem:[%s248 + $0x98] sm:$0xff]
      %v290 = vld [vmem:[%s248 + $0xa0] sm:$0xff]
      %v291 = vld [vmem:[%s248 + $0xa8] sm:$0xff]
      %v292 = vld [vmem:[%s248 + $0xb0] sm:$0xff]
      %v293 = vld [vmem:[%s248 + $0xb8] sm:$0xff]
      %v294 = vld [vmem:[%s248 + $0xc0] sm:$0xff]
      %v295 = vld [vmem:[%s248 + $0xc8] sm:$0xff]
      %v296 = vld [vmem:[%s248 + $0xd0] sm:$0xff]
      %v297 = vld [vmem:[%s248 + $0xd8] sm:$0xff]
      %v298 = vld [vmem:[%s248 + $0xe0] sm:$0xff]
      %v299 = vld [vmem:[%s248 + $0xe8] sm:$0xff]
      %v300 = vld [vmem:[%s248 + $0xf0] sm:$0xff]
      %v301 = vld [vmem:[%s248 + $0xf8] sm:$0xff]
      %v302 = vld [vmem:[%s248 + $0x100] sm:$0xff]
      %v303 = vld [vmem:[%s248 + $0x108] sm:$0xff]
      %v304 = vld [vmem:[%s248 + $0x110] sm:$0xff]
      %v305 = vld [vmem:[%s248 + $0x118] sm:$0xff]
      %v306 = vld [vmem:[%s248 + $0x120] sm:$0xff]
      %v307 = vld [vmem:[%s248 + $0x128] sm:$0xff]
      %v308 = vld [vmem:[%s248 + $0x130] sm:$0xff]
      %v309 = vld [vmem:[%s248 + $0x138] sm:$0xff]
      %v310 = vld [vmem:[%s248 + $0x140] sm:$0xff]
      %v311 = vld [vmem:[%s248 + $0x148] sm:$0xff]
      %v312 = vld [vmem:[%s248 + $0x150] sm:$0xff]
      %v313 = vld [vmem:[%s248 + $0x158] sm:$0xff]
      %v314 = vld [vmem:[%s248 + $0x160] sm:$0xff]
      %v315 = vld [vmem:[%s248 + $0x168] sm:$0xff]
      %v316 = vld [vmem:[%s248 + $0x170] sm:$0xff]
      %v317 = vld [vmem:[%s248 + $0x178] sm:$0xff]
      %v318 = vld [vmem:[%s248 + $0x180] sm:$0xff]
      %v319 = vld [vmem:[%s248 + $0x188] sm:$0xff]
      %v320 = vld [vmem:[%s248 + $0x190] sm:$0xff]
      %v321 = vld [vmem:[%s248 + $0x198] sm:$0xff]
      %v322 = vld [vmem:[%s248 + $0x1a0] sm:$0xff]
      %v323 = vld [vmem:[%s248 + $0x1a8] sm:$0xff]
      %v324 = vld [vmem:[%s248 + $0x1b0] sm:$0xff]
      %v325 = vld [vmem:[%s248 + $0x1b8] sm:$0xff]
      %v326 = vld [vmem:[%s248 + $0x1c0] sm:$0xff]
      %v327 = vld [vmem:[%s248 + $0x1c8] sm:$0xff]
      %v328 = vld [vmem:[%s248 + $0x1d0] sm:$0xff]
      %v329 = vld [vmem:[%s248 + $0x1d8] sm:$0xff]
      %v330 = vld [vmem:[%s248 + $0x1e0] sm:$0xff]
      %v331 = vld [vmem:[%s248 + $0x1e8] sm:$0xff]
      %v332 = vld [vmem:[%s248 + $0x1f0] sm:$0xff]
      %v333 = vld [vmem:[%s248 + $0x1f8] sm:$0xff]
      %v334 = vld [vmem:[%s253] sm:$0xf]
      %v335 = vld [vmem:[%s253 + $0x4] sm:$0xf]
      %v336 = vld [vmem:[%s253 + $0x8] sm:$0xf]
      %v337 = vld [vmem:[%s253 + $0xc] sm:$0xf]
      %v338 = vld [vmem:[%s253 + $0x10] sm:$0xf]
      %v339 = vld [vmem:[%s253 + $0x14] sm:$0xf]
      %v340 = vld [vmem:[%s253 + $0x18] sm:$0xf]
      %v341 = vld [vmem:[%s253 + $0x1c] sm:$0xf]
      %v342 = vld [vmem:[%s253 + $0x20] sm:$0xf]
      %v343 = vld [vmem:[%s253 + $0x24] sm:$0xf]
      %v344 = vld [vmem:[%s253 + $0x28] sm:$0xf]
      %v345 = vld [vmem:[%s253 + $0x2c] sm:$0xf]
      %v346 = vld [vmem:[%s253 + $0x30] sm:$0xf]
      %v347 = vld [vmem:[%s253 + $0x34] sm:$0xf]
      %v348 = vld [vmem:[%s253 + $0x38] sm:$0xf]
      %v349 = vld [vmem:[%s253 + $0x3c] sm:$0xf]
      %v350 = vld [vmem:[%s253 + $0x40] sm:$0xf]
      %v351 = vld [vmem:[%s253 + $0x44] sm:$0xf]
      %v352 = vld [vmem:[%s253 + $0x48] sm:$0x3]
      %v417 = vunpack.c.l.b16 %v270
      %v418 = vunpack.c.h.b16 %v270
      %v419 = vunpack.c.l.b16 %v271
      %v420 = vunpack.c.h.b16 %v271
      %v421 = vunpack.c.l.b16 %v272
      %v422 = vunpack.c.h.b16 %v272
      %v423 = vunpack.c.l.b16 %v273
      %v424 = vunpack.c.h.b16 %v273
      %v425 = vunpack.c.l.b16 %v274
      %v426 = vunpack.c.h.b16 %v274
      %v427 = vunpack.c.l.b16 %v275
      %v428 = vunpack.c.h.b16 %v275
      %v429 = vunpack.c.l.b16 %v276
      %v430 = vunpack.c.h.b16 %v276
      %v431 = vunpack.c.l.b16 %v277
      %v432 = vunpack.c.h.b16 %v277
      %v433 = vunpack.c.l.b16 %v278
      %v434 = vunpack.c.h.b16 %v278
      %v435 = vunpack.c.l.b16 %v279
      %v436 = vunpack.c.h.b16 %v279
      %v437 = vunpack.c.l.b16 %v280
      %v438 = vunpack.c.h.b16 %v280
      %v439 = vunpack.c.l.b16 %v281
      %v440 = vunpack.c.h.b16 %v281
      %v441 = vunpack.c.l.b16 %v282
      %v442 = vunpack.c.h.b16 %v282
      %v443 = vunpack.c.l.b16 %v283
      %v444 = vunpack.c.h.b16 %v283
      %v445 = vunpack.c.l.b16 %v284
      %v446 = vunpack.c.h.b16 %v284
      %v447 = vunpack.c.l.b16 %v285
      %v448 = vunpack.c.h.b16 %v285
      %v449 = vunpack.c.l.b16 %v286
      %v450 = vunpack.c.h.b16 %v286
      %v451 = vunpack.c.l.b16 %v287
      %v452 = vunpack.c.h.b16 %v287
      %v453 = vunpack.c.l.b16 %v288
      %v454 = vunpack.c.h.b16 %v288
      %v455 = vunpack.c.l.b16 %v289
      %v456 = vunpack.c.h.b16 %v289
      %v457 = vunpack.c.l.b16 %v290
      %v458 = vunpack.c.h.b16 %v290
      %v459 = vunpack.c.l.b16 %v291
      %v460 = vunpack.c.h.b16 %v291
      %v461 = vunpack.c.l.b16 %v292
      %v462 = vunpack.c.h.b16 %v292
      %v463 = vunpack.c.l.b16 %v293
      %v464 = vunpack.c.h.b16 %v293
      %v465 = vunpack.c.l.b16 %v294
      %v466 = vunpack.c.h.b16 %v294
      %v467 = vunpack.c.l.b16 %v295
      %v468 = vunpack.c.h.b16 %v295
      %v469 = vunpack.c.l.b16 %v296
      %v470 = vunpack.c.h.b16 %v296
      %v471 = vunpack.c.l.b16 %v297
      %v472 = vunpack.c.h.b16 %v297
      %v473 = vunpack.c.l.b16 %v298
      %v474 = vunpack.c.h.b16 %v298
      %v475 = vunpack.c.l.b16 %v299
      %v476 = vunpack.c.h.b16 %v299
      %v477 = vunpack.c.l.b16 %v300
      %v478 = vunpack.c.h.b16 %v300
      %v479 = vunpack.c.l.b16 %v301
      %v480 = vunpack.c.h.b16 %v301
      %v481 = vunpack.c.l.b16 %v302
      %v482 = vunpack.c.h.b16 %v302
      %v483 = vunpack.c.l.b16 %v303
      %v484 = vunpack.c.h.b16 %v303
      %v485 = vunpack.c.l.b16 %v304
      %v486 = vunpack.c.h.b16 %v304
      %v487 = vunpack.c.l.b16 %v305
      %v488 = vunpack.c.h.b16 %v305
      %v489 = vunpack.c.l.b16 %v306
      %v490 = vunpack.c.h.b16 %v306
      %v491 = vunpack.c.l.b16 %v307
      %v492 = vunpack.c.h.b16 %v307
      %v493 = vunpack.c.l.b16 %v308
      %v494 = vunpack.c.h.b16 %v308
      %v495 = vunpack.c.l.b16 %v309
      %v496 = vunpack.c.h.b16 %v309
      %v497 = vunpack.c.l.b16 %v310
      %v498 = vunpack.c.h.b16 %v310
      %v499 = vunpack.c.l.b16 %v311
      %v500 = vunpack.c.h.b16 %v311
      %v501 = vunpack.c.l.b16 %v312
      %v502 = vunpack.c.h.b16 %v312
      %v503 = vunpack.c.l.b16 %v313
      %v504 = vunpack.c.h.b16 %v313
      %v505 = vunpack.c.l.b16 %v314
      %v506 = vunpack.c.h.b16 %v314
      %v507 = vunpack.c.l.b16 %v315
      %v508 = vunpack.c.h.b16 %v315
      %v509 = vunpack.c.l.b16 %v316
      %v510 = vunpack.c.h.b16 %v316
      %v511 = vunpack.c.l.b16 %v317
      %v512 = vunpack.c.h.b16 %v317
      %v513 = vunpack.c.l.b16 %v318
      %v514 = vunpack.c.h.b16 %v318
      %v515 = vunpack.c.l.b16 %v319
      %v516 = vunpack.c.h.b16 %v319
      %v517 = vunpack.c.l.b16 %v320
      %v518 = vunpack.c.h.b16 %v320
      %v519 = vunpack.c.l.b16 %v321
      %v520 = vunpack.c.h.b16 %v321
      %v521 = vunpack.c.l.b16 %v322
      %v522 = vunpack.c.h.b16 %v322
      %v523 = vunpack.c.l.b16 %v323
      %v524 = vunpack.c.h.b16 %v323
      %v525 = vunpack.c.l.b16 %v324
      %v526 = vunpack.c.h.b16 %v324
      %v527 = vunpack.c.l.b16 %v325
      %v528 = vunpack.c.h.b16 %v325
      %v529 = vunpack.c.l.b16 %v326
      %v530 = vunpack.c.h.b16 %v326
      %v531 = vunpack.c.l.b16 %v327
      %v532 = vunpack.c.h.b16 %v327
      %v533 = vunpack.c.l.b16 %v328
      %v534 = vunpack.c.h.b16 %v328
      %v535 = vunpack.c.l.b16 %v329
      %v536 = vunpack.c.h.b16 %v329
      %v537 = vunpack.c.l.b16 %v330
      %v538 = vunpack.c.h.b16 %v330
      %v539 = vunpack.c.l.b16 %v331
      %v540 = vunpack.c.h.b16 %v331
      %v541 = vunpack.c.l.b16 %v332
      %v542 = vunpack.c.h.b16 %v332
      %v543 = vunpack.c.l.b16 %v333
      %v544 = vunpack.c.h.b16 %v333
      %v545 = vpack.c.b16 %v419, %v417
      %v546 = vpack.c.b16 %v420, %v418
      %v547 = vpack.c.b16 %v423, %v421
      %v548 = vpack.c.b16 %v424, %v422
      %v549 = vpack.c.b16 %v427, %v425
      %v550 = vpack.c.b16 %v428, %v426
      %v551 = vpack.c.b16 %v431, %v429
      %v552 = vpack.c.b16 %v432, %v430
      %v553 = vpack.c.b16 %v435, %v433
      %v554 = vpack.c.b16 %v436, %v434
      %v555 = vpack.c.b16 %v439, %v437
      %v556 = vpack.c.b16 %v440, %v438
      %v557 = vpack.c.b16 %v443, %v441
      %v558 = vpack.c.b16 %v444, %v442
      %v559 = vpack.c.b16 %v447, %v445
      %v560 = vpack.c.b16 %v448, %v446
      %v561 = vpack.c.b16 %v451, %v449
      %v562 = vpack.c.b16 %v452, %v450
      %v563 = vpack.c.b16 %v455, %v453
      %v564 = vpack.c.b16 %v456, %v454
      %v565 = vpack.c.b16 %v459, %v457
      %v566 = vpack.c.b16 %v460, %v458
      %v567 = vpack.c.b16 %v463, %v461
      %v568 = vpack.c.b16 %v464, %v462
      %v569 = vpack.c.b16 %v467, %v465
      %v570 = vpack.c.b16 %v468, %v466
      %v571 = vpack.c.b16 %v471, %v469
      %v572 = vpack.c.b16 %v472, %v470
      %v573 = vpack.c.b16 %v475, %v473
      %v574 = vpack.c.b16 %v476, %v474
      %v575 = vpack.c.b16 %v479, %v477
      %v576 = vpack.c.b16 %v480, %v478
      %v577 = vpack.c.b16 %v483, %v481
      %v578 = vpack.c.b16 %v484, %v482
      %v579 = vpack.c.b16 %v487, %v485
      %v580 = vpack.c.b16 %v488, %v486
      %v581 = vpack.c.b16 %v491, %v489
      %v582 = vpack.c.b16 %v492, %v490
      %v583 = vpack.c.b16 %v495, %v493
      %v584 = vpack.c.b16 %v496, %v494
      %v585 = vpack.c.b16 %v499, %v497
      %v586 = vpack.c.b16 %v500, %v498
      %v587 = vpack.c.b16 %v503, %v501
      %v588 = vpack.c.b16 %v504, %v502
      %v589 = vpack.c.b16 %v507, %v505
      %v590 = vpack.c.b16 %v508, %v506
      %v591 = vpack.c.b16 %v511, %v509
      %v592 = vpack.c.b16 %v512, %v510
      %v593 = vpack.c.b16 %v515, %v513
      %v594 = vpack.c.b16 %v516, %v514
      %v595 = vpack.c.b16 %v519, %v517
      %v596 = vpack.c.b16 %v520, %v518
      %v597 = vpack.c.b16 %v523, %v521
      %v598 = vpack.c.b16 %v524, %v522
      %v599 = vpack.c.b16 %v527, %v525
      %v600 = vpack.c.b16 %v528, %v526
      %v601 = vpack.c.b16 %v531, %v529
      %v602 = vpack.c.b16 %v532, %v530
      %v603 = vpack.c.b16 %v535, %v533
      %v604 = vpack.c.b16 %v536, %v534
      %v605 = vpack.c.b16 %v539, %v537
      %v606 = vpack.c.b16 %v540, %v538
      %v607 = vpack.c.b16 %v543, %v541
      %v608 = vpack.c.b16 %v544, %v542
      %v660 = vunpack.c.l.b16 %v334
      %v661 = vunpack.c.l.b16 %v335
      %v662 = vunpack.c.l.b16 %v336
      %v663 = vunpack.c.l.b16 %v337
      %v664 = vunpack.c.l.b16 %v338
      %v665 = vunpack.c.l.b16 %v339
      %v666 = vunpack.c.l.b16 %v340
      %v667 = vunpack.c.l.b16 %v341
      %v668 = vunpack.c.l.b16 %v342
      %v669 = vunpack.c.l.b16 %v343
      %v670 = vunpack.c.l.b16 %v344
      %v671 = vunpack.c.l.b16 %v345
      %v672 = vunpack.c.l.b16 %v346
      %v673 = vunpack.c.l.b16 %v347
      %v674 = vunpack.c.l.b16 %v348
      %v675 = vunpack.c.l.b16 %v349
      %v676 = vunpack.c.l.b16 %v350
      %v677 = vunpack.c.l.b16 %v351
      %v678 = vunpack.c.l.b16 %v352
      %v679 = vpack.c.b16 %v661, %v660
      %v680 = vpack.c.b16 %v663, %v662
      %v681 = vpack.c.b16 %v665, %v664
      %v682 = vpack.c.b16 %v667, %v666
      %v683 = vpack.c.b16 %v669, %v668
      %v684 = vpack.c.b16 %v671, %v670
      %v685 = vpack.c.b16 %v673, %v672
      %v686 = vpack.c.b16 %v675, %v674
      %v687 = vpack.c.b16 %v677, %v676
      %v688 = vpack.c.b16 %v678, %v678
      %vm698 = vcmask 154624
      %v700 = vsel %vm698, %v546, 0
      %v703 = vsel %vm698, %v548, 0
      %v706 = vsel %vm698, %v550, 0
      %v709 = vsel %vm698, %v552, 0
      %v712 = vsel %vm698, %v554, 0
      %v715 = vsel %vm698, %v556, 0
      %v718 = vsel %vm698, %v558, 0
      %v721 = vsel %vm698, %v560, 0
      %v724 = vsel %vm698, %v562, 0
      %v727 = vsel %vm698, %v564, 0
      %v730 = vsel %vm698, %v566, 0
      %v733 = vsel %vm698, %v568, 0
      %v736 = vsel %vm698, %v570, 0
      %v739 = vsel %vm698, %v572, 0
      %v742 = vsel %vm698, %v574, 0
      %v745 = vsel %vm698, %v576, 0
      %v748 = vsel %vm698, %v578, 0
      %v751 = vsel %vm698, %v580, 0
      %v754 = vsel %vm698, %v582, 0
      %v757 = vsel %vm698, %v584, 0
      %v760 = vsel %vm698, %v586, 0
      %v763 = vsel %vm698, %v588, 0
      %v766 = vsel %vm698, %v590, 0
      %v769 = vsel %vm698, %v592, 0
      %v772 = vsel %vm698, %v594, 0
      %v775 = vsel %vm698, %v596, 0
      %v778 = vsel %vm698, %v598, 0
      %v781 = vsel %vm698, %v600, 0
      %v784 = vsel %vm698, %v602, 0
      %v787 = vsel %vm698, %v604, 0
      %v790 = vsel %vm698, %v606, 0
      %v793 = vsel %vm698, %v608, 0
      %vm795 = vcmask 1040384
      %vm796 = vcmask 1041408
      %v797 = vsel %vm795, 4294967295, 65535
      %v798 = vsel %vm796, %v797, 0
      %v800 = vand.u32 %v688, %v798
      %802 = vmatpush.bf16.msra.mxu0 %v686
      %803 = vmatpush.bf16.msra.mxu0 %v685
      %804 = vmatpush.bf16.msra.mxu0 %v684
      %805 = vmatpush.bf16.msra.mxu0 %v683
      %806 = vmatpush.bf16.msra.mxu0 %v682
      %807 = vmatpush.bf16.msra.mxu0 %v681
      %808 = vmatpush.bf16.msra.mxu0 %v680
      %809 = vmatpush.bf16.msra.mxu0 %v679
      %810 = vmatmul.bf16.gmra.mxu0 %v545
      %v811 = vpop.f32.mrf.mxu0
      %v812 = vadd.f32 0.0, %v811
      %v813 = vpop.f32.mrf.mxu0
      %v814 = vadd.f32 0.0, %v813
      %815 = vmatmul.bf16.gmra.mxu0 %v547
      %v816 = vpop.f32.mrf.mxu0
      %v817 = vadd.f32 0.0, %v816
      %v818 = vpop.f32.mrf.mxu0
      %v819 = vadd.f32 0.0, %v818
      %820 = vmatmul.bf16.gmra.mxu0 %v549
      %v821 = vpop.f32.mrf.mxu0
      %v822 = vadd.f32 0.0, %v821
      %v823 = vpop.f32.mrf.mxu0
      %v824 = vadd.f32 0.0, %v823
      %825 = vmatmul.bf16.gmra.mxu0 %v551
      %v826 = vpop.f32.mrf.mxu0
      %v827 = vadd.f32 0.0, %v826
      %v828 = vpop.f32.mrf.mxu0
      %v829 = vadd.f32 0.0, %v828
      %830 = vmatmul.bf16.gmra.mxu0 %v553
      %v831 = vpop.f32.mrf.mxu0
      %v832 = vadd.f32 0.0, %v831
      %v833 = vpop.f32.mrf.mxu0
      %v834 = vadd.f32 0.0, %v833
      %835 = vmatmul.bf16.gmra.mxu0 %v555
      %v836 = vpop.f32.mrf.mxu0
      %v837 = vadd.f32 0.0, %v836
      %v838 = vpop.f32.mrf.mxu0
      %v839 = vadd.f32 0.0, %v838
      %840 = vmatmul.bf16.gmra.mxu0 %v557
      %v841 = vpop.f32.mrf.mxu0
      %v842 = vadd.f32 0.0, %v841
      %v843 = vpop.f32.mrf.mxu0
      %v844 = vadd.f32 0.0, %v843
      %845 = vmatmul.bf16.gmra.mxu0 %v559
      %v846 = vpop.f32.mrf.mxu0
      %v847 = vadd.f32 0.0, %v846
      %v848 = vpop.f32.mrf.mxu0
      %v849 = vadd.f32 0.0, %v848
      %850 = vmatmul.bf16.gmra.mxu0 %v561
      %v851 = vpop.f32.mrf.mxu0
      %v852 = vadd.f32 0.0, %v851
      %v853 = vpop.f32.mrf.mxu0
      %v854 = vadd.f32 0.0, %v853
      %855 = vmatmul.bf16.gmra.mxu0 %v563
      %v856 = vpop.f32.mrf.mxu0
      %v857 = vadd.f32 0.0, %v856
      %v858 = vpop.f32.mrf.mxu0
      %v859 = vadd.f32 0.0, %v858
      %860 = vmatmul.bf16.gmra.mxu0 %v565
      %v861 = vpop.f32.mrf.mxu0
      %v862 = vadd.f32 0.0, %v861
      %v863 = vpop.f32.mrf.mxu0
      %v864 = vadd.f32 0.0, %v863
      %865 = vmatmul.bf16.gmra.mxu0 %v567
      %v866 = vpop.f32.mrf.mxu0
      %v867 = vadd.f32 0.0, %v866
      %v868 = vpop.f32.mrf.mxu0
      %v869 = vadd.f32 0.0, %v868
      %870 = vmatmul.bf16.gmra.mxu0 %v569
      %v871 = vpop.f32.mrf.mxu0
      %v872 = vadd.f32 0.0, %v871
      %v873 = vpop.f32.mrf.mxu0
      %v874 = vadd.f32 0.0, %v873
      %875 = vmatmul.bf16.gmra.mxu0 %v571
      %v876 = vpop.f32.mrf.mxu0
      %v877 = vadd.f32 0.0, %v876
      %v878 = vpop.f32.mrf.mxu0
      %v879 = vadd.f32 0.0, %v878
      %880 = vmatmul.bf16.gmra.mxu0 %v573
      %v881 = vpop.f32.mrf.mxu0
      %v882 = vadd.f32 0.0, %v881
      %v883 = vpop.f32.mrf.mxu0
      %v884 = vadd.f32 0.0, %v883
      %885 = vmatmul.bf16.gmra.mxu0 %v575
      %v886 = vpop.f32.mrf.mxu0
      %v887 = vadd.f32 0.0, %v886
      %v888 = vpop.f32.mrf.mxu0
      %v889 = vadd.f32 0.0, %v888
      %890 = vmatmul.bf16.gmra.mxu0 %v577
      %v891 = vpop.f32.mrf.mxu0
      %v892 = vadd.f32 0.0, %v891
      %v893 = vpop.f32.mrf.mxu0
      %v894 = vadd.f32 0.0, %v893
      %895 = vmatmul.bf16.gmra.mxu0 %v579
      %v896 = vpop.f32.mrf.mxu0
      %v897 = vadd.f32 0.0, %v896
      %v898 = vpop.f32.mrf.mxu0
      %v899 = vadd.f32 0.0, %v898
      %900 = vmatmul.bf16.gmra.mxu0 %v581
      %v901 = vpop.f32.mrf.mxu0
      %v902 = vadd.f32 0.0, %v901
      %v903 = vpop.f32.mrf.mxu0
      %v904 = vadd.f32 0.0, %v903
      %905 = vmatmul.bf16.gmra.mxu0 %v583
      %v906 = vpop.f32.mrf.mxu0
      %v907 = vadd.f32 0.0, %v906
      %v908 = vpop.f32.mrf.mxu0
      %v909 = vadd.f32 0.0, %v908
      %910 = vmatmul.bf16.gmra.mxu0 %v585
      %v911 = vpop.f32.mrf.mxu0
      %v912 = vadd.f32 0.0, %v911
      %v913 = vpop.f32.mrf.mxu0
      %v914 = vadd.f32 0.0, %v913
      %915 = vmatmul.bf16.gmra.mxu0 %v587
      %v916 = vpop.f32.mrf.mxu0
      %v917 = vadd.f32 0.0, %v916
      %v918 = vpop.f32.mrf.mxu0
      %v919 = vadd.f32 0.0, %v918
      %920 = vmatmul.bf16.gmra.mxu0 %v589
      %v921 = vpop.f32.mrf.mxu0
      %v922 = vadd.f32 0.0, %v921
      %v923 = vpop.f32.mrf.mxu0
      %v924 = vadd.f32 0.0, %v923
      %925 = vmatmul.bf16.gmra.mxu0 %v591
      %v926 = vpop.f32.mrf.mxu0
      %v927 = vadd.f32 0.0, %v926
      %v928 = vpop.f32.mrf.mxu0
      %v929 = vadd.f32 0.0, %v928
      %930 = vmatmul.bf16.gmra.mxu0 %v593
      %v931 = vpop.f32.mrf.mxu0
      %v932 = vadd.f32 0.0, %v931
      %v933 = vpop.f32.mrf.mxu0
      %v934 = vadd.f32 0.0, %v933
      %935 = vmatmul.bf16.gmra.mxu0 %v595
      %v936 = vpop.f32.mrf.mxu0
      %v937 = vadd.f32 0.0, %v936
      %v938 = vpop.f32.mrf.mxu0
      %v939 = vadd.f32 0.0, %v938
      %940 = vmatmul.bf16.gmra.mxu0 %v597
      %v941 = vpop.f32.mrf.mxu0
      %v942 = vadd.f32 0.0, %v941
      %v943 = vpop.f32.mrf.mxu0
      %v944 = vadd.f32 0.0, %v943
      %945 = vmatmul.bf16.gmra.mxu0 %v599
      %v946 = vpop.f32.mrf.mxu0
      %v947 = vadd.f32 0.0, %v946
      %v948 = vpop.f32.mrf.mxu0
      %v949 = vadd.f32 0.0, %v948
      %950 = vmatmul.bf16.gmra.mxu0 %v601
      %v951 = vpop.f32.mrf.mxu0
      %v952 = vadd.f32 0.0, %v951
      %v953 = vpop.f32.mrf.mxu0
      %v954 = vadd.f32 0.0, %v953
      %955 = vmatmul.bf16.gmra.mxu0 %v603
      %v956 = vpop.f32.mrf.mxu0
      %v957 = vadd.f32 0.0, %v956
      %v958 = vpop.f32.mrf.mxu0
      %v959 = vadd.f32 0.0, %v958
      %960 = vmatmul.bf16.gmra.mxu0 %v605
      %v961 = vpop.f32.mrf.mxu0
      %v962 = vadd.f32 0.0, %v961
      %v963 = vpop.f32.mrf.mxu0
      %v964 = vadd.f32 0.0, %v963
      %965 = vmatmul.bf16.gmra.mxu0 %v607
      %v966 = vpop.f32.mrf.mxu0
      %v967 = vadd.f32 0.0, %v966
      %v968 = vpop.f32.mrf.mxu0
      %v969 = vadd.f32 0.0, %v968
      %970 = vdwg.mxu0
      %971 = vmatpush.bf16.msra.mxu0 0
      %972 = vmatpush.bf16.msra.mxu0 0
      %973 = vmatpush.bf16.msra.mxu0 0
      %974 = vmatpush.bf16.msra.mxu0 0
      %975 = vmatpush.bf16.msra.mxu0 0
      %976 = vmatpush.bf16.msra.mxu0 0
      %977 = vmatpush.bf16.msra.mxu0 %v800
      %978 = vmatpush.bf16.msra.mxu0 %v687
      %979 = vmatmul.bf16.gmra.mxu0 %v700
      %v980 = vpop.f32.mrf.mxu0
      %v981 = vadd.f32 %v812, %v980
      %v982 = vpop.f32.mrf.mxu0
      %v983 = vadd.f32 %v814, %v982
      %984 = vmatmul.bf16.gmra.mxu0 %v703
      %v985 = vpop.f32.mrf.mxu0
      %v986 = vadd.f32 %v817, %v985
      %v987 = vpop.f32.mrf.mxu0
      %v988 = vadd.f32 %v819, %v987
      %989 = vmatmul.bf16.gmra.mxu0 %v706
      %v990 = vpop.f32.mrf.mxu0
      %v991 = vadd.f32 %v822, %v990
      %v992 = vpop.f32.mrf.mxu0
      %v993 = vadd.f32 %v824, %v992
      %994 = vmatmul.bf16.gmra.mxu0 %v709
      %v995 = vpop.f32.mrf.mxu0
      %v996 = vadd.f32 %v827, %v995
      %v997 = vpop.f32.mrf.mxu0
      %v998 = vadd.f32 %v829, %v997
      %999 = vmatmul.bf16.gmra.mxu0 %v712
      %v1000 = vpop.f32.mrf.mxu0
      %v1001 = vadd.f32 %v832, %v1000
      %v1002 = vpop.f32.mrf.mxu0
      %v1003 = vadd.f32 %v834, %v1002
      %1004 = vmatmul.bf16.gmra.mxu0 %v715
      %v1005 = vpop.f32.mrf.mxu0
      %v1006 = vadd.f32 %v837, %v1005
      %v1007 = vpop.f32.mrf.mxu0
      %v1008 = vadd.f32 %v839, %v1007
      %1009 = vmatmul.bf16.gmra.mxu0 %v718
      %v1010 = vpop.f32.mrf.mxu0
      %v1011 = vadd.f32 %v842, %v1010
      %v1012 = vpop.f32.mrf.mxu0
      %v1013 = vadd.f32 %v844, %v1012
      %1014 = vmatmul.bf16.gmra.mxu0 %v721
      %v1015 = vpop.f32.mrf.mxu0
      %v1016 = vadd.f32 %v847, %v1015
      %v1017 = vpop.f32.mrf.mxu0
      %v1018 = vadd.f32 %v849, %v1017
      %1019 = vmatmul.bf16.gmra.mxu0 %v724
      %v1020 = vpop.f32.mrf.mxu0
      %v1021 = vadd.f32 %v852, %v1020
      %v1022 = vpop.f32.mrf.mxu0
      %v1023 = vadd.f32 %v854, %v1022
      %1024 = vmatmul.bf16.gmra.mxu0 %v727
      %v1025 = vpop.f32.mrf.mxu0
      %v1026 = vadd.f32 %v857, %v1025
      %v1027 = vpop.f32.mrf.mxu0
      %v1028 = vadd.f32 %v859, %v1027
      %1029 = vmatmul.bf16.gmra.mxu0 %v730
      %v1030 = vpop.f32.mrf.mxu0
      %v1031 = vadd.f32 %v862, %v1030
      %v1032 = vpop.f32.mrf.mxu0
      %v1033 = vadd.f32 %v864, %v1032
      %1034 = vmatmul.bf16.gmra.mxu0 %v733
      %v1035 = vpop.f32.mrf.mxu0
      %v1036 = vadd.f32 %v867, %v1035
      %v1037 = vpop.f32.mrf.mxu0
      %v1038 = vadd.f32 %v869, %v1037
      %1039 = vmatmul.bf16.gmra.mxu0 %v736
      %v1040 = vpop.f32.mrf.mxu0
      %v1041 = vadd.f32 %v872, %v1040
      %v1042 = vpop.f32.mrf.mxu0
      %v1043 = vadd.f32 %v874, %v1042
      %1044 = vmatmul.bf16.gmra.mxu0 %v739
      %v1045 = vpop.f32.mrf.mxu0
      %v1046 = vadd.f32 %v877, %v1045
      %v1047 = vpop.f32.mrf.mxu0
      %v1048 = vadd.f32 %v879, %v1047
      %1049 = vmatmul.bf16.gmra.mxu0 %v742
      %v1050 = vpop.f32.mrf.mxu0
      %v1051 = vadd.f32 %v882, %v1050
      %v1052 = vpop.f32.mrf.mxu0
      %v1053 = vadd.f32 %v884, %v1052
      %1054 = vmatmul.bf16.gmra.mxu0 %v745
      %v1055 = vpop.f32.mrf.mxu0
      %v1056 = vadd.f32 %v887, %v1055
      %v1057 = vpop.f32.mrf.mxu0
      %v1058 = vadd.f32 %v889, %v1057
      %1059 = vmatmul.bf16.gmra.mxu0 %v748
      %v1060 = vpop.f32.mrf.mxu0
      %v1061 = vadd.f32 %v892, %v1060
      %v1062 = vpop.f32.mrf.mxu0
      %v1063 = vadd.f32 %v894, %v1062
      %1064 = vmatmul.bf16.gmra.mxu0 %v751
      %v1065 = vpop.f32.mrf.mxu0
      %v1066 = vadd.f32 %v897, %v1065
      %v1067 = vpop.f32.mrf.mxu0
      %v1068 = vadd.f32 %v899, %v1067
      %1069 = vmatmul.bf16.gmra.mxu0 %v754
      %v1070 = vpop.f32.mrf.mxu0
      %v1071 = vadd.f32 %v902, %v1070
      %v1072 = vpop.f32.mrf.mxu0
      %v1073 = vadd.f32 %v904, %v1072
      %1074 = vmatmul.bf16.gmra.mxu0 %v757
      %v1075 = vpop.f32.mrf.mxu0
      %v1076 = vadd.f32 %v907, %v1075
      %v1077 = vpop.f32.mrf.mxu0
      %v1078 = vadd.f32 %v909, %v1077
      %1079 = vmatmul.bf16.gmra.mxu0 %v760
      %v1080 = vpop.f32.mrf.mxu0
      %v1081 = vadd.f32 %v912, %v1080
      %v1082 = vpop.f32.mrf.mxu0
      %v1083 = vadd.f32 %v914, %v1082
      %1084 = vmatmul.bf16.gmra.mxu0 %v763
      %v1085 = vpop.f32.mrf.mxu0
      %v1086 = vadd.f32 %v917, %v1085
      %v1087 = vpop.f32.mrf.mxu0
      %v1088 = vadd.f32 %v919, %v1087
      %1089 = vmatmul.bf16.gmra.mxu0 %v766
      %v1090 = vpop.f32.mrf.mxu0
      %v1091 = vadd.f32 %v922, %v1090
      %v1092 = vpop.f32.mrf.mxu0
      %v1093 = vadd.f32 %v924, %v1092
      %1094 = vmatmul.bf16.gmra.mxu0 %v769
      %v1095 = vpop.f32.mrf.mxu0
      %v1096 = vadd.f32 %v927, %v1095
      %v1097 = vpop.f32.mrf.mxu0
      %v1098 = vadd.f32 %v929, %v1097
      %1099 = vmatmul.bf16.gmra.mxu0 %v772
      %v1100 = vpop.f32.mrf.mxu0
      %v1101 = vadd.f32 %v932, %v1100
      %v1102 = vpop.f32.mrf.mxu0
      %v1103 = vadd.f32 %v934, %v1102
      %1104 = vmatmul.bf16.gmra.mxu0 %v775
      %v1105 = vpop.f32.mrf.mxu0
      %v1106 = vadd.f32 %v937, %v1105
      %v1107 = vpop.f32.mrf.mxu0
      %v1108 = vadd.f32 %v939, %v1107
      %1109 = vmatmul.bf16.gmra.mxu0 %v778
      %v1110 = vpop.f32.mrf.mxu0
      %v1111 = vadd.f32 %v942, %v1110
      %v1112 = vpop.f32.mrf.mxu0
      %v1113 = vadd.f32 %v944, %v1112
      %1114 = vmatmul.bf16.gmra.mxu0 %v781
      %v1115 = vpop.f32.mrf.mxu0
      %v1116 = vadd.f32 %v947, %v1115
      %v1117 = vpop.f32.mrf.mxu0
      %v1118 = vadd.f32 %v949, %v1117
      %1119 = vmatmul.bf16.gmra.mxu0 %v784
      %v1120 = vpop.f32.mrf.mxu0
      %v1121 = vadd.f32 %v952, %v1120
      %v1122 = vpop.f32.mrf.mxu0
      %v1123 = vadd.f32 %v954, %v1122
      %1124 = vmatmul.bf16.gmra.mxu0 %v787
      %v1125 = vpop.f32.mrf.mxu0
      %v1126 = vadd.f32 %v957, %v1125
      %v1127 = vpop.f32.mrf.mxu0
      %v1128 = vadd.f32 %v959, %v1127
      %1129 = vmatmul.bf16.gmra.mxu0 %v790
      %v1130 = vpop.f32.mrf.mxu0
      %v1131 = vadd.f32 %v962, %v1130
      %v1132 = vpop.f32.mrf.mxu0
      %v1133 = vadd.f32 %v964, %v1132
      %1134 = vmatmul.bf16.gmra.mxu0 %v793
      %v1135 = vpop.f32.mrf.mxu0
      %v1136 = vadd.f32 %v967, %v1135
      %v1137 = vpop.f32.mrf.mxu0
      %v1138 = vadd.f32 %v969, %v1137
      %1139 = vdwg.mxu0
      %v1140 = vld [vmem:[%s256] sm:$0x1]
      %v1142 = vperm.slane %v1140, 0
      %v1144 = vmul.f32 %v981, %v1142
      %v1145 = vmul.f32 %v983, %v1142
      %v1146 = vmul.f32 %v986, %v1142
      %v1147 = vmul.f32 %v988, %v1142
      %v1148 = vmul.f32 %v991, %v1142
      %v1149 = vmul.f32 %v993, %v1142
      %v1150 = vmul.f32 %v996, %v1142
      %v1151 = vmul.f32 %v998, %v1142
      %v1152 = vmul.f32 %v1001, %v1142
      %v1153 = vmul.f32 %v1003, %v1142
      %v1154 = vmul.f32 %v1006, %v1142
      %v1155 = vmul.f32 %v1008, %v1142
      %v1156 = vmul.f32 %v1011, %v1142
      %v1157 = vmul.f32 %v1013, %v1142
      %v1158 = vmul.f32 %v1016, %v1142
      %v1159 = vmul.f32 %v1018, %v1142
      %v1160 = vmul.f32 %v1021, %v1142
      %v1161 = vmul.f32 %v1023, %v1142
      %v1162 = vmul.f32 %v1026, %v1142
      %v1163 = vmul.f32 %v1028, %v1142
      %v1164 = vmul.f32 %v1031, %v1142
      %v1165 = vmul.f32 %v1033, %v1142
      %v1166 = vmul.f32 %v1036, %v1142
      %v1167 = vmul.f32 %v1038, %v1142
      %v1168 = vmul.f32 %v1041, %v1142
      %v1169 = vmul.f32 %v1043, %v1142
      %v1170 = vmul.f32 %v1046, %v1142
      %v1171 = vmul.f32 %v1048, %v1142
      %v1172 = vmul.f32 %v1051, %v1142
      %v1173 = vmul.f32 %v1053, %v1142
      %v1174 = vmul.f32 %v1056, %v1142
      %v1175 = vmul.f32 %v1058, %v1142
      %v1176 = vmul.f32 %v1061, %v1142
      %v1177 = vmul.f32 %v1063, %v1142
      %v1178 = vmul.f32 %v1066, %v1142
      %v1179 = vmul.f32 %v1068, %v1142
      %v1180 = vmul.f32 %v1071, %v1142
      %v1181 = vmul.f32 %v1073, %v1142
      %v1182 = vmul.f32 %v1076, %v1142
      %v1183 = vmul.f32 %v1078, %v1142
      %v1184 = vmul.f32 %v1081, %v1142
      %v1185 = vmul.f32 %v1083, %v1142
      %v1186 = vmul.f32 %v1086, %v1142
      %v1187 = vmul.f32 %v1088, %v1142
      %v1188 = vmul.f32 %v1091, %v1142
      %v1189 = vmul.f32 %v1093, %v1142
      %v1190 = vmul.f32 %v1096, %v1142
      %v1191 = vmul.f32 %v1098, %v1142
      %v1192 = vmul.f32 %v1101, %v1142
      %v1193 = vmul.f32 %v1103, %v1142
      %v1194 = vmul.f32 %v1106, %v1142
      %v1195 = vmul.f32 %v1108, %v1142
      %v1196 = vmul.f32 %v1111, %v1142
      %v1197 = vmul.f32 %v1113, %v1142
      %v1198 = vmul.f32 %v1116, %v1142
      %v1199 = vmul.f32 %v1118, %v1142
      %v1200 = vmul.f32 %v1121, %v1142
      %v1201 = vmul.f32 %v1123, %v1142
      %v1202 = vmul.f32 %v1126, %v1142
      %v1203 = vmul.f32 %v1128, %v1142
      %v1204 = vmul.f32 %v1131, %v1142
      %v1205 = vmul.f32 %v1133, %v1142
      %v1206 = vmul.f32 %v1136, %v1142
      %v1207 = vmul.f32 %v1138, %v1142
      %v1208 = vld [vmem:[%s259] sm:$0x1]
      %v1210 = vperm.slane %v1208, 0
      %v1212 = vadd.f32 %v1144, %v1210
      %v1213 = vadd.f32 %v1145, %v1210
      %v1214 = vadd.f32 %v1146, %v1210
      %v1215 = vadd.f32 %v1147, %v1210
      %v1216 = vadd.f32 %v1148, %v1210
      %v1217 = vadd.f32 %v1149, %v1210
      %v1218 = vadd.f32 %v1150, %v1210
      %v1219 = vadd.f32 %v1151, %v1210
      %v1220 = vadd.f32 %v1152, %v1210
      %v1221 = vadd.f32 %v1153, %v1210
      %v1222 = vadd.f32 %v1154, %v1210
      %v1223 = vadd.f32 %v1155, %v1210
      %v1224 = vadd.f32 %v1156, %v1210
      %v1225 = vadd.f32 %v1157, %v1210
      %v1226 = vadd.f32 %v1158, %v1210
      %v1227 = vadd.f32 %v1159, %v1210
      %v1228 = vadd.f32 %v1160, %v1210
      %v1229 = vadd.f32 %v1161, %v1210
      %v1230 = vadd.f32 %v1162, %v1210
      %v1231 = vadd.f32 %v1163, %v1210
      %v1232 = vadd.f32 %v1164, %v1210
      %v1233 = vadd.f32 %v1165, %v1210
      %v1234 = vadd.f32 %v1166, %v1210
      %v1235 = vadd.f32 %v1167, %v1210
      %v1236 = vadd.f32 %v1168, %v1210
      %v1237 = vadd.f32 %v1169, %v1210
      %v1238 = vadd.f32 %v1170, %v1210
      %v1239 = vadd.f32 %v1171, %v1210
      %v1240 = vadd.f32 %v1172, %v1210
      %v1241 = vadd.f32 %v1173, %v1210
      %v1242 = vadd.f32 %v1174, %v1210
      %v1243 = vadd.f32 %v1175, %v1210
      %v1244 = vadd.f32 %v1176, %v1210
      %v1245 = vadd.f32 %v1177, %v1210
      %v1246 = vadd.f32 %v1178, %v1210
      %v1247 = vadd.f32 %v1179, %v1210
      %v1248 = vadd.f32 %v1180, %v1210
      %v1249 = vadd.f32 %v1181, %v1210
      %v1250 = vadd.f32 %v1182, %v1210
      %v1251 = vadd.f32 %v1183, %v1210
      %v1252 = vadd.f32 %v1184, %v1210
      %v1253 = vadd.f32 %v1185, %v1210
      %v1254 = vadd.f32 %v1186, %v1210
      %v1255 = vadd.f32 %v1187, %v1210
      %v1256 = vadd.f32 %v1188, %v1210
      %v1257 = vadd.f32 %v1189, %v1210
      %v1258 = vadd.f32 %v1190, %v1210
      %v1259 = vadd.f32 %v1191, %v1210
      %v1260 = vadd.f32 %v1192, %v1210
      %v1261 = vadd.f32 %v1193, %v1210
      %v1262 = vadd.f32 %v1194, %v1210
      %v1263 = vadd.f32 %v1195, %v1210
      %v1264 = vadd.f32 %v1196, %v1210
      %v1265 = vadd.f32 %v1197, %v1210
      %v1266 = vadd.f32 %v1198, %v1210
      %v1267 = vadd.f32 %v1199, %v1210
      %v1268 = vadd.f32 %v1200, %v1210
      %v1269 = vadd.f32 %v1201, %v1210
      %v1270 = vadd.f32 %v1202, %v1210
      %v1271 = vadd.f32 %v1203, %v1210
      %v1272 = vadd.f32 %v1204, %v1210
      %v1273 = vadd.f32 %v1205, %v1210
      %v1274 = vadd.f32 %v1206, %v1210
      %v1275 = vadd.f32 %v1207, %v1210
      %v1276 = vmax.f32 %v1212, 0.0
      %v1277 = vmax.f32 %v1213, 0.0
      %v1278 = vmax.f32 %v1214, 0.0
      %v1279 = vmax.f32 %v1215, 0.0
      %v1280 = vmax.f32 %v1216, 0.0
      %v1281 = vmax.f32 %v1217, 0.0
      %v1282 = vmax.f32 %v1218, 0.0
      %v1283 = vmax.f32 %v1219, 0.0
      %v1284 = vmax.f32 %v1220, 0.0
      %v1285 = vmax.f32 %v1221, 0.0
      %v1286 = vmax.f32 %v1222, 0.0
      %v1287 = vmax.f32 %v1223, 0.0
      %v1288 = vmax.f32 %v1224, 0.0
      %v1289 = vmax.f32 %v1225, 0.0
      %v1290 = vmax.f32 %v1226, 0.0
      %v1291 = vmax.f32 %v1227, 0.0
      %v1292 = vmax.f32 %v1228, 0.0
      %v1293 = vmax.f32 %v1229, 0.0
      %v1294 = vmax.f32 %v1230, 0.0
      %v1295 = vmax.f32 %v1231, 0.0
      %v1296 = vmax.f32 %v1232, 0.0
      %v1297 = vmax.f32 %v1233, 0.0
      %v1298 = vmax.f32 %v1234, 0.0
      %v1299 = vmax.f32 %v1235, 0.0
      %v1300 = vmax.f32 %v1236, 0.0
      %v1301 = vmax.f32 %v1237, 0.0
      %v1302 = vmax.f32 %v1238, 0.0
      %v1303 = vmax.f32 %v1239, 0.0
      %v1304 = vmax.f32 %v1240, 0.0
      %v1305 = vmax.f32 %v1241, 0.0
      %v1306 = vmax.f32 %v1242, 0.0
      %v1307 = vmax.f32 %v1243, 0.0
      %v1308 = vmax.f32 %v1244, 0.0
      %v1309 = vmax.f32 %v1245, 0.0
      %v1310 = vmax.f32 %v1246, 0.0
      %v1311 = vmax.f32 %v1247, 0.0
      %v1312 = vmax.f32 %v1248, 0.0
      %v1313 = vmax.f32 %v1249, 0.0
      %v1314 = vmax.f32 %v1250, 0.0
      %v1315 = vmax.f32 %v1251, 0.0
      %v1316 = vmax.f32 %v1252, 0.0
      %v1317 = vmax.f32 %v1253, 0.0
      %v1318 = vmax.f32 %v1254, 0.0
      %v1319 = vmax.f32 %v1255, 0.0
      %v1320 = vmax.f32 %v1256, 0.0
      %v1321 = vmax.f32 %v1257, 0.0
      %v1322 = vmax.f32 %v1258, 0.0
      %v1323 = vmax.f32 %v1259, 0.0
      %v1324 = vmax.f32 %v1260, 0.0
      %v1325 = vmax.f32 %v1261, 0.0
      %v1326 = vmax.f32 %v1262, 0.0
      %v1327 = vmax.f32 %v1263, 0.0
      %v1328 = vmax.f32 %v1264, 0.0
      %v1329 = vmax.f32 %v1265, 0.0
      %v1330 = vmax.f32 %v1266, 0.0
      %v1331 = vmax.f32 %v1267, 0.0
      %v1332 = vmax.f32 %v1268, 0.0
      %v1333 = vmax.f32 %v1269, 0.0
      %v1334 = vmax.f32 %v1270, 0.0
      %v1335 = vmax.f32 %v1271, 0.0
      %v1336 = vmax.f32 %v1272, 0.0
      %v1337 = vmax.f32 %v1273, 0.0
      %v1338 = vmax.f32 %v1274, 0.0
      %v1339 = vmax.f32 %v1275, 0.0
      %v1340 = vpack.c.bf16 %v1276, %v1276
      %v1341 = vpack.c.bf16 %v1277, %v1277
      %v1342 = vpack.c.bf16 %v1278, %v1278
      %v1343 = vpack.c.bf16 %v1279, %v1279
      %v1344 = vpack.c.bf16 %v1280, %v1280
      %v1345 = vpack.c.bf16 %v1281, %v1281
      %v1346 = vpack.c.bf16 %v1282, %v1282
      %v1347 = vpack.c.bf16 %v1283, %v1283
      %v1348 = vpack.c.bf16 %v1284, %v1284
      %v1349 = vpack.c.bf16 %v1285, %v1285
      %v1350 = vpack.c.bf16 %v1286, %v1286
      %v1351 = vpack.c.bf16 %v1287, %v1287
      %v1352 = vpack.c.bf16 %v1288, %v1288
      %v1353 = vpack.c.bf16 %v1289, %v1289
      %v1354 = vpack.c.bf16 %v1290, %v1290
      %v1355 = vpack.c.bf16 %v1291, %v1291
      %v1356 = vpack.c.bf16 %v1292, %v1292
      %v1357 = vpack.c.bf16 %v1293, %v1293
      %v1358 = vpack.c.bf16 %v1294, %v1294
      %v1359 = vpack.c.bf16 %v1295, %v1295
      %v1360 = vpack.c.bf16 %v1296, %v1296
      %v1361 = vpack.c.bf16 %v1297, %v1297
      %v1362 = vpack.c.bf16 %v1298, %v1298
      %v1363 = vpack.c.bf16 %v1299, %v1299
      %v1364 = vpack.c.bf16 %v1300, %v1300
      %v1365 = vpack.c.bf16 %v1301, %v1301
      %v1366 = vpack.c.bf16 %v1302, %v1302
      %v1367 = vpack.c.bf16 %v1303, %v1303
      %v1368 = vpack.c.bf16 %v1304, %v1304
      %v1369 = vpack.c.bf16 %v1305, %v1305
      %v1370 = vpack.c.bf16 %v1306, %v1306
      %v1371 = vpack.c.bf16 %v1307, %v1307
      %v1372 = vpack.c.bf16 %v1308, %v1308
      %v1373 = vpack.c.bf16 %v1309, %v1309
      %v1374 = vpack.c.bf16 %v1310, %v1310
      %v1375 = vpack.c.bf16 %v1311, %v1311
      %v1376 = vpack.c.bf16 %v1312, %v1312
      %v1377 = vpack.c.bf16 %v1313, %v1313
      %v1378 = vpack.c.bf16 %v1314, %v1314
      %v1379 = vpack.c.bf16 %v1315, %v1315
      %v1380 = vpack.c.bf16 %v1316, %v1316
      %v1381 = vpack.c.bf16 %v1317, %v1317
      %v1382 = vpack.c.bf16 %v1318, %v1318
      %v1383 = vpack.c.bf16 %v1319, %v1319
      %v1384 = vpack.c.bf16 %v1320, %v1320
      %v1385 = vpack.c.bf16 %v1321, %v1321
      %v1386 = vpack.c.bf16 %v1322, %v1322
      %v1387 = vpack.c.bf16 %v1323, %v1323
      %v1388 = vpack.c.bf16 %v1324, %v1324
      %v1389 = vpack.c.bf16 %v1325, %v1325
      %v1390 = vpack.c.bf16 %v1326, %v1326
      %v1391 = vpack.c.bf16 %v1327, %v1327
      %v1392 = vpack.c.bf16 %v1328, %v1328
      %v1393 = vpack.c.bf16 %v1329, %v1329
      %v1394 = vpack.c.bf16 %v1330, %v1330
      %v1395 = vpack.c.bf16 %v1331, %v1331
      %v1396 = vpack.c.bf16 %v1332, %v1332
      %v1397 = vpack.c.bf16 %v1333, %v1333
      %v1398 = vpack.c.bf16 %v1334, %v1334
      %v1399 = vpack.c.bf16 %v1335, %v1335
      %v1400 = vpack.c.bf16 %v1336, %v1336
      %v1401 = vpack.c.bf16 %v1337, %v1337
      %v1402 = vpack.c.bf16 %v1338, %v1338
      %v1403 = vpack.c.bf16 %v1339, %v1339
      %1404 = vst [vmem:[%s267] sm:$0xf] %v1340
      %1405 = vst [vmem:[%s267 + $0x4] sm:$0xf] %v1341
      %1406 = vst [vmem:[%s267 + $0x8] sm:$0xf] %v1342
      %1407 = vst [vmem:[%s267 + $0xc] sm:$0xf] %v1343
      %1408 = vst [vmem:[%s267 + $0x10] sm:$0xf] %v1344
      %1409 = vst [vmem:[%s267 + $0x14] sm:$0xf] %v1345
      %1410 = vst [vmem:[%s267 + $0x18] sm:$0xf] %v1346
      %1411 = vst [vmem:[%s267 + $0x1c] sm:$0xf] %v1347
      %1412 = vst [vmem:[%s267 + $0x20] sm:$0xf] %v1348
      %1413 = vst [vmem:[%s267 + $0x24] sm:$0xf] %v1349
      %1414 = vst [vmem:[%s267 + $0x28] sm:$0xf] %v1350
      %1415 = vst [vmem:[%s267 + $0x2c] sm:$0xf] %v1351
      %1416 = vst [vmem:[%s267 + $0x30] sm:$0xf] %v1352
      %1417 = vst [vmem:[%s267 + $0x34] sm:$0xf] %v1353
      %1418 = vst [vmem:[%s267 + $0x38] sm:$0xf] %v1354
      %1419 = vst [vmem:[%s267 + $0x3c] sm:$0xf] %v1355
      %1420 = vst [vmem:[%s267 + $0x40] sm:$0xf] %v1356
      %1421 = vst [vmem:[%s267 + $0x44] sm:$0xf] %v1357
      %1422 = vst [vmem:[%s267 + $0x48] sm:$0xf] %v1358
      %1423 = vst [vmem:[%s267 + $0x4c] sm:$0xf] %v1359
      %1424 = vst [vmem:[%s267 + $0x50] sm:$0xf] %v1360
      %1425 = vst [vmem:[%s267 + $0x54] sm:$0xf] %v1361
      %1426 = vst [vmem:[%s267 + $0x58] sm:$0xf] %v1362
      %1427 = vst [vmem:[%s267 + $0x5c] sm:$0xf] %v1363
      %1428 = vst [vmem:[%s267 + $0x60] sm:$0xf] %v1364
      %1429 = vst [vmem:[%s267 + $0x64] sm:$0xf] %v1365
      %1430 = vst [vmem:[%s267 + $0x68] sm:$0xf] %v1366
      %1431 = vst [vmem:[%s267 + $0x6c] sm:$0xf] %v1367
      %1432 = vst [vmem:[%s267 + $0x70] sm:$0xf] %v1368
      %1433 = vst [vmem:[%s267 + $0x74] sm:$0xf] %v1369
      %1434 = vst [vmem:[%s267 + $0x78] sm:$0xf] %v1370
      %1435 = vst [vmem:[%s267 + $0x7c] sm:$0xf] %v1371
      %1436 = vst [vmem:[%s267 + $0x80] sm:$0xf] %v1372
      %1437 = vst [vmem:[%s267 + $0x84] sm:$0xf] %v1373
      %1438 = vst [vmem:[%s267 + $0x88] sm:$0xf] %v1374
      %1439 = vst [vmem:[%s267 + $0x8c] sm:$0xf] %v1375
      %1440 = vst [vmem:[%s267 + $0x90] sm:$0xf] %v1376
      %1441 = vst [vmem:[%s267 + $0x94] sm:$0xf] %v1377
      %1442 = vst [vmem:[%s267 + $0x98] sm:$0xf] %v1378
      %1443 = vst [vmem:[%s267 + $0x9c] sm:$0xf] %v1379
      %1444 = vst [vmem:[%s267 + $0xa0] sm:$0xf] %v1380
      %1445 = vst [vmem:[%s267 + $0xa4] sm:$0xf] %v1381
      %1446 = vst [vmem:[%s267 + $0xa8] sm:$0xf] %v1382
      %1447 = vst [vmem:[%s267 + $0xac] sm:$0xf] %v1383
      %1448 = vst [vmem:[%s267 + $0xb0] sm:$0xf] %v1384
      %1449 = vst [vmem:[%s267 + $0xb4] sm:$0xf] %v1385
      %1450 = vst [vmem:[%s267 + $0xb8] sm:$0xf] %v1386
      %1451 = vst [vmem:[%s267 + $0xbc] sm:$0xf] %v1387
      %1452 = vst [vmem:[%s267 + $0xc0] sm:$0xf] %v1388
      %1453 = vst [vmem:[%s267 + $0xc4] sm:$0xf] %v1389
      %1454 = vst [vmem:[%s267 + $0xc8] sm:$0xf] %v1390
      %1455 = vst [vmem:[%s267 + $0xcc] sm:$0xf] %v1391
      %1456 = vst [vmem:[%s267 + $0xd0] sm:$0xf] %v1392
      %1457 = vst [vmem:[%s267 + $0xd4] sm:$0xf] %v1393
      %1458 = vst [vmem:[%s267 + $0xd8] sm:$0xf] %v1394
      %1459 = vst [vmem:[%s267 + $0xdc] sm:$0xf] %v1395
      %1460 = vst [vmem:[%s267 + $0xe0] sm:$0xf] %v1396
      %1461 = vst [vmem:[%s267 + $0xe4] sm:$0xf] %v1397
      %1462 = vst [vmem:[%s267 + $0xe8] sm:$0xf] %v1398
      %1463 = vst [vmem:[%s267 + $0xec] sm:$0xf] %v1399
      %1464 = vst [vmem:[%s267 + $0xf0] sm:$0xf] %v1400
      %1465 = vst [vmem:[%s267 + $0xf4] sm:$0xf] %v1401
      %1466 = vst [vmem:[%s267 + $0xf8] sm:$0xf] %v1402
      %1467 = vst [vmem:[%s267 + $0xfc] sm:$0xf] %v1403
      %s1468 = smul.u32 64, %s19
      %p1469 = scmp.lt.s32.totalorder %s1468, 255
      %s1470 = scalar_select %p1469, %s1468, 255
      %p1471 = scmp.lt.s32.totalorder %s20, 0
      %s1472 = scalar_select %p1471, %s20, 0
      %s1473 = sadd.s32 %s1472, %s1470
      %s1474 = smul.addr %s1473, 4
      %s1475 = scalar_lea.vmem %s4, %s1474
      // Predicated region
      $region37: #{image_encoder_forward.25} parent=35 // pred_check
        %p1476 = pneg %p151
      $region38: #{image_encoder_forward.25} parent=35 // pred_check_branch
        %1478 = sbr.rel (%p1476) target = $region40
      $region39: #{image_encoder_forward.25} parent=35 // pred_region
        %s1479 = smul.u32 64, %s19
      $region40: #{image_encoder_forward.25} parent=35 // pred_fallthru
        _
    $region36: #{image_encoder_forward.25} parent=5 // pred_fallthru
      _
    %p1480 = scmp.le.s32.totalorder 2, %s10
    // Predicated region
    $region41: #{image_encoder_forward.25} parent=5 // pred_check
      %p1481 = pneg %p1480
    $region42: #{image_encoder_forward.25} parent=5 // pred_check_branch
      %1483 = sbr.rel (%p1481) target = $region44
    $region43: #{image_encoder_forward.25} parent=5 // pred_region
      %s1484 = ssub.s32 %s10, 2
      // Predicated region
      $region45: #{image_encoder_forward.25} parent=43 // pred_check
        %p1485 = pneg %p157
      $region46: #{image_encoder_forward.25} parent=43 // pred_check_branch
        %1487 = sbr.rel (%p1485) target = $region48
      $region47: #{image_encoder_forward.25} parent=43 // pred_region
        %s1488 = smul.u32 64, %s21
        %p1489 = scmp.lt.s32.totalorder %s1488, 255
        %s1490 = scalar_select %p1489, %s1488, 255
        %p1491 = scmp.lt.s32.totalorder %s22, 0
        %s1492 = scalar_select %p1491, %s22, 0
        %s1493 = sadd.s32 %s1492, %s1490
        %s1494 = smul.addr %s1493, 4
        %s1495 = scalar_lea.vmem %s4, %s1494
      $region48: #{image_encoder_forward.25} parent=43 // pred_fallthru
        _
    $region44: #{image_encoder_forward.25} parent=5 // pred_fallthru
      _
  $region6: #{image_encoder_forward.25} parent=0 // loop_footer
    %s14 = sadd.s32 1, %s10
  $region7: #{image_encoder_forward.25} parent=0 // loop_footer_branch
    %9 = sbr.rel target = $region3
  $region8: #{image_encoder_forward.25} parent=0 // loop_exit
    _

// kernel: image_encoder_forward.26
$region0: #{image_encoder_forward.26}
  #allocation0 [shape = 'u32[]', space=smem, size = 0x4, offset = 0x4, fixed_abs, tag = 'smem constant byte address 0x4 - core index']
  #allocation1 [shape = 'u32[72,128]{1,0:T(1,128)}', space=vmem, size = 0x9000, scoped, tag = 'internal scratch']
  %s0 = inlined_call_operand.vmem [shape: bf16[9,64,128], index: 0, kind: input, shape index: {}]
  %s1 = inlined_call_operand.vmem [shape: bf16[64,128], index: 1, kind: output, shape index: {}]
  %s2 = sld [smem:[#allocation0]]
  $region14: #{image_encoder_forward.26} parent=0
    _
  %s4 = ssub.s32 1, %s2
  %s5 = scalar_select 0, %s4, %s2
  // Predicated region
  $region2: #{image_encoder_forward.26} parent=0 // pred_check
    _
  $region3: #{image_encoder_forward.26} parent=0 // pred_check_branch
    %7 = sbr.rel (0) target = $region5
  $region4: #{image_encoder_forward.26} parent=0 // pred_region
    _
  $region5: #{image_encoder_forward.26} parent=0 // pred_fallthru
    _
  %v8 = vld [vmem:[%s0] sm:$0xf]
  %v9 = vld [vmem:[%s0 + $0x4] sm:$0xf]
  %v10 = vld [vmem:[%s0 + $0x8] sm:$0xf]
  %v11 = vld [vmem:[%s0 + $0xc] sm:$0xf]
  %v12 = vld [vmem:[%s0 + $0x10] sm:$0xf]
  %v13 = vld [vmem:[%s0 + $0x14] sm:$0xf]
  %v14 = vld [vmem:[%s0 + $0x18] sm:$0xf]
  %v15 = vld [vmem:[%s0 + $0x1c] sm:$0xf]
  %v16 = vld [vmem:[%s0 + $0x20] sm:$0xf]
  %v17 = vld [vmem:[%s0 + $0x24] sm:$0xf]
  %v18 = vld [vmem:[%s0 + $0x28] sm:$0xf]
  %v19 = vld [vmem:[%s0 + $0x2c] sm:$0xf]
  %v20 = vld [vmem:[%s0 + $0x30] sm:$0xf]
  %v21 = vld [vmem:[%s0 + $0x34] sm:$0xf]
  %v22 = vld [vmem:[%s0 + $0x38] sm:$0xf]
  %v23 = vld [vmem:[%s0 + $0x3c] sm:$0xf]
  %v24 = vld [vmem:[%s0 + $0x40] sm:$0xf]
  %v25 = vld [vmem:[%s0 + $0x44] sm:$0xf]
  %v26 = vld [vmem:[%s0 + $0x48] sm:$0xf]
  %v27 = vld [vmem:[%s0 + $0x4c] sm:$0xf]
  %v28 = vld [vmem:[%s0 + $0x50] sm:$0xf]
  %v29 = vld [vmem:[%s0 + $0x54] sm:$0xf]
  %v30 = vld [vmem:[%s0 + $0x58] sm:$0xf]
  %v31 = vld [vmem:[%s0 + $0x5c] sm:$0xf]
  %v32 = vld [vmem:[%s0 + $0x60] sm:$0xf]
  %v33 = vld [vmem:[%s0 + $0x64] sm:$0xf]
  %v34 = vld [vmem:[%s0 + $0x68] sm:$0xf]
  %v35 = vld [vmem:[%s0 + $0x6c] sm:$0xf]
  %v36 = vld [vmem:[%s0 + $0x70] sm:$0xf]
  %v37 = vld [vmem:[%s0 + $0x74] sm:$0xf]
  %v38 = vld [vmem:[%s0 + $0x78] sm:$0xf]
  %v39 = vld [vmem:[%s0 + $0x7c] sm:$0xf]
  %v40 = vld [vmem:[%s0 + $0x80] sm:$0xf]
  %v41 = vld [vmem:[%s0 + $0x84] sm:$0xf]
  %v42 = vld [vmem:[%s0 + $0x88] sm:$0xf]
  %v43 = vld [vmem:[%s0 + $0x8c] sm:$0xf]
  %v44 = vld [vmem:[%s0 + $0x90] sm:$0xf]
  %v45 = vld [vmem:[%s0 + $0x94] sm:$0xf]
  %v46 = vld [vmem:[%s0 + $0x98] sm:$0xf]
  %v47 = vld [vmem:[%s0 + $0x9c] sm:$0xf]
  %v48 = vld [vmem:[%s0 + $0xa0] sm:$0xf]
  %v49 = vld [vmem:[%s0 + $0xa4] sm:$0xf]
  %v50 = vld [vmem:[%s0 + $0xa8] sm:$0xf]
  %v51 = vld [vmem:[%s0 + $0xac] sm:$0xf]
  %v52 = vld [vmem:[%s0 + $0xb0] sm:$0xf]
  %v53 = vld [vmem:[%s0 + $0xb4] sm:$0xf]
  %v54 = vld [vmem:[%s0 + $0xb8] sm:$0xf]
  %v55 = vld [vmem:[%s0 + $0xbc] sm:$0xf]
  %v56 = vld [vmem:[%s0 + $0xc0] sm:$0xf]
  %v57 = vld [vmem:[%s0 + $0xc4] sm:$0xf]
  %v58 = vld [vmem:[%s0 + $0xc8] sm:$0xf]
  %v59 = vld [vmem:[%s0 + $0xcc] sm:$0xf]
  %v60 = vld [vmem:[%s0 + $0xd0] sm:$0xf]
  %v61 = vld [vmem:[%s0 + $0xd4] sm:$0xf]
  %v62 = vld [vmem:[%s0 + $0xd8] sm:$0xf]
  %v63 = vld [vmem:[%s0 + $0xdc] sm:$0xf]
  %v64 = vld [vmem:[%s0 + $0xe0] sm:$0xf]
  %v65 = vld [vmem:[%s0 + $0xe4] sm:$0xf]
  %v66 = vld [vmem:[%s0 + $0xe8] sm:$0xf]
  %v67 = vld [vmem:[%s0 + $0xec] sm:$0xf]
  %v68 = vld [vmem:[%s0 + $0xf0] sm:$0xf]
  %v69 = vld [vmem:[%s0 + $0xf4] sm:$0xf]
  %v70 = vld [vmem:[%s0 + $0xf8] sm:$0xf]
  %v71 = vld [vmem:[%s0 + $0xfc] sm:$0xf]
  %v72 = vld [vmem:[%s0 + $0x100] sm:$0xf]
  %v73 = vld [vmem:[%s0 + $0x104] sm:$0xf]
  %v74 = vld [vmem:[%s0 + $0x108] sm:$0xf]
  %v75 = vld [vmem:[%s0 + $0x10c] sm:$0xf]
  %v76 = vld [vmem:[%s0 + $0x110] sm:$0xf]
  %v77 = vld [vmem:[%s0 + $0x114] sm:$0xf]
  %v78 = vld [vmem:[%s0 + $0x118] sm:$0xf]
  %v79 = vld [vmem:[%s0 + $0x11c] sm:$0xf]
  %v80 = vunpack.c.l.bf16 %v8
  %v81 = vunpack.c.l.bf16 %v9
  %v82 = vunpack.c.l.bf16 %v10
  %v83 = vunpack.c.l.bf16 %v11
  %v84 = vunpack.c.l.bf16 %v12
  %v85 = vunpack.c.l.bf16 %v13
  %v86 = vunpack.c.l.bf16 %v14
  %v87 = vunpack.c.l.bf16 %v15
  %v88 = vunpack.c.l.bf16 %v16
  %v89 = vunpack.c.l.bf16 %v17
  %v90 = vunpack.c.l.bf16 %v18
  %v91 = vunpack.c.l.bf16 %v19
  %v92 = vunpack.c.l.bf16 %v20
  %v93 = vunpack.c.l.bf16 %v21
  %v94 = vunpack.c.l.bf16 %v22
  %v95 = vunpack.c.l.bf16 %v23
  %v96 = vunpack.c.l.bf16 %v24
  %v97 = vunpack.c.l.bf16 %v25
  %v98 = vunpack.c.l.bf16 %v26
  %v99 = vunpack.c.l.bf16 %v27
  %v100 = vunpack.c.l.bf16 %v28
  %v101 = vunpack.c.l.bf16 %v29
  %v102 = vunpack.c.l.bf16 %v30
  %v103 = vunpack.c.l.bf16 %v31
  %v104 = vunpack.c.l.bf16 %v32
  %v105 = vunpack.c.l.bf16 %v33
  %v106 = vunpack.c.l.bf16 %v34
  %v107 = vunpack.c.l.bf16 %v35
  %v108 = vunpack.c.l.bf16 %v36
  %v109 = vunpack.c.l.bf16 %v37
  %v110 = vunpack.c.l.bf16 %v38
  %v111 = vunpack.c.l.bf16 %v39
  %v112 = vunpack.c.l.bf16 %v40
  %v113 = vunpack.c.l.bf16 %v41
  %v114 = vunpack.c.l.bf16 %v42
  %v115 = vunpack.c.l.bf16 %v43
  %v116 = vunpack.c.l.bf16 %v44
  %v117 = vunpack.c.l.bf16 %v45
  %v118 = vunpack.c.l.bf16 %v46
  %v119 = vunpack.c.l.bf16 %v47
  %v120 = vunpack.c.l.bf16 %v48
  %v121 = vunpack.c.l.bf16 %v49
  %v122 = vunpack.c.l.bf16 %v50
  %v123 = vunpack.c.l.bf16 %v51
  %v124 = vunpack.c.l.bf16 %v52
  %v125 = vunpack.c.l.bf16 %v53
  %v126 = vunpack.c.l.bf16 %v54
  %v127 = vunpack.c.l.bf16 %v55
  %v128 = vunpack.c.l.bf16 %v56
  %v129 = vunpack.c.l.bf16 %v57
  %v130 = vunpack.c.l.bf16 %v58
  %v131 = vunpack.c.l.bf16 %v59
  %v132 = vunpack.c.l.bf16 %v60
  %v133 = vunpack.c.l.bf16 %v61
  %v134 = vunpack.c.l.bf16 %v62
  %v135 = vunpack.c.l.bf16 %v63
  %v136 = vunpack.c.l.bf16 %v64
  %v137 = vunpack.c.l.bf16 %v65
  %v138 = vunpack.c.l.bf16 %v66
  %v139 = vunpack.c.l.bf16 %v67
  %v140 = vunpack.c.l.bf16 %v68
  %v141 = vunpack.c.l.bf16 %v69
  %v142 = vunpack.c.l.bf16 %v70
  %v143 = vunpack.c.l.bf16 %v71
  %v144 = vunpack.c.l.bf16 %v72
  %v145 = vunpack.c.l.bf16 %v73
  %v146 = vunpack.c.l.bf16 %v74
  %v147 = vunpack.c.l.bf16 %v75
  %v148 = vunpack.c.l.bf16 %v76
  %v149 = vunpack.c.l.bf16 %v77
  %v150 = vunpack.c.l.bf16 %v78
  %v151 = vunpack.c.l.bf16 %v79
  %v152 = vmax.f32 %v80, %v88
  %v153 = vmax.f32 %v152, %v96
  %v154 = vmax.f32 %v153, %v104
  %v155 = vmax.f32 %v154, %v112
  %v156 = vmax.f32 %v155, %v120
  %v157 = vmax.f32 %v156, %v128
  %v158 = vmax.f32 %v157, %v136
  %v159 = vmax.f32 %v158, %v144
  %v160 = vmax.f32 %v81, %v89
  %v161 = vmax.f32 %v160, %v97
  %v162 = vmax.f32 %v161, %v105
  %v163 = vmax.f32 %v162, %v113
  %v164 = vmax.f32 %v163, %v121
  %v165 = vmax.f32 %v164, %v129
  %v166 = vmax.f32 %v165, %v137
  %v167 = vmax.f32 %v166, %v145
  %v168 = vmax.f32 %v82, %v90
  %v169 = vmax.f32 %v168, %v98
  %v170 = vmax.f32 %v169, %v106
  %v171 = vmax.f32 %v170, %v114
  %v172 = vmax.f32 %v171, %v122
  %v173 = vmax.f32 %v172, %v130
  %v174 = vmax.f32 %v173, %v138
  %v175 = vmax.f32 %v174, %v146
  %v176 = vmax.f32 %v83, %v91
  %v177 = vmax.f32 %v176, %v99
  %v178 = vmax.f32 %v177, %v107
  %v179 = vmax.f32 %v178, %v115
  %v180 = vmax.f32 %v179, %v123
  %v181 = vmax.f32 %v180, %v131
  %v182 = vmax.f32 %v181, %v139
  %v183 = vmax.f32 %v182, %v147
  %v184 = vmax.f32 %v84, %v92
  %v185 = vmax.f32 %v184, %v100
  %v186 = vmax.f32 %v185, %v108
  %v187 = vmax.f32 %v186, %v116
  %v188 = vmax.f32 %v187, %v124
  %v189 = vmax.f32 %v188, %v132
  %v190 = vmax.f32 %v189, %v140
  %v191 = vmax.f32 %v190, %v148
  %v192 = vmax.f32 %v85, %v93
  %v193 = vmax.f32 %v192, %v101
  %v194 = vmax.f32 %v193, %v109
  %v195 = vmax.f32 %v194, %v117
  %v196 = vmax.f32 %v195, %v125
  %v197 = vmax.f32 %v196, %v133
  %v198 = vmax.f32 %v197, %v141
  %v199 = vmax.f32 %v198, %v149
  %v200 = vmax.f32 %v86, %v94
  %v201 = vmax.f32 %v200, %v102
  %v202 = vmax.f32 %v201, %v110
  %v203 = vmax.f32 %v202, %v118
  %v204 = vmax.f32 %v203, %v126
  %v205 = vmax.f32 %v204, %v134
  %v206 = vmax.f32 %v205, %v142
  %v207 = vmax.f32 %v206, %v150
  %v208 = vmax.f32 %v87, %v95
  %v209 = vmax.f32 %v208, %v103
  %v210 = vmax.f32 %v209, %v111
  %v211 = vmax.f32 %v210, %v119
  %v212 = vmax.f32 %v211, %v127
  %v213 = vmax.f32 %v212, %v135
  %v214 = vmax.f32 %v213, %v143
  %v215 = vmax.f32 %v214, %v151
  %v216 = vpack.c.bf16 %v159, %v159
  %v217 = vpack.c.bf16 %v167, %v167
  %v218 = vpack.c.bf16 %v175, %v175
  %v219 = vpack.c.bf16 %v183, %v183
  %v220 = vpack.c.bf16 %v191, %v191
  %v221 = vpack.c.bf16 %v199, %v199
  %v222 = vpack.c.bf16 %v207, %v207
  %v223 = vpack.c.bf16 %v215, %v215
  %224 = vst [vmem:[%s1] sm:$0xf] %v216
  %225 = vst [vmem:[%s1 + $0x4] sm:$0xf] %v217
  %226 = vst [vmem:[%s1 + $0x8] sm:$0xf] %v218
  %227 = vst [vmem:[%s1 + $0xc] sm:$0xf] %v219
  %228 = vst [vmem:[%s1 + $0x10] sm:$0xf] %v220
  %229 = vst [vmem:[%s1 + $0x14] sm:$0xf] %v221
  %230 = vst [vmem:[%s1 + $0x18] sm:$0xf] %v222
  %231 = vst [vmem:[%s1 + $0x1c] sm:$0xf] %v223
  // Predicated region
  $region6: #{image_encoder_forward.26} parent=0 // pred_check
    _
  $region7: #{image_encoder_forward.26} parent=0 // pred_check_branch
    %233 = sbr.rel (0) target = $region9
  $region8: #{image_encoder_forward.26} parent=0 // pred_region
    _
  $region9: #{image_encoder_forward.26} parent=0 // pred_fallthru
    _
  // Predicated region
  $region10: #{image_encoder_forward.26} parent=0 // pred_check
    _
  $region11: #{image_encoder_forward.26} parent=0 // pred_check_branch
    %235 = sbr.rel (0) target = $region13
  $region12: #{image_encoder_forward.26} parent=0 // pred_region
    _
  $region13: #{image_encoder_forward.26} parent=0 // pred_fallthru
    _

// kernel: image_encoder_forward.27
$region0: #{image_encoder_forward.27}
  #allocation0 [shape = 'u32[]', space=smem, size = 0x4, offset = 0x4, fixed_abs, tag = 'smem constant byte address 0x4 - core index']
  #allocation1 [shape = 'u32[72,128]{1,0:T(1,128)}', space=vmem, size = 0x9000, scoped, tag = 'internal scratch']
  %s0 = inlined_call_operand.vmem [shape: bf16[512,16], index: 0, kind: input, shape index: {}]
  %s1 = inlined_call_operand.vmem [shape: bf16[16,128], index: 1, kind: input, shape index: {}]
  %s2 = inlined_call_operand.vmem [shape: f32[1,16], index: 2, kind: input, shape index: {}]
  %s3 = inlined_call_operand.vmem [shape: f32[1,16], index: 3, kind: input, shape index: {}]
  %s4 = inlined_call_operand.vmem [shape: f32[1,128], index: 4, kind: input, shape index: {}]
  %s5 = inlined_call_operand.vmem [shape: f32[1,128], index: 5, kind: input, shape index: {}]
  %s6 = inlined_call_operand.vmem [shape: bf16[512,128], index: 6, kind: output, shape index: {}]
  %s7 = sld [smem:[#allocation0]]
  $region34: #{image_encoder_forward.27} parent=0
    _
  %s9 = ssub.s32 1, %s7
  %s10 = scalar_select 0, %s9, %s7
  // Predicated region
  $region2: #{image_encoder_forward.27} parent=0 // pred_check
    _
  $region3: #{image_encoder_forward.27} parent=0 // pred_check_branch
    %12 = sbr.rel (0) target = $region5
  $region4: #{image_encoder_forward.27} parent=0 // pred_region
    _
  $region5: #{image_encoder_forward.27} parent=0 // pred_fallthru
    _
  // Predicated region
  $region6: #{image_encoder_forward.27} parent=0 // pred_check
    _
  $region7: #{image_encoder_forward.27} parent=0 // pred_check_branch
    %14 = sbr.rel (0) target = $region9
  $region8: #{image_encoder_forward.27} parent=0 // pred_region
    _
  $region9: #{image_encoder_forward.27} parent=0 // pred_fallthru
    _
  // Predicated region
  $region10: #{image_encoder_forward.27} parent=0 // pred_check
    _
  $region11: #{image_encoder_forward.27} parent=0 // pred_check_branch
    %16 = sbr.rel (0) target = $region13
  $region12: #{image_encoder_forward.27} parent=0 // pred_region
    _
  $region13: #{image_encoder_forward.27} parent=0 // pred_fallthru
    _
  // Predicated region
  $region14: #{image_encoder_forward.27} parent=0 // pred_check
    _
  $region15: #{image_encoder_forward.27} parent=0 // pred_check_branch
    %18 = sbr.rel (0) target = $region17
  $region16: #{image_encoder_forward.27} parent=0 // pred_region
    _
  $region17: #{image_encoder_forward.27} parent=0 // pred_fallthru
    _
  // Predicated region
  $region18: #{image_encoder_forward.27} parent=0 // pred_check
    _
  $region19: #{image_encoder_forward.27} parent=0 // pred_check_branch
    %20 = sbr.rel (0) target = $region21
  $region20: #{image_encoder_forward.27} parent=0 // pred_region
    _
  $region21: #{image_encoder_forward.27} parent=0 // pred_fallthru
    _
  // Predicated region
  $region22: #{image_encoder_forward.27} parent=0 // pred_check
    _
  $region23: #{image_encoder_forward.27} parent=0 // pred_check_branch
    %22 = sbr.rel (0) target = $region25
  $region24: #{image_encoder_forward.27} parent=0 // pred_region
    _
  $region25: #{image_encoder_forward.27} parent=0 // pred_fallthru
    _
  %v24 = vld [vmem:[%s0] sm:$0xf]
  %v25 = vld [vmem:[%s0 + $0x4] sm:$0xf]
  %v26 = vld [vmem:[%s0 + $0x8] sm:$0xf]
  %v27 = vld [vmem:[%s0 + $0xc] sm:$0xf]
  %v28 = vld [vmem:[%s0 + $0x10] sm:$0xf]
  %v29 = vld [vmem:[%s0 + $0x14] sm:$0xf]
  %v30 = vld [vmem:[%s0 + $0x18] sm:$0xf]
  %v31 = vld [vmem:[%s0 + $0x1c] sm:$0xf]
  %v32 = vld [vmem:[%s0 + $0x20] sm:$0xf]
  %v33 = vld [vmem:[%s0 + $0x24] sm:$0xf]
  %v34 = vld [vmem:[%s0 + $0x28] sm:$0xf]
  %v35 = vld [vmem:[%s0 + $0x2c] sm:$0xf]
  %v36 = vld [vmem:[%s0 + $0x30] sm:$0xf]
  %v37 = vld [vmem:[%s0 + $0x34] sm:$0xf]
  %v38 = vld [vmem:[%s0 + $0x38] sm:$0xf]
  %v39 = vld [vmem:[%s0 + $0x3c] sm:$0xf]
  %v40 = vld [vmem:[%s0 + $0x40] sm:$0xf]
  %v41 = vld [vmem:[%s0 + $0x44] sm:$0xf]
  %v42 = vld [vmem:[%s0 + $0x48] sm:$0xf]
  %v43 = vld [vmem:[%s0 + $0x4c] sm:$0xf]
  %v44 = vld [vmem:[%s0 + $0x50] sm:$0xf]
  %v45 = vld [vmem:[%s0 + $0x54] sm:$0xf]
  %v46 = vld [vmem:[%s0 + $0x58] sm:$0xf]
  %v47 = vld [vmem:[%s0 + $0x5c] sm:$0xf]
  %v48 = vld [vmem:[%s0 + $0x60] sm:$0xf]
  %v49 = vld [vmem:[%s0 + $0x64] sm:$0xf]
  %v50 = vld [vmem:[%s0 + $0x68] sm:$0xf]
  %v51 = vld [vmem:[%s0 + $0x6c] sm:$0xf]
  %v52 = vld [vmem:[%s0 + $0x70] sm:$0xf]
  %v53 = vld [vmem:[%s0 + $0x74] sm:$0xf]
  %v54 = vld [vmem:[%s0 + $0x78] sm:$0xf]
  %v55 = vld [vmem:[%s0 + $0x7c] sm:$0xf]
  %v56 = vld [vmem:[%s0 + $0x80] sm:$0xf]
  %v57 = vld [vmem:[%s0 + $0x84] sm:$0xf]
  %v58 = vld [vmem:[%s0 + $0x88] sm:$0xf]
  %v59 = vld [vmem:[%s0 + $0x8c] sm:$0xf]
  %v60 = vld [vmem:[%s0 + $0x90] sm:$0xf]
  %v61 = vld [vmem:[%s0 + $0x94] sm:$0xf]
  %v62 = vld [vmem:[%s0 + $0x98] sm:$0xf]
  %v63 = vld [vmem:[%s0 + $0x9c] sm:$0xf]
  %v64 = vld [vmem:[%s0 + $0xa0] sm:$0xf]
  %v65 = vld [vmem:[%s0 + $0xa4] sm:$0xf]
  %v66 = vld [vmem:[%s0 + $0xa8] sm:$0xf]
  %v67 = vld [vmem:[%s0 + $0xac] sm:$0xf]
  %v68 = vld [vmem:[%s0 + $0xb0] sm:$0xf]
  %v69 = vld [vmem:[%s0 + $0xb4] sm:$0xf]
  %v70 = vld [vmem:[%s0 + $0xb8] sm:$0xf]
  %v71 = vld [vmem:[%s0 + $0xbc] sm:$0xf]
  %v72 = vld [vmem:[%s0 + $0xc0] sm:$0xf]
  %v73 = vld [vmem:[%s0 + $0xc4] sm:$0xf]
  %v74 = vld [vmem:[%s0 + $0xc8] sm:$0xf]
  %v75 = vld [vmem:[%s0 + $0xcc] sm:$0xf]
  %v76 = vld [vmem:[%s0 + $0xd0] sm:$0xf]
  %v77 = vld [vmem:[%s0 + $0xd4] sm:$0xf]
  %v78 = vld [vmem:[%s0 + $0xd8] sm:$0xf]
  %v79 = vld [vmem:[%s0 + $0xdc] sm:$0xf]
  %v80 = vld [vmem:[%s0 + $0xe0] sm:$0xf]
  %v81 = vld [vmem:[%s0 + $0xe4] sm:$0xf]
  %v82 = vld [vmem:[%s0 + $0xe8] sm:$0xf]
  %v83 = vld [vmem:[%s0 + $0xec] sm:$0xf]
  %v84 = vld [vmem:[%s0 + $0xf0] sm:$0xf]
  %v85 = vld [vmem:[%s0 + $0xf4] sm:$0xf]
  %v86 = vld [vmem:[%s0 + $0xf8] sm:$0xf]
  %v87 = vld [vmem:[%s0 + $0xfc] sm:$0xf]
  %v88 = vunpack.c.l.bf16 %v24
  %v89 = vunpack.c.l.bf16 %v25
  %v90 = vunpack.c.l.bf16 %v26
  %v91 = vunpack.c.l.bf16 %v27
  %v92 = vunpack.c.l.bf16 %v28
  %v93 = vunpack.c.l.bf16 %v29
  %v94 = vunpack.c.l.bf16 %v30
  %v95 = vunpack.c.l.bf16 %v31
  %v96 = vunpack.c.l.bf16 %v32
  %v97 = vunpack.c.l.bf16 %v33
  %v98 = vunpack.c.l.bf16 %v34
  %v99 = vunpack.c.l.bf16 %v35
  %v100 = vunpack.c.l.bf16 %v36
  %v101 = vunpack.c.l.bf16 %v37
  %v102 = vunpack.c.l.bf16 %v38
  %v103 = vunpack.c.l.bf16 %v39
  %v104 = vunpack.c.l.bf16 %v40
  %v105 = vunpack.c.l.bf16 %v41
  %v106 = vunpack.c.l.bf16 %v42
  %v107 = vunpack.c.l.bf16 %v43
  %v108 = vunpack.c.l.bf16 %v44
  %v109 = vunpack.c.l.bf16 %v45
  %v110 = vunpack.c.l.bf16 %v46
  %v111 = vunpack.c.l.bf16 %v47
  %v112 = vunpack.c.l.bf16 %v48
  %v113 = vunpack.c.l.bf16 %v49
  %v114 = vunpack.c.l.bf16 %v50
  %v115 = vunpack.c.l.bf16 %v51
  %v116 = vunpack.c.l.bf16 %v52
  %v117 = vunpack.c.l.bf16 %v53
  %v118 = vunpack.c.l.bf16 %v54
  %v119 = vunpack.c.l.bf16 %v55
  %v120 = vunpack.c.l.bf16 %v56
  %v121 = vunpack.c.l.bf16 %v57
  %v122 = vunpack.c.l.bf16 %v58
  %v123 = vunpack.c.l.bf16 %v59
  %v124 = vunpack.c.l.bf16 %v60
  %v125 = vunpack.c.l.bf16 %v61
  %v126 = vunpack.c.l.bf16 %v62
  %v127 = vunpack.c.l.bf16 %v63
  %v128 = vunpack.c.l.bf16 %v64
  %v129 = vunpack.c.l.bf16 %v65
  %v130 = vunpack.c.l.bf16 %v66
  %v131 = vunpack.c.l.bf16 %v67
  %v132 = vunpack.c.l.bf16 %v68
  %v133 = vunpack.c.l.bf16 %v69
  %v134 = vunpack.c.l.bf16 %v70
  %v135 = vunpack.c.l.bf16 %v71
  %v136 = vunpack.c.l.bf16 %v72
  %v137 = vunpack.c.l.bf16 %v73
  %v138 = vunpack.c.l.bf16 %v74
  %v139 = vunpack.c.l.bf16 %v75
  %v140 = vunpack.c.l.bf16 %v76
  %v141 = vunpack.c.l.bf16 %v77
  %v142 = vunpack.c.l.bf16 %v78
  %v143 = vunpack.c.l.bf16 %v79
  %v144 = vunpack.c.l.bf16 %v80
  %v145 = vunpack.c.l.bf16 %v81
  %v146 = vunpack.c.l.bf16 %v82
  %v147 = vunpack.c.l.bf16 %v83
  %v148 = vunpack.c.l.bf16 %v84
  %v149 = vunpack.c.l.bf16 %v85
  %v150 = vunpack.c.l.bf16 %v86
  %v151 = vunpack.c.l.bf16 %v87
  %v152 = vld [vmem:[%s2] sm:$0x1]
  %v154 = vperm.slane %v152, 0
  %v156 = vmul.f32 %v88, %v154
  %v157 = vmul.f32 %v89, %v154
  %v158 = vmul.f32 %v90, %v154
  %v159 = vmul.f32 %v91, %v154
  %v160 = vmul.f32 %v92, %v154
  %v161 = vmul.f32 %v93, %v154
  %v162 = vmul.f32 %v94, %v154
  %v163 = vmul.f32 %v95, %v154
  %v164 = vmul.f32 %v96, %v154
  %v165 = vmul.f32 %v97, %v154
  %v166 = vmul.f32 %v98, %v154
  %v167 = vmul.f32 %v99, %v154
  %v168 = vmul.f32 %v100, %v154
  %v169 = vmul.f32 %v101, %v154
  %v170 = vmul.f32 %v102, %v154
  %v171 = vmul.f32 %v103, %v154
  %v172 = vmul.f32 %v104, %v154
  %v173 = vmul.f32 %v105, %v154
  %v174 = vmul.f32 %v106, %v154
  %v175 = vmul.f32 %v107, %v154
  %v176 = vmul.f32 %v108, %v154
  %v177 = vmul.f32 %v109, %v154
  %v178 = vmul.f32 %v110, %v154
  %v179 = vmul.f32 %v111, %v154
  %v180 = vmul.f32 %v112, %v154
  %v181 = vmul.f32 %v113, %v154
  %v182 = vmul.f32 %v114, %v154
  %v183 = vmul.f32 %v115, %v154
  %v184 = vmul.f32 %v116, %v154
  %v185 = vmul.f32 %v117, %v154
  %v186 = vmul.f32 %v118, %v154
  %v187 = vmul.f32 %v119, %v154
  %v188 = vmul.f32 %v120, %v154
  %v189 = vmul.f32 %v121, %v154
  %v190 = vmul.f32 %v122, %v154
  %v191 = vmul.f32 %v123, %v154
  %v192 = vmul.f32 %v124, %v154
  %v193 = vmul.f32 %v125, %v154
  %v194 = vmul.f32 %v126, %v154
  %v195 = vmul.f32 %v127, %v154
  %v196 = vmul.f32 %v128, %v154
  %v197 = vmul.f32 %v129, %v154
  %v198 = vmul.f32 %v130, %v154
  %v199 = vmul.f32 %v131, %v154
  %v200 = vmul.f32 %v132, %v154
  %v201 = vmul.f32 %v133, %v154
  %v202 = vmul.f32 %v134, %v154
  %v203 = vmul.f32 %v135, %v154
  %v204 = vmul.f32 %v136, %v154
  %v205 = vmul.f32 %v137, %v154
  %v206 = vmul.f32 %v138, %v154
  %v207 = vmul.f32 %v139, %v154
  %v208 = vmul.f32 %v140, %v154
  %v209 = vmul.f32 %v141, %v154
  %v210 = vmul.f32 %v142, %v154
  %v211 = vmul.f32 %v143, %v154
  %v212 = vmul.f32 %v144, %v154
  %v213 = vmul.f32 %v145, %v154
  %v214 = vmul.f32 %v146, %v154
  %v215 = vmul.f32 %v147, %v154
  %v216 = vmul.f32 %v148, %v154
  %v217 = vmul.f32 %v149, %v154
  %v218 = vmul.f32 %v150, %v154
  %v219 = vmul.f32 %v151, %v154
  %v220 = vld [vmem:[%s3] sm:$0x1]
  %v222 = vperm.slane %v220, 0
  %v224 = vadd.f32 %v156, %v222
  %v225 = vadd.f32 %v157, %v222
  %v226 = vadd.f32 %v158, %v222
  %v227 = vadd.f32 %v159, %v222
  %v228 = vadd.f32 %v160, %v222
  %v229 = vadd.f32 %v161, %v222
  %v230 = vadd.f32 %v162, %v222
  %v231 = vadd.f32 %v163, %v222
  %v232 = vadd.f32 %v164, %v222
  %v233 = vadd.f32 %v165, %v222
  %v234 = vadd.f32 %v166, %v222
  %v235 = vadd.f32 %v167, %v222
  %v236 = vadd.f32 %v168, %v222
  %v237 = vadd.f32 %v169, %v222
  %v238 = vadd.f32 %v170, %v222
  %v239 = vadd.f32 %v171, %v222
  %v240 = vadd.f32 %v172, %v222
  %v241 = vadd.f32 %v173, %v222
  %v242 = vadd.f32 %v174, %v222
  %v243 = vadd.f32 %v175, %v222
  %v244 = vadd.f32 %v176, %v222
  %v245 = vadd.f32 %v177, %v222
  %v246 = vadd.f32 %v178, %v222
  %v247 = vadd.f32 %v179, %v222
  %v248 = vadd.f32 %v180, %v222
  %v249 = vadd.f32 %v181, %v222
  %v250 = vadd.f32 %v182, %v222
  %v251 = vadd.f32 %v183, %v222
  %v252 = vadd.f32 %v184, %v222
  %v253 = vadd.f32 %v185, %v222
  %v254 = vadd.f32 %v186, %v222
  %v255 = vadd.f32 %v187, %v222
  %v256 = vadd.f32 %v188, %v222
  %v257 = vadd.f32 %v189, %v222
  %v258 = vadd.f32 %v190, %v222
  %v259 = vadd.f32 %v191, %v222
  %v260 = vadd.f32 %v192, %v222
  %v261 = vadd.f32 %v193, %v222
  %v262 = vadd.f32 %v194, %v222
  %v263 = vadd.f32 %v195, %v222
  %v264 = vadd.f32 %v196, %v222
  %v265 = vadd.f32 %v197, %v222
  %v266 = vadd.f32 %v198, %v222
  %v267 = vadd.f32 %v199, %v222
  %v268 = vadd.f32 %v200, %v222
  %v269 = vadd.f32 %v201, %v222
  %v270 = vadd.f32 %v202, %v222
  %v271 = vadd.f32 %v203, %v222
  %v272 = vadd.f32 %v204, %v222
  %v273 = vadd.f32 %v205, %v222
  %v274 = vadd.f32 %v206, %v222
  %v275 = vadd.f32 %v207, %v222
  %v276 = vadd.f32 %v208, %v222
  %v277 = vadd.f32 %v209, %v222
  %v278 = vadd.f32 %v210, %v222
  %v279 = vadd.f32 %v211, %v222
  %v280 = vadd.f32 %v212, %v222
  %v281 = vadd.f32 %v213, %v222
  %v282 = vadd.f32 %v214, %v222
  %v283 = vadd.f32 %v215, %v222
  %v284 = vadd.f32 %v216, %v222
  %v285 = vadd.f32 %v217, %v222
  %v286 = vadd.f32 %v218, %v222
  %v287 = vadd.f32 %v219, %v222
  %v288 = vmax.f32 %v224, 0.0
  %v289 = vmax.f32 %v225, 0.0
  %v290 = vmax.f32 %v226, 0.0
  %v291 = vmax.f32 %v227, 0.0
  %v292 = vmax.f32 %v228, 0.0
  %v293 = vmax.f32 %v229, 0.0
  %v294 = vmax.f32 %v230, 0.0
  %v295 = vmax.f32 %v231, 0.0
  %v296 = vmax.f32 %v232, 0.0
  %v297 = vmax.f32 %v233, 0.0
  %v298 = vmax.f32 %v234, 0.0
  %v299 = vmax.f32 %v235, 0.0
  %v300 = vmax.f32 %v236, 0.0
  %v301 = vmax.f32 %v237, 0.0
  %v302 = vmax.f32 %v238, 0.0
  %v303 = vmax.f32 %v239, 0.0
  %v304 = vmax.f32 %v240, 0.0
  %v305 = vmax.f32 %v241, 0.0
  %v306 = vmax.f32 %v242, 0.0
  %v307 = vmax.f32 %v243, 0.0
  %v308 = vmax.f32 %v244, 0.0
  %v309 = vmax.f32 %v245, 0.0
  %v310 = vmax.f32 %v246, 0.0
  %v311 = vmax.f32 %v247, 0.0
  %v312 = vmax.f32 %v248, 0.0
  %v313 = vmax.f32 %v249, 0.0
  %v314 = vmax.f32 %v250, 0.0
  %v315 = vmax.f32 %v251, 0.0
  %v316 = vmax.f32 %v252, 0.0
  %v317 = vmax.f32 %v253, 0.0
  %v318 = vmax.f32 %v254, 0.0
  %v319 = vmax.f32 %v255, 0.0
  %v320 = vmax.f32 %v256, 0.0
  %v321 = vmax.f32 %v257, 0.0
  %v322 = vmax.f32 %v258, 0.0
  %v323 = vmax.f32 %v259, 0.0
  %v324 = vmax.f32 %v260, 0.0
  %v325 = vmax.f32 %v261, 0.0
  %v326 = vmax.f32 %v262, 0.0
  %v327 = vmax.f32 %v263, 0.0
  %v328 = vmax.f32 %v264, 0.0
  %v329 = vmax.f32 %v265, 0.0
  %v330 = vmax.f32 %v266, 0.0
  %v331 = vmax.f32 %v267, 0.0
  %v332 = vmax.f32 %v268, 0.0
  %v333 = vmax.f32 %v269, 0.0
  %v334 = vmax.f32 %v270, 0.0
  %v335 = vmax.f32 %v271, 0.0
  %v336 = vmax.f32 %v272, 0.0
  %v337 = vmax.f32 %v273, 0.0
  %v338 = vmax.f32 %v274, 0.0
  %v339 = vmax.f32 %v275, 0.0
  %v340 = vmax.f32 %v276, 0.0
  %v341 = vmax.f32 %v277, 0.0
  %v342 = vmax.f32 %v278, 0.0
  %v343 = vmax.f32 %v279, 0.0
  %v344 = vmax.f32 %v280, 0.0
  %v345 = vmax.f32 %v281, 0.0
  %v346 = vmax.f32 %v282, 0.0
  %v347 = vmax.f32 %v283, 0.0
  %v348 = vmax.f32 %v284, 0.0
  %v349 = vmax.f32 %v285, 0.0
  %v350 = vmax.f32 %v286, 0.0
  %v351 = vmax.f32 %v287, 0.0
  %v352 = vpack.c.bf16 %v289, %v288
  %v353 = vpack.c.bf16 %v291, %v290
  %v354 = vpack.c.bf16 %v293, %v292
  %v355 = vpack.c.bf16 %v295, %v294
  %v356 = vpack.c.bf16 %v297, %v296
  %v357 = vpack.c.bf16 %v299, %v298
  %v358 = vpack.c.bf16 %v301, %v300
  %v359 = vpack.c.bf16 %v303, %v302
  %v360 = vpack.c.bf16 %v305, %v304
  %v361 = vpack.c.bf16 %v307, %v306
  %v362 = vpack.c.bf16 %v309, %v308
  %v363 = vpack.c.bf16 %v311, %v310
  %v364 = vpack.c.bf16 %v313, %v312
  %v365 = vpack.c.bf16 %v315, %v314
  %v366 = vpack.c.bf16 %v317, %v316
  %v367 = vpack.c.bf16 %v319, %v318
  %v368 = vpack.c.bf16 %v321, %v320
  %v369 = vpack.c.bf16 %v323, %v322
  %v370 = vpack.c.bf16 %v325, %v324
  %v371 = vpack.c.bf16 %v327, %v326
  %v372 = vpack.c.bf16 %v329, %v328
  %v373 = vpack.c.bf16 %v331, %v330
  %v374 = vpack.c.bf16 %v333, %v332
  %v375 = vpack.c.bf16 %v335, %v334
  %v376 = vpack.c.bf16 %v337, %v336
  %v377 = vpack.c.bf16 %v339, %v338
  %v378 = vpack.c.bf16 %v341, %v340
  %v379 = vpack.c.bf16 %v343, %v342
  %v380 = vpack.c.bf16 %v345, %v344
  %v381 = vpack.c.bf16 %v347, %v346
  %v382 = vpack.c.bf16 %v349, %v348
  %v383 = vpack.c.bf16 %v351, %v350
  %v384 = vld [vmem:[%s1] sm:$0xf]
  %v385 = vld [vmem:[%s1 + $0x4] sm:$0xf]
  %v388 = vunpack.c.l.b16 %v384
  %v389 = vunpack.c.l.b16 %v385
  %v390 = vpack.c.b16 %v389, %v388
  %vm392 = vcmask 130048
  %v394 = vsel %vm392, %v352, 0
  %v397 = vsel %vm392, %v353, 0
  %v400 = vsel %vm392, %v354, 0
  %v403 = vsel %vm392, %v355, 0
  %v406 = vsel %vm392, %v356, 0
  %v409 = vsel %vm392, %v357, 0
  %v412 = vsel %vm392, %v358, 0
  %v415 = vsel %vm392, %v359, 0
  %v418 = vsel %vm392, %v360, 0
  %v421 = vsel %vm392, %v361, 0
  %v424 = vsel %vm392, %v362, 0
  %v427 = vsel %vm392, %v363, 0
  %v430 = vsel %vm392, %v364, 0
  %v433 = vsel %vm392, %v365, 0
  %v436 = vsel %vm392, %v366, 0
  %v439 = vsel %vm392, %v367, 0
  %v442 = vsel %vm392, %v368, 0
  %v445 = vsel %vm392, %v369, 0
  %v448 = vsel %vm392, %v370, 0
  %v451 = vsel %vm392, %v371, 0
  %v454 = vsel %vm392, %v372, 0
  %v457 = vsel %vm392, %v373, 0
  %v460 = vsel %vm392, %v374, 0
  %v463 = vsel %vm392, %v375, 0
  %v466 = vsel %vm392, %v376, 0
  %v469 = vsel %vm392, %v377, 0
  %v472 = vsel %vm392, %v378, 0
  %v475 = vsel %vm392, %v379, 0
  %v478 = vsel %vm392, %v380, 0
  %v481 = vsel %vm392, %v381, 0
  %v484 = vsel %vm392, %v382, 0
  %v487 = vsel %vm392, %v383, 0
  %489 = vmatpush.bf16.msra.mxu0 0
  %490 = vmatpush.bf16.msra.mxu0 0
  %491 = vmatpush.bf16.msra.mxu0 0
  %492 = vmatpush.bf16.msra.mxu0 0
  %493 = vmatpush.bf16.msra.mxu0 0
  %494 = vmatpush.bf16.msra.mxu0 0
  %495 = vmatpush.bf16.msra.mxu0 0
  %496 = vmatpush.bf16.msra.mxu0 %v390
  %497 = vmatmul.bf16.gmra.mxu0 %v394
  %v498 = vpop.f32.mrf.mxu0
  %v499 = vadd.f32 0.0, %v498
  %v500 = vpop.f32.mrf.mxu0
  %v501 = vadd.f32 0.0, %v500
  %502 = vmatmul.bf16.gmra.mxu0 %v397
  %v503 = vpop.f32.mrf.mxu0
  %v504 = vadd.f32 0.0, %v503
  %v505 = vpop.f32.mrf.mxu0
  %v506 = vadd.f32 0.0, %v505
  %507 = vmatmul.bf16.gmra.mxu0 %v400
  %v508 = vpop.f32.mrf.mxu0
  %v509 = vadd.f32 0.0, %v508
  %v510 = vpop.f32.mrf.mxu0
  %v511 = vadd.f32 0.0, %v510
  %512 = vmatmul.bf16.gmra.mxu0 %v403
  %v513 = vpop.f32.mrf.mxu0
  %v514 = vadd.f32 0.0, %v513
  %v515 = vpop.f32.mrf.mxu0
  %v516 = vadd.f32 0.0, %v515
  %517 = vmatmul.bf16.gmra.mxu0 %v406
  %v518 = vpop.f32.mrf.mxu0
  %v519 = vadd.f32 0.0, %v518
  %v520 = vpop.f32.mrf.mxu0
  %v521 = vadd.f32 0.0, %v520
  %522 = vmatmul.bf16.gmra.mxu0 %v409
  %v523 = vpop.f32.mrf.mxu0
  %v524 = vadd.f32 0.0, %v523
  %v525 = vpop.f32.mrf.mxu0
  %v526 = vadd.f32 0.0, %v525
  %527 = vmatmul.bf16.gmra.mxu0 %v412
  %v528 = vpop.f32.mrf.mxu0
  %v529 = vadd.f32 0.0, %v528
  %v530 = vpop.f32.mrf.mxu0
  %v531 = vadd.f32 0.0, %v530
  %532 = vmatmul.bf16.gmra.mxu0 %v415
  %v533 = vpop.f32.mrf.mxu0
  %v534 = vadd.f32 0.0, %v533
  %v535 = vpop.f32.mrf.mxu0
  %v536 = vadd.f32 0.0, %v535
  %537 = vmatmul.bf16.gmra.mxu0 %v418
  %v538 = vpop.f32.mrf.mxu0
  %v539 = vadd.f32 0.0, %v538
  %v540 = vpop.f32.mrf.mxu0
  %v541 = vadd.f32 0.0, %v540
  %542 = vmatmul.bf16.gmra.mxu0 %v421
  %v543 = vpop.f32.mrf.mxu0
  %v544 = vadd.f32 0.0, %v543
  %v545 = vpop.f32.mrf.mxu0
  %v546 = vadd.f32 0.0, %v545
  %547 = vmatmul.bf16.gmra.mxu0 %v424
  %v548 = vpop.f32.mrf.mxu0
  %v549 = vadd.f32 0.0, %v548
  %v550 = vpop.f32.mrf.mxu0
  %v551 = vadd.f32 0.0, %v550
  %552 = vmatmul.bf16.gmra.mxu0 %v427
  %v553 = vpop.f32.mrf.mxu0
  %v554 = vadd.f32 0.0, %v553
  %v555 = vpop.f32.mrf.mxu0
  %v556 = vadd.f32 0.0, %v555
  %557 = vmatmul.bf16.gmra.mxu0 %v430
  %v558 = vpop.f32.mrf.mxu0
  %v559 = vadd.f32 0.0, %v558
  %v560 = vpop.f32.mrf.mxu0
  %v561 = vadd.f32 0.0, %v560
  %562 = vmatmul.bf16.gmra.mxu0 %v433
  %v563 = vpop.f32.mrf.mxu0
  %v564 = vadd.f32 0.0, %v563
  %v565 = vpop.f32.mrf.mxu0
  %v566 = vadd.f32 0.0, %v565
  %567 = vmatmul.bf16.gmra.mxu0 %v436
  %v568 = vpop.f32.mrf.mxu0
  %v569 = vadd.f32 0.0, %v568
  %v570 = vpop.f32.mrf.mxu0
  %v571 = vadd.f32 0.0, %v570
  %572 = vmatmul.bf16.gmra.mxu0 %v439
  %v573 = vpop.f32.mrf.mxu0
  %v574 = vadd.f32 0.0, %v573
  %v575 = vpop.f32.mrf.mxu0
  %v576 = vadd.f32 0.0, %v575
  %577 = vmatmul.bf16.gmra.mxu0 %v442
  %v578 = vpop.f32.mrf.mxu0
  %v579 = vadd.f32 0.0, %v578
  %v580 = vpop.f32.mrf.mxu0
  %v581 = vadd.f32 0.0, %v580
  %582 = vmatmul.bf16.gmra.mxu0 %v445
  %v583 = vpop.f32.mrf.mxu0
  %v584 = vadd.f32 0.0, %v583
  %v585 = vpop.f32.mrf.mxu0
  %v586 = vadd.f32 0.0, %v585
  %587 = vmatmul.bf16.gmra.mxu0 %v448
  %v588 = vpop.f32.mrf.mxu0
  %v589 = vadd.f32 0.0, %v588
  %v590 = vpop.f32.mrf.mxu0
  %v591 = vadd.f32 0.0, %v590
  %592 = vmatmul.bf16.gmra.mxu0 %v451
  %v593 = vpop.f32.mrf.mxu0
  %v594 = vadd.f32 0.0, %v593
  %v595 = vpop.f32.mrf.mxu0
  %v596 = vadd.f32 0.0, %v595
  %597 = vmatmul.bf16.gmra.mxu0 %v454
  %v598 = vpop.f32.mrf.mxu0
  %v599 = vadd.f32 0.0, %v598
  %v600 = vpop.f32.mrf.mxu0
  %v601 = vadd.f32 0.0, %v600
  %602 = vmatmul.bf16.gmra.mxu0 %v457
  %v603 = vpop.f32.mrf.mxu0
  %v604 = vadd.f32 0.0, %v603
  %v605 = vpop.f32.mrf.mxu0
  %v606 = vadd.f32 0.0, %v605
  %607 = vmatmul.bf16.gmra.mxu0 %v460
  %v608 = vpop.f32.mrf.mxu0
  %v609 = vadd.f32 0.0, %v608
  %v610 = vpop.f32.mrf.mxu0
  %v611 = vadd.f32 0.0, %v610
  %612 = vmatmul.bf16.gmra.mxu0 %v463
  %v613 = vpop.f32.mrf.mxu0
  %v614 = vadd.f32 0.0, %v613
  %v615 = vpop.f32.mrf.mxu0
  %v616 = vadd.f32 0.0, %v615
  %617 = vmatmul.bf16.gmra.mxu0 %v466
  %v618 = vpop.f32.mrf.mxu0
  %v619 = vadd.f32 0.0, %v618
  %v620 = vpop.f32.mrf.mxu0
  %v621 = vadd.f32 0.0, %v620
  %622 = vmatmul.bf16.gmra.mxu0 %v469
  %v623 = vpop.f32.mrf.mxu0
  %v624 = vadd.f32 0.0, %v623
  %v625 = vpop.f32.mrf.mxu0
  %v626 = vadd.f32 0.0, %v625
  %627 = vmatmul.bf16.gmra.mxu0 %v472
  %v628 = vpop.f32.mrf.mxu0
  %v629 = vadd.f32 0.0, %v628
  %v630 = vpop.f32.mrf.mxu0
  %v631 = vadd.f32 0.0, %v630
  %632 = vmatmul.bf16.gmra.mxu0 %v475
  %v633 = vpop.f32.mrf.mxu0
  %v634 = vadd.f32 0.0, %v633
  %v635 = vpop.f32.mrf.mxu0
  %v636 = vadd.f32 0.0, %v635
  %637 = vmatmul.bf16.gmra.mxu0 %v478
  %v638 = vpop.f32.mrf.mxu0
  %v639 = vadd.f32 0.0, %v638
  %v640 = vpop.f32.mrf.mxu0
  %v641 = vadd.f32 0.0, %v640
  %642 = vmatmul.bf16.gmra.mxu0 %v481
  %v643 = vpop.f32.mrf.mxu0
  %v644 = vadd.f32 0.0, %v643
  %v645 = vpop.f32.mrf.mxu0
  %v646 = vadd.f32 0.0, %v645
  %647 = vmatmul.bf16.gmra.mxu0 %v484
  %v648 = vpop.f32.mrf.mxu0
  %v649 = vadd.f32 0.0, %v648
  %v650 = vpop.f32.mrf.mxu0
  %v651 = vadd.f32 0.0, %v650
  %652 = vmatmul.bf16.gmra.mxu0 %v487
  %v653 = vpop.f32.mrf.mxu0
  %v654 = vadd.f32 0.0, %v653
  %v655 = vpop.f32.mrf.mxu0
  %v656 = vadd.f32 0.0, %v655
  %657 = vdwg.mxu0
  %v658 = vld [vmem:[%s4] sm:$0x1]
  %v660 = vperm.slane %v658, 0
  %v662 = vmul.f32 %v499, %v660
  %v663 = vmul.f32 %v501, %v660
  %v664 = vmul.f32 %v504, %v660
  %v665 = vmul.f32 %v506, %v660
  %v666 = vmul.f32 %v509, %v660
  %v667 = vmul.f32 %v511, %v660
  %v668 = vmul.f32 %v514, %v660
  %v669 = vmul.f32 %v516, %v660
  %v670 = vmul.f32 %v519, %v660
  %v671 = vmul.f32 %v521, %v660
  %v672 = vmul.f32 %v524, %v660
  %v673 = vmul.f32 %v526, %v660
  %v674 = vmul.f32 %v529, %v660
  %v675 = vmul.f32 %v531, %v660
  %v676 = vmul.f32 %v534, %v660
  %v677 = vmul.f32 %v536, %v660
  %v678 = vmul.f32 %v539, %v660
  %v679 = vmul.f32 %v541, %v660
  %v680 = vmul.f32 %v544, %v660
  %v681 = vmul.f32 %v546, %v660
  %v682 = vmul.f32 %v549, %v660
  %v683 = vmul.f32 %v551, %v660
  %v684 = vmul.f32 %v554, %v660
  %v685 = vmul.f32 %v556, %v660
  %v686 = vmul.f32 %v559, %v660
  %v687 = vmul.f32 %v561, %v660
  %v688 = vmul.f32 %v564, %v660
  %v689 = vmul.f32 %v566, %v660
  %v690 = vmul.f32 %v569, %v660
  %v691 = vmul.f32 %v571, %v660
  %v692 = vmul.f32 %v574, %v660
  %v693 = vmul.f32 %v576, %v660
  %v694 = vmul.f32 %v579, %v660
  %v695 = vmul.f32 %v581, %v660
  %v696 = vmul.f32 %v584, %v660
  %v697 = vmul.f32 %v586, %v660
  %v698 = vmul.f32 %v589, %v660
  %v699 = vmul.f32 %v591, %v660
  %v700 = vmul.f32 %v594, %v660
  %v701 = vmul.f32 %v596, %v660
  %v702 = vmul.f32 %v599, %v660
  %v703 = vmul.f32 %v601, %v660
  %v704 = vmul.f32 %v604, %v660
  %v705 = vmul.f32 %v606, %v660
  %v706 = vmul.f32 %v609, %v660
  %v707 = vmul.f32 %v611, %v660
  %v708 = vmul.f32 %v614, %v660
  %v709 = vmul.f32 %v616, %v660
  %v710 = vmul.f32 %v619, %v660
  %v711 = vmul.f32 %v621, %v660
  %v712 = vmul.f32 %v624, %v660
  %v713 = vmul.f32 %v626, %v660
  %v714 = vmul.f32 %v629, %v660
  %v715 = vmul.f32 %v631, %v660
  %v716 = vmul.f32 %v634, %v660
  %v717 = vmul.f32 %v636, %v660
  %v718 = vmul.f32 %v639, %v660
  %v719 = vmul.f32 %v641, %v660
  %v720 = vmul.f32 %v644, %v660
  %v721 = vmul.f32 %v646, %v660
  %v722 = vmul.f32 %v649, %v660
  %v723 = vmul.f32 %v651, %v660
  %v724 = vmul.f32 %v654, %v660
  %v725 = vmul.f32 %v656, %v660
  %v726 = vld [vmem:[%s5] sm:$0x1]
  %v728 = vperm.slane %v726, 0
  %v730 = vadd.f32 %v662, %v728
  %v731 = vadd.f32 %v663, %v728
  %v732 = vadd.f32 %v664, %v728
  %v733 = vadd.f32 %v665, %v728
  %v734 = vadd.f32 %v666, %v728
  %v735 = vadd.f32 %v667, %v728
  %v736 = vadd.f32 %v668, %v728
  %v737 = vadd.f32 %v669, %v728
  %v738 = vadd.f32 %v670, %v728
  %v739 = vadd.f32 %v671, %v728
  %v740 = vadd.f32 %v672, %v728
  %v741 = vadd.f32 %v673, %v728
  %v742 = vadd.f32 %v674, %v728
  %v743 = vadd.f32 %v675, %v728
  %v744 = vadd.f32 %v676, %v728
  %v745 = vadd.f32 %v677, %v728
  %v746 = vadd.f32 %v678, %v728
  %v747 = vadd.f32 %v679, %v728
  %v748 = vadd.f32 %v680, %v728
  %v749 = vadd.f32 %v681, %v728
  %v750 = vadd.f32 %v682, %v728
  %v751 = vadd.f32 %v683, %v728
  %v752 = vadd.f32 %v684, %v728
  %v753 = vadd.f32 %v685, %v728
  %v754 = vadd.f32 %v686, %v728
  %v755 = vadd.f32 %v687, %v728
  %v756 = vadd.f32 %v688, %v728
  %v757 = vadd.f32 %v689, %v728
  %v758 = vadd.f32 %v690, %v728
  %v759 = vadd.f32 %v691, %v728
  %v760 = vadd.f32 %v692, %v728
  %v761 = vadd.f32 %v693, %v728
  %v762 = vadd.f32 %v694, %v728
  %v763 = vadd.f32 %v695, %v728
  %v764 = vadd.f32 %v696, %v728
  %v765 = vadd.f32 %v697, %v728
  %v766 = vadd.f32 %v698, %v728
  %v767 = vadd.f32 %v699, %v728
  %v768 = vadd.f32 %v700, %v728
  %v769 = vadd.f32 %v701, %v728
  %v770 = vadd.f32 %v702, %v728
  %v771 = vadd.f32 %v703, %v728
  %v772 = vadd.f32 %v704, %v728
  %v773 = vadd.f32 %v705, %v728
  %v774 = vadd.f32 %v706, %v728
  %v775 = vadd.f32 %v707, %v728
  %v776 = vadd.f32 %v708, %v728
  %v777 = vadd.f32 %v709, %v728
  %v778 = vadd.f32 %v710, %v728
  %v779 = vadd.f32 %v711, %v728
  %v780 = vadd.f32 %v712, %v728
  %v781 = vadd.f32 %v713, %v728
  %v782 = vadd.f32 %v714, %v728
  %v783 = vadd.f32 %v715, %v728
  %v784 = vadd.f32 %v716, %v728
  %v785 = vadd.f32 %v717, %v728
  %v786 = vadd.f32 %v718, %v728
  %v787 = vadd.f32 %v719, %v728
  %v788 = vadd.f32 %v720, %v728
  %v789 = vadd.f32 %v721, %v728
  %v790 = vadd.f32 %v722, %v728
  %v791 = vadd.f32 %v723, %v728
  %v792 = vadd.f32 %v724, %v728
  %v793 = vadd.f32 %v725, %v728
  %v794 = vmax.f32 %v730, 0.0
  %v795 = vmax.f32 %v731, 0.0
  %v796 = vmax.f32 %v732, 0.0
  %v797 = vmax.f32 %v733, 0.0
  %v798 = vmax.f32 %v734, 0.0
  %v799 = vmax.f32 %v735, 0.0
  %v800 = vmax.f32 %v736, 0.0
  %v801 = vmax.f32 %v737, 0.0
  %v802 = vmax.f32 %v738, 0.0
  %v803 = vmax.f32 %v739, 0.0
  %v804 = vmax.f32 %v740, 0.0
  %v805 = vmax.f32 %v741, 0.0
  %v806 = vmax.f32 %v742, 0.0
  %v807 = vmax.f32 %v743, 0.0
  %v808 = vmax.f32 %v744, 0.0
  %v809 = vmax.f32 %v745, 0.0
  %v810 = vmax.f32 %v746, 0.0
  %v811 = vmax.f32 %v747, 0.0
  %v812 = vmax.f32 %v748, 0.0
  %v813 = vmax.f32 %v749, 0.0
  %v814 = vmax.f32 %v750, 0.0
  %v815 = vmax.f32 %v751, 0.0
  %v816 = vmax.f32 %v752, 0.0
  %v817 = vmax.f32 %v753, 0.0
  %v818 = vmax.f32 %v754, 0.0
  %v819 = vmax.f32 %v755, 0.0
  %v820 = vmax.f32 %v756, 0.0
  %v821 = vmax.f32 %v757, 0.0
  %v822 = vmax.f32 %v758, 0.0
  %v823 = vmax.f32 %v759, 0.0
  %v824 = vmax.f32 %v760, 0.0
  %v825 = vmax.f32 %v761, 0.0
  %v826 = vmax.f32 %v762, 0.0
  %v827 = vmax.f32 %v763, 0.0
  %v828 = vmax.f32 %v764, 0.0
  %v829 = vmax.f32 %v765, 0.0
  %v830 = vmax.f32 %v766, 0.0
  %v831 = vmax.f32 %v767, 0.0
  %v832 = vmax.f32 %v768, 0.0
  %v833 = vmax.f32 %v769, 0.0
  %v834 = vmax.f32 %v770, 0.0
  %v835 = vmax.f32 %v771, 0.0
  %v836 = vmax.f32 %v772, 0.0
  %v837 = vmax.f32 %v773, 0.0
  %v838 = vmax.f32 %v774, 0.0
  %v839 = vmax.f32 %v775, 0.0
  %v840 = vmax.f32 %v776, 0.0
  %v841 = vmax.f32 %v777, 0.0
  %v842 = vmax.f32 %v778, 0.0
  %v843 = vmax.f32 %v779, 0.0
  %v844 = vmax.f32 %v780, 0.0
  %v845 = vmax.f32 %v781, 0.0
  %v846 = vmax.f32 %v782, 0.0
  %v847 = vmax.f32 %v783, 0.0
  %v848 = vmax.f32 %v784, 0.0
  %v849 = vmax.f32 %v785, 0.0
  %v850 = vmax.f32 %v786, 0.0
  %v851 = vmax.f32 %v787, 0.0
  %v852 = vmax.f32 %v788, 0.0
  %v853 = vmax.f32 %v789, 0.0
  %v854 = vmax.f32 %v790, 0.0
  %v855 = vmax.f32 %v791, 0.0
  %v856 = vmax.f32 %v792, 0.0
  %v857 = vmax.f32 %v793, 0.0
  %v858 = vpack.c.bf16 %v794, %v794
  %v859 = vpack.c.bf16 %v795, %v795
  %v860 = vpack.c.bf16 %v796, %v796
  %v861 = vpack.c.bf16 %v797, %v797
  %v862 = vpack.c.bf16 %v798, %v798
  %v863 = vpack.c.bf16 %v799, %v799
  %v864 = vpack.c.bf16 %v800, %v800
  %v865 = vpack.c.bf16 %v801, %v801
  %v866 = vpack.c.bf16 %v802, %v802
  %v867 = vpack.c.bf16 %v803, %v803
  %v868 = vpack.c.bf16 %v804, %v804
  %v869 = vpack.c.bf16 %v805, %v805
  %v870 = vpack.c.bf16 %v806, %v806
  %v871 = vpack.c.bf16 %v807, %v807
  %v872 = vpack.c.bf16 %v808, %v808
  %v873 = vpack.c.bf16 %v809, %v809
  %v874 = vpack.c.bf16 %v810, %v810
  %v875 = vpack.c.bf16 %v811, %v811
  %v876 = vpack.c.bf16 %v812, %v812
  %v877 = vpack.c.bf16 %v813, %v813
  %v878 = vpack.c.bf16 %v814, %v814
  %v879 = vpack.c.bf16 %v815, %v815
  %v880 = vpack.c.bf16 %v816, %v816
  %v881 = vpack.c.bf16 %v817, %v817
  %v882 = vpack.c.bf16 %v818, %v818
  %v883 = vpack.c.bf16 %v819, %v819
  %v884 = vpack.c.bf16 %v820, %v820
  %v885 = vpack.c.bf16 %v821, %v821
  %v886 = vpack.c.bf16 %v822, %v822
  %v887 = vpack.c.bf16 %v823, %v823
  %v888 = vpack.c.bf16 %v824, %v824
  %v889 = vpack.c.bf16 %v825, %v825
  %v890 = vpack.c.bf16 %v826, %v826
  %v891 = vpack.c.bf16 %v827, %v827
  %v892 = vpack.c.bf16 %v828, %v828
  %v893 = vpack.c.bf16 %v829, %v829
  %v894 = vpack.c.bf16 %v830, %v830
  %v895 = vpack.c.bf16 %v831, %v831
  %v896 = vpack.c.bf16 %v832, %v832
  %v897 = vpack.c.bf16 %v833, %v833
  %v898 = vpack.c.bf16 %v834, %v834
  %v899 = vpack.c.bf16 %v835, %v835
  %v900 = vpack.c.bf16 %v836, %v836
  %v901 = vpack.c.bf16 %v837, %v837
  %v902 = vpack.c.bf16 %v838, %v838
  %v903 = vpack.c.bf16 %v839, %v839
  %v904 = vpack.c.bf16 %v840, %v840
  %v905 = vpack.c.bf16 %v841, %v841
  %v906 = vpack.c.bf16 %v842, %v842
  %v907 = vpack.c.bf16 %v843, %v843
  %v908 = vpack.c.bf16 %v844, %v844
  %v909 = vpack.c.bf16 %v845, %v845
  %v910 = vpack.c.bf16 %v846, %v846
  %v911 = vpack.c.bf16 %v847, %v847
  %v912 = vpack.c.bf16 %v848, %v848
  %v913 = vpack.c.bf16 %v849, %v849
  %v914 = vpack.c.bf16 %v850, %v850
  %v915 = vpack.c.bf16 %v851, %v851
  %v916 = vpack.c.bf16 %v852, %v852
  %v917 = vpack.c.bf16 %v853, %v853
  %v918 = vpack.c.bf16 %v854, %v854
  %v919 = vpack.c.bf16 %v855, %v855
  %v920 = vpack.c.bf16 %v856, %v856
  %v921 = vpack.c.bf16 %v857, %v857
  %922 = vst [vmem:[%s6] sm:$0xf] %v858
  %923 = vst [vmem:[%s6 + $0x4] sm:$0xf] %v859
  %924 = vst [vmem:[%s6 + $0x8] sm:$0xf] %v860
  %925 = vst [vmem:[%s6 + $0xc] sm:$0xf] %v861
  %926 = vst [vmem:[%s6 + $0x10] sm:$0xf] %v862
  %927 = vst [vmem:[%s6 + $0x14] sm:$0xf] %v863
  %928 = vst [vmem:[%s6 + $0x18] sm:$0xf] %v864
  %929 = vst [vmem:[%s6 + $0x1c] sm:$0xf] %v865
  %930 = vst [vmem:[%s6 + $0x20] sm:$0xf] %v866
  %931 = vst [vmem:[%s6 + $0x24] sm:$0xf] %v867
  %932 = vst [vmem:[%s6 + $0x28] sm:$0xf] %v868
  %933 = vst [vmem:[%s6 + $0x2c] sm:$0xf] %v869
  %934 = vst [vmem:[%s6 + $0x30] sm:$0xf] %v870
  %935 = vst [vmem:[%s6 + $0x34] sm:$0xf] %v871
  %936 = vst [vmem:[%s6 + $0x38] sm:$0xf] %v872
  %937 = vst [vmem:[%s6 + $0x3c] sm:$0xf] %v873
  %938 = vst [vmem:[%s6 + $0x40] sm:$0xf] %v874
  %939 = vst [vmem:[%s6 + $0x44] sm:$0xf] %v875
  %940 = vst [vmem:[%s6 + $0x48] sm:$0xf] %v876
  %941 = vst [vmem:[%s6 + $0x4c] sm:$0xf] %v877
  %942 = vst [vmem:[%s6 + $0x50] sm:$0xf] %v878
  %943 = vst [vmem:[%s6 + $0x54] sm:$0xf] %v879
  %944 = vst [vmem:[%s6 + $0x58] sm:$0xf] %v880
  %945 = vst [vmem:[%s6 + $0x5c] sm:$0xf] %v881
  %946 = vst [vmem:[%s6 + $0x60] sm:$0xf] %v882
  %947 = vst [vmem:[%s6 + $0x64] sm:$0xf] %v883
  %948 = vst [vmem:[%s6 + $0x68] sm:$0xf] %v884
  %949 = vst [vmem:[%s6 + $0x6c] sm:$0xf] %v885
  %950 = vst [vmem:[%s6 + $0x70] sm:$0xf] %v886
  %951 = vst [vmem:[%s6 + $0x74] sm:$0xf] %v887
  %952 = vst [vmem:[%s6 + $0x78] sm:$0xf] %v888
  %953 = vst [vmem:[%s6 + $0x7c] sm:$0xf] %v889
  %954 = vst [vmem:[%s6 + $0x80] sm:$0xf] %v890
  %955 = vst [vmem:[%s6 + $0x84] sm:$0xf] %v891
  %956 = vst [vmem:[%s6 + $0x88] sm:$0xf] %v892
  %957 = vst [vmem:[%s6 + $0x8c] sm:$0xf] %v893
  %958 = vst [vmem:[%s6 + $0x90] sm:$0xf] %v894
  %959 = vst [vmem:[%s6 + $0x94] sm:$0xf] %v895
  %960 = vst [vmem:[%s6 + $0x98] sm:$0xf] %v896
  %961 = vst [vmem:[%s6 + $0x9c] sm:$0xf] %v897
  %962 = vst [vmem:[%s6 + $0xa0] sm:$0xf] %v898
  %963 = vst [vmem:[%s6 + $0xa4] sm:$0xf] %v899
  %964 = vst [vmem:[%s6 + $0xa8] sm:$0xf] %v900
  %965 = vst [vmem:[%s6 + $0xac] sm:$0xf] %v901
  %966 = vst [vmem:[%s6 + $0xb0] sm:$0xf] %v902
  %967 = vst [vmem:[%s6 + $0xb4] sm:$0xf] %v903
  %968 = vst [vmem:[%s6 + $0xb8] sm:$0xf] %v904
  %969 = vst [vmem:[%s6 + $0xbc] sm:$0xf] %v905
  %970 = vst [vmem:[%s6 + $0xc0] sm:$0xf] %v906
  %971 = vst [vmem:[%s6 + $0xc4] sm:$0xf] %v907
  %972 = vst [vmem:[%s6 + $0xc8] sm:$0xf] %v908
  %973 = vst [vmem:[%s6 + $0xcc] sm:$0xf] %v909
  %974 = vst [vmem:[%s6 + $0xd0] sm:$0xf] %v910
  %975 = vst [vmem:[%s6 + $0xd4] sm:$0xf] %v911
  %976 = vst [vmem:[%s6 + $0xd8] sm:$0xf] %v912
  %977 = vst [vmem:[%s6 + $0xdc] sm:$0xf] %v913
  %978 = vst [vmem:[%s6 + $0xe0] sm:$0xf] %v914
  %979 = vst [vmem:[%s6 + $0xe4] sm:$0xf] %v915
  %980 = vst [vmem:[%s6 + $0xe8] sm:$0xf] %v916
  %981 = vst [vmem:[%s6 + $0xec] sm:$0xf] %v917
  %982 = vst [vmem:[%s6 + $0xf0] sm:$0xf] %v918
  %983 = vst [vmem:[%s6 + $0xf4] sm:$0xf] %v919
  %984 = vst [vmem:[%s6 + $0xf8] sm:$0xf] %v920
  %985 = vst [vmem:[%s6 + $0xfc] sm:$0xf] %v921
  // Predicated region
  $region26: #{image_encoder_forward.27} parent=0 // pred_check
    _
  $region27: #{image_encoder_forward.27} parent=0 // pred_check_branch
    %987 = sbr.rel (0) target = $region29
  $region28: #{image_encoder_forward.27} parent=0 // pred_region
    _
  $region29: #{image_encoder_forward.27} parent=0 // pred_fallthru
    _
  // Predicated region
  $region30: #{image_encoder_forward.27} parent=0 // pred_check
    _
  $region31: #{image_encoder_forward.27} parent=0 // pred_check_branch
    %989 = sbr.rel (0) target = $region33
  $region32: #{image_encoder_forward.27} parent=0 // pred_region
    _
  $region33: #{image_encoder_forward.27} parent=0 // pred_fallthru
    _

// kernel: image_encoder_forward.28
$region0: #{image_encoder_forward.28}
  #allocation0 [shape = 'u32[]', space=smem, size = 0x4, offset = 0x4, fixed_abs, tag = 'smem constant byte address 0x4 - core index']
  #allocation1 [shape = 'u32[72,128]{1,0:T(1,128)}', space=vmem, size = 0x9000, scoped, tag = 'internal scratch']
  %s0 = inlined_call_operand.vmem [shape: bf16[512,288], index: 0, kind: input, shape index: {}]
  %s1 = inlined_call_operand.vmem [shape: bf16[288,128], index: 1, kind: input, shape index: {}]
  %s2 = inlined_call_operand.vmem [shape: bf16[512,128], index: 2, kind: output, shape index: {}]
  %s3 = sld [smem:[#allocation0]]
  $region18: #{image_encoder_forward.28} parent=0
    _
  %s5 = ssub.s32 1, %s3
  %s6 = scalar_select 0, %s5, %s3
  // Predicated region
  $region2: #{image_encoder_forward.28} parent=0 // pred_check
    _
  $region3: #{image_encoder_forward.28} parent=0 // pred_check_branch
    %8 = sbr.rel (0) target = $region5
  $region4: #{image_encoder_forward.28} parent=0 // pred_region
    _
  $region5: #{image_encoder_forward.28} parent=0 // pred_fallthru
    _
  // Predicated region
  $region6: #{image_encoder_forward.28} parent=0 // pred_check
    _
  $region7: #{image_encoder_forward.28} parent=0 // pred_check_branch
    %10 = sbr.rel (0) target = $region9
  $region8: #{image_encoder_forward.28} parent=0 // pred_region
    _
  $region9: #{image_encoder_forward.28} parent=0 // pred_fallthru
    _
  %v12 = vld [vmem:[%s0] sm:$0xff]
  %v13 = vld [vmem:[%s0 + $0x8] sm:$0xf]
  %v14 = vld [vmem:[%s0 + $0xc] sm:$0xff]
  %v15 = vld [vmem:[%s0 + $0x14] sm:$0xf]
  %v16 = vld [vmem:[%s0 + $0x18] sm:$0xff]
  %v17 = vld [vmem:[%s0 + $0x20] sm:$0xf]
  %v18 = vld [vmem:[%s0 + $0x24] sm:$0xff]
  %v19 = vld [vmem:[%s0 + $0x2c] sm:$0xf]
  %v20 = vld [vmem:[%s0 + $0x30] sm:$0xff]
  %v21 = vld [vmem:[%s0 + $0x38] sm:$0xf]
  %v22 = vld [vmem:[%s0 + $0x3c] sm:$0xff]
  %v23 = vld [vmem:[%s0 + $0x44] sm:$0xf]
  %v24 = vld [vmem:[%s0 + $0x48] sm:$0xff]
  %v25 = vld [vmem:[%s0 + $0x50] sm:$0xf]
  %v26 = vld [vmem:[%s0 + $0x54] sm:$0xff]
  %v27 = vld [vmem:[%s0 + $0x5c] sm:$0xf]
  %v28 = vld [vmem:[%s0 + $0x60] sm:$0xff]
  %v29 = vld [vmem:[%s0 + $0x68] sm:$0xf]
  %v30 = vld [vmem:[%s0 + $0x6c] sm:$0xff]
  %v31 = vld [vmem:[%s0 + $0x74] sm:$0xf]
  %v32 = vld [vmem:[%s0 + $0x78] sm:$0xff]
  %v33 = vld [vmem:[%s0 + $0x80] sm:$0xf]
  %v34 = vld [vmem:[%s0 + $0x84] sm:$0xff]
  %v35 = vld [vmem:[%s0 + $0x8c] sm:$0xf]
  %v36 = vld [vmem:[%s0 + $0x90] sm:$0xff]
  %v37 = vld [vmem:[%s0 + $0x98] sm:$0xf]
  %v38 = vld [vmem:[%s0 + $0x9c] sm:$0xff]
  %v39 = vld [vmem:[%s0 + $0xa4] sm:$0xf]
  %v40 = vld [vmem:[%s0 + $0xa8] sm:$0xff]
  %v41 = vld [vmem:[%s0 + $0xb0] sm:$0xf]
  %v42 = vld [vmem:[%s0 + $0xb4] sm:$0xff]
  %v43 = vld [vmem:[%s0 + $0xbc] sm:$0xf]
  %v44 = vld [vmem:[%s0 + $0xc0] sm:$0xff]
  %v45 = vld [vmem:[%s0 + $0xc8] sm:$0xf]
  %v46 = vld [vmem:[%s0 + $0xcc] sm:$0xff]
  %v47 = vld [vmem:[%s0 + $0xd4] sm:$0xf]
  %v48 = vld [vmem:[%s0 + $0xd8] sm:$0xff]
  %v49 = vld [vmem:[%s0 + $0xe0] sm:$0xf]
  %v50 = vld [vmem:[%s0 + $0xe4] sm:$0xff]
  %v51 = vld [vmem:[%s0 + $0xec] sm:$0xf]
  %v52 = vld [vmem:[%s0 + $0xf0] sm:$0xff]
  %v53 = vld [vmem:[%s0 + $0xf8] sm:$0xf]
  %v54 = vld [vmem:[%s0 + $0xfc] sm:$0xff]
  %v55 = vld [vmem:[%s0 + $0x104] sm:$0xf]
  %v56 = vld [vmem:[%s0 + $0x108] sm:$0xff]
  %v57 = vld [vmem:[%s0 + $0x110] sm:$0xf]
  %v58 = vld [vmem:[%s0 + $0x114] sm:$0xff]
  %v59 = vld [vmem:[%s0 + $0x11c] sm:$0xf]
  %v60 = vld [vmem:[%s0 + $0x120] sm:$0xff]
  %v61 = vld [vmem:[%s0 + $0x128] sm:$0xf]
  %v62 = vld [vmem:[%s0 + $0x12c] sm:$0xff]
  %v63 = vld [vmem:[%s0 + $0x134] sm:$0xf]
  %v64 = vld [vmem:[%s0 + $0x138] sm:$0xff]
  %v65 = vld [vmem:[%s0 + $0x140] sm:$0xf]
  %v66 = vld [vmem:[%s0 + $0x144] sm:$0xff]
  %v67 = vld [vmem:[%s0 + $0x14c] sm:$0xf]
  %v68 = vld [vmem:[%s0 + $0x150] sm:$0xff]
  %v69 = vld [vmem:[%s0 + $0x158] sm:$0xf]
  %v70 = vld [vmem:[%s0 + $0x15c] sm:$0xff]
  %v71 = vld [vmem:[%s0 + $0x164] sm:$0xf]
  %v72 = vld [vmem:[%s0 + $0x168] sm:$0xff]
  %v73 = vld [vmem:[%s0 + $0x170] sm:$0xf]
  %v74 = vld [vmem:[%s0 + $0x174] sm:$0xff]
  %v75 = vld [vmem:[%s0 + $0x17c] sm:$0xf]
  %v76 = vld [vmem:[%s0 + $0x180] sm:$0xff]
  %v77 = vld [vmem:[%s0 + $0x188] sm:$0xf]
  %v78 = vld [vmem:[%s0 + $0x18c] sm:$0xff]
  %v79 = vld [vmem:[%s0 + $0x194] sm:$0xf]
  %v80 = vld [vmem:[%s0 + $0x198] sm:$0xff]
  %v81 = vld [vmem:[%s0 + $0x1a0] sm:$0xf]
  %v82 = vld [vmem:[%s0 + $0x1a4] sm:$0xff]
  %v83 = vld [vmem:[%s0 + $0x1ac] sm:$0xf]
  %v84 = vld [vmem:[%s0 + $0x1b0] sm:$0xff]
  %v85 = vld [vmem:[%s0 + $0x1b8] sm:$0xf]
  %v86 = vld [vmem:[%s0 + $0x1bc] sm:$0xff]
  %v87 = vld [vmem:[%s0 + $0x1c4] sm:$0xf]
  %v88 = vld [vmem:[%s0 + $0x1c8] sm:$0xff]
  %v89 = vld [vmem:[%s0 + $0x1d0] sm:$0xf]
  %v90 = vld [vmem:[%s0 + $0x1d4] sm:$0xff]
  %v91 = vld [vmem:[%s0 + $0x1dc] sm:$0xf]
  %v92 = vld [vmem:[%s0 + $0x1e0] sm:$0xff]
  %v93 = vld [vmem:[%s0 + $0x1e8] sm:$0xf]
  %v94 = vld [vmem:[%s0 + $0x1ec] sm:$0xff]
  %v95 = vld [vmem:[%s0 + $0x1f4] sm:$0xf]
  %v96 = vld [vmem:[%s0 + $0x1f8] sm:$0xff]
  %v97 = vld [vmem:[%s0 + $0x200] sm:$0xf]
  %v98 = vld [vmem:[%s0 + $0x204] sm:$0xff]
  %v99 = vld [vmem:[%s0 + $0x20c] sm:$0xf]
  %v100 = vld [vmem:[%s0 + $0x210] sm:$0xff]
  %v101 = vld [vmem:[%s0 + $0x218] sm:$0xf]
  %v102 = vld [vmem:[%s0 + $0x21c] sm:$0xff]
  %v103 = vld [vmem:[%s0 + $0x224] sm:$0xf]
  %v104 = vld [vmem:[%s0 + $0x228] sm:$0xff]
  %v105 = vld [vmem:[%s0 + $0x230] sm:$0xf]
  %v106 = vld [vmem:[%s0 + $0x234] sm:$0xff]
  %v107 = vld [vmem:[%s0 + $0x23c] sm:$0xf]
  %v108 = vld [vmem:[%s0 + $0x240] sm:$0xff]
  %v109 = vld [vmem:[%s0 + $0x248] sm:$0xf]
  %v110 = vld [vmem:[%s0 + $0x24c] sm:$0xff]
  %v111 = vld [vmem:[%s0 + $0x254] sm:$0xf]
  %v112 = vld [vmem:[%s0 + $0x258] sm:$0xff]
  %v113 = vld [vmem:[%s0 + $0x260] sm:$0xf]
  %v114 = vld [vmem:[%s0 + $0x264] sm:$0xff]
  %v115 = vld [vmem:[%s0 + $0x26c] sm:$0xf]
  %v116 = vld [vmem:[%s0 + $0x270] sm:$0xff]
  %v117 = vld [vmem:[%s0 + $0x278] sm:$0xf]
  %v118 = vld [vmem:[%s0 + $0x27c] sm:$0xff]
  %v119 = vld [vmem:[%s0 + $0x284] sm:$0xf]
  %v120 = vld [vmem:[%s0 + $0x288] sm:$0xff]
  %v121 = vld [vmem:[%s0 + $0x290] sm:$0xf]
  %v122 = vld [vmem:[%s0 + $0x294] sm:$0xff]
  %v123 = vld [vmem:[%s0 + $0x29c] sm:$0xf]
  %v124 = vld [vmem:[%s0 + $0x2a0] sm:$0xff]
  %v125 = vld [vmem:[%s0 + $0x2a8] sm:$0xf]
  %v126 = vld [vmem:[%s0 + $0x2ac] sm:$0xff]
  %v127 = vld [vmem:[%s0 + $0x2b4] sm:$0xf]
  %v128 = vld [vmem:[%s0 + $0x2b8] sm:$0xff]
  %v129 = vld [vmem:[%s0 + $0x2c0] sm:$0xf]
  %v130 = vld [vmem:[%s0 + $0x2c4] sm:$0xff]
  %v131 = vld [vmem:[%s0 + $0x2cc] sm:$0xf]
  %v132 = vld [vmem:[%s0 + $0x2d0] sm:$0xff]
  %v133 = vld [vmem:[%s0 + $0x2d8] sm:$0xf]
  %v134 = vld [vmem:[%s0 + $0x2dc] sm:$0xff]
  %v135 = vld [vmem:[%s0 + $0x2e4] sm:$0xf]
  %v136 = vld [vmem:[%s0 + $0x2e8] sm:$0xff]
  %v137 = vld [vmem:[%s0 + $0x2f0] sm:$0xf]
  %v138 = vld [vmem:[%s0 + $0x2f4] sm:$0xff]
  %v139 = vld [vmem:[%s0 + $0x2fc] sm:$0xf]
  %v140 = vld [vmem:[%s1] sm:$0xf]
  %v141 = vld [vmem:[%s1 + $0x4] sm:$0xf]
  %v142 = vld [vmem:[%s1 + $0x8] sm:$0xf]
  %v143 = vld [vmem:[%s1 + $0xc] sm:$0xf]
  %v144 = vld [vmem:[%s1 + $0x10] sm:$0xf]
  %v145 = vld [vmem:[%s1 + $0x14] sm:$0xf]
  %v146 = vld [vmem:[%s1 + $0x18] sm:$0xf]
  %v147 = vld [vmem:[%s1 + $0x1c] sm:$0xf]
  %v148 = vld [vmem:[%s1 + $0x20] sm:$0xf]
  %v149 = vld [vmem:[%s1 + $0x24] sm:$0xf]
  %v150 = vld [vmem:[%s1 + $0x28] sm:$0xf]
  %v151 = vld [vmem:[%s1 + $0x2c] sm:$0xf]
  %v152 = vld [vmem:[%s1 + $0x30] sm:$0xf]
  %v153 = vld [vmem:[%s1 + $0x34] sm:$0xf]
  %v154 = vld [vmem:[%s1 + $0x38] sm:$0xf]
  %v155 = vld [vmem:[%s1 + $0x3c] sm:$0xf]
  %v156 = vld [vmem:[%s1 + $0x40] sm:$0xf]
  %v157 = vld [vmem:[%s1 + $0x44] sm:$0xf]
  %v158 = vld [vmem:[%s1 + $0x48] sm:$0xf]
  %v159 = vld [vmem:[%s1 + $0x4c] sm:$0xf]
  %v160 = vld [vmem:[%s1 + $0x50] sm:$0xf]
  %v161 = vld [vmem:[%s1 + $0x54] sm:$0xf]
  %v162 = vld [vmem:[%s1 + $0x58] sm:$0xf]
  %v163 = vld [vmem:[%s1 + $0x5c] sm:$0xf]
  %v164 = vld [vmem:[%s1 + $0x60] sm:$0xf]
  %v165 = vld [vmem:[%s1 + $0x64] sm:$0xf]
  %v166 = vld [vmem:[%s1 + $0x68] sm:$0xf]
  %v167 = vld [vmem:[%s1 + $0x6c] sm:$0xf]
  %v168 = vld [vmem:[%s1 + $0x70] sm:$0xf]
  %v169 = vld [vmem:[%s1 + $0x74] sm:$0xf]
  %v170 = vld [vmem:[%s1 + $0x78] sm:$0xf]
  %v171 = vld [vmem:[%s1 + $0x7c] sm:$0xf]
  %v172 = vld [vmem:[%s1 + $0x80] sm:$0xf]
  %v173 = vld [vmem:[%s1 + $0x84] sm:$0xf]
  %v174 = vld [vmem:[%s1 + $0x88] sm:$0xf]
  %v175 = vld [vmem:[%s1 + $0x8c] sm:$0xf]
  %v304 = vunpack.c.l.b16 %v12
  %v305 = vunpack.c.h.b16 %v12
  %v306 = vunpack.c.l.b16 %v13
  %v307 = vunpack.c.l.b16 %v14
  %v308 = vunpack.c.h.b16 %v14
  %v309 = vunpack.c.l.b16 %v15
  %v310 = vunpack.c.l.b16 %v16
  %v311 = vunpack.c.h.b16 %v16
  %v312 = vunpack.c.l.b16 %v17
  %v313 = vunpack.c.l.b16 %v18
  %v314 = vunpack.c.h.b16 %v18
  %v315 = vunpack.c.l.b16 %v19
  %v316 = vunpack.c.l.b16 %v20
  %v317 = vunpack.c.h.b16 %v20
  %v318 = vunpack.c.l.b16 %v21
  %v319 = vunpack.c.l.b16 %v22
  %v320 = vunpack.c.h.b16 %v22
  %v321 = vunpack.c.l.b16 %v23
  %v322 = vunpack.c.l.b16 %v24
  %v323 = vunpack.c.h.b16 %v24
  %v324 = vunpack.c.l.b16 %v25
  %v325 = vunpack.c.l.b16 %v26
  %v326 = vunpack.c.h.b16 %v26
  %v327 = vunpack.c.l.b16 %v27
  %v328 = vunpack.c.l.b16 %v28
  %v329 = vunpack.c.h.b16 %v28
  %v330 = vunpack.c.l.b16 %v29
  %v331 = vunpack.c.l.b16 %v30
  %v332 = vunpack.c.h.b16 %v30
  %v333 = vunpack.c.l.b16 %v31
  %v334 = vunpack.c.l.b16 %v32
  %v335 = vunpack.c.h.b16 %v32
  %v336 = vunpack.c.l.b16 %v33
  %v337 = vunpack.c.l.b16 %v34
  %v338 = vunpack.c.h.b16 %v34
  %v339 = vunpack.c.l.b16 %v35
  %v340 = vunpack.c.l.b16 %v36
  %v341 = vunpack.c.h.b16 %v36
  %v342 = vunpack.c.l.b16 %v37
  %v343 = vunpack.c.l.b16 %v38
  %v344 = vunpack.c.h.b16 %v38
  %v345 = vunpack.c.l.b16 %v39
  %v346 = vunpack.c.l.b16 %v40
  %v347 = vunpack.c.h.b16 %v40
  %v348 = vunpack.c.l.b16 %v41
  %v349 = vunpack.c.l.b16 %v42
  %v350 = vunpack.c.h.b16 %v42
  %v351 = vunpack.c.l.b16 %v43
  %v352 = vunpack.c.l.b16 %v44
  %v353 = vunpack.c.h.b16 %v44
  %v354 = vunpack.c.l.b16 %v45
  %v355 = vunpack.c.l.b16 %v46
  %v356 = vunpack.c.h.b16 %v46
  %v357 = vunpack.c.l.b16 %v47
  %v358 = vunpack.c.l.b16 %v48
  %v359 = vunpack.c.h.b16 %v48
  %v360 = vunpack.c.l.b16 %v49
  %v361 = vunpack.c.l.b16 %v50
  %v362 = vunpack.c.h.b16 %v50
  %v363 = vunpack.c.l.b16 %v51
  %v364 = vunpack.c.l.b16 %v52
  %v365 = vunpack.c.h.b16 %v52
  %v366 = vunpack.c.l.b16 %v53
  %v367 = vunpack.c.l.b16 %v54
  %v368 = vunpack.c.h.b16 %v54
  %v369 = vunpack.c.l.b16 %v55
  %v370 = vunpack.c.l.b16 %v56
  %v371 = vunpack.c.h.b16 %v56
  %v372 = vunpack.c.l.b16 %v57
  %v373 = vunpack.c.l.b16 %v58
  %v374 = vunpack.c.h.b16 %v58
  %v375 = vunpack.c.l.b16 %v59
  %v376 = vunpack.c.l.b16 %v60
  %v377 = vunpack.c.h.b16 %v60
  %v378 = vunpack.c.l.b16 %v61
  %v379 = vunpack.c.l.b16 %v62
  %v380 = vunpack.c.h.b16 %v62
  %v381 = vunpack.c.l.b16 %v63
  %v382 = vunpack.c.l.b16 %v64
  %v383 = vunpack.c.h.b16 %v64
  %v384 = vunpack.c.l.b16 %v65
  %v385 = vunpack.c.l.b16 %v66
  %v386 = vunpack.c.h.b16 %v66
  %v387 = vunpack.c.l.b16 %v67
  %v388 = vunpack.c.l.b16 %v68
  %v389 = vunpack.c.h.b16 %v68
  %v390 = vunpack.c.l.b16 %v69
  %v391 = vunpack.c.l.b16 %v70
  %v392 = vunpack.c.h.b16 %v70
  %v393 = vunpack.c.l.b16 %v71
  %v394 = vunpack.c.l.b16 %v72
  %v395 = vunpack.c.h.b16 %v72
  %v396 = vunpack.c.l.b16 %v73
  %v397 = vunpack.c.l.b16 %v74
  %v398 = vunpack.c.h.b16 %v74
  %v399 = vunpack.c.l.b16 %v75
  %v400 = vunpack.c.l.b16 %v76
  %v401 = vunpack.c.h.b16 %v76
  %v402 = vunpack.c.l.b16 %v77
  %v403 = vunpack.c.l.b16 %v78
  %v404 = vunpack.c.h.b16 %v78
  %v405 = vunpack.c.l.b16 %v79
  %v406 = vunpack.c.l.b16 %v80
  %v407 = vunpack.c.h.b16 %v80
  %v408 = vunpack.c.l.b16 %v81
  %v409 = vunpack.c.l.b16 %v82
  %v410 = vunpack.c.h.b16 %v82
  %v411 = vunpack.c.l.b16 %v83
  %v412 = vunpack.c.l.b16 %v84
  %v413 = vunpack.c.h.b16 %v84
  %v414 = vunpack.c.l.b16 %v85
  %v415 = vunpack.c.l.b16 %v86
  %v416 = vunpack.c.h.b16 %v86
  %v417 = vunpack.c.l.b16 %v87
  %v418 = vunpack.c.l.b16 %v88
  %v419 = vunpack.c.h.b16 %v88
  %v420 = vunpack.c.l.b16 %v89
  %v421 = vunpack.c.l.b16 %v90
  %v422 = vunpack.c.h.b16 %v90
  %v423 = vunpack.c.l.b16 %v91
  %v424 = vunpack.c.l.b16 %v92
  %v425 = vunpack.c.h.b16 %v92
  %v426 = vunpack.c.l.b16 %v93
  %v427 = vunpack.c.l.b16 %v94
  %v428 = vunpack.c.h.b16 %v94
  %v429 = vunpack.c.l.b16 %v95
  %v430 = vunpack.c.l.b16 %v96
  %v431 = vunpack.c.h.b16 %v96
  %v432 = vunpack.c.l.b16 %v97
  %v433 = vunpack.c.l.b16 %v98
  %v434 = vunpack.c.h.b16 %v98
  %v435 = vunpack.c.l.b16 %v99
  %v436 = vunpack.c.l.b16 %v100
  %v437 = vunpack.c.h.b16 %v100
  %v438 = vunpack.c.l.b16 %v101
  %v439 = vunpack.c.l.b16 %v102
  %v440 = vunpack.c.h.b16 %v102
  %v441 = vunpack.c.l.b16 %v103
  %v442 = vunpack.c.l.b16 %v104
  %v443 = vunpack.c.h.b16 %v104
  %v444 = vunpack.c.l.b16 %v105
  %v445 = vunpack.c.l.b16 %v106
  %v446 = vunpack.c.h.b16 %v106
  %v447 = vunpack.c.l.b16 %v107
  %v448 = vunpack.c.l.b16 %v108
  %v449 = vunpack.c.h.b16 %v108
  %v450 = vunpack.c.l.b16 %v109
  %v451 = vunpack.c.l.b16 %v110
  %v452 = vunpack.c.h.b16 %v110
  %v453 = vunpack.c.l.b16 %v111
  %v454 = vunpack.c.l.b16 %v112
  %v455 = vunpack.c.h.b16 %v112
  %v456 = vunpack.c.l.b16 %v113
  %v457 = vunpack.c.l.b16 %v114
  %v458 = vunpack.c.h.b16 %v114
  %v459 = vunpack.c.l.b16 %v115
  %v460 = vunpack.c.l.b16 %v116
  %v461 = vunpack.c.h.b16 %v116
  %v462 = vunpack.c.l.b16 %v117
  %v463 = vunpack.c.l.b16 %v118
  %v464 = vunpack.c.h.b16 %v118
  %v465 = vunpack.c.l.b16 %v119
  %v466 = vunpack.c.l.b16 %v120
  %v467 = vunpack.c.h.b16 %v120
  %v468 = vunpack.c.l.b16 %v121
  %v469 = vunpack.c.l.b16 %v122
  %v470 = vunpack.c.h.b16 %v122
  %v471 = vunpack.c.l.b16 %v123
  %v472 = vunpack.c.l.b16 %v124
  %v473 = vunpack.c.h.b16 %v124
  %v474 = vunpack.c.l.b16 %v125
  %v475 = vunpack.c.l.b16 %v126
  %v476 = vunpack.c.h.b16 %v126
  %v477 = vunpack.c.l.b16 %v127
  %v478 = vunpack.c.l.b16 %v128
  %v479 = vunpack.c.h.b16 %v128
  %v480 = vunpack.c.l.b16 %v129
  %v481 = vunpack.c.l.b16 %v130
  %v482 = vunpack.c.h.b16 %v130
  %v483 = vunpack.c.l.b16 %v131
  %v484 = vunpack.c.l.b16 %v132
  %v485 = vunpack.c.h.b16 %v132
  %v486 = vunpack.c.l.b16 %v133
  %v487 = vunpack.c.l.b16 %v134
  %v488 = vunpack.c.h.b16 %v134
  %v489 = vunpack.c.l.b16 %v135
  %v490 = vunpack.c.l.b16 %v136
  %v491 = vunpack.c.h.b16 %v136
  %v492 = vunpack.c.l.b16 %v137
  %v493 = vunpack.c.l.b16 %v138
  %v494 = vunpack.c.h.b16 %v138
  %v495 = vunpack.c.l.b16 %v139
  %v496 = vpack.c.b16 %v307, %v304
  %v497 = vpack.c.b16 %v308, %v305
  %v498 = vpack.c.b16 %v309, %v306
  %v499 = vpack.c.b16 %v313, %v310
  %v500 = vpack.c.b16 %v314, %v311
  %v501 = vpack.c.b16 %v315, %v312
  %v502 = vpack.c.b16 %v319, %v316
  %v503 = vpack.c.b16 %v320, %v317
  %v504 = vpack.c.b16 %v321, %v318
  %v505 = vpack.c.b16 %v325, %v322
  %v506 = vpack.c.b16 %v326, %v323
  %v507 = vpack.c.b16 %v327, %v324
  %v508 = vpack.c.b16 %v331, %v328
  %v509 = vpack.c.b16 %v332, %v329
  %v510 = vpack.c.b16 %v333, %v330
  %v511 = vpack.c.b16 %v337, %v334
  %v512 = vpack.c.b16 %v338, %v335
  %v513 = vpack.c.b16 %v339, %v336
  %v514 = vpack.c.b16 %v343, %v340
  %v515 = vpack.c.b16 %v344, %v341
  %v516 = vpack.c.b16 %v345, %v342
  %v517 = vpack.c.b16 %v349, %v346
  %v518 = vpack.c.b16 %v350, %v347
  %v519 = vpack.c.b16 %v351, %v348
  %v520 = vpack.c.b16 %v355, %v352
  %v521 = vpack.c.b16 %v356, %v353
  %v522 = vpack.c.b16 %v357, %v354
  %v523 = vpack.c.b16 %v361, %v358
  %v524 = vpack.c.b16 %v362, %v359
  %v525 = vpack.c.b16 %v363, %v360
  %v526 = vpack.c.b16 %v367, %v364
  %v527 = vpack.c.b16 %v368, %v365
  %v528 = vpack.c.b16 %v369, %v366
  %v529 = vpack.c.b16 %v373, %v370
  %v530 = vpack.c.b16 %v374, %v371
  %v531 = vpack.c.b16 %v375, %v372
  %v532 = vpack.c.b16 %v379, %v376
  %v533 = vpack.c.b16 %v380, %v377
  %v534 = vpack.c.b16 %v381, %v378
  %v535 = vpack.c.b16 %v385, %v382
  %v536 = vpack.c.b16 %v386, %v383
  %v537 = vpack.c.b16 %v387, %v384
  %v538 = vpack.c.b16 %v391, %v388
  %v539 = vpack.c.b16 %v392, %v389
  %v540 = vpack.c.b16 %v393, %v390
  %v541 = vpack.c.b16 %v397, %v394
  %v542 = vpack.c.b16 %v398, %v395
  %v543 = vpack.c.b16 %v399, %v396
  %v544 = vpack.c.b16 %v403, %v400
  %v545 = vpack.c.b16 %v404, %v401
  %v546 = vpack.c.b16 %v405, %v402
  %v547 = vpack.c.b16 %v409, %v406
  %v548 = vpack.c.b16 %v410, %v407
  %v549 = vpack.c.b16 %v411, %v408
  %v550 = vpack.c.b16 %v415, %v412
  %v551 = vpack.c.b16 %v416, %v413
  %v552 = vpack.c.b16 %v417, %v414
  %v553 = vpack.c.b16 %v421, %v418
  %v554 = vpack.c.b16 %v422, %v419
  %v555 = vpack.c.b16 %v423, %v420
  %v556 = vpack.c.b16 %v427, %v424
  %v557 = vpack.c.b16 %v428, %v425
  %v558 = vpack.c.b16 %v429, %v426
  %v559 = vpack.c.b16 %v433, %v430
  %v560 = vpack.c.b16 %v434, %v431
  %v561 = vpack.c.b16 %v435, %v432
  %v562 = vpack.c.b16 %v439, %v436
  %v563 = vpack.c.b16 %v440, %v437
  %v564 = vpack.c.b16 %v441, %v438
  %v565 = vpack.c.b16 %v445, %v442
  %v566 = vpack.c.b16 %v446, %v443
  %v567 = vpack.c.b16 %v447, %v444
  %v568 = vpack.c.b16 %v451, %v448
  %v569 = vpack.c.b16 %v452, %v449
  %v570 = vpack.c.b16 %v453, %v450
  %v571 = vpack.c.b16 %v457, %v454
  %v572 = vpack.c.b16 %v458, %v455
  %v573 = vpack.c.b16 %v459, %v456
  %v574 = vpack.c.b16 %v463, %v460
  %v575 = vpack.c.b16 %v464, %v461
  %v576 = vpack.c.b16 %v465, %v462
  %v577 = vpack.c.b16 %v469, %v466
  %v578 = vpack.c.b16 %v470, %v467
  %v579 = vpack.c.b16 %v471, %v468
  %v580 = vpack.c.b16 %v475, %v472
  %v581 = vpack.c.b16 %v476, %v473
  %v582 = vpack.c.b16 %v477, %v474
  %v583 = vpack.c.b16 %v481, %v478
  %v584 = vpack.c.b16 %v482, %v479
  %v585 = vpack.c.b16 %v483, %v480
  %v586 = vpack.c.b16 %v487, %v484
  %v587 = vpack.c.b16 %v488, %v485
  %v588 = vpack.c.b16 %v489, %v486
  %v589 = vpack.c.b16 %v493, %v490
  %v590 = vpack.c.b16 %v494, %v491
  %v591 = vpack.c.b16 %v495, %v492
  %v692 = vunpack.c.l.b16 %v140
  %v693 = vunpack.c.l.b16 %v141
  %v694 = vunpack.c.l.b16 %v142
  %v695 = vunpack.c.l.b16 %v143
  %v696 = vunpack.c.l.b16 %v144
  %v697 = vunpack.c.l.b16 %v145
  %v698 = vunpack.c.l.b16 %v146
  %v699 = vunpack.c.l.b16 %v147
  %v700 = vunpack.c.l.b16 %v148
  %v701 = vunpack.c.l.b16 %v149
  %v702 = vunpack.c.l.b16 %v150
  %v703 = vunpack.c.l.b16 %v151
  %v704 = vunpack.c.l.b16 %v152
  %v705 = vunpack.c.l.b16 %v153
  %v706 = vunpack.c.l.b16 %v154
  %v707 = vunpack.c.l.b16 %v155
  %v708 = vunpack.c.l.b16 %v156
  %v709 = vunpack.c.l.b16 %v157
  %v710 = vunpack.c.l.b16 %v158
  %v711 = vunpack.c.l.b16 %v159
  %v712 = vunpack.c.l.b16 %v160
  %v713 = vunpack.c.l.b16 %v161
  %v714 = vunpack.c.l.b16 %v162
  %v715 = vunpack.c.l.b16 %v163
  %v716 = vunpack.c.l.b16 %v164
  %v717 = vunpack.c.l.b16 %v165
  %v718 = vunpack.c.l.b16 %v166
  %v719 = vunpack.c.l.b16 %v167
  %v720 = vunpack.c.l.b16 %v168
  %v721 = vunpack.c.l.b16 %v169
  %v722 = vunpack.c.l.b16 %v170
  %v723 = vunpack.c.l.b16 %v171
  %v724 = vunpack.c.l.b16 %v172
  %v725 = vunpack.c.l.b16 %v173
  %v726 = vunpack.c.l.b16 %v174
  %v727 = vunpack.c.l.b16 %v175
  %v728 = vpack.c.b16 %v693, %v692
  %v729 = vpack.c.b16 %v695, %v694
  %v730 = vpack.c.b16 %v697, %v696
  %v731 = vpack.c.b16 %v699, %v698
  %v732 = vpack.c.b16 %v701, %v700
  %v733 = vpack.c.b16 %v703, %v702
  %v734 = vpack.c.b16 %v705, %v704
  %v735 = vpack.c.b16 %v707, %v706
  %v736 = vpack.c.b16 %v709, %v708
  %v737 = vpack.c.b16 %v711, %v710
  %v738 = vpack.c.b16 %v713, %v712
  %v739 = vpack.c.b16 %v715, %v714
  %v740 = vpack.c.b16 %v717, %v716
  %v741 = vpack.c.b16 %v719, %v718
  %v742 = vpack.c.b16 %v721, %v720
  %v743 = vpack.c.b16 %v723, %v722
  %v744 = vpack.c.b16 %v725, %v724
  %v745 = vpack.c.b16 %v727, %v726
  %vm764 = vcmask 261120
  %v766 = vsel %vm764, %v498, 0
  %v769 = vsel %vm764, %v501, 0
  %v772 = vsel %vm764, %v504, 0
  %v775 = vsel %vm764, %v507, 0
  %v778 = vsel %vm764, %v510, 0
  %v781 = vsel %vm764, %v513, 0
  %v784 = vsel %vm764, %v516, 0
  %v787 = vsel %vm764, %v519, 0
  %v790 = vsel %vm764, %v522, 0
  %v793 = vsel %vm764, %v525, 0
  %v796 = vsel %vm764, %v528, 0
  %v799 = vsel %vm764, %v531, 0
  %v802 = vsel %vm764, %v534, 0
  %v805 = vsel %vm764, %v537, 0
  %v808 = vsel %vm764, %v540, 0
  %v811 = vsel %vm764, %v543, 0
  %v814 = vsel %vm764, %v546, 0
  %v817 = vsel %vm764, %v549, 0
  %v820 = vsel %vm764, %v552, 0
  %v823 = vsel %vm764, %v555, 0
  %v826 = vsel %vm764, %v558, 0
  %v829 = vsel %vm764, %v561, 0
  %v832 = vsel %vm764, %v564, 0
  %v835 = vsel %vm764, %v567, 0
  %v838 = vsel %vm764, %v570, 0
  %v841 = vsel %vm764, %v573, 0
  %v844 = vsel %vm764, %v576, 0
  %v847 = vsel %vm764, %v579, 0
  %v850 = vsel %vm764, %v582, 0
  %v853 = vsel %vm764, %v585, 0
  %v856 = vsel %vm764, %v588, 0
  %v859 = vsel %vm764, %v591, 0
  %861 = vmatpush.bf16.msra.mxu0 %v735
  %862 = vmatpush.bf16.msra.mxu0 %v734
  %863 = vmatpush.bf16.msra.mxu0 %v733
  %864 = vmatpush.bf16.msra.mxu0 %v732
  %865 = vmatpush.bf16.msra.mxu0 %v731
  %866 = vmatpush.bf16.msra.mxu0 %v730
  %867 = vmatpush.bf16.msra.mxu0 %v729
  %868 = vmatpush.bf16.msra.mxu0 %v728
  %869 = vmatmul.bf16.gmra.mxu0 %v496
  %v870 = vpop.f32.mrf.mxu0
  %v871 = vadd.f32 0.0, %v870
  %v872 = vpop.f32.mrf.mxu0
  %v873 = vadd.f32 0.0, %v872
  %874 = vmatmul.bf16.gmra.mxu0 %v499
  %v875 = vpop.f32.mrf.mxu0
  %v876 = vadd.f32 0.0, %v875
  %v877 = vpop.f32.mrf.mxu0
  %v878 = vadd.f32 0.0, %v877
  %879 = vmatmul.bf16.gmra.mxu0 %v502
  %v880 = vpop.f32.mrf.mxu0
  %v881 = vadd.f32 0.0, %v880
  %v882 = vpop.f32.mrf.mxu0
  %v883 = vadd.f32 0.0, %v882
  %884 = vmatmul.bf16.gmra.mxu0 %v505
  %v885 = vpop.f32.mrf.mxu0
  %v886 = vadd.f32 0.0, %v885
  %v887 = vpop.f32.mrf.mxu0
  %v888 = vadd.f32 0.0, %v887
  %889 = vmatmul.bf16.gmra.mxu0 %v508
  %v890 = vpop.f32.mrf.mxu0
  %v891 = vadd.f32 0.0, %v890
  %v892 = vpop.f32.mrf.mxu0
  %v893 = vadd.f32 0.0, %v892
  %894 = vmatmul.bf16.gmra.mxu0 %v511
  %v895 = vpop.f32.mrf.mxu0
  %v896 = vadd.f32 0.0, %v895
  %v897 = vpop.f32.mrf.mxu0
  %v898 = vadd.f32 0.0, %v897
  %899 = vmatmul.bf16.gmra.mxu0 %v514
  %v900 = vpop.f32.mrf.mxu0
  %v901 = vadd.f32 0.0, %v900
  %v902 = vpop.f32.mrf.mxu0
  %v903 = vadd.f32 0.0, %v902
  %904 = vmatmul.bf16.gmra.mxu0 %v517
  %v905 = vpop.f32.mrf.mxu0
  %v906 = vadd.f32 0.0, %v905
  %v907 = vpop.f32.mrf.mxu0
  %v908 = vadd.f32 0.0, %v907
  %909 = vmatmul.bf16.gmra.mxu0 %v520
  %v910 = vpop.f32.mrf.mxu0
  %v911 = vadd.f32 0.0, %v910
  %v912 = vpop.f32.mrf.mxu0
  %v913 = vadd.f32 0.0, %v912
  %914 = vmatmul.bf16.gmra.mxu0 %v523
  %v915 = vpop.f32.mrf.mxu0
  %v916 = vadd.f32 0.0, %v915
  %v917 = vpop.f32.mrf.mxu0
  %v918 = vadd.f32 0.0, %v917
  %919 = vmatmul.bf16.gmra.mxu0 %v526
  %v920 = vpop.f32.mrf.mxu0
  %v921 = vadd.f32 0.0, %v920
  %v922 = vpop.f32.mrf.mxu0
  %v923 = vadd.f32 0.0, %v922
  %924 = vmatmul.bf16.gmra.mxu0 %v529
  %v925 = vpop.f32.mrf.mxu0
  %v926 = vadd.f32 0.0, %v925
  %v927 = vpop.f32.mrf.mxu0
  %v928 = vadd.f32 0.0, %v927
  %929 = vmatmul.bf16.gmra.mxu0 %v532
  %v930 = vpop.f32.mrf.mxu0
  %v931 = vadd.f32 0.0, %v930
  %v932 = vpop.f32.mrf.mxu0
  %v933 = vadd.f32 0.0, %v932
  %934 = vmatmul.bf16.gmra.mxu0 %v535
  %v935 = vpop.f32.mrf.mxu0
  %v936 = vadd.f32 0.0, %v935
  %v937 = vpop.f32.mrf.mxu0
  %v938 = vadd.f32 0.0, %v937
  %939 = vmatmul.bf16.gmra.mxu0 %v538
  %v940 = vpop.f32.mrf.mxu0
  %v941 = vadd.f32 0.0, %v940
  %v942 = vpop.f32.mrf.mxu0
  %v943 = vadd.f32 0.0, %v942
  %944 = vmatmul.bf16.gmra.mxu0 %v541
  %v945 = vpop.f32.mrf.mxu0
  %v946 = vadd.f32 0.0, %v945
  %v947 = vpop.f32.mrf.mxu0
  %v948 = vadd.f32 0.0, %v947
  %949 = vmatmul.bf16.gmra.mxu0 %v544
  %v950 = vpop.f32.mrf.mxu0
  %v951 = vadd.f32 0.0, %v950
  %v952 = vpop.f32.mrf.mxu0
  %v953 = vadd.f32 0.0, %v952
  %954 = vmatmul.bf16.gmra.mxu0 %v547
  %v955 = vpop.f32.mrf.mxu0
  %v956 = vadd.f32 0.0, %v955
  %v957 = vpop.f32.mrf.mxu0
  %v958 = vadd.f32 0.0, %v957
  %959 = vmatmul.bf16.gmra.mxu0 %v550
  %v960 = vpop.f32.mrf.mxu0
  %v961 = vadd.f32 0.0, %v960
  %v962 = vpop.f32.mrf.mxu0
  %v963 = vadd.f32 0.0, %v962
  %964 = vmatmul.bf16.gmra.mxu0 %v553
  %v965 = vpop.f32.mrf.mxu0
  %v966 = vadd.f32 0.0, %v965
  %v967 = vpop.f32.mrf.mxu0
  %v968 = vadd.f32 0.0, %v967
  %969 = vmatmul.bf16.gmra.mxu0 %v556
  %v970 = vpop.f32.mrf.mxu0
  %v971 = vadd.f32 0.0, %v970
  %v972 = vpop.f32.mrf.mxu0
  %v973 = vadd.f32 0.0, %v972
  %974 = vmatmul.bf16.gmra.mxu0 %v559
  %v975 = vpop.f32.mrf.mxu0
  %v976 = vadd.f32 0.0, %v975
  %v977 = vpop.f32.mrf.mxu0
  %v978 = vadd.f32 0.0, %v977
  %979 = vmatmul.bf16.gmra.mxu0 %v562
  %v980 = vpop.f32.mrf.mxu0
  %v981 = vadd.f32 0.0, %v980
  %v982 = vpop.f32.mrf.mxu0
  %v983 = vadd.f32 0.0, %v982
  %984 = vmatmul.bf16.gmra.mxu0 %v565
  %v985 = vpop.f32.mrf.mxu0
  %v986 = vadd.f32 0.0, %v985
  %v987 = vpop.f32.mrf.mxu0
  %v988 = vadd.f32 0.0, %v987
  %989 = vmatmul.bf16.gmra.mxu0 %v568
  %v990 = vpop.f32.mrf.mxu0
  %v991 = vadd.f32 0.0, %v990
  %v992 = vpop.f32.mrf.mxu0
  %v993 = vadd.f32 0.0, %v992
  %994 = vmatmul.bf16.gmra.mxu0 %v571
  %v995 = vpop.f32.mrf.mxu0
  %v996 = vadd.f32 0.0, %v995
  %v997 = vpop.f32.mrf.mxu0
  %v998 = vadd.f32 0.0, %v997
  %999 = vmatmul.bf16.gmra.mxu0 %v574
  %v1000 = vpop.f32.mrf.mxu0
  %v1001 = vadd.f32 0.0, %v1000
  %v1002 = vpop.f32.mrf.mxu0
  %v1003 = vadd.f32 0.0, %v1002
  %1004 = vmatmul.bf16.gmra.mxu0 %v577
  %v1005 = vpop.f32.mrf.mxu0
  %v1006 = vadd.f32 0.0, %v1005
  %v1007 = vpop.f32.mrf.mxu0
  %v1008 = vadd.f32 0.0, %v1007
  %1009 = vmatmul.bf16.gmra.mxu0 %v580
  %v1010 = vpop.f32.mrf.mxu0
  %v1011 = vadd.f32 0.0, %v1010
  %v1012 = vpop.f32.mrf.mxu0
  %v1013 = vadd.f32 0.0, %v1012
  %1014 = vmatmul.bf16.gmra.mxu0 %v583
  %v1015 = vpop.f32.mrf.mxu0
  %v1016 = vadd.f32 0.0, %v1015
  %v1017 = vpop.f32.mrf.mxu0
  %v1018 = vadd.f32 0.0, %v1017
  %1019 = vmatmul.bf16.gmra.mxu0 %v586
  %v1020 = vpop.f32.mrf.mxu0
  %v1021 = vadd.f32 0.0, %v1020
  %v1022 = vpop.f32.mrf.mxu0
  %v1023 = vadd.f32 0.0, %v1022
  %1024 = vmatmul.bf16.gmra.mxu0 %v589
  %v1025 = vpop.f32.mrf.mxu0
  %v1026 = vadd.f32 0.0, %v1025
  %v1027 = vpop.f32.mrf.mxu0
  %v1028 = vadd.f32 0.0, %v1027
  %1029 = vdwg.mxu0
  %1030 = vmatpush.bf16.msra.mxu0 %v743
  %1031 = vmatpush.bf16.msra.mxu0 %v742
  %1032 = vmatpush.bf16.msra.mxu0 %v741
  %1033 = vmatpush.bf16.msra.mxu0 %v740
  %1034 = vmatpush.bf16.msra.mxu0 %v739
  %1035 = vmatpush.bf16.msra.mxu0 %v738
  %1036 = vmatpush.bf16.msra.mxu0 %v737
  %1037 = vmatpush.bf16.msra.mxu0 %v736
  %1038 = vmatmul.bf16.gmra.mxu0 %v497
  %v1039 = vpop.f32.mrf.mxu0
  %v1040 = vadd.f32 %v871, %v1039
  %v1041 = vpop.f32.mrf.mxu0
  %v1042 = vadd.f32 %v873, %v1041
  %1043 = vmatmul.bf16.gmra.mxu0 %v500
  %v1044 = vpop.f32.mrf.mxu0
  %v1045 = vadd.f32 %v876, %v1044
  %v1046 = vpop.f32.mrf.mxu0
  %v1047 = vadd.f32 %v878, %v1046
  %1048 = vmatmul.bf16.gmra.mxu0 %v503
  %v1049 = vpop.f32.mrf.mxu0
  %v1050 = vadd.f32 %v881, %v1049
  %v1051 = vpop.f32.mrf.mxu0
  %v1052 = vadd.f32 %v883, %v1051
  %1053 = vmatmul.bf16.gmra.mxu0 %v506
  %v1054 = vpop.f32.mrf.mxu0
  %v1055 = vadd.f32 %v886, %v1054
  %v1056 = vpop.f32.mrf.mxu0
  %v1057 = vadd.f32 %v888, %v1056
  %1058 = vmatmul.bf16.gmra.mxu0 %v509
  %v1059 = vpop.f32.mrf.mxu0
  %v1060 = vadd.f32 %v891, %v1059
  %v1061 = vpop.f32.mrf.mxu0
  %v1062 = vadd.f32 %v893, %v1061
  %1063 = vmatmul.bf16.gmra.mxu0 %v512
  %v1064 = vpop.f32.mrf.mxu0
  %v1065 = vadd.f32 %v896, %v1064
  %v1066 = vpop.f32.mrf.mxu0
  %v1067 = vadd.f32 %v898, %v1066
  %1068 = vmatmul.bf16.gmra.mxu0 %v515
  %v1069 = vpop.f32.mrf.mxu0
  %v1070 = vadd.f32 %v901, %v1069
  %v1071 = vpop.f32.mrf.mxu0
  %v1072 = vadd.f32 %v903, %v1071
  %1073 = vmatmul.bf16.gmra.mxu0 %v518
  %v1074 = vpop.f32.mrf.mxu0
  %v1075 = vadd.f32 %v906, %v1074
  %v1076 = vpop.f32.mrf.mxu0
  %v1077 = vadd.f32 %v908, %v1076
  %1078 = vmatmul.bf16.gmra.mxu0 %v521
  %v1079 = vpop.f32.mrf.mxu0
  %v1080 = vadd.f32 %v911, %v1079
  %v1081 = vpop.f32.mrf.mxu0
  %v1082 = vadd.f32 %v913, %v1081
  %1083 = vmatmul.bf16.gmra.mxu0 %v524
  %v1084 = vpop.f32.mrf.mxu0
  %v1085 = vadd.f32 %v916, %v1084
  %v1086 = vpop.f32.mrf.mxu0
  %v1087 = vadd.f32 %v918, %v1086
  %1088 = vmatmul.bf16.gmra.mxu0 %v527
  %v1089 = vpop.f32.mrf.mxu0
  %v1090 = vadd.f32 %v921, %v1089
  %v1091 = vpop.f32.mrf.mxu0
  %v1092 = vadd.f32 %v923, %v1091
  %1093 = vmatmul.bf16.gmra.mxu0 %v530
  %v1094 = vpop.f32.mrf.mxu0
  %v1095 = vadd.f32 %v926, %v1094
  %v1096 = vpop.f32.mrf.mxu0
  %v1097 = vadd.f32 %v928, %v1096
  %1098 = vmatmul.bf16.gmra.mxu0 %v533
  %v1099 = vpop.f32.mrf.mxu0
  %v1100 = vadd.f32 %v931, %v1099
  %v1101 = vpop.f32.mrf.mxu0
  %v1102 = vadd.f32 %v933, %v1101
  %1103 = vmatmul.bf16.gmra.mxu0 %v536
  %v1104 = vpop.f32.mrf.mxu0
  %v1105 = vadd.f32 %v936, %v1104
  %v1106 = vpop.f32.mrf.mxu0
  %v1107 = vadd.f32 %v938, %v1106
  %1108 = vmatmul.bf16.gmra.mxu0 %v539
  %v1109 = vpop.f32.mrf.mxu0
  %v1110 = vadd.f32 %v941, %v1109
  %v1111 = vpop.f32.mrf.mxu0
  %v1112 = vadd.f32 %v943, %v1111
  %1113 = vmatmul.bf16.gmra.mxu0 %v542
  %v1114 = vpop.f32.mrf.mxu0
  %v1115 = vadd.f32 %v946, %v1114
  %v1116 = vpop.f32.mrf.mxu0
  %v1117 = vadd.f32 %v948, %v1116
  %1118 = vmatmul.bf16.gmra.mxu0 %v545
  %v1119 = vpop.f32.mrf.mxu0
  %v1120 = vadd.f32 %v951, %v1119
  %v1121 = vpop.f32.mrf.mxu0
  %v1122 = vadd.f32 %v953, %v1121
  %1123 = vmatmul.bf16.gmra.mxu0 %v548
  %v1124 = vpop.f32.mrf.mxu0
  %v1125 = vadd.f32 %v956, %v1124
  %v1126 = vpop.f32.mrf.mxu0
  %v1127 = vadd.f32 %v958, %v1126
  %1128 = vmatmul.bf16.gmra.mxu0 %v551
  %v1129 = vpop.f32.mrf.mxu0
  %v1130 = vadd.f32 %v961, %v1129
  %v1131 = vpop.f32.mrf.mxu0
  %v1132 = vadd.f32 %v963, %v1131
  %1133 = vmatmul.bf16.gmra.mxu0 %v554
  %v1134 = vpop.f32.mrf.mxu0
  %v1135 = vadd.f32 %v966, %v1134
  %v1136 = vpop.f32.mrf.mxu0
  %v1137 = vadd.f32 %v968, %v1136
  %1138 = vmatmul.bf16.gmra.mxu0 %v557
  %v1139 = vpop.f32.mrf.mxu0
  %v1140 = vadd.f32 %v971, %v1139
  %v1141 = vpop.f32.mrf.mxu0
  %v1142 = vadd.f32 %v973, %v1141
  %1143 = vmatmul.bf16.gmra.mxu0 %v560
  %v1144 = vpop.f32.mrf.mxu0
  %v1145 = vadd.f32 %v976, %v1144
  %v1146 = vpop.f32.mrf.mxu0
  %v1147 = vadd.f32 %v978, %v1146
  %1148 = vmatmul.bf16.gmra.mxu0 %v563
  %v1149 = vpop.f32.mrf.mxu0
  %v1150 = vadd.f32 %v981, %v1149
  %v1151 = vpop.f32.mrf.mxu0
  %v1152 = vadd.f32 %v983, %v1151
  %1153 = vmatmul.bf16.gmra.mxu0 %v566
  %v1154 = vpop.f32.mrf.mxu0
  %v1155 = vadd.f32 %v986, %v1154
  %v1156 = vpop.f32.mrf.mxu0
  %v1157 = vadd.f32 %v988, %v1156
  %1158 = vmatmul.bf16.gmra.mxu0 %v569
  %v1159 = vpop.f32.mrf.mxu0
  %v1160 = vadd.f32 %v991, %v1159
  %v1161 = vpop.f32.mrf.mxu0
  %v1162 = vadd.f32 %v993, %v1161
  %1163 = vmatmul.bf16.gmra.mxu0 %v572
  %v1164 = vpop.f32.mrf.mxu0
  %v1165 = vadd.f32 %v996, %v1164
  %v1166 = vpop.f32.mrf.mxu0
  %v1167 = vadd.f32 %v998, %v1166
  %1168 = vmatmul.bf16.gmra.mxu0 %v575
  %v1169 = vpop.f32.mrf.mxu0
  %v1170 = vadd.f32 %v1001, %v1169
  %v1171 = vpop.f32.mrf.mxu0
  %v1172 = vadd.f32 %v1003, %v1171
  %1173 = vmatmul.bf16.gmra.mxu0 %v578
  %v1174 = vpop.f32.mrf.mxu0
  %v1175 = vadd.f32 %v1006, %v1174
  %v1176 = vpop.f32.mrf.mxu0
  %v1177 = vadd.f32 %v1008, %v1176
  %1178 = vmatmul.bf16.gmra.mxu0 %v581
  %v1179 = vpop.f32.mrf.mxu0
  %v1180 = vadd.f32 %v1011, %v1179
  %v1181 = vpop.f32.mrf.mxu0
  %v1182 = vadd.f32 %v1013, %v1181
  %1183 = vmatmul.bf16.gmra.mxu0 %v584
  %v1184 = vpop.f32.mrf.mxu0
  %v1185 = vadd.f32 %v1016, %v1184
  %v1186 = vpop.f32.mrf.mxu0
  %v1187 = vadd.f32 %v1018, %v1186
  %1188 = vmatmul.bf16.gmra.mxu0 %v587
  %v1189 = vpop.f32.mrf.mxu0
  %v1190 = vadd.f32 %v1021, %v1189
  %v1191 = vpop.f32.mrf.mxu0
  %v1192 = vadd.f32 %v1023, %v1191
  %1193 = vmatmul.bf16.gmra.mxu0 %v590
  %v1194 = vpop.f32.mrf.mxu0
  %v1195 = vadd.f32 %v1026, %v1194
  %v1196 = vpop.f32.mrf.mxu0
  %v1197 = vadd.f32 %v1028, %v1196
  %1198 = vdwg.mxu0
  %1199 = vmatpush.bf16.msra.mxu0 0
  %1200 = vmatpush.bf16.msra.mxu0 0
  %1201 = vmatpush.bf16.msra.mxu0 0
  %1202 = vmatpush.bf16.msra.mxu0 0
  %1203 = vmatpush.bf16.msra.mxu0 0
  %1204 = vmatpush.bf16.msra.mxu0 0
  %1205 = vmatpush.bf16.msra.mxu0 %v745
  %1206 = vmatpush.bf16.msra.mxu0 %v744
  %1207 = vmatmul.bf16.gmra.mxu0 %v766
  %v1208 = vpop.f32.mrf.mxu0
  %v1209 = vadd.f32 %v1040, %v1208
  %v1210 = vpop.f32.mrf.mxu0
  %v1211 = vadd.f32 %v1042, %v1210
  %1212 = vmatmul.bf16.gmra.mxu0 %v769
  %v1213 = vpop.f32.mrf.mxu0
  %v1214 = vadd.f32 %v1045, %v1213
  %v1215 = vpop.f32.mrf.mxu0
  %v1216 = vadd.f32 %v1047, %v1215
  %1217 = vmatmul.bf16.gmra.mxu0 %v772
  %v1218 = vpop.f32.mrf.mxu0
  %v1219 = vadd.f32 %v1050, %v1218
  %v1220 = vpop.f32.mrf.mxu0
  %v1221 = vadd.f32 %v1052, %v1220
  %1222 = vmatmul.bf16.gmra.mxu0 %v775
  %v1223 = vpop.f32.mrf.mxu0
  %v1224 = vadd.f32 %v1055, %v1223
  %v1225 = vpop.f32.mrf.mxu0
  %v1226 = vadd.f32 %v1057, %v1225
  %1227 = vmatmul.bf16.gmra.mxu0 %v778
  %v1228 = vpop.f32.mrf.mxu0
  %v1229 = vadd.f32 %v1060, %v1228
  %v1230 = vpop.f32.mrf.mxu0
  %v1231 = vadd.f32 %v1062, %v1230
  %1232 = vmatmul.bf16.gmra.mxu0 %v781
  %v1233 = vpop.f32.mrf.mxu0
  %v1234 = vadd.f32 %v1065, %v1233
  %v1235 = vpop.f32.mrf.mxu0
  %v1236 = vadd.f32 %v1067, %v1235
  %1237 = vmatmul.bf16.gmra.mxu0 %v784
  %v1238 = vpop.f32.mrf.mxu0
  %v1239 = vadd.f32 %v1070, %v1238
  %v1240 = vpop.f32.mrf.mxu0
  %v1241 = vadd.f32 %v1072, %v1240
  %1242 = vmatmul.bf16.gmra.mxu0 %v787
  %v1243 = vpop.f32.mrf.mxu0
  %v1244 = vadd.f32 %v1075, %v1243
  %v1245 = vpop.f32.mrf.mxu0
  %v1246 = vadd.f32 %v1077, %v1245
  %1247 = vmatmul.bf16.gmra.mxu0 %v790
  %v1248 = vpop.f32.mrf.mxu0
  %v1249 = vadd.f32 %v1080, %v1248
  %v1250 = vpop.f32.mrf.mxu0
  %v1251 = vadd.f32 %v1082, %v1250
  %1252 = vmatmul.bf16.gmra.mxu0 %v793
  %v1253 = vpop.f32.mrf.mxu0
  %v1254 = vadd.f32 %v1085, %v1253
  %v1255 = vpop.f32.mrf.mxu0
  %v1256 = vadd.f32 %v1087, %v1255
  %1257 = vmatmul.bf16.gmra.mxu0 %v796
  %v1258 = vpop.f32.mrf.mxu0
  %v1259 = vadd.f32 %v1090, %v1258
  %v1260 = vpop.f32.mrf.mxu0
  %v1261 = vadd.f32 %v1092, %v1260
  %1262 = vmatmul.bf16.gmra.mxu0 %v799
  %v1263 = vpop.f32.mrf.mxu0
  %v1264 = vadd.f32 %v1095, %v1263
  %v1265 = vpop.f32.mrf.mxu0
  %v1266 = vadd.f32 %v1097, %v1265
  %1267 = vmatmul.bf16.gmra.mxu0 %v802
  %v1268 = vpop.f32.mrf.mxu0
  %v1269 = vadd.f32 %v1100, %v1268
  %v1270 = vpop.f32.mrf.mxu0
  %v1271 = vadd.f32 %v1102, %v1270
  %1272 = vmatmul.bf16.gmra.mxu0 %v805
  %v1273 = vpop.f32.mrf.mxu0
  %v1274 = vadd.f32 %v1105, %v1273
  %v1275 = vpop.f32.mrf.mxu0
  %v1276 = vadd.f32 %v1107, %v1275
  %1277 = vmatmul.bf16.gmra.mxu0 %v808
  %v1278 = vpop.f32.mrf.mxu0
  %v1279 = vadd.f32 %v1110, %v1278
  %v1280 = vpop.f32.mrf.mxu0
  %v1281 = vadd.f32 %v1112, %v1280
  %1282 = vmatmul.bf16.gmra.mxu0 %v811
  %v1283 = vpop.f32.mrf.mxu0
  %v1284 = vadd.f32 %v1115, %v1283
  %v1285 = vpop.f32.mrf.mxu0
  %v1286 = vadd.f32 %v1117, %v1285
  %1287 = vmatmul.bf16.gmra.mxu0 %v814
  %v1288 = vpop.f32.mrf.mxu0
  %v1289 = vadd.f32 %v1120, %v1288
  %v1290 = vpop.f32.mrf.mxu0
  %v1291 = vadd.f32 %v1122, %v1290
  %1292 = vmatmul.bf16.gmra.mxu0 %v817
  %v1293 = vpop.f32.mrf.mxu0
  %v1294 = vadd.f32 %v1125, %v1293
  %v1295 = vpop.f32.mrf.mxu0
  %v1296 = vadd.f32 %v1127, %v1295
  %1297 = vmatmul.bf16.gmra.mxu0 %v820
  %v1298 = vpop.f32.mrf.mxu0
  %v1299 = vadd.f32 %v1130, %v1298
  %v1300 = vpop.f32.mrf.mxu0
  %v1301 = vadd.f32 %v1132, %v1300
  %1302 = vmatmul.bf16.gmra.mxu0 %v823
  %v1303 = vpop.f32.mrf.mxu0
  %v1304 = vadd.f32 %v1135, %v1303
  %v1305 = vpop.f32.mrf.mxu0
  %v1306 = vadd.f32 %v1137, %v1305
  %1307 = vmatmul.bf16.gmra.mxu0 %v826
  %v1308 = vpop.f32.mrf.mxu0
  %v1309 = vadd.f32 %v1140, %v1308
  %v1310 = vpop.f32.mrf.mxu0
  %v1311 = vadd.f32 %v1142, %v1310
  %1312 = vmatmul.bf16.gmra.mxu0 %v829
  %v1313 = vpop.f32.mrf.mxu0
  %v1314 = vadd.f32 %v1145, %v1313
  %v1315 = vpop.f32.mrf.mxu0
  %v1316 = vadd.f32 %v1147, %v1315
  %1317 = vmatmul.bf16.gmra.mxu0 %v832
  %v1318 = vpop.f32.mrf.mxu0
  %v1319 = vadd.f32 %v1150, %v1318
  %v1320 = vpop.f32.mrf.mxu0
  %v1321 = vadd.f32 %v1152, %v1320
  %1322 = vmatmul.bf16.gmra.mxu0 %v835
  %v1323 = vpop.f32.mrf.mxu0
  %v1324 = vadd.f32 %v1155, %v1323
  %v1325 = vpop.f32.mrf.mxu0
  %v1326 = vadd.f32 %v1157, %v1325
  %1327 = vmatmul.bf16.gmra.mxu0 %v838
  %v1328 = vpop.f32.mrf.mxu0
  %v1329 = vadd.f32 %v1160, %v1328
  %v1330 = vpop.f32.mrf.mxu0
  %v1331 = vadd.f32 %v1162, %v1330
  %1332 = vmatmul.bf16.gmra.mxu0 %v841
  %v1333 = vpop.f32.mrf.mxu0
  %v1334 = vadd.f32 %v1165, %v1333
  %v1335 = vpop.f32.mrf.mxu0
  %v1336 = vadd.f32 %v1167, %v1335
  %1337 = vmatmul.bf16.gmra.mxu0 %v844
  %v1338 = vpop.f32.mrf.mxu0
  %v1339 = vadd.f32 %v1170, %v1338
  %v1340 = vpop.f32.mrf.mxu0
  %v1341 = vadd.f32 %v1172, %v1340
  %1342 = vmatmul.bf16.gmra.mxu0 %v847
  %v1343 = vpop.f32.mrf.mxu0
  %v1344 = vadd.f32 %v1175, %v1343
  %v1345 = vpop.f32.mrf.mxu0
  %v1346 = vadd.f32 %v1177, %v1345
  %1347 = vmatmul.bf16.gmra.mxu0 %v850
  %v1348 = vpop.f32.mrf.mxu0
  %v1349 = vadd.f32 %v1180, %v1348
  %v1350 = vpop.f32.mrf.mxu0
  %v1351 = vadd.f32 %v1182, %v1350
  %1352 = vmatmul.bf16.gmra.mxu0 %v853
  %v1353 = vpop.f32.mrf.mxu0
  %v1354 = vadd.f32 %v1185, %v1353
  %v1355 = vpop.f32.mrf.mxu0
  %v1356 = vadd.f32 %v1187, %v1355
  %1357 = vmatmul.bf16.gmra.mxu0 %v856
  %v1358 = vpop.f32.mrf.mxu0
  %v1359 = vadd.f32 %v1190, %v1358
  %v1360 = vpop.f32.mrf.mxu0
  %v1361 = vadd.f32 %v1192, %v1360
  %1362 = vmatmul.bf16.gmra.mxu0 %v859
  %v1363 = vpop.f32.mrf.mxu0
  %v1364 = vadd.f32 %v1195, %v1363
  %v1365 = vpop.f32.mrf.mxu0
  %v1366 = vadd.f32 %v1197, %v1365
  %1367 = vdwg.mxu0
  %v1368 = vpack.c.bf16 %v1209, %v1209
  %v1369 = vpack.c.bf16 %v1211, %v1211
  %v1370 = vpack.c.bf16 %v1214, %v1214
  %v1371 = vpack.c.bf16 %v1216, %v1216
  %v1372 = vpack.c.bf16 %v1219, %v1219
  %v1373 = vpack.c.bf16 %v1221, %v1221
  %v1374 = vpack.c.bf16 %v1224, %v1224
  %v1375 = vpack.c.bf16 %v1226, %v1226
  %v1376 = vpack.c.bf16 %v1229, %v1229
  %v1377 = vpack.c.bf16 %v1231, %v1231
  %v1378 = vpack.c.bf16 %v1234, %v1234
  %v1379 = vpack.c.bf16 %v1236, %v1236
  %v1380 = vpack.c.bf16 %v1239, %v1239
  %v1381 = vpack.c.bf16 %v1241, %v1241
  %v1382 = vpack.c.bf16 %v1244, %v1244
  %v1383 = vpack.c.bf16 %v1246, %v1246
  %v1384 = vpack.c.bf16 %v1249, %v1249
  %v1385 = vpack.c.bf16 %v1251, %v1251
  %v1386 = vpack.c.bf16 %v1254, %v1254
  %v1387 = vpack.c.bf16 %v1256, %v1256
  %v1388 = vpack.c.bf16 %v1259, %v1259
  %v1389 = vpack.c.bf16 %v1261, %v1261
  %v1390 = vpack.c.bf16 %v1264, %v1264
  %v1391 = vpack.c.bf16 %v1266, %v1266
  %v1392 = vpack.c.bf16 %v1269, %v1269
  %v1393 = vpack.c.bf16 %v1271, %v1271
  %v1394 = vpack.c.bf16 %v1274, %v1274
  %v1395 = vpack.c.bf16 %v1276, %v1276
  %v1396 = vpack.c.bf16 %v1279, %v1279
  %v1397 = vpack.c.bf16 %v1281, %v1281
  %v1398 = vpack.c.bf16 %v1284, %v1284
  %v1399 = vpack.c.bf16 %v1286, %v1286
  %v1400 = vpack.c.bf16 %v1289, %v1289
  %v1401 = vpack.c.bf16 %v1291, %v1291
  %v1402 = vpack.c.bf16 %v1294, %v1294
  %v1403 = vpack.c.bf16 %v1296, %v1296
  %v1404 = vpack.c.bf16 %v1299, %v1299
  %v1405 = vpack.c.bf16 %v1301, %v1301
  %v1406 = vpack.c.bf16 %v1304, %v1304
  %v1407 = vpack.c.bf16 %v1306, %v1306
  %v1408 = vpack.c.bf16 %v1309, %v1309
  %v1409 = vpack.c.bf16 %v1311, %v1311
  %v1410 = vpack.c.bf16 %v1314, %v1314
  %v1411 = vpack.c.bf16 %v1316, %v1316
  %v1412 = vpack.c.bf16 %v1319, %v1319
  %v1413 = vpack.c.bf16 %v1321, %v1321
  %v1414 = vpack.c.bf16 %v1324, %v1324
  %v1415 = vpack.c.bf16 %v1326, %v1326
  %v1416 = vpack.c.bf16 %v1329, %v1329
  %v1417 = vpack.c.bf16 %v1331, %v1331
  %v1418 = vpack.c.bf16 %v1334, %v1334
  %v1419 = vpack.c.bf16 %v1336, %v1336
  %v1420 = vpack.c.bf16 %v1339, %v1339
  %v1421 = vpack.c.bf16 %v1341, %v1341
  %v1422 = vpack.c.bf16 %v1344, %v1344
  %v1423 = vpack.c.bf16 %v1346, %v1346
  %v1424 = vpack.c.bf16 %v1349, %v1349
  %v1425 = vpack.c.bf16 %v1351, %v1351
  %v1426 = vpack.c.bf16 %v1354, %v1354
  %v1427 = vpack.c.bf16 %v1356, %v1356
  %v1428 = vpack.c.bf16 %v1359, %v1359
  %v1429 = vpack.c.bf16 %v1361, %v1361
  %v1430 = vpack.c.bf16 %v1364, %v1364
  %v1431 = vpack.c.bf16 %v1366, %v1366
  %1432 = vst [vmem:[%s2] sm:$0xf] %v1368
  %1433 = vst [vmem:[%s2 + $0x4] sm:$0xf] %v1369
  %1434 = vst [vmem:[%s2 + $0x8] sm:$0xf] %v1370
  %1435 = vst [vmem:[%s2 + $0xc] sm:$0xf] %v1371
  %1436 = vst [vmem:[%s2 + $0x10] sm:$0xf] %v1372
  %1437 = vst [vmem:[%s2 + $0x14] sm:$0xf] %v1373
  %1438 = vst [vmem:[%s2 + $0x18] sm:$0xf] %v1374
  %1439 = vst [vmem:[%s2 + $0x1c] sm:$0xf] %v1375
  %1440 = vst [vmem:[%s2 + $0x20] sm:$0xf] %v1376
  %1441 = vst [vmem:[%s2 + $0x24] sm:$0xf] %v1377
  %1442 = vst [vmem:[%s2 + $0x28] sm:$0xf] %v1378
  %1443 = vst [vmem:[%s2 + $0x2c] sm:$0xf] %v1379
  %1444 = vst [vmem:[%s2 + $0x30] sm:$0xf] %v1380
  %1445 = vst [vmem:[%s2 + $0x34] sm:$0xf] %v1381
  %1446 = vst [vmem:[%s2 + $0x38] sm:$0xf] %v1382
  %1447 = vst [vmem:[%s2 + $0x3c] sm:$0xf] %v1383
  %1448 = vst [vmem:[%s2 + $0x40] sm:$0xf] %v1384
  %1449 = vst [vmem:[%s2 + $0x44] sm:$0xf] %v1385
  %1450 = vst [vmem:[%s2 + $0x48] sm:$0xf] %v1386
  %1451 = vst [vmem:[%s2 + $0x4c] sm:$0xf] %v1387
  %1452 = vst [vmem:[%s2 + $0x50] sm:$0xf] %v1388
  %1453 = vst [vmem:[%s2 + $0x54] sm:$0xf] %v1389
  %1454 = vst [vmem:[%s2 + $0x58] sm:$0xf] %v1390
  %1455 = vst [vmem:[%s2 + $0x5c] sm:$0xf] %v1391
  %1456 = vst [vmem:[%s2 + $0x60] sm:$0xf] %v1392
  %1457 = vst [vmem:[%s2 + $0x64] sm:$0xf] %v1393
  %1458 = vst [vmem:[%s2 + $0x68] sm:$0xf] %v1394
  %1459 = vst [vmem:[%s2 + $0x6c] sm:$0xf] %v1395
  %1460 = vst [vmem:[%s2 + $0x70] sm:$0xf] %v1396
  %1461 = vst [vmem:[%s2 + $0x74] sm:$0xf] %v1397
  %1462 = vst [vmem:[%s2 + $0x78] sm:$0xf] %v1398
  %1463 = vst [vmem:[%s2 + $0x7c] sm:$0xf] %v1399
  %1464 = vst [vmem:[%s2 + $0x80] sm:$0xf] %v1400
  %1465 = vst [vmem:[%s2 + $0x84] sm:$0xf] %v1401
  %1466 = vst [vmem:[%s2 + $0x88] sm:$0xf] %v1402
  %1467 = vst [vmem:[%s2 + $0x8c] sm:$0xf] %v1403
  %1468 = vst [vmem:[%s2 + $0x90] sm:$0xf] %v1404
  %1469 = vst [vmem:[%s2 + $0x94] sm:$0xf] %v1405
  %1470 = vst [vmem:[%s2 + $0x98] sm:$0xf] %v1406
  %1471 = vst [vmem:[%s2 + $0x9c] sm:$0xf] %v1407
  %1472 = vst [vmem:[%s2 + $0xa0] sm:$0xf] %v1408
  %1473 = vst [vmem:[%s2 + $0xa4] sm:$0xf] %v1409
  %1474 = vst [vmem:[%s2 + $0xa8] sm:$0xf] %v1410
  %1475 = vst [vmem:[%s2 + $0xac] sm:$0xf] %v1411
  %1476 = vst [vmem:[%s2 + $0xb0] sm:$0xf] %v1412
  %1477 = vst [vmem:[%s2 + $0xb4] sm:$0xf] %v1413
  %1478 = vst [vmem:[%s2 + $0xb8] sm:$0xf] %v1414
  %1479 = vst [vmem:[%s2 + $0xbc] sm:$0xf] %v1415
  %1480 = vst [vmem:[%s2 + $0xc0] sm:$0xf] %v1416
  %1481 = vst [vmem:[%s2 + $0xc4] sm:$0xf] %v1417
  %1482 = vst [vmem:[%s2 + $0xc8] sm:$0xf] %v1418
  %1483 = vst [vmem:[%s2 + $0xcc] sm:$0xf] %v1419
  %1484 = vst [vmem:[%s2 + $0xd0] sm:$0xf] %v1420
  %1485 = vst [vmem:[%s2 + $0xd4] sm:$0xf] %v1421
  %1486 = vst [vmem:[%s2 + $0xd8] sm:$0xf] %v1422
  %1487 = vst [vmem:[%s2 + $0xdc] sm:$0xf] %v1423
  %1488 = vst [vmem:[%s2 + $0xe0] sm:$0xf] %v1424
  %1489 = vst [vmem:[%s2 + $0xe4] sm:$0xf] %v1425
  %1490 = vst [vmem:[%s2 + $0xe8] sm:$0xf] %v1426
  %1491 = vst [vmem:[%s2 + $0xec] sm:$0xf] %v1427
  %1492 = vst [vmem:[%s2 + $0xf0] sm:$0xf] %v1428
  %1493 = vst [vmem:[%s2 + $0xf4] sm:$0xf] %v1429
  %1494 = vst [vmem:[%s2 + $0xf8] sm:$0xf] %v1430
  %1495 = vst [vmem:[%s2 + $0xfc] sm:$0xf] %v1431
  // Predicated region
  $region10: #{image_encoder_forward.28} parent=0 // pred_check
    _
  $region11: #{image_encoder_forward.28} parent=0 // pred_check_branch
    %1497 = sbr.rel (0) target = $region13
  $region12: #{image_encoder_forward.28} parent=0 // pred_region
    _
  $region13: #{image_encoder_forward.28} parent=0 // pred_fallthru
    _
  // Predicated region
  $region14: #{image_encoder_forward.28} parent=0 // pred_check
    _
  $region15: #{image_encoder_forward.28} parent=0 // pred_check_branch
    %1499 = sbr.rel (0) target = $region17
  $region16: #{image_encoder_forward.28} parent=0 // pred_region
    _
  $region17: #{image_encoder_forward.28} parent=0 // pred_fallthru
    _

// kernel: image_encoder_forward.29
$region0: #{image_encoder_forward.29}
  #allocation0 [shape = 'u32[]', space=smem, size = 0x4, offset = 0x4, fixed_abs, tag = 'smem constant byte address 0x4 - core index']
  #allocation1 [shape = 'u32[72,128]{1,0:T(1,128)}', space=vmem, size = 0x9000, scoped, tag = 'internal scratch']
  %s0 = inlined_call_operand.vmem [shape: bf16[512,24], index: 0, kind: input, shape index: {}]
  %s1 = inlined_call_operand.vmem [shape: bf16[24,128], index: 1, kind: input, shape index: {}]
  %s2 = inlined_call_operand.vmem [shape: f32[1,24], index: 2, kind: input, shape index: {}]
  %s3 = inlined_call_operand.vmem [shape: f32[1,24], index: 3, kind: input, shape index: {}]
  %s4 = inlined_call_operand.vmem [shape: f32[1,128], index: 4, kind: input, shape index: {}]
  %s5 = inlined_call_operand.vmem [shape: f32[1,128], index: 5, kind: input, shape index: {}]
  %s6 = inlined_call_operand.vmem [shape: bf16[512,128], index: 6, kind: output, shape index: {}]
  %s7 = sld [smem:[#allocation0]]
  $region34: #{image_encoder_forward.29} parent=0
    _
  %s9 = ssub.s32 1, %s7
  %s10 = scalar_select 0, %s9, %s7
  // Predicated region
  $region2: #{image_encoder_forward.29} parent=0 // pred_check
    _
  $region3: #{image_encoder_forward.29} parent=0 // pred_check_branch
    %12 = sbr.rel (0) target = $region5
  $region4: #{image_encoder_forward.29} parent=0 // pred_region
    _
  $region5: #{image_encoder_forward.29} parent=0 // pred_fallthru
    _
  // Predicated region
  $region6: #{image_encoder_forward.29} parent=0 // pred_check
    _
  $region7: #{image_encoder_forward.29} parent=0 // pred_check_branch
    %14 = sbr.rel (0) target = $region9
  $region8: #{image_encoder_forward.29} parent=0 // pred_region
    _
  $region9: #{image_encoder_forward.29} parent=0 // pred_fallthru
    _
  // Predicated region
  $region10: #{image_encoder_forward.29} parent=0 // pred_check
    _
  $region11: #{image_encoder_forward.29} parent=0 // pred_check_branch
    %16 = sbr.rel (0) target = $region13
  $region12: #{image_encoder_forward.29} parent=0 // pred_region
    _
  $region13: #{image_encoder_forward.29} parent=0 // pred_fallthru
    _
  // Predicated region
  $region14: #{image_encoder_forward.29} parent=0 // pred_check
    _
  $region15: #{image_encoder_forward.29} parent=0 // pred_check_branch
    %18 = sbr.rel (0) target = $region17
  $region16: #{image_encoder_forward.29} parent=0 // pred_region
    _
  $region17: #{image_encoder_forward.29} parent=0 // pred_fallthru
    _
  // Predicated region
  $region18: #{image_encoder_forward.29} parent=0 // pred_check
    _
  $region19: #{image_encoder_forward.29} parent=0 // pred_check_branch
    %20 = sbr.rel (0) target = $region21
  $region20: #{image_encoder_forward.29} parent=0 // pred_region
    _
  $region21: #{image_encoder_forward.29} parent=0 // pred_fallthru
    _
  // Predicated region
  $region22: #{image_encoder_forward.29} parent=0 // pred_check
    _
  $region23: #{image_encoder_forward.29} parent=0 // pred_check_branch
    %22 = sbr.rel (0) target = $region25
  $region24: #{image_encoder_forward.29} parent=0 // pred_region
    _
  $region25: #{image_encoder_forward.29} parent=0 // pred_fallthru
    _
  %v24 = vld [vmem:[%s0] sm:$0xf]
  %v25 = vld [vmem:[%s0 + $0x4] sm:$0xf]
  %v26 = vld [vmem:[%s0 + $0x8] sm:$0xf]
  %v27 = vld [vmem:[%s0 + $0xc] sm:$0xf]
  %v28 = vld [vmem:[%s0 + $0x10] sm:$0xf]
  %v29 = vld [vmem:[%s0 + $0x14] sm:$0xf]
  %v30 = vld [vmem:[%s0 + $0x18] sm:$0xf]
  %v31 = vld [vmem:[%s0 + $0x1c] sm:$0xf]
  %v32 = vld [vmem:[%s0 + $0x20] sm:$0xf]
  %v33 = vld [vmem:[%s0 + $0x24] sm:$0xf]
  %v34 = vld [vmem:[%s0 + $0x28] sm:$0xf]
  %v35 = vld [vmem:[%s0 + $0x2c] sm:$0xf]
  %v36 = vld [vmem:[%s0 + $0x30] sm:$0xf]
  %v37 = vld [vmem:[%s0 + $0x34] sm:$0xf]
  %v38 = vld [vmem:[%s0 + $0x38] sm:$0xf]
  %v39 = vld [vmem:[%s0 + $0x3c] sm:$0xf]
  %v40 = vld [vmem:[%s0 + $0x40] sm:$0xf]
  %v41 = vld [vmem:[%s0 + $0x44] sm:$0xf]
  %v42 = vld [vmem:[%s0 + $0x48] sm:$0xf]
  %v43 = vld [vmem:[%s0 + $0x4c] sm:$0xf]
  %v44 = vld [vmem:[%s0 + $0x50] sm:$0xf]
  %v45 = vld [vmem:[%s0 + $0x54] sm:$0xf]
  %v46 = vld [vmem:[%s0 + $0x58] sm:$0xf]
  %v47 = vld [vmem:[%s0 + $0x5c] sm:$0xf]
  %v48 = vld [vmem:[%s0 + $0x60] sm:$0xf]
  %v49 = vld [vmem:[%s0 + $0x64] sm:$0xf]
  %v50 = vld [vmem:[%s0 + $0x68] sm:$0xf]
  %v51 = vld [vmem:[%s0 + $0x6c] sm:$0xf]
  %v52 = vld [vmem:[%s0 + $0x70] sm:$0xf]
  %v53 = vld [vmem:[%s0 + $0x74] sm:$0xf]
  %v54 = vld [vmem:[%s0 + $0x78] sm:$0xf]
  %v55 = vld [vmem:[%s0 + $0x7c] sm:$0xf]
  %v56 = vld [vmem:[%s0 + $0x80] sm:$0xf]
  %v57 = vld [vmem:[%s0 + $0x84] sm:$0xf]
  %v58 = vld [vmem:[%s0 + $0x88] sm:$0xf]
  %v59 = vld [vmem:[%s0 + $0x8c] sm:$0xf]
  %v60 = vld [vmem:[%s0 + $0x90] sm:$0xf]
  %v61 = vld [vmem:[%s0 + $0x94] sm:$0xf]
  %v62 = vld [vmem:[%s0 + $0x98] sm:$0xf]
  %v63 = vld [vmem:[%s0 + $0x9c] sm:$0xf]
  %v64 = vld [vmem:[%s0 + $0xa0] sm:$0xf]
  %v65 = vld [vmem:[%s0 + $0xa4] sm:$0xf]
  %v66 = vld [vmem:[%s0 + $0xa8] sm:$0xf]
  %v67 = vld [vmem:[%s0 + $0xac] sm:$0xf]
  %v68 = vld [vmem:[%s0 + $0xb0] sm:$0xf]
  %v69 = vld [vmem:[%s0 + $0xb4] sm:$0xf]
  %v70 = vld [vmem:[%s0 + $0xb8] sm:$0xf]
  %v71 = vld [vmem:[%s0 + $0xbc] sm:$0xf]
  %v72 = vld [vmem:[%s0 + $0xc0] sm:$0xf]
  %v73 = vld [vmem:[%s0 + $0xc4] sm:$0xf]
  %v74 = vld [vmem:[%s0 + $0xc8] sm:$0xf]
  %v75 = vld [vmem:[%s0 + $0xcc] sm:$0xf]
  %v76 = vld [vmem:[%s0 + $0xd0] sm:$0xf]
  %v77 = vld [vmem:[%s0 + $0xd4] sm:$0xf]
  %v78 = vld [vmem:[%s0 + $0xd8] sm:$0xf]
  %v79 = vld [vmem:[%s0 + $0xdc] sm:$0xf]
  %v80 = vld [vmem:[%s0 + $0xe0] sm:$0xf]
  %v81 = vld [vmem:[%s0 + $0xe4] sm:$0xf]
  %v82 = vld [vmem:[%s0 + $0xe8] sm:$0xf]
  %v83 = vld [vmem:[%s0 + $0xec] sm:$0xf]
  %v84 = vld [vmem:[%s0 + $0xf0] sm:$0xf]
  %v85 = vld [vmem:[%s0 + $0xf4] sm:$0xf]
  %v86 = vld [vmem:[%s0 + $0xf8] sm:$0xf]
  %v87 = vld [vmem:[%s0 + $0xfc] sm:$0xf]
  %v88 = vunpack.c.l.bf16 %v24
  %v89 = vunpack.c.l.bf16 %v25
  %v90 = vunpack.c.l.bf16 %v26
  %v91 = vunpack.c.l.bf16 %v27
  %v92 = vunpack.c.l.bf16 %v28
  %v93 = vunpack.c.l.bf16 %v29
  %v94 = vunpack.c.l.bf16 %v30
  %v95 = vunpack.c.l.bf16 %v31
  %v96 = vunpack.c.l.bf16 %v32
  %v97 = vunpack.c.l.bf16 %v33
  %v98 = vunpack.c.l.bf16 %v34
  %v99 = vunpack.c.l.bf16 %v35
  %v100 = vunpack.c.l.bf16 %v36
  %v101 = vunpack.c.l.bf16 %v37
  %v102 = vunpack.c.l.bf16 %v38
  %v103 = vunpack.c.l.bf16 %v39
  %v104 = vunpack.c.l.bf16 %v40
  %v105 = vunpack.c.l.bf16 %v41
  %v106 = vunpack.c.l.bf16 %v42
  %v107 = vunpack.c.l.bf16 %v43
  %v108 = vunpack.c.l.bf16 %v44
  %v109 = vunpack.c.l.bf16 %v45
  %v110 = vunpack.c.l.bf16 %v46
  %v111 = vunpack.c.l.bf16 %v47
  %v112 = vunpack.c.l.bf16 %v48
  %v113 = vunpack.c.l.bf16 %v49
  %v114 = vunpack.c.l.bf16 %v50
  %v115 = vunpack.c.l.bf16 %v51
  %v116 = vunpack.c.l.bf16 %v52
  %v117 = vunpack.c.l.bf16 %v53
  %v118 = vunpack.c.l.bf16 %v54
  %v119 = vunpack.c.l.bf16 %v55
  %v120 = vunpack.c.l.bf16 %v56
  %v121 = vunpack.c.l.bf16 %v57
  %v122 = vunpack.c.l.bf16 %v58
  %v123 = vunpack.c.l.bf16 %v59
  %v124 = vunpack.c.l.bf16 %v60
  %v125 = vunpack.c.l.bf16 %v61
  %v126 = vunpack.c.l.bf16 %v62
  %v127 = vunpack.c.l.bf16 %v63
  %v128 = vunpack.c.l.bf16 %v64
  %v129 = vunpack.c.l.bf16 %v65
  %v130 = vunpack.c.l.bf16 %v66
  %v131 = vunpack.c.l.bf16 %v67
  %v132 = vunpack.c.l.bf16 %v68
  %v133 = vunpack.c.l.bf16 %v69
  %v134 = vunpack.c.l.bf16 %v70
  %v135 = vunpack.c.l.bf16 %v71
  %v136 = vunpack.c.l.bf16 %v72
  %v137 = vunpack.c.l.bf16 %v73
  %v138 = vunpack.c.l.bf16 %v74
  %v139 = vunpack.c.l.bf16 %v75
  %v140 = vunpack.c.l.bf16 %v76
  %v141 = vunpack.c.l.bf16 %v77
  %v142 = vunpack.c.l.bf16 %v78
  %v143 = vunpack.c.l.bf16 %v79
  %v144 = vunpack.c.l.bf16 %v80
  %v145 = vunpack.c.l.bf16 %v81
  %v146 = vunpack.c.l.bf16 %v82
  %v147 = vunpack.c.l.bf16 %v83
  %v148 = vunpack.c.l.bf16 %v84
  %v149 = vunpack.c.l.bf16 %v85
  %v150 = vunpack.c.l.bf16 %v86
  %v151 = vunpack.c.l.bf16 %v87
  %v152 = vld [vmem:[%s2] sm:$0x1]
  %v154 = vperm.slane %v152, 0
  %v156 = vmul.f32 %v88, %v154
  %v157 = vmul.f32 %v89, %v154
  %v158 = vmul.f32 %v90, %v154
  %v159 = vmul.f32 %v91, %v154
  %v160 = vmul.f32 %v92, %v154
  %v161 = vmul.f32 %v93, %v154
  %v162 = vmul.f32 %v94, %v154
  %v163 = vmul.f32 %v95, %v154
  %v164 = vmul.f32 %v96, %v154
  %v165 = vmul.f32 %v97, %v154
  %v166 = vmul.f32 %v98, %v154
  %v167 = vmul.f32 %v99, %v154
  %v168 = vmul.f32 %v100, %v154
  %v169 = vmul.f32 %v101, %v154
  %v170 = vmul.f32 %v102, %v154
  %v171 = vmul.f32 %v103, %v154
  %v172 = vmul.f32 %v104, %v154
  %v173 = vmul.f32 %v105, %v154
  %v174 = vmul.f32 %v106, %v154
  %v175 = vmul.f32 %v107, %v154
  %v176 = vmul.f32 %v108, %v154
  %v177 = vmul.f32 %v109, %v154
  %v178 = vmul.f32 %v110, %v154
  %v179 = vmul.f32 %v111, %v154
  %v180 = vmul.f32 %v112, %v154
  %v181 = vmul.f32 %v113, %v154
  %v182 = vmul.f32 %v114, %v154
  %v183 = vmul.f32 %v115, %v154
  %v184 = vmul.f32 %v116, %v154
  %v185 = vmul.f32 %v117, %v154
  %v186 = vmul.f32 %v118, %v154
  %v187 = vmul.f32 %v119, %v154
  %v188 = vmul.f32 %v120, %v154
  %v189 = vmul.f32 %v121, %v154
  %v190 = vmul.f32 %v122, %v154
  %v191 = vmul.f32 %v123, %v154
  %v192 = vmul.f32 %v124, %v154
  %v193 = vmul.f32 %v125, %v154
  %v194 = vmul.f32 %v126, %v154
  %v195 = vmul.f32 %v127, %v154
  %v196 = vmul.f32 %v128, %v154
  %v197 = vmul.f32 %v129, %v154
  %v198 = vmul.f32 %v130, %v154
  %v199 = vmul.f32 %v131, %v154
  %v200 = vmul.f32 %v132, %v154
  %v201 = vmul.f32 %v133, %v154
  %v202 = vmul.f32 %v134, %v154
  %v203 = vmul.f32 %v135, %v154
  %v204 = vmul.f32 %v136, %v154
  %v205 = vmul.f32 %v137, %v154
  %v206 = vmul.f32 %v138, %v154
  %v207 = vmul.f32 %v139, %v154
  %v208 = vmul.f32 %v140, %v154
  %v209 = vmul.f32 %v141, %v154
  %v210 = vmul.f32 %v142, %v154
  %v211 = vmul.f32 %v143, %v154
  %v212 = vmul.f32 %v144, %v154
  %v213 = vmul.f32 %v145, %v154
  %v214 = vmul.f32 %v146, %v154
  %v215 = vmul.f32 %v147, %v154
  %v216 = vmul.f32 %v148, %v154
  %v217 = vmul.f32 %v149, %v154
  %v218 = vmul.f32 %v150, %v154
  %v219 = vmul.f32 %v151, %v154
  %v220 = vld [vmem:[%s3] sm:$0x1]
  %v222 = vperm.slane %v220, 0
  %v224 = vadd.f32 %v156, %v222
  %v225 = vadd.f32 %v157, %v222
  %v226 = vadd.f32 %v158, %v222
  %v227 = vadd.f32 %v159, %v222
  %v228 = vadd.f32 %v160, %v222
  %v229 = vadd.f32 %v161, %v222
  %v230 = vadd.f32 %v162, %v222
  %v231 = vadd.f32 %v163, %v222
  %v232 = vadd.f32 %v164, %v222
  %v233 = vadd.f32 %v165, %v222
  %v234 = vadd.f32 %v166, %v222
  %v235 = vadd.f32 %v167, %v222
  %v236 = vadd.f32 %v168, %v222
  %v237 = vadd.f32 %v169, %v222
  %v238 = vadd.f32 %v170, %v222
  %v239 = vadd.f32 %v171, %v222
  %v240 = vadd.f32 %v172, %v222
  %v241 = vadd.f32 %v173, %v222
  %v242 = vadd.f32 %v174, %v222
  %v243 = vadd.f32 %v175, %v222
  %v244 = vadd.f32 %v176, %v222
  %v245 = vadd.f32 %v177, %v222
  %v246 = vadd.f32 %v178, %v222
  %v247 = vadd.f32 %v179, %v222
  %v248 = vadd.f32 %v180, %v222
  %v249 = vadd.f32 %v181, %v222
  %v250 = vadd.f32 %v182, %v222
  %v251 = vadd.f32 %v183, %v222
  %v252 = vadd.f32 %v184, %v222
  %v253 = vadd.f32 %v185, %v222
  %v254 = vadd.f32 %v186, %v222
  %v255 = vadd.f32 %v187, %v222
  %v256 = vadd.f32 %v188, %v222
  %v257 = vadd.f32 %v189, %v222
  %v258 = vadd.f32 %v190, %v222
  %v259 = vadd.f32 %v191, %v222
  %v260 = vadd.f32 %v192, %v222
  %v261 = vadd.f32 %v193, %v222
  %v262 = vadd.f32 %v194, %v222
  %v263 = vadd.f32 %v195, %v222
  %v264 = vadd.f32 %v196, %v222
  %v265 = vadd.f32 %v197, %v222
  %v266 = vadd.f32 %v198, %v222
  %v267 = vadd.f32 %v199, %v222
  %v268 = vadd.f32 %v200, %v222
  %v269 = vadd.f32 %v201, %v222
  %v270 = vadd.f32 %v202, %v222
  %v271 = vadd.f32 %v203, %v222
  %v272 = vadd.f32 %v204, %v222
  %v273 = vadd.f32 %v205, %v222
  %v274 = vadd.f32 %v206, %v222
  %v275 = vadd.f32 %v207, %v222
  %v276 = vadd.f32 %v208, %v222
  %v277 = vadd.f32 %v209, %v222
  %v278 = vadd.f32 %v210, %v222
  %v279 = vadd.f32 %v211, %v222
  %v280 = vadd.f32 %v212, %v222
  %v281 = vadd.f32 %v213, %v222
  %v282 = vadd.f32 %v214, %v222
  %v283 = vadd.f32 %v215, %v222
  %v284 = vadd.f32 %v216, %v222
  %v285 = vadd.f32 %v217, %v222
  %v286 = vadd.f32 %v218, %v222
  %v287 = vadd.f32 %v219, %v222
  %v288 = vmax.f32 %v224, 0.0
  %v289 = vmax.f32 %v225, 0.0
  %v290 = vmax.f32 %v226, 0.0
  %v291 = vmax.f32 %v227, 0.0
  %v292 = vmax.f32 %v228, 0.0
  %v293 = vmax.f32 %v229, 0.0
  %v294 = vmax.f32 %v230, 0.0
  %v295 = vmax.f32 %v231, 0.0
  %v296 = vmax.f32 %v232, 0.0
  %v297 = vmax.f32 %v233, 0.0
  %v298 = vmax.f32 %v234, 0.0
  %v299 = vmax.f32 %v235, 0.0
  %v300 = vmax.f32 %v236, 0.0
  %v301 = vmax.f32 %v237, 0.0
  %v302 = vmax.f32 %v238, 0.0
  %v303 = vmax.f32 %v239, 0.0
  %v304 = vmax.f32 %v240, 0.0
  %v305 = vmax.f32 %v241, 0.0
  %v306 = vmax.f32 %v242, 0.0
  %v307 = vmax.f32 %v243, 0.0
  %v308 = vmax.f32 %v244, 0.0
  %v309 = vmax.f32 %v245, 0.0
  %v310 = vmax.f32 %v246, 0.0
  %v311 = vmax.f32 %v247, 0.0
  %v312 = vmax.f32 %v248, 0.0
  %v313 = vmax.f32 %v249, 0.0
  %v314 = vmax.f32 %v250, 0.0
  %v315 = vmax.f32 %v251, 0.0
  %v316 = vmax.f32 %v252, 0.0
  %v317 = vmax.f32 %v253, 0.0
  %v318 = vmax.f32 %v254, 0.0
  %v319 = vmax.f32 %v255, 0.0
  %v320 = vmax.f32 %v256, 0.0
  %v321 = vmax.f32 %v257, 0.0
  %v322 = vmax.f32 %v258, 0.0
  %v323 = vmax.f32 %v259, 0.0
  %v324 = vmax.f32 %v260, 0.0
  %v325 = vmax.f32 %v261, 0.0
  %v326 = vmax.f32 %v262, 0.0
  %v327 = vmax.f32 %v263, 0.0
  %v328 = vmax.f32 %v264, 0.0
  %v329 = vmax.f32 %v265, 0.0
  %v330 = vmax.f32 %v266, 0.0
  %v331 = vmax.f32 %v267, 0.0
  %v332 = vmax.f32 %v268, 0.0
  %v333 = vmax.f32 %v269, 0.0
  %v334 = vmax.f32 %v270, 0.0
  %v335 = vmax.f32 %v271, 0.0
  %v336 = vmax.f32 %v272, 0.0
  %v337 = vmax.f32 %v273, 0.0
  %v338 = vmax.f32 %v274, 0.0
  %v339 = vmax.f32 %v275, 0.0
  %v340 = vmax.f32 %v276, 0.0
  %v341 = vmax.f32 %v277, 0.0
  %v342 = vmax.f32 %v278, 0.0
  %v343 = vmax.f32 %v279, 0.0
  %v344 = vmax.f32 %v280, 0.0
  %v345 = vmax.f32 %v281, 0.0
  %v346 = vmax.f32 %v282, 0.0
  %v347 = vmax.f32 %v283, 0.0
  %v348 = vmax.f32 %v284, 0.0
  %v349 = vmax.f32 %v285, 0.0
  %v350 = vmax.f32 %v286, 0.0
  %v351 = vmax.f32 %v287, 0.0
  %v352 = vpack.c.bf16 %v289, %v288
  %v353 = vpack.c.bf16 %v291, %v290
  %v354 = vpack.c.bf16 %v293, %v292
  %v355 = vpack.c.bf16 %v295, %v294
  %v356 = vpack.c.bf16 %v297, %v296
  %v357 = vpack.c.bf16 %v299, %v298
  %v358 = vpack.c.bf16 %v301, %v300
  %v359 = vpack.c.bf16 %v303, %v302
  %v360 = vpack.c.bf16 %v305, %v304
  %v361 = vpack.c.bf16 %v307, %v306
  %v362 = vpack.c.bf16 %v309, %v308
  %v363 = vpack.c.bf16 %v311, %v310
  %v364 = vpack.c.bf16 %v313, %v312
  %v365 = vpack.c.bf16 %v315, %v314
  %v366 = vpack.c.bf16 %v317, %v316
  %v367 = vpack.c.bf16 %v319, %v318
  %v368 = vpack.c.bf16 %v321, %v320
  %v369 = vpack.c.bf16 %v323, %v322
  %v370 = vpack.c.bf16 %v325, %v324
  %v371 = vpack.c.bf16 %v327, %v326
  %v372 = vpack.c.bf16 %v329, %v328
  %v373 = vpack.c.bf16 %v331, %v330
  %v374 = vpack.c.bf16 %v333, %v332
  %v375 = vpack.c.bf16 %v335, %v334
  %v376 = vpack.c.bf16 %v337, %v336
  %v377 = vpack.c.bf16 %v339, %v338
  %v378 = vpack.c.bf16 %v341, %v340
  %v379 = vpack.c.bf16 %v343, %v342
  %v380 = vpack.c.bf16 %v345, %v344
  %v381 = vpack.c.bf16 %v347, %v346
  %v382 = vpack.c.bf16 %v349, %v348
  %v383 = vpack.c.bf16 %v351, %v350
  %v384 = vld [vmem:[%s1] sm:$0xf]
  %v385 = vld [vmem:[%s1 + $0x4] sm:$0xf]
  %v386 = vld [vmem:[%s1 + $0x8] sm:$0xf]
  %v390 = vunpack.c.l.b16 %v384
  %v391 = vunpack.c.l.b16 %v385
  %v392 = vunpack.c.l.b16 %v386
  %v393 = vpack.c.b16 %v391, %v390
  %v394 = vpack.c.b16 %v392, %v392
  %vm396 = vcmask 195584
  %v398 = vsel %vm396, %v352, 0
  %v401 = vsel %vm396, %v353, 0
  %v404 = vsel %vm396, %v354, 0
  %v407 = vsel %vm396, %v355, 0
  %v410 = vsel %vm396, %v356, 0
  %v413 = vsel %vm396, %v357, 0
  %v416 = vsel %vm396, %v358, 0
  %v419 = vsel %vm396, %v359, 0
  %v422 = vsel %vm396, %v360, 0
  %v425 = vsel %vm396, %v361, 0
  %v428 = vsel %vm396, %v362, 0
  %v431 = vsel %vm396, %v363, 0
  %v434 = vsel %vm396, %v364, 0
  %v437 = vsel %vm396, %v365, 0
  %v440 = vsel %vm396, %v366, 0
  %v443 = vsel %vm396, %v367, 0
  %v446 = vsel %vm396, %v368, 0
  %v449 = vsel %vm396, %v369, 0
  %v452 = vsel %vm396, %v370, 0
  %v455 = vsel %vm396, %v371, 0
  %v458 = vsel %vm396, %v372, 0
  %v461 = vsel %vm396, %v373, 0
  %v464 = vsel %vm396, %v374, 0
  %v467 = vsel %vm396, %v375, 0
  %v470 = vsel %vm396, %v376, 0
  %v473 = vsel %vm396, %v377, 0
  %v476 = vsel %vm396, %v378, 0
  %v479 = vsel %vm396, %v379, 0
  %v482 = vsel %vm396, %v380, 0
  %v485 = vsel %vm396, %v381, 0
  %v488 = vsel %vm396, %v382, 0
  %v491 = vsel %vm396, %v383, 0
  %vm493 = vcmask 1043456
  %v495 = vsel %vm493, %v394, 0
  %497 = vmatpush.bf16.msra.mxu0 0
  %498 = vmatpush.bf16.msra.mxu0 0
  %499 = vmatpush.bf16.msra.mxu0 0
  %500 = vmatpush.bf16.msra.mxu0 0
  %501 = vmatpush.bf16.msra.mxu0 0
  %502 = vmatpush.bf16.msra.mxu0 0
  %503 = vmatpush.bf16.msra.mxu0 %v495
  %504 = vmatpush.bf16.msra.mxu0 %v393
  %505 = vmatmul.bf16.gmra.mxu0 %v398
  %v506 = vpop.f32.mrf.mxu0
  %v507 = vadd.f32 0.0, %v506
  %v508 = vpop.f32.mrf.mxu0
  %v509 = vadd.f32 0.0, %v508
  %510 = vmatmul.bf16.gmra.mxu0 %v401
  %v511 = vpop.f32.mrf.mxu0
  %v512 = vadd.f32 0.0, %v511
  %v513 = vpop.f32.mrf.mxu0
  %v514 = vadd.f32 0.0, %v513
  %515 = vmatmul.bf16.gmra.mxu0 %v404
  %v516 = vpop.f32.mrf.mxu0
  %v517 = vadd.f32 0.0, %v516
  %v518 = vpop.f32.mrf.mxu0
  %v519 = vadd.f32 0.0, %v518
  %520 = vmatmul.bf16.gmra.mxu0 %v407
  %v521 = vpop.f32.mrf.mxu0
  %v522 = vadd.f32 0.0, %v521
  %v523 = vpop.f32.mrf.mxu0
  %v524 = vadd.f32 0.0, %v523
  %525 = vmatmul.bf16.gmra.mxu0 %v410
  %v526 = vpop.f32.mrf.mxu0
  %v527 = vadd.f32 0.0, %v526
  %v528 = vpop.f32.mrf.mxu0
  %v529 = vadd.f32 0.0, %v528
  %530 = vmatmul.bf16.gmra.mxu0 %v413
  %v531 = vpop.f32.mrf.mxu0
  %v532 = vadd.f32 0.0, %v531
  %v533 = vpop.f32.mrf.mxu0
  %v534 = vadd.f32 0.0, %v533
  %535 = vmatmul.bf16.gmra.mxu0 %v416
  %v536 = vpop.f32.mrf.mxu0
  %v537 = vadd.f32 0.0, %v536
  %v538 = vpop.f32.mrf.mxu0
  %v539 = vadd.f32 0.0, %v538
  %540 = vmatmul.bf16.gmra.mxu0 %v419
  %v541 = vpop.f32.mrf.mxu0
  %v542 = vadd.f32 0.0, %v541
  %v543 = vpop.f32.mrf.mxu0
  %v544 = vadd.f32 0.0, %v543
  %545 = vmatmul.bf16.gmra.mxu0 %v422
  %v546 = vpop.f32.mrf.mxu0
  %v547 = vadd.f32 0.0, %v546
  %v548 = vpop.f32.mrf.mxu0
  %v549 = vadd.f32 0.0, %v548
  %550 = vmatmul.bf16.gmra.mxu0 %v425
  %v551 = vpop.f32.mrf.mxu0
  %v552 = vadd.f32 0.0, %v551
  %v553 = vpop.f32.mrf.mxu0
  %v554 = vadd.f32 0.0, %v553
  %555 = vmatmul.bf16.gmra.mxu0 %v428
  %v556 = vpop.f32.mrf.mxu0
  %v557 = vadd.f32 0.0, %v556
  %v558 = vpop.f32.mrf.mxu0
  %v559 = vadd.f32 0.0, %v558
  %560 = vmatmul.bf16.gmra.mxu0 %v431
  %v561 = vpop.f32.mrf.mxu0
  %v562 = vadd.f32 0.0, %v561
  %v563 = vpop.f32.mrf.mxu0
  %v564 = vadd.f32 0.0, %v563
  %565 = vmatmul.bf16.gmra.mxu0 %v434
  %v566 = vpop.f32.mrf.mxu0
  %v567 = vadd.f32 0.0, %v566
  %v568 = vpop.f32.mrf.mxu0
  %v569 = vadd.f32 0.0, %v568
  %570 = vmatmul.bf16.gmra.mxu0 %v437
  %v571 = vpop.f32.mrf.mxu0
  %v572 = vadd.f32 0.0, %v571
  %v573 = vpop.f32.mrf.mxu0
  %v574 = vadd.f32 0.0, %v573
  %575 = vmatmul.bf16.gmra.mxu0 %v440
  %v576 = vpop.f32.mrf.mxu0
  %v577 = vadd.f32 0.0, %v576
  %v578 = vpop.f32.mrf.mxu0
  %v579 = vadd.f32 0.0, %v578
  %580 = vmatmul.bf16.gmra.mxu0 %v443
  %v581 = vpop.f32.mrf.mxu0
  %v582 = vadd.f32 0.0, %v581
  %v583 = vpop.f32.mrf.mxu0
  %v584 = vadd.f32 0.0, %v583
  %585 = vmatmul.bf16.gmra.mxu0 %v446
  %v586 = vpop.f32.mrf.mxu0
  %v587 = vadd.f32 0.0, %v586
  %v588 = vpop.f32.mrf.mxu0
  %v589 = vadd.f32 0.0, %v588
  %590 = vmatmul.bf16.gmra.mxu0 %v449
  %v591 = vpop.f32.mrf.mxu0
  %v592 = vadd.f32 0.0, %v591
  %v593 = vpop.f32.mrf.mxu0
  %v594 = vadd.f32 0.0, %v593
  %595 = vmatmul.bf16.gmra.mxu0 %v452
  %v596 = vpop.f32.mrf.mxu0
  %v597 = vadd.f32 0.0, %v596
  %v598 = vpop.f32.mrf.mxu0
  %v599 = vadd.f32 0.0, %v598
  %600 = vmatmul.bf16.gmra.mxu0 %v455
  %v601 = vpop.f32.mrf.mxu0
  %v602 = vadd.f32 0.0, %v601
  %v603 = vpop.f32.mrf.mxu0
  %v604 = vadd.f32 0.0, %v603
  %605 = vmatmul.bf16.gmra.mxu0 %v458
  %v606 = vpop.f32.mrf.mxu0
  %v607 = vadd.f32 0.0, %v606
  %v608 = vpop.f32.mrf.mxu0
  %v609 = vadd.f32 0.0, %v608
  %610 = vmatmul.bf16.gmra.mxu0 %v461
  %v611 = vpop.f32.mrf.mxu0
  %v612 = vadd.f32 0.0, %v611
  %v613 = vpop.f32.mrf.mxu0
  %v614 = vadd.f32 0.0, %v613
  %615 = vmatmul.bf16.gmra.mxu0 %v464
  %v616 = vpop.f32.mrf.mxu0
  %v617 = vadd.f32 0.0, %v616
  %v618 = vpop.f32.mrf.mxu0
  %v619 = vadd.f32 0.0, %v618
  %620 = vmatmul.bf16.gmra.mxu0 %v467
  %v621 = vpop.f32.mrf.mxu0
  %v622 = vadd.f32 0.0, %v621
  %v623 = vpop.f32.mrf.mxu0
  %v624 = vadd.f32 0.0, %v623
  %625 = vmatmul.bf16.gmra.mxu0 %v470
  %v626 = vpop.f32.mrf.mxu0
  %v627 = vadd.f32 0.0, %v626
  %v628 = vpop.f32.mrf.mxu0
  %v629 = vadd.f32 0.0, %v628
  %630 = vmatmul.bf16.gmra.mxu0 %v473
  %v631 = vpop.f32.mrf.mxu0
  %v632 = vadd.f32 0.0, %v631
  %v633 = vpop.f32.mrf.mxu0
  %v634 = vadd.f32 0.0, %v633
  %635 = vmatmul.bf16.gmra.mxu0 %v476
  %v636 = vpop.f32.mrf.mxu0
  %v637 = vadd.f32 0.0, %v636
  %v638 = vpop.f32.mrf.mxu0
  %v639 = vadd.f32 0.0, %v638
  %640 = vmatmul.bf16.gmra.mxu0 %v479
  %v641 = vpop.f32.mrf.mxu0
  %v642 = vadd.f32 0.0, %v641
  %v643 = vpop.f32.mrf.mxu0
  %v644 = vadd.f32 0.0, %v643
  %645 = vmatmul.bf16.gmra.mxu0 %v482
  %v646 = vpop.f32.mrf.mxu0
  %v647 = vadd.f32 0.0, %v646
  %v648 = vpop.f32.mrf.mxu0
  %v649 = vadd.f32 0.0, %v648
  %650 = vmatmul.bf16.gmra.mxu0 %v485
  %v651 = vpop.f32.mrf.mxu0
  %v652 = vadd.f32 0.0, %v651
  %v653 = vpop.f32.mrf.mxu0
  %v654 = vadd.f32 0.0, %v653
  %655 = vmatmul.bf16.gmra.mxu0 %v488
  %v656 = vpop.f32.mrf.mxu0
  %v657 = vadd.f32 0.0, %v656
  %v658 = vpop.f32.mrf.mxu0
  %v659 = vadd.f32 0.0, %v658
  %660 = vmatmul.bf16.gmra.mxu0 %v491
  %v661 = vpop.f32.mrf.mxu0
  %v662 = vadd.f32 0.0, %v661
  %v663 = vpop.f32.mrf.mxu0
  %v664 = vadd.f32 0.0, %v663
  %665 = vdwg.mxu0
  %v666 = vld [vmem:[%s4] sm:$0x1]
  %v668 = vperm.slane %v666, 0
  %v670 = vmul.f32 %v507, %v668
  %v671 = vmul.f32 %v509, %v668
  %v672 = vmul.f32 %v512, %v668
  %v673 = vmul.f32 %v514, %v668
  %v674 = vmul.f32 %v517, %v668
  %v675 = vmul.f32 %v519, %v668
  %v676 = vmul.f32 %v522, %v668
  %v677 = vmul.f32 %v524, %v668
  %v678 = vmul.f32 %v527, %v668
  %v679 = vmul.f32 %v529, %v668
  %v680 = vmul.f32 %v532, %v668
  %v681 = vmul.f32 %v534, %v668
  %v682 = vmul.f32 %v537, %v668
  %v683 = vmul.f32 %v539, %v668
  %v684 = vmul.f32 %v542, %v668
  %v685 = vmul.f32 %v544, %v668
  %v686 = vmul.f32 %v547, %v668
  %v687 = vmul.f32 %v549, %v668
  %v688 = vmul.f32 %v552, %v668
  %v689 = vmul.f32 %v554, %v668
  %v690 = vmul.f32 %v557, %v668
  %v691 = vmul.f32 %v559, %v668
  %v692 = vmul.f32 %v562, %v668
  %v693 = vmul.f32 %v564, %v668
  %v694 = vmul.f32 %v567, %v668
  %v695 = vmul.f32 %v569, %v668
  %v696 = vmul.f32 %v572, %v668
  %v697 = vmul.f32 %v574, %v668
  %v698 = vmul.f32 %v577, %v668
  %v699 = vmul.f32 %v579, %v668
  %v700 = vmul.f32 %v582, %v668
  %v701 = vmul.f32 %v584, %v668
  %v702 = vmul.f32 %v587, %v668
  %v703 = vmul.f32 %v589, %v668
  %v704 = vmul.f32 %v592, %v668
  %v705 = vmul.f32 %v594, %v668
  %v706 = vmul.f32 %v597, %v668
  %v707 = vmul.f32 %v599, %v668
  %v708 = vmul.f32 %v602, %v668
  %v709 = vmul.f32 %v604, %v668
  %v710 = vmul.f32 %v607, %v668
  %v711 = vmul.f32 %v609, %v668
  %v712 = vmul.f32 %v612, %v668
  %v713 = vmul.f32 %v614, %v668
  %v714 = vmul.f32 %v617, %v668
  %v715 = vmul.f32 %v619, %v668
  %v716 = vmul.f32 %v622, %v668
  %v717 = vmul.f32 %v624, %v668
  %v718 = vmul.f32 %v627, %v668
  %v719 = vmul.f32 %v629, %v668
  %v720 = vmul.f32 %v632, %v668
  %v721 = vmul.f32 %v634, %v668
  %v722 = vmul.f32 %v637, %v668
  %v723 = vmul.f32 %v639, %v668
  %v724 = vmul.f32 %v642, %v668
  %v725 = vmul.f32 %v644, %v668
  %v726 = vmul.f32 %v647, %v668
  %v727 = vmul.f32 %v649, %v668
  %v728 = vmul.f32 %v652, %v668
  %v729 = vmul.f32 %v654, %v668
  %v730 = vmul.f32 %v657, %v668
  %v731 = vmul.f32 %v659, %v668
  %v732 = vmul.f32 %v662, %v668
  %v733 = vmul.f32 %v664, %v668
  %v734 = vld [vmem:[%s5] sm:$0x1]
  %v736 = vperm.slane %v734, 0
  %v738 = vadd.f32 %v670, %v736
  %v739 = vadd.f32 %v671, %v736
  %v740 = vadd.f32 %v672, %v736
  %v741 = vadd.f32 %v673, %v736
  %v742 = vadd.f32 %v674, %v736
  %v743 = vadd.f32 %v675, %v736
  %v744 = vadd.f32 %v676, %v736
  %v745 = vadd.f32 %v677, %v736
  %v746 = vadd.f32 %v678, %v736
  %v747 = vadd.f32 %v679, %v736
  %v748 = vadd.f32 %v680, %v736
  %v749 = vadd.f32 %v681, %v736
  %v750 = vadd.f32 %v682, %v736
  %v751 = vadd.f32 %v683, %v736
  %v752 = vadd.f32 %v684, %v736
  %v753 = vadd.f32 %v685, %v736
  %v754 = vadd.f32 %v686, %v736
  %v755 = vadd.f32 %v687, %v736
  %v756 = vadd.f32 %v688, %v736
  %v757 = vadd.f32 %v689, %v736
  %v758 = vadd.f32 %v690, %v736
  %v759 = vadd.f32 %v691, %v736
  %v760 = vadd.f32 %v692, %v736
  %v761 = vadd.f32 %v693, %v736
  %v762 = vadd.f32 %v694, %v736
  %v763 = vadd.f32 %v695, %v736
  %v764 = vadd.f32 %v696, %v736
  %v765 = vadd.f32 %v697, %v736
  %v766 = vadd.f32 %v698, %v736
  %v767 = vadd.f32 %v699, %v736
  %v768 = vadd.f32 %v700, %v736
  %v769 = vadd.f32 %v701, %v736
  %v770 = vadd.f32 %v702, %v736
  %v771 = vadd.f32 %v703, %v736
  %v772 = vadd.f32 %v704, %v736
  %v773 = vadd.f32 %v705, %v736
  %v774 = vadd.f32 %v706, %v736
  %v775 = vadd.f32 %v707, %v736
  %v776 = vadd.f32 %v708, %v736
  %v777 = vadd.f32 %v709, %v736
  %v778 = vadd.f32 %v710, %v736
  %v779 = vadd.f32 %v711, %v736
  %v780 = vadd.f32 %v712, %v736
  %v781 = vadd.f32 %v713, %v736
  %v782 = vadd.f32 %v714, %v736
  %v783 = vadd.f32 %v715, %v736
  %v784 = vadd.f32 %v716, %v736
  %v785 = vadd.f32 %v717, %v736
  %v786 = vadd.f32 %v718, %v736
  %v787 = vadd.f32 %v719, %v736
  %v788 = vadd.f32 %v720, %v736
  %v789 = vadd.f32 %v721, %v736
  %v790 = vadd.f32 %v722, %v736
  %v791 = vadd.f32 %v723, %v736
  %v792 = vadd.f32 %v724, %v736
  %v793 = vadd.f32 %v725, %v736
  %v794 = vadd.f32 %v726, %v736
  %v795 = vadd.f32 %v727, %v736
  %v796 = vadd.f32 %v728, %v736
  %v797 = vadd.f32 %v729, %v736
  %v798 = vadd.f32 %v730, %v736
  %v799 = vadd.f32 %v731, %v736
  %v800 = vadd.f32 %v732, %v736
  %v801 = vadd.f32 %v733, %v736
  %v802 = vmax.f32 %v738, 0.0
  %v803 = vmax.f32 %v739, 0.0
  %v804 = vmax.f32 %v740, 0.0
  %v805 = vmax.f32 %v741, 0.0
  %v806 = vmax.f32 %v742, 0.0
  %v807 = vmax.f32 %v743, 0.0
  %v808 = vmax.f32 %v744, 0.0
  %v809 = vmax.f32 %v745, 0.0
  %v810 = vmax.f32 %v746, 0.0
  %v811 = vmax.f32 %v747, 0.0
  %v812 = vmax.f32 %v748, 0.0
  %v813 = vmax.f32 %v749, 0.0
  %v814 = vmax.f32 %v750, 0.0
  %v815 = vmax.f32 %v751, 0.0
  %v816 = vmax.f32 %v752, 0.0
  %v817 = vmax.f32 %v753, 0.0
  %v818 = vmax.f32 %v754, 0.0
  %v819 = vmax.f32 %v755, 0.0
  %v820 = vmax.f32 %v756, 0.0
  %v821 = vmax.f32 %v757, 0.0
  %v822 = vmax.f32 %v758, 0.0
  %v823 = vmax.f32 %v759, 0.0
  %v824 = vmax.f32 %v760, 0.0
  %v825 = vmax.f32 %v761, 0.0
  %v826 = vmax.f32 %v762, 0.0
  %v827 = vmax.f32 %v763, 0.0
  %v828 = vmax.f32 %v764, 0.0
  %v829 = vmax.f32 %v765, 0.0
  %v830 = vmax.f32 %v766, 0.0
  %v831 = vmax.f32 %v767, 0.0
  %v832 = vmax.f32 %v768, 0.0
  %v833 = vmax.f32 %v769, 0.0
  %v834 = vmax.f32 %v770, 0.0
  %v835 = vmax.f32 %v771, 0.0
  %v836 = vmax.f32 %v772, 0.0
  %v837 = vmax.f32 %v773, 0.0
  %v838 = vmax.f32 %v774, 0.0
  %v839 = vmax.f32 %v775, 0.0
  %v840 = vmax.f32 %v776, 0.0
  %v841 = vmax.f32 %v777, 0.0
  %v842 = vmax.f32 %v778, 0.0
  %v843 = vmax.f32 %v779, 0.0
  %v844 = vmax.f32 %v780, 0.0
  %v845 = vmax.f32 %v781, 0.0
  %v846 = vmax.f32 %v782, 0.0
  %v847 = vmax.f32 %v783, 0.0
  %v848 = vmax.f32 %v784, 0.0
  %v849 = vmax.f32 %v785, 0.0
  %v850 = vmax.f32 %v786, 0.0
  %v851 = vmax.f32 %v787, 0.0
  %v852 = vmax.f32 %v788, 0.0
  %v853 = vmax.f32 %v789, 0.0
  %v854 = vmax.f32 %v790, 0.0
  %v855 = vmax.f32 %v791, 0.0
  %v856 = vmax.f32 %v792, 0.0
  %v857 = vmax.f32 %v793, 0.0
  %v858 = vmax.f32 %v794, 0.0
  %v859 = vmax.f32 %v795, 0.0
  %v860 = vmax.f32 %v796, 0.0
  %v861 = vmax.f32 %v797, 0.0
  %v862 = vmax.f32 %v798, 0.0
  %v863 = vmax.f32 %v799, 0.0
  %v864 = vmax.f32 %v800, 0.0
  %v865 = vmax.f32 %v801, 0.0
  %v866 = vpack.c.bf16 %v802, %v802
  %v867 = vpack.c.bf16 %v803, %v803
  %v868 = vpack.c.bf16 %v804, %v804
  %v869 = vpack.c.bf16 %v805, %v805
  %v870 = vpack.c.bf16 %v806, %v806
  %v871 = vpack.c.bf16 %v807, %v807
  %v872 = vpack.c.bf16 %v808, %v808
  %v873 = vpack.c.bf16 %v809, %v809
  %v874 = vpack.c.bf16 %v810, %v810
  %v875 = vpack.c.bf16 %v811, %v811
  %v876 = vpack.c.bf16 %v812, %v812
  %v877 = vpack.c.bf16 %v813, %v813
  %v878 = vpack.c.bf16 %v814, %v814
  %v879 = vpack.c.bf16 %v815, %v815
  %v880 = vpack.c.bf16 %v816, %v816
  %v881 = vpack.c.bf16 %v817, %v817
  %v882 = vpack.c.bf16 %v818, %v818
  %v883 = vpack.c.bf16 %v819, %v819
  %v884 = vpack.c.bf16 %v820, %v820
  %v885 = vpack.c.bf16 %v821, %v821
  %v886 = vpack.c.bf16 %v822, %v822
  %v887 = vpack.c.bf16 %v823, %v823
  %v888 = vpack.c.bf16 %v824, %v824
  %v889 = vpack.c.bf16 %v825, %v825
  %v890 = vpack.c.bf16 %v826, %v826
  %v891 = vpack.c.bf16 %v827, %v827
  %v892 = vpack.c.bf16 %v828, %v828
  %v893 = vpack.c.bf16 %v829, %v829
  %v894 = vpack.c.bf16 %v830, %v830
  %v895 = vpack.c.bf16 %v831, %v831
  %v896 = vpack.c.bf16 %v832, %v832
  %v897 = vpack.c.bf16 %v833, %v833
  %v898 = vpack.c.bf16 %v834, %v834
  %v899 = vpack.c.bf16 %v835, %v835
  %v900 = vpack.c.bf16 %v836, %v836
  %v901 = vpack.c.bf16 %v837, %v837
  %v902 = vpack.c.bf16 %v838, %v838
  %v903 = vpack.c.bf16 %v839, %v839
  %v904 = vpack.c.bf16 %v840, %v840
  %v905 = vpack.c.bf16 %v841, %v841
  %v906 = vpack.c.bf16 %v842, %v842
  %v907 = vpack.c.bf16 %v843, %v843
  %v908 = vpack.c.bf16 %v844, %v844
  %v909 = vpack.c.bf16 %v845, %v845
  %v910 = vpack.c.bf16 %v846, %v846
  %v911 = vpack.c.bf16 %v847, %v847
  %v912 = vpack.c.bf16 %v848, %v848
  %v913 = vpack.c.bf16 %v849, %v849
  %v914 = vpack.c.bf16 %v850, %v850
  %v915 = vpack.c.bf16 %v851, %v851
  %v916 = vpack.c.bf16 %v852, %v852
  %v917 = vpack.c.bf16 %v853, %v853
  %v918 = vpack.c.bf16 %v854, %v854
  %v919 = vpack.c.bf16 %v855, %v855
  %v920 = vpack.c.bf16 %v856, %v856
  %v921 = vpack.c.bf16 %v857, %v857
  %v922 = vpack.c.bf16 %v858, %v858
  %v923 = vpack.c.bf16 %v859, %v859
  %v924 = vpack.c.bf16 %v860, %v860
  %v925 = vpack.c.bf16 %v861, %v861
  %v926 = vpack.c.bf16 %v862, %v862
  %v927 = vpack.c.bf16 %v863, %v863
  %v928 = vpack.c.bf16 %v864, %v864
  %v929 = vpack.c.bf16 %v865, %v865
  %930 = vst [vmem:[%s6] sm:$0xf] %v866
  %931 = vst [vmem:[%s6 + $0x4] sm:$0xf] %v867
  %932 = vst [vmem:[%s6 + $0x8] sm:$0xf] %v868
  %933 = vst [vmem:[%s6 + $0xc] sm:$0xf] %v869
  %934 = vst [vmem:[%s6 + $0x10] sm:$0xf] %v870
  %935 = vst [vmem:[%s6 + $0x14] sm:$0xf] %v871
  %936 = vst [vmem:[%s6 + $0x18] sm:$0xf] %v872
  %937 = vst [vmem:[%s6 + $0x1c] sm:$0xf] %v873
  %938 = vst [vmem:[%s6 + $0x20] sm:$0xf] %v874
  %939 = vst [vmem:[%s6 + $0x24] sm:$0xf] %v875
  %940 = vst [vmem:[%s6 + $0x28] sm:$0xf] %v876
  %941 = vst [vmem:[%s6 + $0x2c] sm:$0xf] %v877
  %942 = vst [vmem:[%s6 + $0x30] sm:$0xf] %v878
  %943 = vst [vmem:[%s6 + $0x34] sm:$0xf] %v879
  %944 = vst [vmem:[%s6 + $0x38] sm:$0xf] %v880
  %945 = vst [vmem:[%s6 + $0x3c] sm:$0xf] %v881
  %946 = vst [vmem:[%s6 + $0x40] sm:$0xf] %v882
  %947 = vst [vmem:[%s6 + $0x44] sm:$0xf] %v883
  %948 = vst [vmem:[%s6 + $0x48] sm:$0xf] %v884
  %949 = vst [vmem:[%s6 + $0x4c] sm:$0xf] %v885
  %950 = vst [vmem:[%s6 + $0x50] sm:$0xf] %v886
  %951 = vst [vmem:[%s6 + $0x54] sm:$0xf] %v887
  %952 = vst [vmem:[%s6 + $0x58] sm:$0xf] %v888
  %953 = vst [vmem:[%s6 + $0x5c] sm:$0xf] %v889
  %954 = vst [vmem:[%s6 + $0x60] sm:$0xf] %v890
  %955 = vst [vmem:[%s6 + $0x64] sm:$0xf] %v891
  %956 = vst [vmem:[%s6 + $0x68] sm:$0xf] %v892
  %957 = vst [vmem:[%s6 + $0x6c] sm:$0xf] %v893
  %958 = vst [vmem:[%s6 + $0x70] sm:$0xf] %v894
  %959 = vst [vmem:[%s6 + $0x74] sm:$0xf] %v895
  %960 = vst [vmem:[%s6 + $0x78] sm:$0xf] %v896
  %961 = vst [vmem:[%s6 + $0x7c] sm:$0xf] %v897
  %962 = vst [vmem:[%s6 + $0x80] sm:$0xf] %v898
  %963 = vst [vmem:[%s6 + $0x84] sm:$0xf] %v899
  %964 = vst [vmem:[%s6 + $0x88] sm:$0xf] %v900
  %965 = vst [vmem:[%s6 + $0x8c] sm:$0xf] %v901
  %966 = vst [vmem:[%s6 + $0x90] sm:$0xf] %v902
  %967 = vst [vmem:[%s6 + $0x94] sm:$0xf] %v903
  %968 = vst [vmem:[%s6 + $0x98] sm:$0xf] %v904
  %969 = vst [vmem:[%s6 + $0x9c] sm:$0xf] %v905
  %970 = vst [vmem:[%s6 + $0xa0] sm:$0xf] %v906
  %971 = vst [vmem:[%s6 + $0xa4] sm:$0xf] %v907
  %972 = vst [vmem:[%s6 + $0xa8] sm:$0xf] %v908
  %973 = vst [vmem:[%s6 + $0xac] sm:$0xf] %v909
  %974 = vst [vmem:[%s6 + $0xb0] sm:$0xf] %v910
  %975 = vst [vmem:[%s6 + $0xb4] sm:$0xf] %v911
  %976 = vst [vmem:[%s6 + $0xb8] sm:$0xf] %v912
  %977 = vst [vmem:[%s6 + $0xbc] sm:$0xf] %v913
  %978 = vst [vmem:[%s6 + $0xc0] sm:$0xf] %v914
  %979 = vst [vmem:[%s6 + $0xc4] sm:$0xf] %v915
  %980 = vst [vmem:[%s6 + $0xc8] sm:$0xf] %v916
  %981 = vst [vmem:[%s6 + $0xcc] sm:$0xf] %v917
  %982 = vst [vmem:[%s6 + $0xd0] sm:$0xf] %v918
  %983 = vst [vmem:[%s6 + $0xd4] sm:$0xf] %v919
  %984 = vst [vmem:[%s6 + $0xd8] sm:$0xf] %v920
  %985 = vst [vmem:[%s6 + $0xdc] sm:$0xf] %v921
  %986 = vst [vmem:[%s6 + $0xe0] sm:$0xf] %v922
  %987 = vst [vmem:[%s6 + $0xe4] sm:$0xf] %v923
  %988 = vst [vmem:[%s6 + $0xe8] sm:$0xf] %v924
  %989 = vst [vmem:[%s6 + $0xec] sm:$0xf] %v925
  %990 = vst [vmem:[%s6 + $0xf0] sm:$0xf] %v926
  %991 = vst [vmem:[%s6 + $0xf4] sm:$0xf] %v927
  %992 = vst [vmem:[%s6 + $0xf8] sm:$0xf] %v928
  %993 = vst [vmem:[%s6 + $0xfc] sm:$0xf] %v929
  // Predicated region
  $region26: #{image_encoder_forward.29} parent=0 // pred_check
    _
  $region27: #{image_encoder_forward.29} parent=0 // pred_check_branch
    %995 = sbr.rel (0) target = $region29
  $region28: #{image_encoder_forward.29} parent=0 // pred_region
    _
  $region29: #{image_encoder_forward.29} parent=0 // pred_fallthru
    _
  // Predicated region
  $region30: #{image_encoder_forward.29} parent=0 // pred_check
    _
  $region31: #{image_encoder_forward.29} parent=0 // pred_check_branch
    %997 = sbr.rel (0) target = $region33
  $region32: #{image_encoder_forward.29} parent=0 // pred_region
    _
  $region33: #{image_encoder_forward.29} parent=0 // pred_fallthru
    _

// kernel: image_encoder_forward.32
$region0: #{image_encoder_forward.32}
  #allocation0 [shape = 'u32[]', space=smem, size = 0x4, offset = 0x4, fixed_abs, tag = 'smem constant byte address 0x4 - core index']
  #allocation1 [shape = 'u32[72,128]{1,0:T(1,128)}', space=vmem, size = 0x9000, scoped, tag = 'internal scratch']
  %s0 = inlined_call_operand.vmem [shape: bf16[16,2,8,32], index: 0, kind: input, shape index: {}]
  %s1 = inlined_call_operand.vmem [shape: bf16[16,8,16], index: 1, kind: output, shape index: {}]
  %s2 = sld [smem:[#allocation0]]
  $region14: #{image_encoder_forward.32} parent=0
    _
  %s4 = ssub.s32 1, %s2
  %s5 = scalar_select 0, %s4, %s2
  // Predicated region
  $region2: #{image_encoder_forward.32} parent=0 // pred_check
    _
  $region3: #{image_encoder_forward.32} parent=0 // pred_check_branch
    %7 = sbr.rel (0) target = $region5
  $region4: #{image_encoder_forward.32} parent=0 // pred_region
    _
  $region5: #{image_encoder_forward.32} parent=0 // pred_fallthru
    _
  %v8 = vld [vmem:[%s0] sm:$0xf]
  %v9 = vld [vmem:[%s0 + $0x4] sm:$0xf]
  %v10 = vld [vmem:[%s0 + $0x8] sm:$0xf]
  %v11 = vld [vmem:[%s0 + $0xc] sm:$0xf]
  %v12 = vld [vmem:[%s0 + $0x10] sm:$0xf]
  %v13 = vld [vmem:[%s0 + $0x14] sm:$0xf]
  %v14 = vld [vmem:[%s0 + $0x18] sm:$0xf]
  %v15 = vld [vmem:[%s0 + $0x1c] sm:$0xf]
  %v16 = vld [vmem:[%s0 + $0x20] sm:$0xf]
  %v17 = vld [vmem:[%s0 + $0x24] sm:$0xf]
  %v18 = vld [vmem:[%s0 + $0x28] sm:$0xf]
  %v19 = vld [vmem:[%s0 + $0x2c] sm:$0xf]
  %v20 = vld [vmem:[%s0 + $0x30] sm:$0xf]
  %v21 = vld [vmem:[%s0 + $0x34] sm:$0xf]
  %v22 = vld [vmem:[%s0 + $0x38] sm:$0xf]
  %v23 = vld [vmem:[%s0 + $0x3c] sm:$0xf]
  %v24 = vld [vmem:[%s0 + $0x40] sm:$0xf]
  %v25 = vld [vmem:[%s0 + $0x44] sm:$0xf]
  %v26 = vld [vmem:[%s0 + $0x48] sm:$0xf]
  %v27 = vld [vmem:[%s0 + $0x4c] sm:$0xf]
  %v28 = vld [vmem:[%s0 + $0x50] sm:$0xf]
  %v29 = vld [vmem:[%s0 + $0x54] sm:$0xf]
  %v30 = vld [vmem:[%s0 + $0x58] sm:$0xf]
  %v31 = vld [vmem:[%s0 + $0x5c] sm:$0xf]
  %v32 = vld [vmem:[%s0 + $0x60] sm:$0xf]
  %v33 = vld [vmem:[%s0 + $0x64] sm:$0xf]
  %v34 = vld [vmem:[%s0 + $0x68] sm:$0xf]
  %v35 = vld [vmem:[%s0 + $0x6c] sm:$0xf]
  %v36 = vld [vmem:[%s0 + $0x70] sm:$0xf]
  %v37 = vld [vmem:[%s0 + $0x74] sm:$0xf]
  %v38 = vld [vmem:[%s0 + $0x78] sm:$0xf]
  %v39 = vld [vmem:[%s0 + $0x7c] sm:$0xf]
  %v40 = vunpack.c.l.bf16 %v8
  %v41 = vunpack.c.l.bf16 %v9
  %v42 = vunpack.c.l.bf16 %v10
  %v43 = vunpack.c.l.bf16 %v11
  %v44 = vunpack.c.l.bf16 %v12
  %v45 = vunpack.c.l.bf16 %v13
  %v46 = vunpack.c.l.bf16 %v14
  %v47 = vunpack.c.l.bf16 %v15
  %v48 = vunpack.c.l.bf16 %v16
  %v49 = vunpack.c.l.bf16 %v17
  %v50 = vunpack.c.l.bf16 %v18
  %v51 = vunpack.c.l.bf16 %v19
  %v52 = vunpack.c.l.bf16 %v20
  %v53 = vunpack.c.l.bf16 %v21
  %v54 = vunpack.c.l.bf16 %v22
  %v55 = vunpack.c.l.bf16 %v23
  %v56 = vunpack.c.l.bf16 %v24
  %v57 = vunpack.c.l.bf16 %v25
  %v58 = vunpack.c.l.bf16 %v26
  %v59 = vunpack.c.l.bf16 %v27
  %v60 = vunpack.c.l.bf16 %v28
  %v61 = vunpack.c.l.bf16 %v29
  %v62 = vunpack.c.l.bf16 %v30
  %v63 = vunpack.c.l.bf16 %v31
  %v64 = vunpack.c.l.bf16 %v32
  %v65 = vunpack.c.l.bf16 %v33
  %v66 = vunpack.c.l.bf16 %v34
  %v67 = vunpack.c.l.bf16 %v35
  %v68 = vunpack.c.l.bf16 %v36
  %v69 = vunpack.c.l.bf16 %v37
  %v70 = vunpack.c.l.bf16 %v38
  %v71 = vunpack.c.l.bf16 %v39
  %v72 = vadd.f32 %v40, %v41
  %v73 = vadd.f32 %v42, %v43
  %v74 = vadd.f32 %v44, %v45
  %v75 = vadd.f32 %v46, %v47
  %v76 = vadd.f32 %v48, %v49
  %v77 = vadd.f32 %v50, %v51
  %v78 = vadd.f32 %v52, %v53
  %v79 = vadd.f32 %v54, %v55
  %v80 = vadd.f32 %v56, %v57
  %v81 = vadd.f32 %v58, %v59
  %v82 = vadd.f32 %v60, %v61
  %v83 = vadd.f32 %v62, %v63
  %v84 = vadd.f32 %v64, %v65
  %v85 = vadd.f32 %v66, %v67
  %v86 = vadd.f32 %v68, %v69
  %v87 = vadd.f32 %v70, %v71
  %104 = vrot.lane.b32.xlu0 %v72, 112
  %v105 = vpop.permute.xlu0 %104
  %106 = vrot.lane.b32.xlu0 %v73, 112
  %v107 = vpop.permute.xlu0 %106
  %108 = vrot.lane.b32.xlu0 %v74, 112
  %v109 = vpop.permute.xlu0 %108
  %110 = vrot.lane.b32.xlu0 %v75, 112
  %v111 = vpop.permute.xlu0 %110
  %112 = vrot.lane.b32.xlu0 %v76, 112
  %v113 = vpop.permute.xlu0 %112
  %114 = vrot.lane.b32.xlu0 %v77, 112
  %v115 = vpop.permute.xlu0 %114
  %116 = vrot.lane.b32.xlu0 %v78, 112
  %v117 = vpop.permute.xlu0 %116
  %118 = vrot.lane.b32.xlu0 %v79, 112
  %v119 = vpop.permute.xlu0 %118
  %120 = vrot.lane.b32.xlu0 %v80, 112
  %v121 = vpop.permute.xlu0 %120
  %122 = vrot.lane.b32.xlu0 %v81, 112
  %v123 = vpop.permute.xlu0 %122
  %124 = vrot.lane.b32.xlu0 %v82, 112
  %v125 = vpop.permute.xlu0 %124
  %126 = vrot.lane.b32.xlu0 %v83, 112
  %v127 = vpop.permute.xlu0 %126
  %128 = vrot.lane.b32.xlu0 %v84, 112
  %v129 = vpop.permute.xlu0 %128
  %130 = vrot.lane.b32.xlu0 %v85, 112
  %v131 = vpop.permute.xlu0 %130
  %132 = vrot.lane.b32.xlu0 %v86, 112
  %v133 = vpop.permute.xlu0 %132
  %134 = vrot.lane.b32.xlu0 %v87, 112
  %v135 = vpop.permute.xlu0 %134
  %v152 = vadd.f32 %v72, %v105
  %v153 = vadd.f32 %v73, %v107
  %v154 = vadd.f32 %v74, %v109
  %v155 = vadd.f32 %v75, %v111
  %v156 = vadd.f32 %v76, %v113
  %v157 = vadd.f32 %v77, %v115
  %v158 = vadd.f32 %v78, %v117
  %v159 = vadd.f32 %v79, %v119
  %v160 = vadd.f32 %v80, %v121
  %v161 = vadd.f32 %v81, %v123
  %v162 = vadd.f32 %v82, %v125
  %v163 = vadd.f32 %v83, %v127
  %v164 = vadd.f32 %v84, %v129
  %v165 = vadd.f32 %v85, %v131
  %v166 = vadd.f32 %v86, %v133
  %v167 = vadd.f32 %v87, %v135
  %v168 = vmul.f32 %v152, 0.25
  %v169 = vmul.f32 %v153, 0.25
  %v170 = vmul.f32 %v154, 0.25
  %v171 = vmul.f32 %v155, 0.25
  %v172 = vmul.f32 %v156, 0.25
  %v173 = vmul.f32 %v157, 0.25
  %v174 = vmul.f32 %v158, 0.25
  %v175 = vmul.f32 %v159, 0.25
  %v176 = vmul.f32 %v160, 0.25
  %v177 = vmul.f32 %v161, 0.25
  %v178 = vmul.f32 %v162, 0.25
  %v179 = vmul.f32 %v163, 0.25
  %v180 = vmul.f32 %v164, 0.25
  %v181 = vmul.f32 %v165, 0.25
  %v182 = vmul.f32 %v166, 0.25
  %v183 = vmul.f32 %v167, 0.25
  %v184 = vpack.c.bf16 %v168, %v168
  %v185 = vpack.c.bf16 %v169, %v169
  %v186 = vpack.c.bf16 %v170, %v170
  %v187 = vpack.c.bf16 %v171, %v171
  %v188 = vpack.c.bf16 %v172, %v172
  %v189 = vpack.c.bf16 %v173, %v173
  %v190 = vpack.c.bf16 %v174, %v174
  %v191 = vpack.c.bf16 %v175, %v175
  %v192 = vpack.c.bf16 %v176, %v176
  %v193 = vpack.c.bf16 %v177, %v177
  %v194 = vpack.c.bf16 %v178, %v178
  %v195 = vpack.c.bf16 %v179, %v179
  %v196 = vpack.c.bf16 %v180, %v180
  %v197 = vpack.c.bf16 %v181, %v181
  %v198 = vpack.c.bf16 %v182, %v182
  %v199 = vpack.c.bf16 %v183, %v183
  %vm200 = vcmask 125952
  %201 = vst.msk [vmem:[%s1] sm:$0xf] %vm200, %v184
  %202 = vst.msk [vmem:[%s1 + $0x4] sm:$0xf] %vm200, %v185
  %203 = vst.msk [vmem:[%s1 + $0x8] sm:$0xf] %vm200, %v186
  %204 = vst.msk [vmem:[%s1 + $0xc] sm:$0xf] %vm200, %v187
  %205 = vst.msk [vmem:[%s1 + $0x10] sm:$0xf] %vm200, %v188
  %206 = vst.msk [vmem:[%s1 + $0x14] sm:$0xf] %vm200, %v189
  %207 = vst.msk [vmem:[%s1 + $0x18] sm:$0xf] %vm200, %v190
  %208 = vst.msk [vmem:[%s1 + $0x1c] sm:$0xf] %vm200, %v191
  %209 = vst.msk [vmem:[%s1 + $0x20] sm:$0xf] %vm200, %v192
  %210 = vst.msk [vmem:[%s1 + $0x24] sm:$0xf] %vm200, %v193
  %211 = vst.msk [vmem:[%s1 + $0x28] sm:$0xf] %vm200, %v194
  %212 = vst.msk [vmem:[%s1 + $0x2c] sm:$0xf] %vm200, %v195
  %213 = vst.msk [vmem:[%s1 + $0x30] sm:$0xf] %vm200, %v196
  %214 = vst.msk [vmem:[%s1 + $0x34] sm:$0xf] %vm200, %v197
  %215 = vst.msk [vmem:[%s1 + $0x38] sm:$0xf] %vm200, %v198
  %216 = vst.msk [vmem:[%s1 + $0x3c] sm:$0xf] %vm200, %v199
  // Predicated region
  $region6: #{image_encoder_forward.32} parent=0 // pred_check
    _
  $region7: #{image_encoder_forward.32} parent=0 // pred_check_branch
    %218 = sbr.rel (0) target = $region9
  $region8: #{image_encoder_forward.32} parent=0 // pred_region
    _
  $region9: #{image_encoder_forward.32} parent=0 // pred_fallthru
    _
  // Predicated region
  $region10: #{image_encoder_forward.32} parent=0 // pred_check
    _
  $region11: #{image_encoder_forward.32} parent=0 // pred_check_branch
    %220 = sbr.rel (0) target = $region13
  $region12: #{image_encoder_forward.32} parent=0 // pred_region
    _
  $region13: #{image_encoder_forward.32} parent=0 // pred_fallthru
    _

// kernel: image_encoder_forward.31
$region0: #{image_encoder_forward.31}
  #allocation0 [shape = 'u32[]', space=smem, size = 0x4, offset = 0x4, fixed_abs, tag = 'smem constant byte address 0x4 - core index']
  #allocation1 [shape = 'u32[72,128]{1,0:T(1,128)}', space=vmem, size = 0x9000, scoped, tag = 'internal scratch']
  %s0 = inlined_call_operand.vmem [shape: bf16[512,32], index: 0, kind: input, shape index: {}]
  %s1 = inlined_call_operand.vmem [shape: bf16[32,128], index: 1, kind: input, shape index: {}]
  %s2 = inlined_call_operand.vmem [shape: f32[1,32], index: 2, kind: input, shape index: {}]
  %s3 = inlined_call_operand.vmem [shape: f32[1,32], index: 3, kind: input, shape index: {}]
  %s4 = inlined_call_operand.vmem [shape: bf16[512,128], index: 4, kind: output, shape index: {}]
  %s5 = sld [smem:[#allocation0]]
  $region26: #{image_encoder_forward.31} parent=0
    _
  %s7 = ssub.s32 1, %s5
  %s8 = scalar_select 0, %s7, %s5
  // Predicated region
  $region2: #{image_encoder_forward.31} parent=0 // pred_check
    _
  $region3: #{image_encoder_forward.31} parent=0 // pred_check_branch
    %10 = sbr.rel (0) target = $region5
  $region4: #{image_encoder_forward.31} parent=0 // pred_region
    _
  $region5: #{image_encoder_forward.31} parent=0 // pred_fallthru
    _
  // Predicated region
  $region6: #{image_encoder_forward.31} parent=0 // pred_check
    _
  $region7: #{image_encoder_forward.31} parent=0 // pred_check_branch
    %12 = sbr.rel (0) target = $region9
  $region8: #{image_encoder_forward.31} parent=0 // pred_region
    _
  $region9: #{image_encoder_forward.31} parent=0 // pred_fallthru
    _
  // Predicated region
  $region10: #{image_encoder_forward.31} parent=0 // pred_check
    _
  $region11: #{image_encoder_forward.31} parent=0 // pred_check_branch
    %14 = sbr.rel (0) target = $region13
  $region12: #{image_encoder_forward.31} parent=0 // pred_region
    _
  $region13: #{image_encoder_forward.31} parent=0 // pred_fallthru
    _
  // Predicated region
  $region14: #{image_encoder_forward.31} parent=0 // pred_check
    _
  $region15: #{image_encoder_forward.31} parent=0 // pred_check_branch
    %16 = sbr.rel (0) target = $region17
  $region16: #{image_encoder_forward.31} parent=0 // pred_region
    _
  $region17: #{image_encoder_forward.31} parent=0 // pred_fallthru
    _
  %v18 = vld [vmem:[%s0] sm:$0xf]
  %v19 = vld [vmem:[%s0 + $0x4] sm:$0xf]
  %v20 = vld [vmem:[%s0 + $0x8] sm:$0xf]
  %v21 = vld [vmem:[%s0 + $0xc] sm:$0xf]
  %v22 = vld [vmem:[%s0 + $0x10] sm:$0xf]
  %v23 = vld [vmem:[%s0 + $0x14] sm:$0xf]
  %v24 = vld [vmem:[%s0 + $0x18] sm:$0xf]
  %v25 = vld [vmem:[%s0 + $0x1c] sm:$0xf]
  %v26 = vld [vmem:[%s0 + $0x20] sm:$0xf]
  %v27 = vld [vmem:[%s0 + $0x24] sm:$0xf]
  %v28 = vld [vmem:[%s0 + $0x28] sm:$0xf]
  %v29 = vld [vmem:[%s0 + $0x2c] sm:$0xf]
  %v30 = vld [vmem:[%s0 + $0x30] sm:$0xf]
  %v31 = vld [vmem:[%s0 + $0x34] sm:$0xf]
  %v32 = vld [vmem:[%s0 + $0x38] sm:$0xf]
  %v33 = vld [vmem:[%s0 + $0x3c] sm:$0xf]
  %v34 = vld [vmem:[%s0 + $0x40] sm:$0xf]
  %v35 = vld [vmem:[%s0 + $0x44] sm:$0xf]
  %v36 = vld [vmem:[%s0 + $0x48] sm:$0xf]
  %v37 = vld [vmem:[%s0 + $0x4c] sm:$0xf]
  %v38 = vld [vmem:[%s0 + $0x50] sm:$0xf]
  %v39 = vld [vmem:[%s0 + $0x54] sm:$0xf]
  %v40 = vld [vmem:[%s0 + $0x58] sm:$0xf]
  %v41 = vld [vmem:[%s0 + $0x5c] sm:$0xf]
  %v42 = vld [vmem:[%s0 + $0x60] sm:$0xf]
  %v43 = vld [vmem:[%s0 + $0x64] sm:$0xf]
  %v44 = vld [vmem:[%s0 + $0x68] sm:$0xf]
  %v45 = vld [vmem:[%s0 + $0x6c] sm:$0xf]
  %v46 = vld [vmem:[%s0 + $0x70] sm:$0xf]
  %v47 = vld [vmem:[%s0 + $0x74] sm:$0xf]
  %v48 = vld [vmem:[%s0 + $0x78] sm:$0xf]
  %v49 = vld [vmem:[%s0 + $0x7c] sm:$0xf]
  %v50 = vld [vmem:[%s0 + $0x80] sm:$0xf]
  %v51 = vld [vmem:[%s0 + $0x84] sm:$0xf]
  %v52 = vld [vmem:[%s0 + $0x88] sm:$0xf]
  %v53 = vld [vmem:[%s0 + $0x8c] sm:$0xf]
  %v54 = vld [vmem:[%s0 + $0x90] sm:$0xf]
  %v55 = vld [vmem:[%s0 + $0x94] sm:$0xf]
  %v56 = vld [vmem:[%s0 + $0x98] sm:$0xf]
  %v57 = vld [vmem:[%s0 + $0x9c] sm:$0xf]
  %v58 = vld [vmem:[%s0 + $0xa0] sm:$0xf]
  %v59 = vld [vmem:[%s0 + $0xa4] sm:$0xf]
  %v60 = vld [vmem:[%s0 + $0xa8] sm:$0xf]
  %v61 = vld [vmem:[%s0 + $0xac] sm:$0xf]
  %v62 = vld [vmem:[%s0 + $0xb0] sm:$0xf]
  %v63 = vld [vmem:[%s0 + $0xb4] sm:$0xf]
  %v64 = vld [vmem:[%s0 + $0xb8] sm:$0xf]
  %v65 = vld [vmem:[%s0 + $0xbc] sm:$0xf]
  %v66 = vld [vmem:[%s0 + $0xc0] sm:$0xf]
  %v67 = vld [vmem:[%s0 + $0xc4] sm:$0xf]
  %v68 = vld [vmem:[%s0 + $0xc8] sm:$0xf]
  %v69 = vld [vmem:[%s0 + $0xcc] sm:$0xf]
  %v70 = vld [vmem:[%s0 + $0xd0] sm:$0xf]
  %v71 = vld [vmem:[%s0 + $0xd4] sm:$0xf]
  %v72 = vld [vmem:[%s0 + $0xd8] sm:$0xf]
  %v73 = vld [vmem:[%s0 + $0xdc] sm:$0xf]
  %v74 = vld [vmem:[%s0 + $0xe0] sm:$0xf]
  %v75 = vld [vmem:[%s0 + $0xe4] sm:$0xf]
  %v76 = vld [vmem:[%s0 + $0xe8] sm:$0xf]
  %v77 = vld [vmem:[%s0 + $0xec] sm:$0xf]
  %v78 = vld [vmem:[%s0 + $0xf0] sm:$0xf]
  %v79 = vld [vmem:[%s0 + $0xf4] sm:$0xf]
  %v80 = vld [vmem:[%s0 + $0xf8] sm:$0xf]
  %v81 = vld [vmem:[%s0 + $0xfc] sm:$0xf]
  %v82 = vunpack.c.l.bf16 %v18
  %v83 = vunpack.c.l.bf16 %v19
  %v84 = vunpack.c.l.bf16 %v20
  %v85 = vunpack.c.l.bf16 %v21
  %v86 = vunpack.c.l.bf16 %v22
  %v87 = vunpack.c.l.bf16 %v23
  %v88 = vunpack.c.l.bf16 %v24
  %v89 = vunpack.c.l.bf16 %v25
  %v90 = vunpack.c.l.bf16 %v26
  %v91 = vunpack.c.l.bf16 %v27
  %v92 = vunpack.c.l.bf16 %v28
  %v93 = vunpack.c.l.bf16 %v29
  %v94 = vunpack.c.l.bf16 %v30
  %v95 = vunpack.c.l.bf16 %v31
  %v96 = vunpack.c.l.bf16 %v32
  %v97 = vunpack.c.l.bf16 %v33
  %v98 = vunpack.c.l.bf16 %v34
  %v99 = vunpack.c.l.bf16 %v35
  %v100 = vunpack.c.l.bf16 %v36
  %v101 = vunpack.c.l.bf16 %v37
  %v102 = vunpack.c.l.bf16 %v38
  %v103 = vunpack.c.l.bf16 %v39
  %v104 = vunpack.c.l.bf16 %v40
  %v105 = vunpack.c.l.bf16 %v41
  %v106 = vunpack.c.l.bf16 %v42
  %v107 = vunpack.c.l.bf16 %v43
  %v108 = vunpack.c.l.bf16 %v44
  %v109 = vunpack.c.l.bf16 %v45
  %v110 = vunpack.c.l.bf16 %v46
  %v111 = vunpack.c.l.bf16 %v47
  %v112 = vunpack.c.l.bf16 %v48
  %v113 = vunpack.c.l.bf16 %v49
  %v114 = vunpack.c.l.bf16 %v50
  %v115 = vunpack.c.l.bf16 %v51
  %v116 = vunpack.c.l.bf16 %v52
  %v117 = vunpack.c.l.bf16 %v53
  %v118 = vunpack.c.l.bf16 %v54
  %v119 = vunpack.c.l.bf16 %v55
  %v120 = vunpack.c.l.bf16 %v56
  %v121 = vunpack.c.l.bf16 %v57
  %v122 = vunpack.c.l.bf16 %v58
  %v123 = vunpack.c.l.bf16 %v59
  %v124 = vunpack.c.l.bf16 %v60
  %v125 = vunpack.c.l.bf16 %v61
  %v126 = vunpack.c.l.bf16 %v62
  %v127 = vunpack.c.l.bf16 %v63
  %v128 = vunpack.c.l.bf16 %v64
  %v129 = vunpack.c.l.bf16 %v65
  %v130 = vunpack.c.l.bf16 %v66
  %v131 = vunpack.c.l.bf16 %v67
  %v132 = vunpack.c.l.bf16 %v68
  %v133 = vunpack.c.l.bf16 %v69
  %v134 = vunpack.c.l.bf16 %v70
  %v135 = vunpack.c.l.bf16 %v71
  %v136 = vunpack.c.l.bf16 %v72
  %v137 = vunpack.c.l.bf16 %v73
  %v138 = vunpack.c.l.bf16 %v74
  %v139 = vunpack.c.l.bf16 %v75
  %v140 = vunpack.c.l.bf16 %v76
  %v141 = vunpack.c.l.bf16 %v77
  %v142 = vunpack.c.l.bf16 %v78
  %v143 = vunpack.c.l.bf16 %v79
  %v144 = vunpack.c.l.bf16 %v80
  %v145 = vunpack.c.l.bf16 %v81
  %v146 = vld [vmem:[%s2] sm:$0x1]
  %v148 = vperm.slane %v146, 0
  %v150 = vmul.f32 %v82, %v148
  %v151 = vmul.f32 %v83, %v148
  %v152 = vmul.f32 %v84, %v148
  %v153 = vmul.f32 %v85, %v148
  %v154 = vmul.f32 %v86, %v148
  %v155 = vmul.f32 %v87, %v148
  %v156 = vmul.f32 %v88, %v148
  %v157 = vmul.f32 %v89, %v148
  %v158 = vmul.f32 %v90, %v148
  %v159 = vmul.f32 %v91, %v148
  %v160 = vmul.f32 %v92, %v148
  %v161 = vmul.f32 %v93, %v148
  %v162 = vmul.f32 %v94, %v148
  %v163 = vmul.f32 %v95, %v148
  %v164 = vmul.f32 %v96, %v148
  %v165 = vmul.f32 %v97, %v148
  %v166 = vmul.f32 %v98, %v148
  %v167 = vmul.f32 %v99, %v148
  %v168 = vmul.f32 %v100, %v148
  %v169 = vmul.f32 %v101, %v148
  %v170 = vmul.f32 %v102, %v148
  %v171 = vmul.f32 %v103, %v148
  %v172 = vmul.f32 %v104, %v148
  %v173 = vmul.f32 %v105, %v148
  %v174 = vmul.f32 %v106, %v148
  %v175 = vmul.f32 %v107, %v148
  %v176 = vmul.f32 %v108, %v148
  %v177 = vmul.f32 %v109, %v148
  %v178 = vmul.f32 %v110, %v148
  %v179 = vmul.f32 %v111, %v148
  %v180 = vmul.f32 %v112, %v148
  %v181 = vmul.f32 %v113, %v148
  %v182 = vmul.f32 %v114, %v148
  %v183 = vmul.f32 %v115, %v148
  %v184 = vmul.f32 %v116, %v148
  %v185 = vmul.f32 %v117, %v148
  %v186 = vmul.f32 %v118, %v148
  %v187 = vmul.f32 %v119, %v148
  %v188 = vmul.f32 %v120, %v148
  %v189 = vmul.f32 %v121, %v148
  %v190 = vmul.f32 %v122, %v148
  %v191 = vmul.f32 %v123, %v148
  %v192 = vmul.f32 %v124, %v148
  %v193 = vmul.f32 %v125, %v148
  %v194 = vmul.f32 %v126, %v148
  %v195 = vmul.f32 %v127, %v148
  %v196 = vmul.f32 %v128, %v148
  %v197 = vmul.f32 %v129, %v148
  %v198 = vmul.f32 %v130, %v148
  %v199 = vmul.f32 %v131, %v148
  %v200 = vmul.f32 %v132, %v148
  %v201 = vmul.f32 %v133, %v148
  %v202 = vmul.f32 %v134, %v148
  %v203 = vmul.f32 %v135, %v148
  %v204 = vmul.f32 %v136, %v148
  %v205 = vmul.f32 %v137, %v148
  %v206 = vmul.f32 %v138, %v148
  %v207 = vmul.f32 %v139, %v148
  %v208 = vmul.f32 %v140, %v148
  %v209 = vmul.f32 %v141, %v148
  %v210 = vmul.f32 %v142, %v148
  %v211 = vmul.f32 %v143, %v148
  %v212 = vmul.f32 %v144, %v148
  %v213 = vmul.f32 %v145, %v148
  %v214 = vld [vmem:[%s3] sm:$0x1]
  %v216 = vperm.slane %v214, 0
  %v218 = vadd.f32 %v150, %v216
  %v219 = vadd.f32 %v151, %v216
  %v220 = vadd.f32 %v152, %v216
  %v221 = vadd.f32 %v153, %v216
  %v222 = vadd.f32 %v154, %v216
  %v223 = vadd.f32 %v155, %v216
  %v224 = vadd.f32 %v156, %v216
  %v225 = vadd.f32 %v157, %v216
  %v226 = vadd.f32 %v158, %v216
  %v227 = vadd.f32 %v159, %v216
  %v228 = vadd.f32 %v160, %v216
  %v229 = vadd.f32 %v161, %v216
  %v230 = vadd.f32 %v162, %v216
  %v231 = vadd.f32 %v163, %v216
  %v232 = vadd.f32 %v164, %v216
  %v233 = vadd.f32 %v165, %v216
  %v234 = vadd.f32 %v166, %v216
  %v235 = vadd.f32 %v167, %v216
  %v236 = vadd.f32 %v168, %v216
  %v237 = vadd.f32 %v169, %v216
  %v238 = vadd.f32 %v170, %v216
  %v239 = vadd.f32 %v171, %v216
  %v240 = vadd.f32 %v172, %v216
  %v241 = vadd.f32 %v173, %v216
  %v242 = vadd.f32 %v174, %v216
  %v243 = vadd.f32 %v175, %v216
  %v244 = vadd.f32 %v176, %v216
  %v245 = vadd.f32 %v177, %v216
  %v246 = vadd.f32 %v178, %v216
  %v247 = vadd.f32 %v179, %v216
  %v248 = vadd.f32 %v180, %v216
  %v249 = vadd.f32 %v181, %v216
  %v250 = vadd.f32 %v182, %v216
  %v251 = vadd.f32 %v183, %v216
  %v252 = vadd.f32 %v184, %v216
  %v253 = vadd.f32 %v185, %v216
  %v254 = vadd.f32 %v186, %v216
  %v255 = vadd.f32 %v187, %v216
  %v256 = vadd.f32 %v188, %v216
  %v257 = vadd.f32 %v189, %v216
  %v258 = vadd.f32 %v190, %v216
  %v259 = vadd.f32 %v191, %v216
  %v260 = vadd.f32 %v192, %v216
  %v261 = vadd.f32 %v193, %v216
  %v262 = vadd.f32 %v194, %v216
  %v263 = vadd.f32 %v195, %v216
  %v264 = vadd.f32 %v196, %v216
  %v265 = vadd.f32 %v197, %v216
  %v266 = vadd.f32 %v198, %v216
  %v267 = vadd.f32 %v199, %v216
  %v268 = vadd.f32 %v200, %v216
  %v269 = vadd.f32 %v201, %v216
  %v270 = vadd.f32 %v202, %v216
  %v271 = vadd.f32 %v203, %v216
  %v272 = vadd.f32 %v204, %v216
  %v273 = vadd.f32 %v205, %v216
  %v274 = vadd.f32 %v206, %v216
  %v275 = vadd.f32 %v207, %v216
  %v276 = vadd.f32 %v208, %v216
  %v277 = vadd.f32 %v209, %v216
  %v278 = vadd.f32 %v210, %v216
  %v279 = vadd.f32 %v211, %v216
  %v280 = vadd.f32 %v212, %v216
  %v281 = vadd.f32 %v213, %v216
  %v282 = vmax.f32 %v218, 0.0
  %v283 = vmax.f32 %v219, 0.0
  %v284 = vmax.f32 %v220, 0.0
  %v285 = vmax.f32 %v221, 0.0
  %v286 = vmax.f32 %v222, 0.0
  %v287 = vmax.f32 %v223, 0.0
  %v288 = vmax.f32 %v224, 0.0
  %v289 = vmax.f32 %v225, 0.0
  %v290 = vmax.f32 %v226, 0.0
  %v291 = vmax.f32 %v227, 0.0
  %v292 = vmax.f32 %v228, 0.0
  %v293 = vmax.f32 %v229, 0.0
  %v294 = vmax.f32 %v230, 0.0
  %v295 = vmax.f32 %v231, 0.0
  %v296 = vmax.f32 %v232, 0.0
  %v297 = vmax.f32 %v233, 0.0
  %v298 = vmax.f32 %v234, 0.0
  %v299 = vmax.f32 %v235, 0.0
  %v300 = vmax.f32 %v236, 0.0
  %v301 = vmax.f32 %v237, 0.0
  %v302 = vmax.f32 %v238, 0.0
  %v303 = vmax.f32 %v239, 0.0
  %v304 = vmax.f32 %v240, 0.0
  %v305 = vmax.f32 %v241, 0.0
  %v306 = vmax.f32 %v242, 0.0
  %v307 = vmax.f32 %v243, 0.0
  %v308 = vmax.f32 %v244, 0.0
  %v309 = vmax.f32 %v245, 0.0
  %v310 = vmax.f32 %v246, 0.0
  %v311 = vmax.f32 %v247, 0.0
  %v312 = vmax.f32 %v248, 0.0
  %v313 = vmax.f32 %v249, 0.0
  %v314 = vmax.f32 %v250, 0.0
  %v315 = vmax.f32 %v251, 0.0
  %v316 = vmax.f32 %v252, 0.0
  %v317 = vmax.f32 %v253, 0.0
  %v318 = vmax.f32 %v254, 0.0
  %v319 = vmax.f32 %v255, 0.0
  %v320 = vmax.f32 %v256, 0.0
  %v321 = vmax.f32 %v257, 0.0
  %v322 = vmax.f32 %v258, 0.0
  %v323 = vmax.f32 %v259, 0.0
  %v324 = vmax.f32 %v260, 0.0
  %v325 = vmax.f32 %v261, 0.0
  %v326 = vmax.f32 %v262, 0.0
  %v327 = vmax.f32 %v263, 0.0
  %v328 = vmax.f32 %v264, 0.0
  %v329 = vmax.f32 %v265, 0.0
  %v330 = vmax.f32 %v266, 0.0
  %v331 = vmax.f32 %v267, 0.0
  %v332 = vmax.f32 %v268, 0.0
  %v333 = vmax.f32 %v269, 0.0
  %v334 = vmax.f32 %v270, 0.0
  %v335 = vmax.f32 %v271, 0.0
  %v336 = vmax.f32 %v272, 0.0
  %v337 = vmax.f32 %v273, 0.0
  %v338 = vmax.f32 %v274, 0.0
  %v339 = vmax.f32 %v275, 0.0
  %v340 = vmax.f32 %v276, 0.0
  %v341 = vmax.f32 %v277, 0.0
  %v342 = vmax.f32 %v278, 0.0
  %v343 = vmax.f32 %v279, 0.0
  %v344 = vmax.f32 %v280, 0.0
  %v345 = vmax.f32 %v281, 0.0
  %v346 = vpack.c.bf16 %v283, %v282
  %v347 = vpack.c.bf16 %v285, %v284
  %v348 = vpack.c.bf16 %v287, %v286
  %v349 = vpack.c.bf16 %v289, %v288
  %v350 = vpack.c.bf16 %v291, %v290
  %v351 = vpack.c.bf16 %v293, %v292
  %v352 = vpack.c.bf16 %v295, %v294
  %v353 = vpack.c.bf16 %v297, %v296
  %v354 = vpack.c.bf16 %v299, %v298
  %v355 = vpack.c.bf16 %v301, %v300
  %v356 = vpack.c.bf16 %v303, %v302
  %v357 = vpack.c.bf16 %v305, %v304
  %v358 = vpack.c.bf16 %v307, %v306
  %v359 = vpack.c.bf16 %v309, %v308
  %v360 = vpack.c.bf16 %v311, %v310
  %v361 = vpack.c.bf16 %v313, %v312
  %v362 = vpack.c.bf16 %v315, %v314
  %v363 = vpack.c.bf16 %v317, %v316
  %v364 = vpack.c.bf16 %v319, %v318
  %v365 = vpack.c.bf16 %v321, %v320
  %v366 = vpack.c.bf16 %v323, %v322
  %v367 = vpack.c.bf16 %v325, %v324
  %v368 = vpack.c.bf16 %v327, %v326
  %v369 = vpack.c.bf16 %v329, %v328
  %v370 = vpack.c.bf16 %v331, %v330
  %v371 = vpack.c.bf16 %v333, %v332
  %v372 = vpack.c.bf16 %v335, %v334
  %v373 = vpack.c.bf16 %v337, %v336
  %v374 = vpack.c.bf16 %v339, %v338
  %v375 = vpack.c.bf16 %v341, %v340
  %v376 = vpack.c.bf16 %v343, %v342
  %v377 = vpack.c.bf16 %v345, %v344
  %v378 = vld [vmem:[%s1] sm:$0xf]
  %v379 = vld [vmem:[%s1 + $0x4] sm:$0xf]
  %v380 = vld [vmem:[%s1 + $0x8] sm:$0xf]
  %v381 = vld [vmem:[%s1 + $0xc] sm:$0xf]
  %v386 = vunpack.c.l.b16 %v378
  %v387 = vunpack.c.l.b16 %v379
  %v388 = vunpack.c.l.b16 %v380
  %v389 = vunpack.c.l.b16 %v381
  %v390 = vpack.c.b16 %v387, %v386
  %v391 = vpack.c.b16 %v389, %v388
  %vm394 = vcmask 261120
  %v396 = vsel %vm394, %v346, 0
  %v399 = vsel %vm394, %v347, 0
  %v402 = vsel %vm394, %v348, 0
  %v405 = vsel %vm394, %v349, 0
  %v408 = vsel %vm394, %v350, 0
  %v411 = vsel %vm394, %v351, 0
  %v414 = vsel %vm394, %v352, 0
  %v417 = vsel %vm394, %v353, 0
  %v420 = vsel %vm394, %v354, 0
  %v423 = vsel %vm394, %v355, 0
  %v426 = vsel %vm394, %v356, 0
  %v429 = vsel %vm394, %v357, 0
  %v432 = vsel %vm394, %v358, 0
  %v435 = vsel %vm394, %v359, 0
  %v438 = vsel %vm394, %v360, 0
  %v441 = vsel %vm394, %v361, 0
  %v444 = vsel %vm394, %v362, 0
  %v447 = vsel %vm394, %v363, 0
  %v450 = vsel %vm394, %v364, 0
  %v453 = vsel %vm394, %v365, 0
  %v456 = vsel %vm394, %v366, 0
  %v459 = vsel %vm394, %v367, 0
  %v462 = vsel %vm394, %v368, 0
  %v465 = vsel %vm394, %v369, 0
  %v468 = vsel %vm394, %v370, 0
  %v471 = vsel %vm394, %v371, 0
  %v474 = vsel %vm394, %v372, 0
  %v477 = vsel %vm394, %v373, 0
  %v480 = vsel %vm394, %v374, 0
  %v483 = vsel %vm394, %v375, 0
  %v486 = vsel %vm394, %v376, 0
  %v489 = vsel %vm394, %v377, 0
  %491 = vmatpush.bf16.msra.mxu0 0
  %492 = vmatpush.bf16.msra.mxu0 0
  %493 = vmatpush.bf16.msra.mxu0 0
  %494 = vmatpush.bf16.msra.mxu0 0
  %495 = vmatpush.bf16.msra.mxu0 0
  %496 = vmatpush.bf16.msra.mxu0 0
  %497 = vmatpush.bf16.msra.mxu0 %v391
  %498 = vmatpush.bf16.msra.mxu0 %v390
  %499 = vmatmul.bf16.gmra.mxu0 %v396
  %v500 = vpop.f32.mrf.mxu0
  %v501 = vadd.f32 0.0, %v500
  %v502 = vpop.f32.mrf.mxu0
  %v503 = vadd.f32 0.0, %v502
  %504 = vmatmul.bf16.gmra.mxu0 %v399
  %v505 = vpop.f32.mrf.mxu0
  %v506 = vadd.f32 0.0, %v505
  %v507 = vpop.f32.mrf.mxu0
  %v508 = vadd.f32 0.0, %v507
  %509 = vmatmul.bf16.gmra.mxu0 %v402
  %v510 = vpop.f32.mrf.mxu0
  %v511 = vadd.f32 0.0, %v510
  %v512 = vpop.f32.mrf.mxu0
  %v513 = vadd.f32 0.0, %v512
  %514 = vmatmul.bf16.gmra.mxu0 %v405
  %v515 = vpop.f32.mrf.mxu0
  %v516 = vadd.f32 0.0, %v515
  %v517 = vpop.f32.mrf.mxu0
  %v518 = vadd.f32 0.0, %v517
  %519 = vmatmul.bf16.gmra.mxu0 %v408
  %v520 = vpop.f32.mrf.mxu0
  %v521 = vadd.f32 0.0, %v520
  %v522 = vpop.f32.mrf.mxu0
  %v523 = vadd.f32 0.0, %v522
  %524 = vmatmul.bf16.gmra.mxu0 %v411
  %v525 = vpop.f32.mrf.mxu0
  %v526 = vadd.f32 0.0, %v525
  %v527 = vpop.f32.mrf.mxu0
  %v528 = vadd.f32 0.0, %v527
  %529 = vmatmul.bf16.gmra.mxu0 %v414
  %v530 = vpop.f32.mrf.mxu0
  %v531 = vadd.f32 0.0, %v530
  %v532 = vpop.f32.mrf.mxu0
  %v533 = vadd.f32 0.0, %v532
  %534 = vmatmul.bf16.gmra.mxu0 %v417
  %v535 = vpop.f32.mrf.mxu0
  %v536 = vadd.f32 0.0, %v535
  %v537 = vpop.f32.mrf.mxu0
  %v538 = vadd.f32 0.0, %v537
  %539 = vmatmul.bf16.gmra.mxu0 %v420
  %v540 = vpop.f32.mrf.mxu0
  %v541 = vadd.f32 0.0, %v540
  %v542 = vpop.f32.mrf.mxu0
  %v543 = vadd.f32 0.0, %v542
  %544 = vmatmul.bf16.gmra.mxu0 %v423
  %v545 = vpop.f32.mrf.mxu0
  %v546 = vadd.f32 0.0, %v545
  %v547 = vpop.f32.mrf.mxu0
  %v548 = vadd.f32 0.0, %v547
  %549 = vmatmul.bf16.gmra.mxu0 %v426
  %v550 = vpop.f32.mrf.mxu0
  %v551 = vadd.f32 0.0, %v550
  %v552 = vpop.f32.mrf.mxu0
  %v553 = vadd.f32 0.0, %v552
  %554 = vmatmul.bf16.gmra.mxu0 %v429
  %v555 = vpop.f32.mrf.mxu0
  %v556 = vadd.f32 0.0, %v555
  %v557 = vpop.f32.mrf.mxu0
  %v558 = vadd.f32 0.0, %v557
  %559 = vmatmul.bf16.gmra.mxu0 %v432
  %v560 = vpop.f32.mrf.mxu0
  %v561 = vadd.f32 0.0, %v560
  %v562 = vpop.f32.mrf.mxu0
  %v563 = vadd.f32 0.0, %v562
  %564 = vmatmul.bf16.gmra.mxu0 %v435
  %v565 = vpop.f32.mrf.mxu0
  %v566 = vadd.f32 0.0, %v565
  %v567 = vpop.f32.mrf.mxu0
  %v568 = vadd.f32 0.0, %v567
  %569 = vmatmul.bf16.gmra.mxu0 %v438
  %v570 = vpop.f32.mrf.mxu0
  %v571 = vadd.f32 0.0, %v570
  %v572 = vpop.f32.mrf.mxu0
  %v573 = vadd.f32 0.0, %v572
  %574 = vmatmul.bf16.gmra.mxu0 %v441
  %v575 = vpop.f32.mrf.mxu0
  %v576 = vadd.f32 0.0, %v575
  %v577 = vpop.f32.mrf.mxu0
  %v578 = vadd.f32 0.0, %v577
  %579 = vmatmul.bf16.gmra.mxu0 %v444
  %v580 = vpop.f32.mrf.mxu0
  %v581 = vadd.f32 0.0, %v580
  %v582 = vpop.f32.mrf.mxu0
  %v583 = vadd.f32 0.0, %v582
  %584 = vmatmul.bf16.gmra.mxu0 %v447
  %v585 = vpop.f32.mrf.mxu0
  %v586 = vadd.f32 0.0, %v585
  %v587 = vpop.f32.mrf.mxu0
  %v588 = vadd.f32 0.0, %v587
  %589 = vmatmul.bf16.gmra.mxu0 %v450
  %v590 = vpop.f32.mrf.mxu0
  %v591 = vadd.f32 0.0, %v590
  %v592 = vpop.f32.mrf.mxu0
  %v593 = vadd.f32 0.0, %v592
  %594 = vmatmul.bf16.gmra.mxu0 %v453
  %v595 = vpop.f32.mrf.mxu0
  %v596 = vadd.f32 0.0, %v595
  %v597 = vpop.f32.mrf.mxu0
  %v598 = vadd.f32 0.0, %v597
  %599 = vmatmul.bf16.gmra.mxu0 %v456
  %v600 = vpop.f32.mrf.mxu0
  %v601 = vadd.f32 0.0, %v600
  %v602 = vpop.f32.mrf.mxu0
  %v603 = vadd.f32 0.0, %v602
  %604 = vmatmul.bf16.gmra.mxu0 %v459
  %v605 = vpop.f32.mrf.mxu0
  %v606 = vadd.f32 0.0, %v605
  %v607 = vpop.f32.mrf.mxu0
  %v608 = vadd.f32 0.0, %v607
  %609 = vmatmul.bf16.gmra.mxu0 %v462
  %v610 = vpop.f32.mrf.mxu0
  %v611 = vadd.f32 0.0, %v610
  %v612 = vpop.f32.mrf.mxu0
  %v613 = vadd.f32 0.0, %v612
  %614 = vmatmul.bf16.gmra.mxu0 %v465
  %v615 = vpop.f32.mrf.mxu0
  %v616 = vadd.f32 0.0, %v615
  %v617 = vpop.f32.mrf.mxu0
  %v618 = vadd.f32 0.0, %v617
  %619 = vmatmul.bf16.gmra.mxu0 %v468
  %v620 = vpop.f32.mrf.mxu0
  %v621 = vadd.f32 0.0, %v620
  %v622 = vpop.f32.mrf.mxu0
  %v623 = vadd.f32 0.0, %v622
  %624 = vmatmul.bf16.gmra.mxu0 %v471
  %v625 = vpop.f32.mrf.mxu0
  %v626 = vadd.f32 0.0, %v625
  %v627 = vpop.f32.mrf.mxu0
  %v628 = vadd.f32 0.0, %v627
  %629 = vmatmul.bf16.gmra.mxu0 %v474
  %v630 = vpop.f32.mrf.mxu0
  %v631 = vadd.f32 0.0, %v630
  %v632 = vpop.f32.mrf.mxu0
  %v633 = vadd.f32 0.0, %v632
  %634 = vmatmul.bf16.gmra.mxu0 %v477
  %v635 = vpop.f32.mrf.mxu0
  %v636 = vadd.f32 0.0, %v635
  %v637 = vpop.f32.mrf.mxu0
  %v638 = vadd.f32 0.0, %v637
  %639 = vmatmul.bf16.gmra.mxu0 %v480
  %v640 = vpop.f32.mrf.mxu0
  %v641 = vadd.f32 0.0, %v640
  %v642 = vpop.f32.mrf.mxu0
  %v643 = vadd.f32 0.0, %v642
  %644 = vmatmul.bf16.gmra.mxu0 %v483
  %v645 = vpop.f32.mrf.mxu0
  %v646 = vadd.f32 0.0, %v645
  %v647 = vpop.f32.mrf.mxu0
  %v648 = vadd.f32 0.0, %v647
  %649 = vmatmul.bf16.gmra.mxu0 %v486
  %v650 = vpop.f32.mrf.mxu0
  %v651 = vadd.f32 0.0, %v650
  %v652 = vpop.f32.mrf.mxu0
  %v653 = vadd.f32 0.0, %v652
  %654 = vmatmul.bf16.gmra.mxu0 %v489
  %v655 = vpop.f32.mrf.mxu0
  %v656 = vadd.f32 0.0, %v655
  %v657 = vpop.f32.mrf.mxu0
  %v658 = vadd.f32 0.0, %v657
  %659 = vdwg.mxu0
  %v660 = vpack.c.bf16 %v501, %v501
  %v661 = vpack.c.bf16 %v503, %v503
  %v662 = vpack.c.bf16 %v506, %v506
  %v663 = vpack.c.bf16 %v508, %v508
  %v664 = vpack.c.bf16 %v511, %v511
  %v665 = vpack.c.bf16 %v513, %v513
  %v666 = vpack.c.bf16 %v516, %v516
  %v667 = vpack.c.bf16 %v518, %v518
  %v668 = vpack.c.bf16 %v521, %v521
  %v669 = vpack.c.bf16 %v523, %v523
  %v670 = vpack.c.bf16 %v526, %v526
  %v671 = vpack.c.bf16 %v528, %v528
  %v672 = vpack.c.bf16 %v531, %v531
  %v673 = vpack.c.bf16 %v533, %v533
  %v674 = vpack.c.bf16 %v536, %v536
  %v675 = vpack.c.bf16 %v538, %v538
  %v676 = vpack.c.bf16 %v541, %v541
  %v677 = vpack.c.bf16 %v543, %v543
  %v678 = vpack.c.bf16 %v546, %v546
  %v679 = vpack.c.bf16 %v548, %v548
  %v680 = vpack.c.bf16 %v551, %v551
  %v681 = vpack.c.bf16 %v553, %v553
  %v682 = vpack.c.bf16 %v556, %v556
  %v683 = vpack.c.bf16 %v558, %v558
  %v684 = vpack.c.bf16 %v561, %v561
  %v685 = vpack.c.bf16 %v563, %v563
  %v686 = vpack.c.bf16 %v566, %v566
  %v687 = vpack.c.bf16 %v568, %v568
  %v688 = vpack.c.bf16 %v571, %v571
  %v689 = vpack.c.bf16 %v573, %v573
  %v690 = vpack.c.bf16 %v576, %v576
  %v691 = vpack.c.bf16 %v578, %v578
  %v692 = vpack.c.bf16 %v581, %v581
  %v693 = vpack.c.bf16 %v583, %v583
  %v694 = vpack.c.bf16 %v586, %v586
  %v695 = vpack.c.bf16 %v588, %v588
  %v696 = vpack.c.bf16 %v591, %v591
  %v697 = vpack.c.bf16 %v593, %v593
  %v698 = vpack.c.bf16 %v596, %v596
  %v699 = vpack.c.bf16 %v598, %v598
  %v700 = vpack.c.bf16 %v601, %v601
  %v701 = vpack.c.bf16 %v603, %v603
  %v702 = vpack.c.bf16 %v606, %v606
  %v703 = vpack.c.bf16 %v608, %v608
  %v704 = vpack.c.bf16 %v611, %v611
  %v705 = vpack.c.bf16 %v613, %v613
  %v706 = vpack.c.bf16 %v616, %v616
  %v707 = vpack.c.bf16 %v618, %v618
  %v708 = vpack.c.bf16 %v621, %v621
  %v709 = vpack.c.bf16 %v623, %v623
  %v710 = vpack.c.bf16 %v626, %v626
  %v711 = vpack.c.bf16 %v628, %v628
  %v712 = vpack.c.bf16 %v631, %v631
  %v713 = vpack.c.bf16 %v633, %v633
  %v714 = vpack.c.bf16 %v636, %v636
  %v715 = vpack.c.bf16 %v638, %v638
  %v716 = vpack.c.bf16 %v641, %v641
  %v717 = vpack.c.bf16 %v643, %v643
  %v718 = vpack.c.bf16 %v646, %v646
  %v719 = vpack.c.bf16 %v648, %v648
  %v720 = vpack.c.bf16 %v651, %v651
  %v721 = vpack.c.bf16 %v653, %v653
  %v722 = vpack.c.bf16 %v656, %v656
  %v723 = vpack.c.bf16 %v658, %v658
  %724 = vst [vmem:[%s4] sm:$0xf] %v660
  %725 = vst [vmem:[%s4 + $0x4] sm:$0xf] %v661
  %726 = vst [vmem:[%s4 + $0x8] sm:$0xf] %v662
  %727 = vst [vmem:[%s4 + $0xc] sm:$0xf] %v663
  %728 = vst [vmem:[%s4 + $0x10] sm:$0xf] %v664
  %729 = vst [vmem:[%s4 + $0x14] sm:$0xf] %v665
  %730 = vst [vmem:[%s4 + $0x18] sm:$0xf] %v666
  %731 = vst [vmem:[%s4 + $0x1c] sm:$0xf] %v667
  %732 = vst [vmem:[%s4 + $0x20] sm:$0xf] %v668
  %733 = vst [vmem:[%s4 + $0x24] sm:$0xf] %v669
  %734 = vst [vmem:[%s4 + $0x28] sm:$0xf] %v670
  %735 = vst [vmem:[%s4 + $0x2c] sm:$0xf] %v671
  %736 = vst [vmem:[%s4 + $0x30] sm:$0xf] %v672
  %737 = vst [vmem:[%s4 + $0x34] sm:$0xf] %v673
  %738 = vst [vmem:[%s4 + $0x38] sm:$0xf] %v674
  %739 = vst [vmem:[%s4 + $0x3c] sm:$0xf] %v675
  %740 = vst [vmem:[%s4 + $0x40] sm:$0xf] %v676
  %741 = vst [vmem:[%s4 + $0x44] sm:$0xf] %v677
  %742 = vst [vmem:[%s4 + $0x48] sm:$0xf] %v678
  %743 = vst [vmem:[%s4 + $0x4c] sm:$0xf] %v679
  %744 = vst [vmem:[%s4 + $0x50] sm:$0xf] %v680
  %745 = vst [vmem:[%s4 + $0x54] sm:$0xf] %v681
  %746 = vst [vmem:[%s4 + $0x58] sm:$0xf] %v682
  %747 = vst [vmem:[%s4 + $0x5c] sm:$0xf] %v683
  %748 = vst [vmem:[%s4 + $0x60] sm:$0xf] %v684
  %749 = vst [vmem:[%s4 + $0x64] sm:$0xf] %v685
  %750 = vst [vmem:[%s4 + $0x68] sm:$0xf] %v686
  %751 = vst [vmem:[%s4 + $0x6c] sm:$0xf] %v687
  %752 = vst [vmem:[%s4 + $0x70] sm:$0xf] %v688
  %753 = vst [vmem:[%s4 + $0x74] sm:$0xf] %v689
  %754 = vst [vmem:[%s4 + $0x78] sm:$0xf] %v690
  %755 = vst [vmem:[%s4 + $0x7c] sm:$0xf] %v691
  %756 = vst [vmem:[%s4 + $0x80] sm:$0xf] %v692
  %757 = vst [vmem:[%s4 + $0x84] sm:$0xf] %v693
  %758 = vst [vmem:[%s4 + $0x88] sm:$0xf] %v694
  %759 = vst [vmem:[%s4 + $0x8c] sm:$0xf] %v695
  %760 = vst [vmem:[%s4 + $0x90] sm:$0xf] %v696
  %761 = vst [vmem:[%s4 + $0x94] sm:$0xf] %v697
  %762 = vst [vmem:[%s4 + $0x98] sm:$0xf] %v698
  %763 = vst [vmem:[%s4 + $0x9c] sm:$0xf] %v699
  %764 = vst [vmem:[%s4 + $0xa0] sm:$0xf] %v700
  %765 = vst [vmem:[%s4 + $0xa4] sm:$0xf] %v701
  %766 = vst [vmem:[%s4 + $0xa8] sm:$0xf] %v702
  %767 = vst [vmem:[%s4 + $0xac] sm:$0xf] %v703
  %768 = vst [vmem:[%s4 + $0xb0] sm:$0xf] %v704
  %769 = vst [vmem:[%s4 + $0xb4] sm:$0xf] %v705
  %770 = vst [vmem:[%s4 + $0xb8] sm:$0xf] %v706
  %771 = vst [vmem:[%s4 + $0xbc] sm:$0xf] %v707
  %772 = vst [vmem:[%s4 + $0xc0] sm:$0xf] %v708
  %773 = vst [vmem:[%s4 + $0xc4] sm:$0xf] %v709
  %774 = vst [vmem:[%s4 + $0xc8] sm:$0xf] %v710
  %775 = vst [vmem:[%s4 + $0xcc] sm:$0xf] %v711
  %776 = vst [vmem:[%s4 + $0xd0] sm:$0xf] %v712
  %777 = vst [vmem:[%s4 + $0xd4] sm:$0xf] %v713
  %778 = vst [vmem:[%s4 + $0xd8] sm:$0xf] %v714
  %779 = vst [vmem:[%s4 + $0xdc] sm:$0xf] %v715
  %780 = vst [vmem:[%s4 + $0xe0] sm:$0xf] %v716
  %781 = vst [vmem:[%s4 + $0xe4] sm:$0xf] %v717
  %782 = vst [vmem:[%s4 + $0xe8] sm:$0xf] %v718
  %783 = vst [vmem:[%s4 + $0xec] sm:$0xf] %v719
  %784 = vst [vmem:[%s4 + $0xf0] sm:$0xf] %v720
  %785 = vst [vmem:[%s4 + $0xf4] sm:$0xf] %v721
  %786 = vst [vmem:[%s4 + $0xf8] sm:$0xf] %v722
  %787 = vst [vmem:[%s4 + $0xfc] sm:$0xf] %v723
  // Predicated region
  $region18: #{image_encoder_forward.31} parent=0 // pred_check
    _
  $region19: #{image_encoder_forward.31} parent=0 // pred_check_branch
    %789 = sbr.rel (0) target = $region21
  $region20: #{image_encoder_forward.31} parent=0 // pred_region
    _
  $region21: #{image_encoder_forward.31} parent=0 // pred_fallthru
    _
  // Predicated region
  $region22: #{image_encoder_forward.31} parent=0 // pred_check
    _
  $region23: #{image_encoder_forward.31} parent=0 // pred_check_branch
    %791 = sbr.rel (0) target = $region25
  $region24: #{image_encoder_forward.31} parent=0 // pred_region
    _
  $region25: #{image_encoder_forward.31} parent=0 // pred_fallthru
    _

// kernel: image_encoder_forward.33
$region0: #{image_encoder_forward.33}
  #allocation0 [shape = 'u32[]', space=smem, size = 0x4, offset = 0x4, fixed_abs, tag = 'smem constant byte address 0x4 - core index']
  #allocation1 [shape = 'u32[72,128]{1,0:T(1,128)}', space=vmem, size = 0x9000, scoped, tag = 'internal scratch']
  %s0 = inlined_call_operand.vmem [shape: bf16[128,16], index: 0, kind: input, shape index: {}]
  %s1 = inlined_call_operand.vmem [shape: bf16[16,128], index: 1, kind: input, shape index: {}]
  %s2 = inlined_call_operand.vmem [shape: f32[1,16], index: 2, kind: input, shape index: {}]
  %s3 = inlined_call_operand.vmem [shape: f32[1,16], index: 3, kind: input, shape index: {}]
  %s4 = inlined_call_operand.vmem [shape: f32[1,128], index: 4, kind: input, shape index: {}]
  %s5 = inlined_call_operand.vmem [shape: f32[1,128], index: 5, kind: input, shape index: {}]
  %s6 = inlined_call_operand.vmem [shape: bf16[128,128], index: 6, kind: output, shape index: {}]
  %s7 = sld [smem:[#allocation0]]
  $region34: #{image_encoder_forward.33} parent=0
    _
  %s9 = ssub.s32 1, %s7
  %s10 = scalar_select 0, %s9, %s7
  // Predicated region
  $region2: #{image_encoder_forward.33} parent=0 // pred_check
    _
  $region3: #{image_encoder_forward.33} parent=0 // pred_check_branch
    %12 = sbr.rel (0) target = $region5
  $region4: #{image_encoder_forward.33} parent=0 // pred_region
    _
  $region5: #{image_encoder_forward.33} parent=0 // pred_fallthru
    _
  // Predicated region
  $region6: #{image_encoder_forward.33} parent=0 // pred_check
    _
  $region7: #{image_encoder_forward.33} parent=0 // pred_check_branch
    %14 = sbr.rel (0) target = $region9
  $region8: #{image_encoder_forward.33} parent=0 // pred_region
    _
  $region9: #{image_encoder_forward.33} parent=0 // pred_fallthru
    _
  // Predicated region
  $region10: #{image_encoder_forward.33} parent=0 // pred_check
    _
  $region11: #{image_encoder_forward.33} parent=0 // pred_check_branch
    %16 = sbr.rel (0) target = $region13
  $region12: #{image_encoder_forward.33} parent=0 // pred_region
    _
  $region13: #{image_encoder_forward.33} parent=0 // pred_fallthru
    _
  // Predicated region
  $region14: #{image_encoder_forward.33} parent=0 // pred_check
    _
  $region15: #{image_encoder_forward.33} parent=0 // pred_check_branch
    %18 = sbr.rel (0) target = $region17
  $region16: #{image_encoder_forward.33} parent=0 // pred_region
    _
  $region17: #{image_encoder_forward.33} parent=0 // pred_fallthru
    _
  // Predicated region
  $region18: #{image_encoder_forward.33} parent=0 // pred_check
    _
  $region19: #{image_encoder_forward.33} parent=0 // pred_check_branch
    %20 = sbr.rel (0) target = $region21
  $region20: #{image_encoder_forward.33} parent=0 // pred_region
    _
  $region21: #{image_encoder_forward.33} parent=0 // pred_fallthru
    _
  // Predicated region
  $region22: #{image_encoder_forward.33} parent=0 // pred_check
    _
  $region23: #{image_encoder_forward.33} parent=0 // pred_check_branch
    %22 = sbr.rel (0) target = $region25
  $region24: #{image_encoder_forward.33} parent=0 // pred_region
    _
  $region25: #{image_encoder_forward.33} parent=0 // pred_fallthru
    _
  %v24 = vld [vmem:[%s0] sm:$0xf]
  %v25 = vld [vmem:[%s0 + $0x4] sm:$0xf]
  %v26 = vld [vmem:[%s0 + $0x8] sm:$0xf]
  %v27 = vld [vmem:[%s0 + $0xc] sm:$0xf]
  %v28 = vld [vmem:[%s0 + $0x10] sm:$0xf]
  %v29 = vld [vmem:[%s0 + $0x14] sm:$0xf]
  %v30 = vld [vmem:[%s0 + $0x18] sm:$0xf]
  %v31 = vld [vmem:[%s0 + $0x1c] sm:$0xf]
  %v32 = vld [vmem:[%s0 + $0x20] sm:$0xf]
  %v33 = vld [vmem:[%s0 + $0x24] sm:$0xf]
  %v34 = vld [vmem:[%s0 + $0x28] sm:$0xf]
  %v35 = vld [vmem:[%s0 + $0x2c] sm:$0xf]
  %v36 = vld [vmem:[%s0 + $0x30] sm:$0xf]
  %v37 = vld [vmem:[%s0 + $0x34] sm:$0xf]
  %v38 = vld [vmem:[%s0 + $0x38] sm:$0xf]
  %v39 = vld [vmem:[%s0 + $0x3c] sm:$0xf]
  %v40 = vunpack.c.l.bf16 %v24
  %v41 = vunpack.c.l.bf16 %v25
  %v42 = vunpack.c.l.bf16 %v26
  %v43 = vunpack.c.l.bf16 %v27
  %v44 = vunpack.c.l.bf16 %v28
  %v45 = vunpack.c.l.bf16 %v29
  %v46 = vunpack.c.l.bf16 %v30
  %v47 = vunpack.c.l.bf16 %v31
  %v48 = vunpack.c.l.bf16 %v32
  %v49 = vunpack.c.l.bf16 %v33
  %v50 = vunpack.c.l.bf16 %v34
  %v51 = vunpack.c.l.bf16 %v35
  %v52 = vunpack.c.l.bf16 %v36
  %v53 = vunpack.c.l.bf16 %v37
  %v54 = vunpack.c.l.bf16 %v38
  %v55 = vunpack.c.l.bf16 %v39
  %v56 = vld [vmem:[%s2] sm:$0x1]
  %v58 = vperm.slane %v56, 0
  %v60 = vmul.f32 %v40, %v58
  %v61 = vmul.f32 %v41, %v58
  %v62 = vmul.f32 %v42, %v58
  %v63 = vmul.f32 %v43, %v58
  %v64 = vmul.f32 %v44, %v58
  %v65 = vmul.f32 %v45, %v58
  %v66 = vmul.f32 %v46, %v58
  %v67 = vmul.f32 %v47, %v58
  %v68 = vmul.f32 %v48, %v58
  %v69 = vmul.f32 %v49, %v58
  %v70 = vmul.f32 %v50, %v58
  %v71 = vmul.f32 %v51, %v58
  %v72 = vmul.f32 %v52, %v58
  %v73 = vmul.f32 %v53, %v58
  %v74 = vmul.f32 %v54, %v58
  %v75 = vmul.f32 %v55, %v58
  %v76 = vld [vmem:[%s3] sm:$0x1]
  %v78 = vperm.slane %v76, 0
  %v80 = vadd.f32 %v60, %v78
  %v81 = vadd.f32 %v61, %v78
  %v82 = vadd.f32 %v62, %v78
  %v83 = vadd.f32 %v63, %v78
  %v84 = vadd.f32 %v64, %v78
  %v85 = vadd.f32 %v65, %v78
  %v86 = vadd.f32 %v66, %v78
  %v87 = vadd.f32 %v67, %v78
  %v88 = vadd.f32 %v68, %v78
  %v89 = vadd.f32 %v69, %v78
  %v90 = vadd.f32 %v70, %v78
  %v91 = vadd.f32 %v71, %v78
  %v92 = vadd.f32 %v72, %v78
  %v93 = vadd.f32 %v73, %v78
  %v94 = vadd.f32 %v74, %v78
  %v95 = vadd.f32 %v75, %v78
  %v96 = vmax.f32 %v80, 0.0
  %v97 = vmax.f32 %v81, 0.0
  %v98 = vmax.f32 %v82, 0.0
  %v99 = vmax.f32 %v83, 0.0
  %v100 = vmax.f32 %v84, 0.0
  %v101 = vmax.f32 %v85, 0.0
  %v102 = vmax.f32 %v86, 0.0
  %v103 = vmax.f32 %v87, 0.0
  %v104 = vmax.f32 %v88, 0.0
  %v105 = vmax.f32 %v89, 0.0
  %v106 = vmax.f32 %v90, 0.0
  %v107 = vmax.f32 %v91, 0.0
  %v108 = vmax.f32 %v92, 0.0
  %v109 = vmax.f32 %v93, 0.0
  %v110 = vmax.f32 %v94, 0.0
  %v111 = vmax.f32 %v95, 0.0
  %v112 = vpack.c.bf16 %v97, %v96
  %v113 = vpack.c.bf16 %v99, %v98
  %v114 = vpack.c.bf16 %v101, %v100
  %v115 = vpack.c.bf16 %v103, %v102
  %v116 = vpack.c.bf16 %v105, %v104
  %v117 = vpack.c.bf16 %v107, %v106
  %v118 = vpack.c.bf16 %v109, %v108
  %v119 = vpack.c.bf16 %v111, %v110
  %v120 = vld [vmem:[%s1] sm:$0xf]
  %v121 = vld [vmem:[%s1 + $0x4] sm:$0xf]
  %v124 = vunpack.c.l.b16 %v120
  %v125 = vunpack.c.l.b16 %v121
  %v126 = vpack.c.b16 %v125, %v124
  %vm128 = vcmask 130048
  %v130 = vsel %vm128, %v112, 0
  %v133 = vsel %vm128, %v113, 0
  %v136 = vsel %vm128, %v114, 0
  %v139 = vsel %vm128, %v115, 0
  %v142 = vsel %vm128, %v116, 0
  %v145 = vsel %vm128, %v117, 0
  %v148 = vsel %vm128, %v118, 0
  %v151 = vsel %vm128, %v119, 0
  %153 = vmatpush.bf16.msra.mxu0 0
  %154 = vmatpush.bf16.msra.mxu0 0
  %155 = vmatpush.bf16.msra.mxu0 0
  %156 = vmatpush.bf16.msra.mxu0 0
  %157 = vmatpush.bf16.msra.mxu0 0
  %158 = vmatpush.bf16.msra.mxu0 0
  %159 = vmatpush.bf16.msra.mxu0 0
  %160 = vmatpush.bf16.msra.mxu0 %v126
  %161 = vmatmul.bf16.gmra.mxu0 %v130
  %v162 = vpop.f32.mrf.mxu0
  %v163 = vadd.f32 0.0, %v162
  %v164 = vpop.f32.mrf.mxu0
  %v165 = vadd.f32 0.0, %v164
  %166 = vmatmul.bf16.gmra.mxu0 %v133
  %v167 = vpop.f32.mrf.mxu0
  %v168 = vadd.f32 0.0, %v167
  %v169 = vpop.f32.mrf.mxu0
  %v170 = vadd.f32 0.0, %v169
  %171 = vmatmul.bf16.gmra.mxu0 %v136
  %v172 = vpop.f32.mrf.mxu0
  %v173 = vadd.f32 0.0, %v172
  %v174 = vpop.f32.mrf.mxu0
  %v175 = vadd.f32 0.0, %v174
  %176 = vmatmul.bf16.gmra.mxu0 %v139
  %v177 = vpop.f32.mrf.mxu0
  %v178 = vadd.f32 0.0, %v177
  %v179 = vpop.f32.mrf.mxu0
  %v180 = vadd.f32 0.0, %v179
  %181 = vmatmul.bf16.gmra.mxu0 %v142
  %v182 = vpop.f32.mrf.mxu0
  %v183 = vadd.f32 0.0, %v182
  %v184 = vpop.f32.mrf.mxu0
  %v185 = vadd.f32 0.0, %v184
  %186 = vmatmul.bf16.gmra.mxu0 %v145
  %v187 = vpop.f32.mrf.mxu0
  %v188 = vadd.f32 0.0, %v187
  %v189 = vpop.f32.mrf.mxu0
  %v190 = vadd.f32 0.0, %v189
  %191 = vmatmul.bf16.gmra.mxu0 %v148
  %v192 = vpop.f32.mrf.mxu0
  %v193 = vadd.f32 0.0, %v192
  %v194 = vpop.f32.mrf.mxu0
  %v195 = vadd.f32 0.0, %v194
  %196 = vmatmul.bf16.gmra.mxu0 %v151
  %v197 = vpop.f32.mrf.mxu0
  %v198 = vadd.f32 0.0, %v197
  %v199 = vpop.f32.mrf.mxu0
  %v200 = vadd.f32 0.0, %v199
  %201 = vdwg.mxu0
  %v202 = vld [vmem:[%s4] sm:$0x1]
  %v204 = vperm.slane %v202, 0
  %v206 = vmul.f32 %v163, %v204
  %v207 = vmul.f32 %v165, %v204
  %v208 = vmul.f32 %v168, %v204
  %v209 = vmul.f32 %v170, %v204
  %v210 = vmul.f32 %v173, %v204
  %v211 = vmul.f32 %v175, %v204
  %v212 = vmul.f32 %v178, %v204
  %v213 = vmul.f32 %v180, %v204
  %v214 = vmul.f32 %v183, %v204
  %v215 = vmul.f32 %v185, %v204
  %v216 = vmul.f32 %v188, %v204
  %v217 = vmul.f32 %v190, %v204
  %v218 = vmul.f32 %v193, %v204
  %v219 = vmul.f32 %v195, %v204
  %v220 = vmul.f32 %v198, %v204
  %v221 = vmul.f32 %v200, %v204
  %v222 = vld [vmem:[%s5] sm:$0x1]
  %v224 = vperm.slane %v222, 0
  %v226 = vadd.f32 %v206, %v224
  %v227 = vadd.f32 %v207, %v224
  %v228 = vadd.f32 %v208, %v224
  %v229 = vadd.f32 %v209, %v224
  %v230 = vadd.f32 %v210, %v224
  %v231 = vadd.f32 %v211, %v224
  %v232 = vadd.f32 %v212, %v224
  %v233 = vadd.f32 %v213, %v224
  %v234 = vadd.f32 %v214, %v224
  %v235 = vadd.f32 %v215, %v224
  %v236 = vadd.f32 %v216, %v224
  %v237 = vadd.f32 %v217, %v224
  %v238 = vadd.f32 %v218, %v224
  %v239 = vadd.f32 %v219, %v224
  %v240 = vadd.f32 %v220, %v224
  %v241 = vadd.f32 %v221, %v224
  %v242 = vmax.f32 %v226, 0.0
  %v243 = vmax.f32 %v227, 0.0
  %v244 = vmax.f32 %v228, 0.0
  %v245 = vmax.f32 %v229, 0.0
  %v246 = vmax.f32 %v230, 0.0
  %v247 = vmax.f32 %v231, 0.0
  %v248 = vmax.f32 %v232, 0.0
  %v249 = vmax.f32 %v233, 0.0
  %v250 = vmax.f32 %v234, 0.0
  %v251 = vmax.f32 %v235, 0.0
  %v252 = vmax.f32 %v236, 0.0
  %v253 = vmax.f32 %v237, 0.0
  %v254 = vmax.f32 %v238, 0.0
  %v255 = vmax.f32 %v239, 0.0
  %v256 = vmax.f32 %v240, 0.0
  %v257 = vmax.f32 %v241, 0.0
  %v258 = vpack.c.bf16 %v242, %v242
  %v259 = vpack.c.bf16 %v243, %v243
  %v260 = vpack.c.bf16 %v244, %v244
  %v261 = vpack.c.bf16 %v245, %v245
  %v262 = vpack.c.bf16 %v246, %v246
  %v263 = vpack.c.bf16 %v247, %v247
  %v264 = vpack.c.bf16 %v248, %v248
  %v265 = vpack.c.bf16 %v249, %v249
  %v266 = vpack.c.bf16 %v250, %v250
  %v267 = vpack.c.bf16 %v251, %v251
  %v268 = vpack.c.bf16 %v252, %v252
  %v269 = vpack.c.bf16 %v253, %v253
  %v270 = vpack.c.bf16 %v254, %v254
  %v271 = vpack.c.bf16 %v255, %v255
  %v272 = vpack.c.bf16 %v256, %v256
  %v273 = vpack.c.bf16 %v257, %v257
  %274 = vst [vmem:[%s6] sm:$0xf] %v258
  %275 = vst [vmem:[%s6 + $0x4] sm:$0xf] %v259
  %276 = vst [vmem:[%s6 + $0x8] sm:$0xf] %v260
  %277 = vst [vmem:[%s6 + $0xc] sm:$0xf] %v261
  %278 = vst [vmem:[%s6 + $0x10] sm:$0xf] %v262
  %279 = vst [vmem:[%s6 + $0x14] sm:$0xf] %v263
  %280 = vst [vmem:[%s6 + $0x18] sm:$0xf] %v264
  %281 = vst [vmem:[%s6 + $0x1c] sm:$0xf] %v265
  %282 = vst [vmem:[%s6 + $0x20] sm:$0xf] %v266
  %283 = vst [vmem:[%s6 + $0x24] sm:$0xf] %v267
  %284 = vst [vmem:[%s6 + $0x28] sm:$0xf] %v268
  %285 = vst [vmem:[%s6 + $0x2c] sm:$0xf] %v269
  %286 = vst [vmem:[%s6 + $0x30] sm:$0xf] %v270
  %287 = vst [vmem:[%s6 + $0x34] sm:$0xf] %v271
  %288 = vst [vmem:[%s6 + $0x38] sm:$0xf] %v272
  %289 = vst [vmem:[%s6 + $0x3c] sm:$0xf] %v273
  // Predicated region
  $region26: #{image_encoder_forward.33} parent=0 // pred_check
    _
  $region27: #{image_encoder_forward.33} parent=0 // pred_check_branch
    %291 = sbr.rel (0) target = $region29
  $region28: #{image_encoder_forward.33} parent=0 // pred_region
    _
  $region29: #{image_encoder_forward.33} parent=0 // pred_fallthru
    _
  // Predicated region
  $region30: #{image_encoder_forward.33} parent=0 // pred_check
    _
  $region31: #{image_encoder_forward.33} parent=0 // pred_check_branch
    %293 = sbr.rel (0) target = $region33
  $region32: #{image_encoder_forward.33} parent=0 // pred_region
    _
  $region33: #{image_encoder_forward.33} parent=0 // pred_fallthru
    _

// kernel: image_encoder_forward.34
$region0: #{image_encoder_forward.34}
  #allocation0 [shape = 'u32[]', space=smem, size = 0x4, offset = 0x4, fixed_abs, tag = 'smem constant byte address 0x4 - core index']
  #allocation1 [shape = 'u32[72,128]{1,0:T(1,128)}', space=vmem, size = 0x9000, scoped, tag = 'internal scratch']
  %s0 = inlined_call_operand.vmem [shape: bf16[128,288], index: 0, kind: input, shape index: {}]
  %s1 = inlined_call_operand.vmem [shape: bf16[288,128], index: 1, kind: input, shape index: {}]
  %s2 = inlined_call_operand.vmem [shape: bf16[128,128], index: 2, kind: output, shape index: {}]
  %s3 = sld [smem:[#allocation0]]
  $region18: #{image_encoder_forward.34} parent=0
    _
  %s5 = ssub.s32 1, %s3
  %s6 = scalar_select 0, %s5, %s3
  // Predicated region
  $region2: #{image_encoder_forward.34} parent=0 // pred_check
    _
  $region3: #{image_encoder_forward.34} parent=0 // pred_check_branch
    %8 = sbr.rel (0) target = $region5
  $region4: #{image_encoder_forward.34} parent=0 // pred_region
    _
  $region5: #{image_encoder_forward.34} parent=0 // pred_fallthru
    _
  // Predicated region
  $region6: #{image_encoder_forward.34} parent=0 // pred_check
    _
  $region7: #{image_encoder_forward.34} parent=0 // pred_check_branch
    %10 = sbr.rel (0) target = $region9
  $region8: #{image_encoder_forward.34} parent=0 // pred_region
    _
  $region9: #{image_encoder_forward.34} parent=0 // pred_fallthru
    _
  %v12 = vld [vmem:[%s0] sm:$0xff]
  %v13 = vld [vmem:[%s0 + $0x8] sm:$0xf]
  %v14 = vld [vmem:[%s0 + $0xc] sm:$0xff]
  %v15 = vld [vmem:[%s0 + $0x14] sm:$0xf]
  %v16 = vld [vmem:[%s0 + $0x18] sm:$0xff]
  %v17 = vld [vmem:[%s0 + $0x20] sm:$0xf]
  %v18 = vld [vmem:[%s0 + $0x24] sm:$0xff]
  %v19 = vld [vmem:[%s0 + $0x2c] sm:$0xf]
  %v20 = vld [vmem:[%s0 + $0x30] sm:$0xff]
  %v21 = vld [vmem:[%s0 + $0x38] sm:$0xf]
  %v22 = vld [vmem:[%s0 + $0x3c] sm:$0xff]
  %v23 = vld [vmem:[%s0 + $0x44] sm:$0xf]
  %v24 = vld [vmem:[%s0 + $0x48] sm:$0xff]
  %v25 = vld [vmem:[%s0 + $0x50] sm:$0xf]
  %v26 = vld [vmem:[%s0 + $0x54] sm:$0xff]
  %v27 = vld [vmem:[%s0 + $0x5c] sm:$0xf]
  %v28 = vld [vmem:[%s0 + $0x60] sm:$0xff]
  %v29 = vld [vmem:[%s0 + $0x68] sm:$0xf]
  %v30 = vld [vmem:[%s0 + $0x6c] sm:$0xff]
  %v31 = vld [vmem:[%s0 + $0x74] sm:$0xf]
  %v32 = vld [vmem:[%s0 + $0x78] sm:$0xff]
  %v33 = vld [vmem:[%s0 + $0x80] sm:$0xf]
  %v34 = vld [vmem:[%s0 + $0x84] sm:$0xff]
  %v35 = vld [vmem:[%s0 + $0x8c] sm:$0xf]
  %v36 = vld [vmem:[%s0 + $0x90] sm:$0xff]
  %v37 = vld [vmem:[%s0 + $0x98] sm:$0xf]
  %v38 = vld [vmem:[%s0 + $0x9c] sm:$0xff]
  %v39 = vld [vmem:[%s0 + $0xa4] sm:$0xf]
  %v40 = vld [vmem:[%s0 + $0xa8] sm:$0xff]
  %v41 = vld [vmem:[%s0 + $0xb0] sm:$0xf]
  %v42 = vld [vmem:[%s0 + $0xb4] sm:$0xff]
  %v43 = vld [vmem:[%s0 + $0xbc] sm:$0xf]
  %v44 = vld [vmem:[%s1] sm:$0xf]
  %v45 = vld [vmem:[%s1 + $0x4] sm:$0xf]
  %v46 = vld [vmem:[%s1 + $0x8] sm:$0xf]
  %v47 = vld [vmem:[%s1 + $0xc] sm:$0xf]
  %v48 = vld [vmem:[%s1 + $0x10] sm:$0xf]
  %v49 = vld [vmem:[%s1 + $0x14] sm:$0xf]
  %v50 = vld [vmem:[%s1 + $0x18] sm:$0xf]
  %v51 = vld [vmem:[%s1 + $0x1c] sm:$0xf]
  %v52 = vld [vmem:[%s1 + $0x20] sm:$0xf]
  %v53 = vld [vmem:[%s1 + $0x24] sm:$0xf]
  %v54 = vld [vmem:[%s1 + $0x28] sm:$0xf]
  %v55 = vld [vmem:[%s1 + $0x2c] sm:$0xf]
  %v56 = vld [vmem:[%s1 + $0x30] sm:$0xf]
  %v57 = vld [vmem:[%s1 + $0x34] sm:$0xf]
  %v58 = vld [vmem:[%s1 + $0x38] sm:$0xf]
  %v59 = vld [vmem:[%s1 + $0x3c] sm:$0xf]
  %v60 = vld [vmem:[%s1 + $0x40] sm:$0xf]
  %v61 = vld [vmem:[%s1 + $0x44] sm:$0xf]
  %v62 = vld [vmem:[%s1 + $0x48] sm:$0xf]
  %v63 = vld [vmem:[%s1 + $0x4c] sm:$0xf]
  %v64 = vld [vmem:[%s1 + $0x50] sm:$0xf]
  %v65 = vld [vmem:[%s1 + $0x54] sm:$0xf]
  %v66 = vld [vmem:[%s1 + $0x58] sm:$0xf]
  %v67 = vld [vmem:[%s1 + $0x5c] sm:$0xf]
  %v68 = vld [vmem:[%s1 + $0x60] sm:$0xf]
  %v69 = vld [vmem:[%s1 + $0x64] sm:$0xf]
  %v70 = vld [vmem:[%s1 + $0x68] sm:$0xf]
  %v71 = vld [vmem:[%s1 + $0x6c] sm:$0xf]
  %v72 = vld [vmem:[%s1 + $0x70] sm:$0xf]
  %v73 = vld [vmem:[%s1 + $0x74] sm:$0xf]
  %v74 = vld [vmem:[%s1 + $0x78] sm:$0xf]
  %v75 = vld [vmem:[%s1 + $0x7c] sm:$0xf]
  %v76 = vld [vmem:[%s1 + $0x80] sm:$0xf]
  %v77 = vld [vmem:[%s1 + $0x84] sm:$0xf]
  %v78 = vld [vmem:[%s1 + $0x88] sm:$0xf]
  %v79 = vld [vmem:[%s1 + $0x8c] sm:$0xf]
  %v112 = vunpack.c.l.b16 %v12
  %v113 = vunpack.c.h.b16 %v12
  %v114 = vunpack.c.l.b16 %v13
  %v115 = vunpack.c.l.b16 %v14
  %v116 = vunpack.c.h.b16 %v14
  %v117 = vunpack.c.l.b16 %v15
  %v118 = vunpack.c.l.b16 %v16
  %v119 = vunpack.c.h.b16 %v16
  %v120 = vunpack.c.l.b16 %v17
  %v121 = vunpack.c.l.b16 %v18
  %v122 = vunpack.c.h.b16 %v18
  %v123 = vunpack.c.l.b16 %v19
  %v124 = vunpack.c.l.b16 %v20
  %v125 = vunpack.c.h.b16 %v20
  %v126 = vunpack.c.l.b16 %v21
  %v127 = vunpack.c.l.b16 %v22
  %v128 = vunpack.c.h.b16 %v22
  %v129 = vunpack.c.l.b16 %v23
  %v130 = vunpack.c.l.b16 %v24
  %v131 = vunpack.c.h.b16 %v24
  %v132 = vunpack.c.l.b16 %v25
  %v133 = vunpack.c.l.b16 %v26
  %v134 = vunpack.c.h.b16 %v26
  %v135 = vunpack.c.l.b16 %v27
  %v136 = vunpack.c.l.b16 %v28
  %v137 = vunpack.c.h.b16 %v28
  %v138 = vunpack.c.l.b16 %v29
  %v139 = vunpack.c.l.b16 %v30
  %v140 = vunpack.c.h.b16 %v30
  %v141 = vunpack.c.l.b16 %v31
  %v142 = vunpack.c.l.b16 %v32
  %v143 = vunpack.c.h.b16 %v32
  %v144 = vunpack.c.l.b16 %v33
  %v145 = vunpack.c.l.b16 %v34
  %v146 = vunpack.c.h.b16 %v34
  %v147 = vunpack.c.l.b16 %v35
  %v148 = vunpack.c.l.b16 %v36
  %v149 = vunpack.c.h.b16 %v36
  %v150 = vunpack.c.l.b16 %v37
  %v151 = vunpack.c.l.b16 %v38
  %v152 = vunpack.c.h.b16 %v38
  %v153 = vunpack.c.l.b16 %v39
  %v154 = vunpack.c.l.b16 %v40
  %v155 = vunpack.c.h.b16 %v40
  %v156 = vunpack.c.l.b16 %v41
  %v157 = vunpack.c.l.b16 %v42
  %v158 = vunpack.c.h.b16 %v42
  %v159 = vunpack.c.l.b16 %v43
  %v160 = vpack.c.b16 %v115, %v112
  %v161 = vpack.c.b16 %v116, %v113
  %v162 = vpack.c.b16 %v117, %v114
  %v163 = vpack.c.b16 %v121, %v118
  %v164 = vpack.c.b16 %v122, %v119
  %v165 = vpack.c.b16 %v123, %v120
  %v166 = vpack.c.b16 %v127, %v124
  %v167 = vpack.c.b16 %v128, %v125
  %v168 = vpack.c.b16 %v129, %v126
  %v169 = vpack.c.b16 %v133, %v130
  %v170 = vpack.c.b16 %v134, %v131
  %v171 = vpack.c.b16 %v135, %v132
  %v172 = vpack.c.b16 %v139, %v136
  %v173 = vpack.c.b16 %v140, %v137
  %v174 = vpack.c.b16 %v141, %v138
  %v175 = vpack.c.b16 %v145, %v142
  %v176 = vpack.c.b16 %v146, %v143
  %v177 = vpack.c.b16 %v147, %v144
  %v178 = vpack.c.b16 %v151, %v148
  %v179 = vpack.c.b16 %v152, %v149
  %v180 = vpack.c.b16 %v153, %v150
  %v181 = vpack.c.b16 %v157, %v154
  %v182 = vpack.c.b16 %v158, %v155
  %v183 = vpack.c.b16 %v159, %v156
  %v236 = vunpack.c.l.b16 %v44
  %v237 = vunpack.c.l.b16 %v45
  %v238 = vunpack.c.l.b16 %v46
  %v239 = vunpack.c.l.b16 %v47
  %v240 = vunpack.c.l.b16 %v48
  %v241 = vunpack.c.l.b16 %v49
  %v242 = vunpack.c.l.b16 %v50
  %v243 = vunpack.c.l.b16 %v51
  %v244 = vunpack.c.l.b16 %v52
  %v245 = vunpack.c.l.b16 %v53
  %v246 = vunpack.c.l.b16 %v54
  %v247 = vunpack.c.l.b16 %v55
  %v248 = vunpack.c.l.b16 %v56
  %v249 = vunpack.c.l.b16 %v57
  %v250 = vunpack.c.l.b16 %v58
  %v251 = vunpack.c.l.b16 %v59
  %v252 = vunpack.c.l.b16 %v60
  %v253 = vunpack.c.l.b16 %v61
  %v254 = vunpack.c.l.b16 %v62
  %v255 = vunpack.c.l.b16 %v63
  %v256 = vunpack.c.l.b16 %v64
  %v257 = vunpack.c.l.b16 %v65
  %v258 = vunpack.c.l.b16 %v66
  %v259 = vunpack.c.l.b16 %v67
  %v260 = vunpack.c.l.b16 %v68
  %v261 = vunpack.c.l.b16 %v69
  %v262 = vunpack.c.l.b16 %v70
  %v263 = vunpack.c.l.b16 %v71
  %v264 = vunpack.c.l.b16 %v72
  %v265 = vunpack.c.l.b16 %v73
  %v266 = vunpack.c.l.b16 %v74
  %v267 = vunpack.c.l.b16 %v75
  %v268 = vunpack.c.l.b16 %v76
  %v269 = vunpack.c.l.b16 %v77
  %v270 = vunpack.c.l.b16 %v78
  %v271 = vunpack.c.l.b16 %v79
  %v272 = vpack.c.b16 %v237, %v236
  %v273 = vpack.c.b16 %v239, %v238
  %v274 = vpack.c.b16 %v241, %v240
  %v275 = vpack.c.b16 %v243, %v242
  %v276 = vpack.c.b16 %v245, %v244
  %v277 = vpack.c.b16 %v247, %v246
  %v278 = vpack.c.b16 %v249, %v248
  %v279 = vpack.c.b16 %v251, %v250
  %v280 = vpack.c.b16 %v253, %v252
  %v281 = vpack.c.b16 %v255, %v254
  %v282 = vpack.c.b16 %v257, %v256
  %v283 = vpack.c.b16 %v259, %v258
  %v284 = vpack.c.b16 %v261, %v260
  %v285 = vpack.c.b16 %v263, %v262
  %v286 = vpack.c.b16 %v265, %v264
  %v287 = vpack.c.b16 %v267, %v266
  %v288 = vpack.c.b16 %v269, %v268
  %v289 = vpack.c.b16 %v271, %v270
  %vm308 = vcmask 261120
  %v310 = vsel %vm308, %v162, 0
  %v313 = vsel %vm308, %v165, 0
  %v316 = vsel %vm308, %v168, 0
  %v319 = vsel %vm308, %v171, 0
  %v322 = vsel %vm308, %v174, 0
  %v325 = vsel %vm308, %v177, 0
  %v328 = vsel %vm308, %v180, 0
  %v331 = vsel %vm308, %v183, 0
  %333 = vmatpush.bf16.msra.mxu0 %v279
  %334 = vmatpush.bf16.msra.mxu0 %v278
  %335 = vmatpush.bf16.msra.mxu0 %v277
  %336 = vmatpush.bf16.msra.mxu0 %v276
  %337 = vmatpush.bf16.msra.mxu0 %v275
  %338 = vmatpush.bf16.msra.mxu0 %v274
  %339 = vmatpush.bf16.msra.mxu0 %v273
  %340 = vmatpush.bf16.msra.mxu0 %v272
  %341 = vmatmul.bf16.gmra.mxu0 %v160
  %v342 = vpop.f32.mrf.mxu0
  %v343 = vadd.f32 0.0, %v342
  %v344 = vpop.f32.mrf.mxu0
  %v345 = vadd.f32 0.0, %v344
  %346 = vmatmul.bf16.gmra.mxu0 %v163
  %v347 = vpop.f32.mrf.mxu0
  %v348 = vadd.f32 0.0, %v347
  %v349 = vpop.f32.mrf.mxu0
  %v350 = vadd.f32 0.0, %v349
  %351 = vmatmul.bf16.gmra.mxu0 %v166
  %v352 = vpop.f32.mrf.mxu0
  %v353 = vadd.f32 0.0, %v352
  %v354 = vpop.f32.mrf.mxu0
  %v355 = vadd.f32 0.0, %v354
  %356 = vmatmul.bf16.gmra.mxu0 %v169
  %v357 = vpop.f32.mrf.mxu0
  %v358 = vadd.f32 0.0, %v357
  %v359 = vpop.f32.mrf.mxu0
  %v360 = vadd.f32 0.0, %v359
  %361 = vmatmul.bf16.gmra.mxu0 %v172
  %v362 = vpop.f32.mrf.mxu0
  %v363 = vadd.f32 0.0, %v362
  %v364 = vpop.f32.mrf.mxu0
  %v365 = vadd.f32 0.0, %v364
  %366 = vmatmul.bf16.gmra.mxu0 %v175
  %v367 = vpop.f32.mrf.mxu0
  %v368 = vadd.f32 0.0, %v367
  %v369 = vpop.f32.mrf.mxu0
  %v370 = vadd.f32 0.0, %v369
  %371 = vmatmul.bf16.gmra.mxu0 %v178
  %v372 = vpop.f32.mrf.mxu0
  %v373 = vadd.f32 0.0, %v372
  %v374 = vpop.f32.mrf.mxu0
  %v375 = vadd.f32 0.0, %v374
  %376 = vmatmul.bf16.gmra.mxu0 %v181
  %v377 = vpop.f32.mrf.mxu0
  %v378 = vadd.f32 0.0, %v377
  %v379 = vpop.f32.mrf.mxu0
  %v380 = vadd.f32 0.0, %v379
  %381 = vdwg.mxu0
  %382 = vmatpush.bf16.msra.mxu0 %v287
  %383 = vmatpush.bf16.msra.mxu0 %v286
  %384 = vmatpush.bf16.msra.mxu0 %v285
  %385 = vmatpush.bf16.msra.mxu0 %v284
  %386 = vmatpush.bf16.msra.mxu0 %v283
  %387 = vmatpush.bf16.msra.mxu0 %v282
  %388 = vmatpush.bf16.msra.mxu0 %v281
  %389 = vmatpush.bf16.msra.mxu0 %v280
  %390 = vmatmul.bf16.gmra.mxu0 %v161
  %v391 = vpop.f32.mrf.mxu0
  %v392 = vadd.f32 %v343, %v391
  %v393 = vpop.f32.mrf.mxu0
  %v394 = vadd.f32 %v345, %v393
  %395 = vmatmul.bf16.gmra.mxu0 %v164
  %v396 = vpop.f32.mrf.mxu0
  %v397 = vadd.f32 %v348, %v396
  %v398 = vpop.f32.mrf.mxu0
  %v399 = vadd.f32 %v350, %v398
  %400 = vmatmul.bf16.gmra.mxu0 %v167
  %v401 = vpop.f32.mrf.mxu0
  %v402 = vadd.f32 %v353, %v401
  %v403 = vpop.f32.mrf.mxu0
  %v404 = vadd.f32 %v355, %v403
  %405 = vmatmul.bf16.gmra.mxu0 %v170
  %v406 = vpop.f32.mrf.mxu0
  %v407 = vadd.f32 %v358, %v406
  %v408 = vpop.f32.mrf.mxu0
  %v409 = vadd.f32 %v360, %v408
  %410 = vmatmul.bf16.gmra.mxu0 %v173
  %v411 = vpop.f32.mrf.mxu0
  %v412 = vadd.f32 %v363, %v411
  %v413 = vpop.f32.mrf.mxu0
  %v414 = vadd.f32 %v365, %v413
  %415 = vmatmul.bf16.gmra.mxu0 %v176
  %v416 = vpop.f32.mrf.mxu0
  %v417 = vadd.f32 %v368, %v416
  %v418 = vpop.f32.mrf.mxu0
  %v419 = vadd.f32 %v370, %v418
  %420 = vmatmul.bf16.gmra.mxu0 %v179
  %v421 = vpop.f32.mrf.mxu0
  %v422 = vadd.f32 %v373, %v421
  %v423 = vpop.f32.mrf.mxu0
  %v424 = vadd.f32 %v375, %v423
  %425 = vmatmul.bf16.gmra.mxu0 %v182
  %v426 = vpop.f32.mrf.mxu0
  %v427 = vadd.f32 %v378, %v426
  %v428 = vpop.f32.mrf.mxu0
  %v429 = vadd.f32 %v380, %v428
  %430 = vdwg.mxu0
  %431 = vmatpush.bf16.msra.mxu0 0
  %432 = vmatpush.bf16.msra.mxu0 0
  %433 = vmatpush.bf16.msra.mxu0 0
  %434 = vmatpush.bf16.msra.mxu0 0
  %435 = vmatpush.bf16.msra.mxu0 0
  %436 = vmatpush.bf16.msra.mxu0 0
  %437 = vmatpush.bf16.msra.mxu0 %v289
  %438 = vmatpush.bf16.msra.mxu0 %v288
  %439 = vmatmul.bf16.gmra.mxu0 %v310
  %v440 = vpop.f32.mrf.mxu0
  %v441 = vadd.f32 %v392, %v440
  %v442 = vpop.f32.mrf.mxu0
  %v443 = vadd.f32 %v394, %v442
  %444 = vmatmul.bf16.gmra.mxu0 %v313
  %v445 = vpop.f32.mrf.mxu0
  %v446 = vadd.f32 %v397, %v445
  %v447 = vpop.f32.mrf.mxu0
  %v448 = vadd.f32 %v399, %v447
  %449 = vmatmul.bf16.gmra.mxu0 %v316
  %v450 = vpop.f32.mrf.mxu0
  %v451 = vadd.f32 %v402, %v450
  %v452 = vpop.f32.mrf.mxu0
  %v453 = vadd.f32 %v404, %v452
  %454 = vmatmul.bf16.gmra.mxu0 %v319
  %v455 = vpop.f32.mrf.mxu0
  %v456 = vadd.f32 %v407, %v455
  %v457 = vpop.f32.mrf.mxu0
  %v458 = vadd.f32 %v409, %v457
  %459 = vmatmul.bf16.gmra.mxu0 %v322
  %v460 = vpop.f32.mrf.mxu0
  %v461 = vadd.f32 %v412, %v460
  %v462 = vpop.f32.mrf.mxu0
  %v463 = vadd.f32 %v414, %v462
  %464 = vmatmul.bf16.gmra.mxu0 %v325
  %v465 = vpop.f32.mrf.mxu0
  %v466 = vadd.f32 %v417, %v465
  %v467 = vpop.f32.mrf.mxu0
  %v468 = vadd.f32 %v419, %v467
  %469 = vmatmul.bf16.gmra.mxu0 %v328
  %v470 = vpop.f32.mrf.mxu0
  %v471 = vadd.f32 %v422, %v470
  %v472 = vpop.f32.mrf.mxu0
  %v473 = vadd.f32 %v424, %v472
  %474 = vmatmul.bf16.gmra.mxu0 %v331
  %v475 = vpop.f32.mrf.mxu0
  %v476 = vadd.f32 %v427, %v475
  %v477 = vpop.f32.mrf.mxu0
  %v478 = vadd.f32 %v429, %v477
  %479 = vdwg.mxu0
  %v480 = vpack.c.bf16 %v441, %v441
  %v481 = vpack.c.bf16 %v443, %v443
  %v482 = vpack.c.bf16 %v446, %v446
  %v483 = vpack.c.bf16 %v448, %v448
  %v484 = vpack.c.bf16 %v451, %v451
  %v485 = vpack.c.bf16 %v453, %v453
  %v486 = vpack.c.bf16 %v456, %v456
  %v487 = vpack.c.bf16 %v458, %v458
  %v488 = vpack.c.bf16 %v461, %v461
  %v489 = vpack.c.bf16 %v463, %v463
  %v490 = vpack.c.bf16 %v466, %v466
  %v491 = vpack.c.bf16 %v468, %v468
  %v492 = vpack.c.bf16 %v471, %v471
  %v493 = vpack.c.bf16 %v473, %v473
  %v494 = vpack.c.bf16 %v476, %v476
  %v495 = vpack.c.bf16 %v478, %v478
  %496 = vst [vmem:[%s2] sm:$0xf] %v480
  %497 = vst [vmem:[%s2 + $0x4] sm:$0xf] %v481
  %498 = vst [vmem:[%s2 + $0x8] sm:$0xf] %v482
  %499 = vst [vmem:[%s2 + $0xc] sm:$0xf] %v483
  %500 = vst [vmem:[%s2 + $0x10] sm:$0xf] %v484
  %501 = vst [vmem:[%s2 + $0x14] sm:$0xf] %v485
  %502 = vst [vmem:[%s2 + $0x18] sm:$0xf] %v486
  %503 = vst [vmem:[%s2 + $0x1c] sm:$0xf] %v487
  %504 = vst [vmem:[%s2 + $0x20] sm:$0xf] %v488
  %505 = vst [vmem:[%s2 + $0x24] sm:$0xf] %v489
  %506 = vst [vmem:[%s2 + $0x28] sm:$0xf] %v490
  %507 = vst [vmem:[%s2 + $0x2c] sm:$0xf] %v491
  %508 = vst [vmem:[%s2 + $0x30] sm:$0xf] %v492
  %509 = vst [vmem:[%s2 + $0x34] sm:$0xf] %v493
  %510 = vst [vmem:[%s2 + $0x38] sm:$0xf] %v494
  %511 = vst [vmem:[%s2 + $0x3c] sm:$0xf] %v495
  // Predicated region
  $region10: #{image_encoder_forward.34} parent=0 // pred_check
    _
  $region11: #{image_encoder_forward.34} parent=0 // pred_check_branch
    %513 = sbr.rel (0) target = $region13
  $region12: #{image_encoder_forward.34} parent=0 // pred_region
    _
  $region13: #{image_encoder_forward.34} parent=0 // pred_fallthru
    _
  // Predicated region
  $region14: #{image_encoder_forward.34} parent=0 // pred_check
    _
  $region15: #{image_encoder_forward.34} parent=0 // pred_check_branch
    %515 = sbr.rel (0) target = $region17
  $region16: #{image_encoder_forward.34} parent=0 // pred_region
    _
  $region17: #{image_encoder_forward.34} parent=0 // pred_fallthru
    _

// kernel: image_encoder_forward.35
$region0: #{image_encoder_forward.35}
  #allocation0 [shape = 'u32[]', space=smem, size = 0x4, offset = 0x4, fixed_abs, tag = 'smem constant byte address 0x4 - core index']
  #allocation1 [shape = 'u32[72,128]{1,0:T(1,128)}', space=vmem, size = 0x9000, scoped, tag = 'internal scratch']
  %s0 = inlined_call_operand.vmem [shape: bf16[128,24], index: 0, kind: input, shape index: {}]
  %s1 = inlined_call_operand.vmem [shape: bf16[24,128], index: 1, kind: input, shape index: {}]
  %s2 = inlined_call_operand.vmem [shape: f32[1,24], index: 2, kind: input, shape index: {}]
  %s3 = inlined_call_operand.vmem [shape: f32[1,24], index: 3, kind: input, shape index: {}]
  %s4 = inlined_call_operand.vmem [shape: f32[1,128], index: 4, kind: input, shape index: {}]
  %s5 = inlined_call_operand.vmem [shape: f32[1,128], index: 5, kind: input, shape index: {}]
  %s6 = inlined_call_operand.vmem [shape: bf16[128,128], index: 6, kind: output, shape index: {}]
  %s7 = sld [smem:[#allocation0]]
  $region34: #{image_encoder_forward.35} parent=0
    _
  %s9 = ssub.s32 1, %s7
  %s10 = scalar_select 0, %s9, %s7
  // Predicated region
  $region2: #{image_encoder_forward.35} parent=0 // pred_check
    _
  $region3: #{image_encoder_forward.35} parent=0 // pred_check_branch
    %12 = sbr.rel (0) target = $region5
  $region4: #{image_encoder_forward.35} parent=0 // pred_region
    _
  $region5: #{image_encoder_forward.35} parent=0 // pred_fallthru
    _
  // Predicated region
  $region6: #{image_encoder_forward.35} parent=0 // pred_check
    _
  $region7: #{image_encoder_forward.35} parent=0 // pred_check_branch
    %14 = sbr.rel (0) target = $region9
  $region8: #{image_encoder_forward.35} parent=0 // pred_region
    _
  $region9: #{image_encoder_forward.35} parent=0 // pred_fallthru
    _
  // Predicated region
  $region10: #{image_encoder_forward.35} parent=0 // pred_check
    _
  $region11: #{image_encoder_forward.35} parent=0 // pred_check_branch
    %16 = sbr.rel (0) target = $region13
  $region12: #{image_encoder_forward.35} parent=0 // pred_region
    _
  $region13: #{image_encoder_forward.35} parent=0 // pred_fallthru
    _
  // Predicated region
  $region14: #{image_encoder_forward.35} parent=0 // pred_check
    _
  $region15: #{image_encoder_forward.35} parent=0 // pred_check_branch
    %18 = sbr.rel (0) target = $region17
  $region16: #{image_encoder_forward.35} parent=0 // pred_region
    _
  $region17: #{image_encoder_forward.35} parent=0 // pred_fallthru
    _
  // Predicated region
  $region18: #{image_encoder_forward.35} parent=0 // pred_check
    _
  $region19: #{image_encoder_forward.35} parent=0 // pred_check_branch
    %20 = sbr.rel (0) target = $region21
  $region20: #{image_encoder_forward.35} parent=0 // pred_region
    _
  $region21: #{image_encoder_forward.35} parent=0 // pred_fallthru
    _
  // Predicated region
  $region22: #{image_encoder_forward.35} parent=0 // pred_check
    _
  $region23: #{image_encoder_forward.35} parent=0 // pred_check_branch
    %22 = sbr.rel (0) target = $region25
  $region24: #{image_encoder_forward.35} parent=0 // pred_region
    _
  $region25: #{image_encoder_forward.35} parent=0 // pred_fallthru
    _
  %v24 = vld [vmem:[%s0] sm:$0xf]
  %v25 = vld [vmem:[%s0 + $0x4] sm:$0xf]
  %v26 = vld [vmem:[%s0 + $0x8] sm:$0xf]
  %v27 = vld [vmem:[%s0 + $0xc] sm:$0xf]
  %v28 = vld [vmem:[%s0 + $0x10] sm:$0xf]
  %v29 = vld [vmem:[%s0 + $0x14] sm:$0xf]
  %v30 = vld [vmem:[%s0 + $0x18] sm:$0xf]
  %v31 = vld [vmem:[%s0 + $0x1c] sm:$0xf]
  %v32 = vld [vmem:[%s0 + $0x20] sm:$0xf]
  %v33 = vld [vmem:[%s0 + $0x24] sm:$0xf]
  %v34 = vld [vmem:[%s0 + $0x28] sm:$0xf]
  %v35 = vld [vmem:[%s0 + $0x2c] sm:$0xf]
  %v36 = vld [vmem:[%s0 + $0x30] sm:$0xf]
  %v37 = vld [vmem:[%s0 + $0x34] sm:$0xf]
  %v38 = vld [vmem:[%s0 + $0x38] sm:$0xf]
  %v39 = vld [vmem:[%s0 + $0x3c] sm:$0xf]
  %v40 = vunpack.c.l.bf16 %v24
  %v41 = vunpack.c.l.bf16 %v25
  %v42 = vunpack.c.l.bf16 %v26
  %v43 = vunpack.c.l.bf16 %v27
  %v44 = vunpack.c.l.bf16 %v28
  %v45 = vunpack.c.l.bf16 %v29
  %v46 = vunpack.c.l.bf16 %v30
  %v47 = vunpack.c.l.bf16 %v31
  %v48 = vunpack.c.l.bf16 %v32
  %v49 = vunpack.c.l.bf16 %v33
  %v50 = vunpack.c.l.bf16 %v34
  %v51 = vunpack.c.l.bf16 %v35
  %v52 = vunpack.c.l.bf16 %v36
  %v53 = vunpack.c.l.bf16 %v37
  %v54 = vunpack.c.l.bf16 %v38
  %v55 = vunpack.c.l.bf16 %v39
  %v56 = vld [vmem:[%s2] sm:$0x1]
  %v58 = vperm.slane %v56, 0
  %v60 = vmul.f32 %v40, %v58
  %v61 = vmul.f32 %v41, %v58
  %v62 = vmul.f32 %v42, %v58
  %v63 = vmul.f32 %v43, %v58
  %v64 = vmul.f32 %v44, %v58
  %v65 = vmul.f32 %v45, %v58
  %v66 = vmul.f32 %v46, %v58
  %v67 = vmul.f32 %v47, %v58
  %v68 = vmul.f32 %v48, %v58
  %v69 = vmul.f32 %v49, %v58
  %v70 = vmul.f32 %v50, %v58
  %v71 = vmul.f32 %v51, %v58
  %v72 = vmul.f32 %v52, %v58
  %v73 = vmul.f32 %v53, %v58
  %v74 = vmul.f32 %v54, %v58
  %v75 = vmul.f32 %v55, %v58
  %v76 = vld [vmem:[%s3] sm:$0x1]
  %v78 = vperm.slane %v76, 0
  %v80 = vadd.f32 %v60, %v78
  %v81 = vadd.f32 %v61, %v78
  %v82 = vadd.f32 %v62, %v78
  %v83 = vadd.f32 %v63, %v78
  %v84 = vadd.f32 %v64, %v78
  %v85 = vadd.f32 %v65, %v78
  %v86 = vadd.f32 %v66, %v78
  %v87 = vadd.f32 %v67, %v78
  %v88 = vadd.f32 %v68, %v78
  %v89 = vadd.f32 %v69, %v78
  %v90 = vadd.f32 %v70, %v78
  %v91 = vadd.f32 %v71, %v78
  %v92 = vadd.f32 %v72, %v78
  %v93 = vadd.f32 %v73, %v78
  %v94 = vadd.f32 %v74, %v78
  %v95 = vadd.f32 %v75, %v78
  %v96 = vmax.f32 %v80, 0.0
  %v97 = vmax.f32 %v81, 0.0
  %v98 = vmax.f32 %v82, 0.0
  %v99 = vmax.f32 %v83, 0.0
  %v100 = vmax.f32 %v84, 0.0
  %v101 = vmax.f32 %v85, 0.0
  %v102 = vmax.f32 %v86, 0.0
  %v103 = vmax.f32 %v87, 0.0
  %v104 = vmax.f32 %v88, 0.0
  %v105 = vmax.f32 %v89, 0.0
  %v106 = vmax.f32 %v90, 0.0
  %v107 = vmax.f32 %v91, 0.0
  %v108 = vmax.f32 %v92, 0.0
  %v109 = vmax.f32 %v93, 0.0
  %v110 = vmax.f32 %v94, 0.0
  %v111 = vmax.f32 %v95, 0.0
  %v112 = vpack.c.bf16 %v97, %v96
  %v113 = vpack.c.bf16 %v99, %v98
  %v114 = vpack.c.bf16 %v101, %v100
  %v115 = vpack.c.bf16 %v103, %v102
  %v116 = vpack.c.bf16 %v105, %v104
  %v117 = vpack.c.bf16 %v107, %v106
  %v118 = vpack.c.bf16 %v109, %v108
  %v119 = vpack.c.bf16 %v111, %v110
  %v120 = vld [vmem:[%s1] sm:$0xf]
  %v121 = vld [vmem:[%s1 + $0x4] sm:$0xf]
  %v122 = vld [vmem:[%s1 + $0x8] sm:$0xf]
  %v126 = vunpack.c.l.b16 %v120
  %v127 = vunpack.c.l.b16 %v121
  %v128 = vunpack.c.l.b16 %v122
  %v129 = vpack.c.b16 %v127, %v126
  %v130 = vpack.c.b16 %v128, %v128
  %vm132 = vcmask 195584
  %v134 = vsel %vm132, %v112, 0
  %v137 = vsel %vm132, %v113, 0
  %v140 = vsel %vm132, %v114, 0
  %v143 = vsel %vm132, %v115, 0
  %v146 = vsel %vm132, %v116, 0
  %v149 = vsel %vm132, %v117, 0
  %v152 = vsel %vm132, %v118, 0
  %v155 = vsel %vm132, %v119, 0
  %vm157 = vcmask 1043456
  %v159 = vsel %vm157, %v130, 0
  %161 = vmatpush.bf16.msra.mxu0 0
  %162 = vmatpush.bf16.msra.mxu0 0
  %163 = vmatpush.bf16.msra.mxu0 0
  %164 = vmatpush.bf16.msra.mxu0 0
  %165 = vmatpush.bf16.msra.mxu0 0
  %166 = vmatpush.bf16.msra.mxu0 0
  %167 = vmatpush.bf16.msra.mxu0 %v159
  %168 = vmatpush.bf16.msra.mxu0 %v129
  %169 = vmatmul.bf16.gmra.mxu0 %v134
  %v170 = vpop.f32.mrf.mxu0
  %v171 = vadd.f32 0.0, %v170
  %v172 = vpop.f32.mrf.mxu0
  %v173 = vadd.f32 0.0, %v172
  %174 = vmatmul.bf16.gmra.mxu0 %v137
  %v175 = vpop.f32.mrf.mxu0
  %v176 = vadd.f32 0.0, %v175
  %v177 = vpop.f32.mrf.mxu0
  %v178 = vadd.f32 0.0, %v177
  %179 = vmatmul.bf16.gmra.mxu0 %v140
  %v180 = vpop.f32.mrf.mxu0
  %v181 = vadd.f32 0.0, %v180
  %v182 = vpop.f32.mrf.mxu0
  %v183 = vadd.f32 0.0, %v182
  %184 = vmatmul.bf16.gmra.mxu0 %v143
  %v185 = vpop.f32.mrf.mxu0
  %v186 = vadd.f32 0.0, %v185
  %v187 = vpop.f32.mrf.mxu0
  %v188 = vadd.f32 0.0, %v187
  %189 = vmatmul.bf16.gmra.mxu0 %v146
  %v190 = vpop.f32.mrf.mxu0
  %v191 = vadd.f32 0.0, %v190
  %v192 = vpop.f32.mrf.mxu0
  %v193 = vadd.f32 0.0, %v192
  %194 = vmatmul.bf16.gmra.mxu0 %v149
  %v195 = vpop.f32.mrf.mxu0
  %v196 = vadd.f32 0.0, %v195
  %v197 = vpop.f32.mrf.mxu0
  %v198 = vadd.f32 0.0, %v197
  %199 = vmatmul.bf16.gmra.mxu0 %v152
  %v200 = vpop.f32.mrf.mxu0
  %v201 = vadd.f32 0.0, %v200
  %v202 = vpop.f32.mrf.mxu0
  %v203 = vadd.f32 0.0, %v202
  %204 = vmatmul.bf16.gmra.mxu0 %v155
  %v205 = vpop.f32.mrf.mxu0
  %v206 = vadd.f32 0.0, %v205
  %v207 = vpop.f32.mrf.mxu0
  %v208 = vadd.f32 0.0, %v207
  %209 = vdwg.mxu0
  %v210 = vld [vmem:[%s4] sm:$0x1]
  %v212 = vperm.slane %v210, 0
  %v214 = vmul.f32 %v171, %v212
  %v215 = vmul.f32 %v173, %v212
  %v216 = vmul.f32 %v176, %v212
  %v217 = vmul.f32 %v178, %v212
  %v218 = vmul.f32 %v181, %v212
  %v219 = vmul.f32 %v183, %v212
  %v220 = vmul.f32 %v186, %v212
  %v221 = vmul.f32 %v188, %v212
  %v222 = vmul.f32 %v191, %v212
  %v223 = vmul.f32 %v193, %v212
  %v224 = vmul.f32 %v196, %v212
  %v225 = vmul.f32 %v198, %v212
  %v226 = vmul.f32 %v201, %v212
  %v227 = vmul.f32 %v203, %v212
  %v228 = vmul.f32 %v206, %v212
  %v229 = vmul.f32 %v208, %v212
  %v230 = vld [vmem:[%s5] sm:$0x1]
  %v232 = vperm.slane %v230, 0
  %v234 = vadd.f32 %v214, %v232
  %v235 = vadd.f32 %v215, %v232
  %v236 = vadd.f32 %v216, %v232
  %v237 = vadd.f32 %v217, %v232
  %v238 = vadd.f32 %v218, %v232
  %v239 = vadd.f32 %v219, %v232
  %v240 = vadd.f32 %v220, %v232
  %v241 = vadd.f32 %v221, %v232
  %v242 = vadd.f32 %v222, %v232
  %v243 = vadd.f32 %v223, %v232
  %v244 = vadd.f32 %v224, %v232
  %v245 = vadd.f32 %v225, %v232
  %v246 = vadd.f32 %v226, %v232
  %v247 = vadd.f32 %v227, %v232
  %v248 = vadd.f32 %v228, %v232
  %v249 = vadd.f32 %v229, %v232
  %v250 = vmax.f32 %v234, 0.0
  %v251 = vmax.f32 %v235, 0.0
  %v252 = vmax.f32 %v236, 0.0
  %v253 = vmax.f32 %v237, 0.0
  %v254 = vmax.f32 %v238, 0.0
  %v255 = vmax.f32 %v239, 0.0
  %v256 = vmax.f32 %v240, 0.0
  %v257 = vmax.f32 %v241, 0.0
  %v258 = vmax.f32 %v242, 0.0
  %v259 = vmax.f32 %v243, 0.0
  %v260 = vmax.f32 %v244, 0.0
  %v261 = vmax.f32 %v245, 0.0
  %v262 = vmax.f32 %v246, 0.0
  %v263 = vmax.f32 %v247, 0.0
  %v264 = vmax.f32 %v248, 0.0
  %v265 = vmax.f32 %v249, 0.0
  %v266 = vpack.c.bf16 %v250, %v250
  %v267 = vpack.c.bf16 %v251, %v251
  %v268 = vpack.c.bf16 %v252, %v252
  %v269 = vpack.c.bf16 %v253, %v253
  %v270 = vpack.c.bf16 %v254, %v254
  %v271 = vpack.c.bf16 %v255, %v255
  %v272 = vpack.c.bf16 %v256, %v256
  %v273 = vpack.c.bf16 %v257, %v257
  %v274 = vpack.c.bf16 %v258, %v258
  %v275 = vpack.c.bf16 %v259, %v259
  %v276 = vpack.c.bf16 %v260, %v260
  %v277 = vpack.c.bf16 %v261, %v261
  %v278 = vpack.c.bf16 %v262, %v262
  %v279 = vpack.c.bf16 %v263, %v263
  %v280 = vpack.c.bf16 %v264, %v264
  %v281 = vpack.c.bf16 %v265, %v265
  %282 = vst [vmem:[%s6] sm:$0xf] %v266
  %283 = vst [vmem:[%s6 + $0x4] sm:$0xf] %v267
  %284 = vst [vmem:[%s6 + $0x8] sm:$0xf] %v268
  %285 = vst [vmem:[%s6 + $0xc] sm:$0xf] %v269
  %286 = vst [vmem:[%s6 + $0x10] sm:$0xf] %v270
  %287 = vst [vmem:[%s6 + $0x14] sm:$0xf] %v271
  %288 = vst [vmem:[%s6 + $0x18] sm:$0xf] %v272
  %289 = vst [vmem:[%s6 + $0x1c] sm:$0xf] %v273
  %290 = vst [vmem:[%s6 + $0x20] sm:$0xf] %v274
  %291 = vst [vmem:[%s6 + $0x24] sm:$0xf] %v275
  %292 = vst [vmem:[%s6 + $0x28] sm:$0xf] %v276
  %293 = vst [vmem:[%s6 + $0x2c] sm:$0xf] %v277
  %294 = vst [vmem:[%s6 + $0x30] sm:$0xf] %v278
  %295 = vst [vmem:[%s6 + $0x34] sm:$0xf] %v279
  %296 = vst [vmem:[%s6 + $0x38] sm:$0xf] %v280
  %297 = vst [vmem:[%s6 + $0x3c] sm:$0xf] %v281
  // Predicated region
  $region26: #{image_encoder_forward.35} parent=0 // pred_check
    _
  $region27: #{image_encoder_forward.35} parent=0 // pred_check_branch
    %299 = sbr.rel (0) target = $region29
  $region28: #{image_encoder_forward.35} parent=0 // pred_region
    _
  $region29: #{image_encoder_forward.35} parent=0 // pred_fallthru
    _
  // Predicated region
  $region30: #{image_encoder_forward.35} parent=0 // pred_check
    _
  $region31: #{image_encoder_forward.35} parent=0 // pred_check_branch
    %301 = sbr.rel (0) target = $region33
  $region32: #{image_encoder_forward.35} parent=0 // pred_region
    _
  $region33: #{image_encoder_forward.35} parent=0 // pred_fallthru
    _

// kernel: image_encoder_forward.39
$region0: #{image_encoder_forward.39}
  #allocation0 [shape = 'u32[]', space=smem, size = 0x4, offset = 0x4, fixed_abs, tag = 'smem constant byte address 0x4 - core index']
  #allocation1 [shape = 'u32[72,128]{1,0:T(1,128)}', space=vmem, size = 0x9000, scoped, tag = 'internal scratch']
  %s0 = inlined_call_operand.vmem [shape: bf16[32,16], index: 0, kind: input, shape index: {}]
  %s1 = inlined_call_operand.vmem [shape: bf16[16,128], index: 1, kind: input, shape index: {}]
  %s2 = inlined_call_operand.vmem [shape: f32[1,16], index: 2, kind: input, shape index: {}]
  %s3 = inlined_call_operand.vmem [shape: f32[1,16], index: 3, kind: input, shape index: {}]
  %s4 = inlined_call_operand.vmem [shape: f32[1,128], index: 4, kind: input, shape index: {}]
  %s5 = inlined_call_operand.vmem [shape: f32[1,128], index: 5, kind: input, shape index: {}]
  %s6 = inlined_call_operand.vmem [shape: bf16[32,128], index: 6, kind: output, shape index: {}]
  %s7 = sld [smem:[#allocation0]]
  $region34: #{image_encoder_forward.39} parent=0
    _
  %s9 = ssub.s32 1, %s7
  %s10 = scalar_select 0, %s9, %s7
  // Predicated region
  $region2: #{image_encoder_forward.39} parent=0 // pred_check
    _
  $region3: #{image_encoder_forward.39} parent=0 // pred_check_branch
    %12 = sbr.rel (0) target = $region5
  $region4: #{image_encoder_forward.39} parent=0 // pred_region
    _
  $region5: #{image_encoder_forward.39} parent=0 // pred_fallthru
    _
  // Predicated region
  $region6: #{image_encoder_forward.39} parent=0 // pred_check
    _
  $region7: #{image_encoder_forward.39} parent=0 // pred_check_branch
    %14 = sbr.rel (0) target = $region9
  $region8: #{image_encoder_forward.39} parent=0 // pred_region
    _
  $region9: #{image_encoder_forward.39} parent=0 // pred_fallthru
    _
  // Predicated region
  $region10: #{image_encoder_forward.39} parent=0 // pred_check
    _
  $region11: #{image_encoder_forward.39} parent=0 // pred_check_branch
    %16 = sbr.rel (0) target = $region13
  $region12: #{image_encoder_forward.39} parent=0 // pred_region
    _
  $region13: #{image_encoder_forward.39} parent=0 // pred_fallthru
    _
  // Predicated region
  $region14: #{image_encoder_forward.39} parent=0 // pred_check
    _
  $region15: #{image_encoder_forward.39} parent=0 // pred_check_branch
    %18 = sbr.rel (0) target = $region17
  $region16: #{image_encoder_forward.39} parent=0 // pred_region
    _
  $region17: #{image_encoder_forward.39} parent=0 // pred_fallthru
    _
  // Predicated region
  $region18: #{image_encoder_forward.39} parent=0 // pred_check
    _
  $region19: #{image_encoder_forward.39} parent=0 // pred_check_branch
    %20 = sbr.rel (0) target = $region21
  $region20: #{image_encoder_forward.39} parent=0 // pred_region
    _
  $region21: #{image_encoder_forward.39} parent=0 // pred_fallthru
    _
  // Predicated region
  $region22: #{image_encoder_forward.39} parent=0 // pred_check
    _
  $region23: #{image_encoder_forward.39} parent=0 // pred_check_branch
    %22 = sbr.rel (0) target = $region25
  $region24: #{image_encoder_forward.39} parent=0 // pred_region
    _
  $region25: #{image_encoder_forward.39} parent=0 // pred_fallthru
    _
  %v24 = vld [vmem:[%s0] sm:$0xf]
  %v25 = vld [vmem:[%s0 + $0x4] sm:$0xf]
  %v26 = vld [vmem:[%s0 + $0x8] sm:$0xf]
  %v27 = vld [vmem:[%s0 + $0xc] sm:$0xf]
  %v28 = vunpack.c.l.bf16 %v24
  %v29 = vunpack.c.l.bf16 %v25
  %v30 = vunpack.c.l.bf16 %v26
  %v31 = vunpack.c.l.bf16 %v27
  %v32 = vld [vmem:[%s2] sm:$0x1]
  %v34 = vperm.slane %v32, 0
  %v36 = vmul.f32 %v28, %v34
  %v37 = vmul.f32 %v29, %v34
  %v38 = vmul.f32 %v30, %v34
  %v39 = vmul.f32 %v31, %v34
  %v40 = vld [vmem:[%s3] sm:$0x1]
  %v42 = vperm.slane %v40, 0
  %v44 = vadd.f32 %v36, %v42
  %v45 = vadd.f32 %v37, %v42
  %v46 = vadd.f32 %v38, %v42
  %v47 = vadd.f32 %v39, %v42
  %v48 = vmax.f32 %v44, 0.0
  %v49 = vmax.f32 %v45, 0.0
  %v50 = vmax.f32 %v46, 0.0
  %v51 = vmax.f32 %v47, 0.0
  %v52 = vpack.c.bf16 %v49, %v48
  %v53 = vpack.c.bf16 %v51, %v50
  %v54 = vld [vmem:[%s1] sm:$0xf]
  %v55 = vld [vmem:[%s1 + $0x4] sm:$0xf]
  %v58 = vunpack.c.l.b16 %v54
  %v59 = vunpack.c.l.b16 %v55
  %v60 = vpack.c.b16 %v59, %v58
  %vm62 = vcmask 130048
  %v64 = vsel %vm62, %v52, 0
  %v67 = vsel %vm62, %v53, 0
  %69 = vmatpush.bf16.msra.mxu0 0
  %70 = vmatpush.bf16.msra.mxu0 0
  %71 = vmatpush.bf16.msra.mxu0 0
  %72 = vmatpush.bf16.msra.mxu0 0
  %73 = vmatpush.bf16.msra.mxu0 0
  %74 = vmatpush.bf16.msra.mxu0 0
  %75 = vmatpush.bf16.msra.mxu0 0
  %76 = vmatpush.bf16.msra.mxu0 %v60
  %77 = vmatmul.bf16.gmra.mxu0 %v64
  %v78 = vpop.f32.mrf.mxu0
  %v79 = vadd.f32 0.0, %v78
  %v80 = vpop.f32.mrf.mxu0
  %v81 = vadd.f32 0.0, %v80
  %82 = vmatmul.bf16.gmra.mxu0 %v67
  %v83 = vpop.f32.mrf.mxu0
  %v84 = vadd.f32 0.0, %v83
  %v85 = vpop.f32.mrf.mxu0
  %v86 = vadd.f32 0.0, %v85
  %87 = vdwg.mxu0
  %v88 = vld [vmem:[%s4] sm:$0x1]
  %v90 = vperm.slane %v88, 0
  %v92 = vmul.f32 %v79, %v90
  %v93 = vmul.f32 %v81, %v90
  %v94 = vmul.f32 %v84, %v90
  %v95 = vmul.f32 %v86, %v90
  %v96 = vld [vmem:[%s5] sm:$0x1]
  %v98 = vperm.slane %v96, 0
  %v100 = vadd.f32 %v92, %v98
  %v101 = vadd.f32 %v93, %v98
  %v102 = vadd.f32 %v94, %v98
  %v103 = vadd.f32 %v95, %v98
  %v104 = vmax.f32 %v100, 0.0
  %v105 = vmax.f32 %v101, 0.0
  %v106 = vmax.f32 %v102, 0.0
  %v107 = vmax.f32 %v103, 0.0
  %v108 = vpack.c.bf16 %v104, %v104
  %v109 = vpack.c.bf16 %v105, %v105
  %v110 = vpack.c.bf16 %v106, %v106
  %v111 = vpack.c.bf16 %v107, %v107
  %112 = vst [vmem:[%s6] sm:$0xf] %v108
  %113 = vst [vmem:[%s6 + $0x4] sm:$0xf] %v109
  %114 = vst [vmem:[%s6 + $0x8] sm:$0xf] %v110
  %115 = vst [vmem:[%s6 + $0xc] sm:$0xf] %v111
  // Predicated region
  $region26: #{image_encoder_forward.39} parent=0 // pred_check
    _
  $region27: #{image_encoder_forward.39} parent=0 // pred_check_branch
    %117 = sbr.rel (0) target = $region29
  $region28: #{image_encoder_forward.39} parent=0 // pred_region
    _
  $region29: #{image_encoder_forward.39} parent=0 // pred_fallthru
    _
  // Predicated region
  $region30: #{image_encoder_forward.39} parent=0 // pred_check
    _
  $region31: #{image_encoder_forward.39} parent=0 // pred_check_branch
    %119 = sbr.rel (0) target = $region33
  $region32: #{image_encoder_forward.39} parent=0 // pred_region
    _
  $region33: #{image_encoder_forward.39} parent=0 // pred_fallthru
    _

// kernel: image_encoder_forward.37
$region0: #{image_encoder_forward.37}
  #allocation0 [shape = 'u32[]', space=smem, size = 0x4, offset = 0x4, fixed_abs, tag = 'smem constant byte address 0x4 - core index']
  #allocation1 [shape = 'u32[72,128]{1,0:T(1,128)}', space=vmem, size = 0x9000, scoped, tag = 'internal scratch']
  %s0 = inlined_call_operand.vmem [shape: bf16[128,32], index: 0, kind: input, shape index: {}]
  %s1 = inlined_call_operand.vmem [shape: bf16[32,128], index: 1, kind: input, shape index: {}]
  %s2 = inlined_call_operand.vmem [shape: f32[1,32], index: 2, kind: input, shape index: {}]
  %s3 = inlined_call_operand.vmem [shape: f32[1,32], index: 3, kind: input, shape index: {}]
  %s4 = inlined_call_operand.vmem [shape: bf16[128,128], index: 4, kind: output, shape index: {}]
  %s5 = sld [smem:[#allocation0]]
  $region26: #{image_encoder_forward.37} parent=0
    _
  %s7 = ssub.s32 1, %s5
  %s8 = scalar_select 0, %s7, %s5
  // Predicated region
  $region2: #{image_encoder_forward.37} parent=0 // pred_check
    _
  $region3: #{image_encoder_forward.37} parent=0 // pred_check_branch
    %10 = sbr.rel (0) target = $region5
  $region4: #{image_encoder_forward.37} parent=0 // pred_region
    _
  $region5: #{image_encoder_forward.37} parent=0 // pred_fallthru
    _
  // Predicated region
  $region6: #{image_encoder_forward.37} parent=0 // pred_check
    _
  $region7: #{image_encoder_forward.37} parent=0 // pred_check_branch
    %12 = sbr.rel (0) target = $region9
  $region8: #{image_encoder_forward.37} parent=0 // pred_region
    _
  $region9: #{image_encoder_forward.37} parent=0 // pred_fallthru
    _
  // Predicated region
  $region10: #{image_encoder_forward.37} parent=0 // pred_check
    _
  $region11: #{image_encoder_forward.37} parent=0 // pred_check_branch
    %14 = sbr.rel (0) target = $region13
  $region12: #{image_encoder_forward.37} parent=0 // pred_region
    _
  $region13: #{image_encoder_forward.37} parent=0 // pred_fallthru
    _
  // Predicated region
  $region14: #{image_encoder_forward.37} parent=0 // pred_check
    _
  $region15: #{image_encoder_forward.37} parent=0 // pred_check_branch
    %16 = sbr.rel (0) target = $region17
  $region16: #{image_encoder_forward.37} parent=0 // pred_region
    _
  $region17: #{image_encoder_forward.37} parent=0 // pred_fallthru
    _
  %v18 = vld [vmem:[%s0] sm:$0xf]
  %v19 = vld [vmem:[%s0 + $0x4] sm:$0xf]
  %v20 = vld [vmem:[%s0 + $0x8] sm:$0xf]
  %v21 = vld [vmem:[%s0 + $0xc] sm:$0xf]
  %v22 = vld [vmem:[%s0 + $0x10] sm:$0xf]
  %v23 = vld [vmem:[%s0 + $0x14] sm:$0xf]
  %v24 = vld [vmem:[%s0 + $0x18] sm:$0xf]
  %v25 = vld [vmem:[%s0 + $0x1c] sm:$0xf]
  %v26 = vld [vmem:[%s0 + $0x20] sm:$0xf]
  %v27 = vld [vmem:[%s0 + $0x24] sm:$0xf]
  %v28 = vld [vmem:[%s0 + $0x28] sm:$0xf]
  %v29 = vld [vmem:[%s0 + $0x2c] sm:$0xf]
  %v30 = vld [vmem:[%s0 + $0x30] sm:$0xf]
  %v31 = vld [vmem:[%s0 + $0x34] sm:$0xf]
  %v32 = vld [vmem:[%s0 + $0x38] sm:$0xf]
  %v33 = vld [vmem:[%s0 + $0x3c] sm:$0xf]
  %v34 = vunpack.c.l.bf16 %v18
  %v35 = vunpack.c.l.bf16 %v19
  %v36 = vunpack.c.l.bf16 %v20
  %v37 = vunpack.c.l.bf16 %v21
  %v38 = vunpack.c.l.bf16 %v22
  %v39 = vunpack.c.l.bf16 %v23
  %v40 = vunpack.c.l.bf16 %v24
  %v41 = vunpack.c.l.bf16 %v25
  %v42 = vunpack.c.l.bf16 %v26
  %v43 = vunpack.c.l.bf16 %v27
  %v44 = vunpack.c.l.bf16 %v28
  %v45 = vunpack.c.l.bf16 %v29
  %v46 = vunpack.c.l.bf16 %v30
  %v47 = vunpack.c.l.bf16 %v31
  %v48 = vunpack.c.l.bf16 %v32
  %v49 = vunpack.c.l.bf16 %v33
  %v50 = vld [vmem:[%s2] sm:$0x1]
  %v52 = vperm.slane %v50, 0
  %v54 = vmul.f32 %v34, %v52
  %v55 = vmul.f32 %v35, %v52
  %v56 = vmul.f32 %v36, %v52
  %v57 = vmul.f32 %v37, %v52
  %v58 = vmul.f32 %v38, %v52
  %v59 = vmul.f32 %v39, %v52
  %v60 = vmul.f32 %v40, %v52
  %v61 = vmul.f32 %v41, %v52
  %v62 = vmul.f32 %v42, %v52
  %v63 = vmul.f32 %v43, %v52
  %v64 = vmul.f32 %v44, %v52
  %v65 = vmul.f32 %v45, %v52
  %v66 = vmul.f32 %v46, %v52
  %v67 = vmul.f32 %v47, %v52
  %v68 = vmul.f32 %v48, %v52
  %v69 = vmul.f32 %v49, %v52
  %v70 = vld [vmem:[%s3] sm:$0x1]
  %v72 = vperm.slane %v70, 0
  %v74 = vadd.f32 %v54, %v72
  %v75 = vadd.f32 %v55, %v72
  %v76 = vadd.f32 %v56, %v72
  %v77 = vadd.f32 %v57, %v72
  %v78 = vadd.f32 %v58, %v72
  %v79 = vadd.f32 %v59, %v72
  %v80 = vadd.f32 %v60, %v72
  %v81 = vadd.f32 %v61, %v72
  %v82 = vadd.f32 %v62, %v72
  %v83 = vadd.f32 %v63, %v72
  %v84 = vadd.f32 %v64, %v72
  %v85 = vadd.f32 %v65, %v72
  %v86 = vadd.f32 %v66, %v72
  %v87 = vadd.f32 %v67, %v72
  %v88 = vadd.f32 %v68, %v72
  %v89 = vadd.f32 %v69, %v72
  %v90 = vmax.f32 %v74, 0.0
  %v91 = vmax.f32 %v75, 0.0
  %v92 = vmax.f32 %v76, 0.0
  %v93 = vmax.f32 %v77, 0.0
  %v94 = vmax.f32 %v78, 0.0
  %v95 = vmax.f32 %v79, 0.0
  %v96 = vmax.f32 %v80, 0.0
  %v97 = vmax.f32 %v81, 0.0
  %v98 = vmax.f32 %v82, 0.0
  %v99 = vmax.f32 %v83, 0.0
  %v100 = vmax.f32 %v84, 0.0
  %v101 = vmax.f32 %v85, 0.0
  %v102 = vmax.f32 %v86, 0.0
  %v103 = vmax.f32 %v87, 0.0
  %v104 = vmax.f32 %v88, 0.0
  %v105 = vmax.f32 %v89, 0.0
  %v106 = vpack.c.bf16 %v91, %v90
  %v107 = vpack.c.bf16 %v93, %v92
  %v108 = vpack.c.bf16 %v95, %v94
  %v109 = vpack.c.bf16 %v97, %v96
  %v110 = vpack.c.bf16 %v99, %v98
  %v111 = vpack.c.bf16 %v101, %v100
  %v112 = vpack.c.bf16 %v103, %v102
  %v113 = vpack.c.bf16 %v105, %v104
  %v114 = vld [vmem:[%s1] sm:$0xf]
  %v115 = vld [vmem:[%s1 + $0x4] sm:$0xf]
  %v116 = vld [vmem:[%s1 + $0x8] sm:$0xf]
  %v117 = vld [vmem:[%s1 + $0xc] sm:$0xf]
  %v122 = vunpack.c.l.b16 %v114
  %v123 = vunpack.c.l.b16 %v115
  %v124 = vunpack.c.l.b16 %v116
  %v125 = vunpack.c.l.b16 %v117
  %v126 = vpack.c.b16 %v123, %v122
  %v127 = vpack.c.b16 %v125, %v124
  %vm130 = vcmask 261120
  %v132 = vsel %vm130, %v106, 0
  %v135 = vsel %vm130, %v107, 0
  %v138 = vsel %vm130, %v108, 0
  %v141 = vsel %vm130, %v109, 0
  %v144 = vsel %vm130, %v110, 0
  %v147 = vsel %vm130, %v111, 0
  %v150 = vsel %vm130, %v112, 0
  %v153 = vsel %vm130, %v113, 0
  %155 = vmatpush.bf16.msra.mxu0 0
  %156 = vmatpush.bf16.msra.mxu0 0
  %157 = vmatpush.bf16.msra.mxu0 0
  %158 = vmatpush.bf16.msra.mxu0 0
  %159 = vmatpush.bf16.msra.mxu0 0
  %160 = vmatpush.bf16.msra.mxu0 0
  %161 = vmatpush.bf16.msra.mxu0 %v127
  %162 = vmatpush.bf16.msra.mxu0 %v126
  %163 = vmatmul.bf16.gmra.mxu0 %v132
  %v164 = vpop.f32.mrf.mxu0
  %v165 = vadd.f32 0.0, %v164
  %v166 = vpop.f32.mrf.mxu0
  %v167 = vadd.f32 0.0, %v166
  %168 = vmatmul.bf16.gmra.mxu0 %v135
  %v169 = vpop.f32.mrf.mxu0
  %v170 = vadd.f32 0.0, %v169
  %v171 = vpop.f32.mrf.mxu0
  %v172 = vadd.f32 0.0, %v171
  %173 = vmatmul.bf16.gmra.mxu0 %v138
  %v174 = vpop.f32.mrf.mxu0
  %v175 = vadd.f32 0.0, %v174
  %v176 = vpop.f32.mrf.mxu0
  %v177 = vadd.f32 0.0, %v176
  %178 = vmatmul.bf16.gmra.mxu0 %v141
  %v179 = vpop.f32.mrf.mxu0
  %v180 = vadd.f32 0.0, %v179
  %v181 = vpop.f32.mrf.mxu0
  %v182 = vadd.f32 0.0, %v181
  %183 = vmatmul.bf16.gmra.mxu0 %v144
  %v184 = vpop.f32.mrf.mxu0
  %v185 = vadd.f32 0.0, %v184
  %v186 = vpop.f32.mrf.mxu0
  %v187 = vadd.f32 0.0, %v186
  %188 = vmatmul.bf16.gmra.mxu0 %v147
  %v189 = vpop.f32.mrf.mxu0
  %v190 = vadd.f32 0.0, %v189
  %v191 = vpop.f32.mrf.mxu0
  %v192 = vadd.f32 0.0, %v191
  %193 = vmatmul.bf16.gmra.mxu0 %v150
  %v194 = vpop.f32.mrf.mxu0
  %v195 = vadd.f32 0.0, %v194
  %v196 = vpop.f32.mrf.mxu0
  %v197 = vadd.f32 0.0, %v196
  %198 = vmatmul.bf16.gmra.mxu0 %v153
  %v199 = vpop.f32.mrf.mxu0
  %v200 = vadd.f32 0.0, %v199
  %v201 = vpop.f32.mrf.mxu0
  %v202 = vadd.f32 0.0, %v201
  %203 = vdwg.mxu0
  %v204 = vpack.c.bf16 %v165, %v165
  %v205 = vpack.c.bf16 %v167, %v167
  %v206 = vpack.c.bf16 %v170, %v170
  %v207 = vpack.c.bf16 %v172, %v172
  %v208 = vpack.c.bf16 %v175, %v175
  %v209 = vpack.c.bf16 %v177, %v177
  %v210 = vpack.c.bf16 %v180, %v180
  %v211 = vpack.c.bf16 %v182, %v182
  %v212 = vpack.c.bf16 %v185, %v185
  %v213 = vpack.c.bf16 %v187, %v187
  %v214 = vpack.c.bf16 %v190, %v190
  %v215 = vpack.c.bf16 %v192, %v192
  %v216 = vpack.c.bf16 %v195, %v195
  %v217 = vpack.c.bf16 %v197, %v197
  %v218 = vpack.c.bf16 %v200, %v200
  %v219 = vpack.c.bf16 %v202, %v202
  %220 = vst [vmem:[%s4] sm:$0xf] %v204
  %221 = vst [vmem:[%s4 + $0x4] sm:$0xf] %v205
  %222 = vst [vmem:[%s4 + $0x8] sm:$0xf] %v206
  %223 = vst [vmem:[%s4 + $0xc] sm:$0xf] %v207
  %224 = vst [vmem:[%s4 + $0x10] sm:$0xf] %v208
  %225 = vst [vmem:[%s4 + $0x14] sm:$0xf] %v209
  %226 = vst [vmem:[%s4 + $0x18] sm:$0xf] %v210
  %227 = vst [vmem:[%s4 + $0x1c] sm:$0xf] %v211
  %228 = vst [vmem:[%s4 + $0x20] sm:$0xf] %v212
  %229 = vst [vmem:[%s4 + $0x24] sm:$0xf] %v213
  %230 = vst [vmem:[%s4 + $0x28] sm:$0xf] %v214
  %231 = vst [vmem:[%s4 + $0x2c] sm:$0xf] %v215
  %232 = vst [vmem:[%s4 + $0x30] sm:$0xf] %v216
  %233 = vst [vmem:[%s4 + $0x34] sm:$0xf] %v217
  %234 = vst [vmem:[%s4 + $0x38] sm:$0xf] %v218
  %235 = vst [vmem:[%s4 + $0x3c] sm:$0xf] %v219
  // Predicated region
  $region18: #{image_encoder_forward.37} parent=0 // pred_check
    _
  $region19: #{image_encoder_forward.37} parent=0 // pred_check_branch
    %237 = sbr.rel (0) target = $region21
  $region20: #{image_encoder_forward.37} parent=0 // pred_region
    _
  $region21: #{image_encoder_forward.37} parent=0 // pred_fallthru
    _
  // Predicated region
  $region22: #{image_encoder_forward.37} parent=0 // pred_check
    _
  $region23: #{image_encoder_forward.37} parent=0 // pred_check_branch
    %239 = sbr.rel (0) target = $region25
  $region24: #{image_encoder_forward.37} parent=0 // pred_region
    _
  $region25: #{image_encoder_forward.37} parent=0 // pred_fallthru
    _

// kernel: image_encoder_forward.38
$region0: #{image_encoder_forward.38}
  #allocation0 [shape = 'u32[]', space=smem, size = 0x4, offset = 0x4, fixed_abs, tag = 'smem constant byte address 0x4 - core index']
  #allocation1 [shape = 'u32[72,128]{1,0:T(1,128)}', space=vmem, size = 0x9000, scoped, tag = 'internal scratch']
  %s0 = inlined_call_operand.vmem [shape: bf16[8,2,4,32], index: 0, kind: input, shape index: {}]
  %s1 = inlined_call_operand.vmem [shape: bf16[8,4,16], index: 1, kind: output, shape index: {}]
  %s2 = sld [smem:[#allocation0]]
  $region14: #{image_encoder_forward.38} parent=0
    _
  %s4 = ssub.s32 1, %s2
  %s5 = scalar_select 0, %s4, %s2
  // Predicated region
  $region2: #{image_encoder_forward.38} parent=0 // pred_check
    _
  $region3: #{image_encoder_forward.38} parent=0 // pred_check_branch
    %7 = sbr.rel (0) target = $region5
  $region4: #{image_encoder_forward.38} parent=0 // pred_region
    _
  $region5: #{image_encoder_forward.38} parent=0 // pred_fallthru
    _
  %v8 = vld [vmem:[%s0] sm:$0x3]
  %v9 = vld [vmem:[%s0 + $0x2] sm:$0x3]
  %v10 = vld [vmem:[%s0 + $0x4] sm:$0x3]
  %v11 = vld [vmem:[%s0 + $0x6] sm:$0x3]
  %v12 = vld [vmem:[%s0 + $0x8] sm:$0x3]
  %v13 = vld [vmem:[%s0 + $0xa] sm:$0x3]
  %v14 = vld [vmem:[%s0 + $0xc] sm:$0x3]
  %v15 = vld [vmem:[%s0 + $0xe] sm:$0x3]
  %v16 = vld [vmem:[%s0 + $0x10] sm:$0x3]
  %v17 = vld [vmem:[%s0 + $0x12] sm:$0x3]
  %v18 = vld [vmem:[%s0 + $0x14] sm:$0x3]
  %v19 = vld [vmem:[%s0 + $0x16] sm:$0x3]
  %v20 = vld [vmem:[%s0 + $0x18] sm:$0x3]
  %v21 = vld [vmem:[%s0 + $0x1a] sm:$0x3]
  %v22 = vld [vmem:[%s0 + $0x1c] sm:$0x3]
  %v23 = vld [vmem:[%s0 + $0x1e] sm:$0x3]
  %v24 = vunpack.c.l.bf16 %v8
  %v25 = vunpack.c.l.bf16 %v9
  %v26 = vunpack.c.l.bf16 %v10
  %v27 = vunpack.c.l.bf16 %v11
  %v28 = vunpack.c.l.bf16 %v12
  %v29 = vunpack.c.l.bf16 %v13
  %v30 = vunpack.c.l.bf16 %v14
  %v31 = vunpack.c.l.bf16 %v15
  %v32 = vunpack.c.l.bf16 %v16
  %v33 = vunpack.c.l.bf16 %v17
  %v34 = vunpack.c.l.bf16 %v18
  %v35 = vunpack.c.l.bf16 %v19
  %v36 = vunpack.c.l.bf16 %v20
  %v37 = vunpack.c.l.bf16 %v21
  %v38 = vunpack.c.l.bf16 %v22
  %v39 = vunpack.c.l.bf16 %v23
  %v40 = vadd.f32 %v24, %v25
  %v41 = vadd.f32 %v26, %v27
  %v42 = vadd.f32 %v28, %v29
  %v43 = vadd.f32 %v30, %v31
  %v44 = vadd.f32 %v32, %v33
  %v45 = vadd.f32 %v34, %v35
  %v46 = vadd.f32 %v36, %v37
  %v47 = vadd.f32 %v38, %v39
  %56 = vrot.lane.b32.xlu0 %v40, 112
  %v57 = vpop.permute.xlu0 %56
  %58 = vrot.lane.b32.xlu0 %v41, 112
  %v59 = vpop.permute.xlu0 %58
  %60 = vrot.lane.b32.xlu0 %v42, 112
  %v61 = vpop.permute.xlu0 %60
  %62 = vrot.lane.b32.xlu0 %v43, 112
  %v63 = vpop.permute.xlu0 %62
  %64 = vrot.lane.b32.xlu0 %v44, 112
  %v65 = vpop.permute.xlu0 %64
  %66 = vrot.lane.b32.xlu0 %v45, 112
  %v67 = vpop.permute.xlu0 %66
  %68 = vrot.lane.b32.xlu0 %v46, 112
  %v69 = vpop.permute.xlu0 %68
  %70 = vrot.lane.b32.xlu0 %v47, 112
  %v71 = vpop.permute.xlu0 %70
  %v80 = vadd.f32 %v40, %v57
  %v81 = vadd.f32 %v41, %v59
  %v82 = vadd.f32 %v42, %v61
  %v83 = vadd.f32 %v43, %v63
  %v84 = vadd.f32 %v44, %v65
  %v85 = vadd.f32 %v45, %v67
  %v86 = vadd.f32 %v46, %v69
  %v87 = vadd.f32 %v47, %v71
  %v88 = vmul.f32 %v80, 0.25
  %v89 = vmul.f32 %v81, 0.25
  %v90 = vmul.f32 %v82, 0.25
  %v91 = vmul.f32 %v83, 0.25
  %v92 = vmul.f32 %v84, 0.25
  %v93 = vmul.f32 %v85, 0.25
  %v94 = vmul.f32 %v86, 0.25
  %v95 = vmul.f32 %v87, 0.25
  %v96 = vpack.c.bf16 %v88, %v88
  %v97 = vpack.c.bf16 %v89, %v89
  %v98 = vpack.c.bf16 %v90, %v90
  %v99 = vpack.c.bf16 %v91, %v91
  %v100 = vpack.c.bf16 %v92, %v92
  %v101 = vpack.c.bf16 %v93, %v93
  %v102 = vpack.c.bf16 %v94, %v94
  %v103 = vpack.c.bf16 %v95, %v95
  %vm104 = vcmask 123904
  %105 = vst.msk [vmem:[%s1] sm:$0x3] %vm104, %v96
  %106 = vst.msk [vmem:[%s1 + $0x2] sm:$0x3] %vm104, %v97
  %107 = vst.msk [vmem:[%s1 + $0x4] sm:$0x3] %vm104, %v98
  %108 = vst.msk [vmem:[%s1 + $0x6] sm:$0x3] %vm104, %v99
  %109 = vst.msk [vmem:[%s1 + $0x8] sm:$0x3] %vm104, %v100
  %110 = vst.msk [vmem:[%s1 + $0xa] sm:$0x3] %vm104, %v101
  %111 = vst.msk [vmem:[%s1 + $0xc] sm:$0x3] %vm104, %v102
  %112 = vst.msk [vmem:[%s1 + $0xe] sm:$0x3] %vm104, %v103
  // Predicated region
  $region6: #{image_encoder_forward.38} parent=0 // pred_check
    _
  $region7: #{image_encoder_forward.38} parent=0 // pred_check_branch
    %114 = sbr.rel (0) target = $region9
  $region8: #{image_encoder_forward.38} parent=0 // pred_region
    _
  $region9: #{image_encoder_forward.38} parent=0 // pred_fallthru
    _
  // Predicated region
  $region10: #{image_encoder_forward.38} parent=0 // pred_check
    _
  $region11: #{image_encoder_forward.38} parent=0 // pred_check_branch
    %116 = sbr.rel (0) target = $region13
  $region12: #{image_encoder_forward.38} parent=0 // pred_region
    _
  $region13: #{image_encoder_forward.38} parent=0 // pred_fallthru
    _

// kernel: image_encoder_forward.41
$region0: #{image_encoder_forward.41}
  #allocation0 [shape = 'u32[]', space=smem, size = 0x4, offset = 0x4, fixed_abs, tag = 'smem constant byte address 0x4 - core index']
  #allocation1 [shape = 'u32[72,128]{1,0:T(1,128)}', space=vmem, size = 0x9000, scoped, tag = 'internal scratch']
  %s0 = inlined_call_operand.vmem [shape: bf16[32,24], index: 0, kind: input, shape index: {}]
  %s1 = inlined_call_operand.vmem [shape: bf16[24,128], index: 1, kind: input, shape index: {}]
  %s2 = inlined_call_operand.vmem [shape: f32[1,24], index: 2, kind: input, shape index: {}]
  %s3 = inlined_call_operand.vmem [shape: f32[1,24], index: 3, kind: input, shape index: {}]
  %s4 = inlined_call_operand.vmem [shape: f32[1,128], index: 4, kind: input, shape index: {}]
  %s5 = inlined_call_operand.vmem [shape: f32[1,128], index: 5, kind: input, shape index: {}]
  %s6 = inlined_call_operand.vmem [shape: bf16[32,128], index: 6, kind: output, shape index: {}]
  %s7 = sld [smem:[#allocation0]]
  $region34: #{image_encoder_forward.41} parent=0
    _
  %s9 = ssub.s32 1, %s7
  %s10 = scalar_select 0, %s9, %s7
  // Predicated region
  $region2: #{image_encoder_forward.41} parent=0 // pred_check
    _
  $region3: #{image_encoder_forward.41} parent=0 // pred_check_branch
    %12 = sbr.rel (0) target = $region5
  $region4: #{image_encoder_forward.41} parent=0 // pred_region
    _
  $region5: #{image_encoder_forward.41} parent=0 // pred_fallthru
    _
  // Predicated region
  $region6: #{image_encoder_forward.41} parent=0 // pred_check
    _
  $region7: #{image_encoder_forward.41} parent=0 // pred_check_branch
    %14 = sbr.rel (0) target = $region9
  $region8: #{image_encoder_forward.41} parent=0 // pred_region
    _
  $region9: #{image_encoder_forward.41} parent=0 // pred_fallthru
    _
  // Predicated region
  $region10: #{image_encoder_forward.41} parent=0 // pred_check
    _
  $region11: #{image_encoder_forward.41} parent=0 // pred_check_branch
    %16 = sbr.rel (0) target = $region13
  $region12: #{image_encoder_forward.41} parent=0 // pred_region
    _
  $region13: #{image_encoder_forward.41} parent=0 // pred_fallthru
    _
  // Predicated region
  $region14: #{image_encoder_forward.41} parent=0 // pred_check
    _
  $region15: #{image_encoder_forward.41} parent=0 // pred_check_branch
    %18 = sbr.rel (0) target = $region17
  $region16: #{image_encoder_forward.41} parent=0 // pred_region
    _
  $region17: #{image_encoder_forward.41} parent=0 // pred_fallthru
    _
  // Predicated region
  $region18: #{image_encoder_forward.41} parent=0 // pred_check
    _
  $region19: #{image_encoder_forward.41} parent=0 // pred_check_branch
    %20 = sbr.rel (0) target = $region21
  $region20: #{image_encoder_forward.41} parent=0 // pred_region
    _
  $region21: #{image_encoder_forward.41} parent=0 // pred_fallthru
    _
  // Predicated region
  $region22: #{image_encoder_forward.41} parent=0 // pred_check
    _
  $region23: #{image_encoder_forward.41} parent=0 // pred_check_branch
    %22 = sbr.rel (0) target = $region25
  $region24: #{image_encoder_forward.41} parent=0 // pred_region
    _
  $region25: #{image_encoder_forward.41} parent=0 // pred_fallthru
    _
  %v24 = vld [vmem:[%s0] sm:$0xf]
  %v25 = vld [vmem:[%s0 + $0x4] sm:$0xf]
  %v26 = vld [vmem:[%s0 + $0x8] sm:$0xf]
  %v27 = vld [vmem:[%s0 + $0xc] sm:$0xf]
  %v28 = vunpack.c.l.bf16 %v24
  %v29 = vunpack.c.l.bf16 %v25
  %v30 = vunpack.c.l.bf16 %v26
  %v31 = vunpack.c.l.bf16 %v27
  %v32 = vld [vmem:[%s2] sm:$0x1]
  %v34 = vperm.slane %v32, 0
  %v36 = vmul.f32 %v28, %v34
  %v37 = vmul.f32 %v29, %v34
  %v38 = vmul.f32 %v30, %v34
  %v39 = vmul.f32 %v31, %v34
  %v40 = vld [vmem:[%s3] sm:$0x1]
  %v42 = vperm.slane %v40, 0
  %v44 = vadd.f32 %v36, %v42
  %v45 = vadd.f32 %v37, %v42
  %v46 = vadd.f32 %v38, %v42
  %v47 = vadd.f32 %v39, %v42
  %v48 = vmax.f32 %v44, 0.0
  %v49 = vmax.f32 %v45, 0.0
  %v50 = vmax.f32 %v46, 0.0
  %v51 = vmax.f32 %v47, 0.0
  %v52 = vpack.c.bf16 %v49, %v48
  %v53 = vpack.c.bf16 %v51, %v50
  %v54 = vld [vmem:[%s1] sm:$0xf]
  %v55 = vld [vmem:[%s1 + $0x4] sm:$0xf]
  %v56 = vld [vmem:[%s1 + $0x8] sm:$0xf]
  %v60 = vunpack.c.l.b16 %v54
  %v61 = vunpack.c.l.b16 %v55
  %v62 = vunpack.c.l.b16 %v56
  %v63 = vpack.c.b16 %v61, %v60
  %v64 = vpack.c.b16 %v62, %v62
  %vm66 = vcmask 195584
  %v68 = vsel %vm66, %v52, 0
  %v71 = vsel %vm66, %v53, 0
  %vm73 = vcmask 1043456
  %v75 = vsel %vm73, %v64, 0
  %77 = vmatpush.bf16.msra.mxu0 0
  %78 = vmatpush.bf16.msra.mxu0 0
  %79 = vmatpush.bf16.msra.mxu0 0
  %80 = vmatpush.bf16.msra.mxu0 0
  %81 = vmatpush.bf16.msra.mxu0 0
  %82 = vmatpush.bf16.msra.mxu0 0
  %83 = vmatpush.bf16.msra.mxu0 %v75
  %84 = vmatpush.bf16.msra.mxu0 %v63
  %85 = vmatmul.bf16.gmra.mxu0 %v68
  %v86 = vpop.f32.mrf.mxu0
  %v87 = vadd.f32 0.0, %v86
  %v88 = vpop.f32.mrf.mxu0
  %v89 = vadd.f32 0.0, %v88
  %90 = vmatmul.bf16.gmra.mxu0 %v71
  %v91 = vpop.f32.mrf.mxu0
  %v92 = vadd.f32 0.0, %v91
  %v93 = vpop.f32.mrf.mxu0
  %v94 = vadd.f32 0.0, %v93
  %95 = vdwg.mxu0
  %v96 = vld [vmem:[%s4] sm:$0x1]
  %v98 = vperm.slane %v96, 0
  %v100 = vmul.f32 %v87, %v98
  %v101 = vmul.f32 %v89, %v98
  %v102 = vmul.f32 %v92, %v98
  %v103 = vmul.f32 %v94, %v98
  %v104 = vld [vmem:[%s5] sm:$0x1]
  %v106 = vperm.slane %v104, 0
  %v108 = vadd.f32 %v100, %v106
  %v109 = vadd.f32 %v101, %v106
  %v110 = vadd.f32 %v102, %v106
  %v111 = vadd.f32 %v103, %v106
  %v112 = vmax.f32 %v108, 0.0
  %v113 = vmax.f32 %v109, 0.0
  %v114 = vmax.f32 %v110, 0.0
  %v115 = vmax.f32 %v111, 0.0
  %v116 = vpack.c.bf16 %v112, %v112
  %v117 = vpack.c.bf16 %v113, %v113
  %v118 = vpack.c.bf16 %v114, %v114
  %v119 = vpack.c.bf16 %v115, %v115
  %120 = vst [vmem:[%s6] sm:$0xf] %v116
  %121 = vst [vmem:[%s6 + $0x4] sm:$0xf] %v117
  %122 = vst [vmem:[%s6 + $0x8] sm:$0xf] %v118
  %123 = vst [vmem:[%s6 + $0xc] sm:$0xf] %v119
  // Predicated region
  $region26: #{image_encoder_forward.41} parent=0 // pred_check
    _
  $region27: #{image_encoder_forward.41} parent=0 // pred_check_branch
    %125 = sbr.rel (0) target = $region29
  $region28: #{image_encoder_forward.41} parent=0 // pred_region
    _
  $region29: #{image_encoder_forward.41} parent=0 // pred_fallthru
    _
  // Predicated region
  $region30: #{image_encoder_forward.41} parent=0 // pred_check
    _
  $region31: #{image_encoder_forward.41} parent=0 // pred_check_branch
    %127 = sbr.rel (0) target = $region33
  $region32: #{image_encoder_forward.41} parent=0 // pred_region
    _
  $region33: #{image_encoder_forward.41} parent=0 // pred_fallthru
    _

// kernel: image_encoder_forward.40
$region0: #{image_encoder_forward.40}
  #allocation0 [shape = 'u32[]', space=smem, size = 0x4, offset = 0x4, fixed_abs, tag = 'smem constant byte address 0x4 - core index']
  #allocation1 [shape = 'u32[72,128]{1,0:T(1,128)}', space=vmem, size = 0x9000, scoped, tag = 'internal scratch']
  %s0 = inlined_call_operand.vmem [shape: bf16[32,288], index: 0, kind: input, shape index: {}]
  %s1 = inlined_call_operand.vmem [shape: bf16[288,128], index: 1, kind: input, shape index: {}]
  %s2 = inlined_call_operand.vmem [shape: bf16[32,128], index: 2, kind: output, shape index: {}]
  %s3 = sld [smem:[#allocation0]]
  $region18: #{image_encoder_forward.40} parent=0
    _
  %s5 = ssub.s32 1, %s3
  %s6 = scalar_select 0, %s5, %s3
  // Predicated region
  $region2: #{image_encoder_forward.40} parent=0 // pred_check
    _
  $region3: #{image_encoder_forward.40} parent=0 // pred_check_branch
    %8 = sbr.rel (0) target = $region5
  $region4: #{image_encoder_forward.40} parent=0 // pred_region
    _
  $region5: #{image_encoder_forward.40} parent=0 // pred_fallthru
    _
  // Predicated region
  $region6: #{image_encoder_forward.40} parent=0 // pred_check
    _
  $region7: #{image_encoder_forward.40} parent=0 // pred_check_branch
    %10 = sbr.rel (0) target = $region9
  $region8: #{image_encoder_forward.40} parent=0 // pred_region
    _
  $region9: #{image_encoder_forward.40} parent=0 // pred_fallthru
    _
  %v12 = vld [vmem:[%s0] sm:$0xff]
  %v13 = vld [vmem:[%s0 + $0x8] sm:$0xf]
  %v14 = vld [vmem:[%s0 + $0xc] sm:$0xff]
  %v15 = vld [vmem:[%s0 + $0x14] sm:$0xf]
  %v16 = vld [vmem:[%s0 + $0x18] sm:$0xff]
  %v17 = vld [vmem:[%s0 + $0x20] sm:$0xf]
  %v18 = vld [vmem:[%s0 + $0x24] sm:$0xff]
  %v19 = vld [vmem:[%s0 + $0x2c] sm:$0xf]
  %v20 = vld [vmem:[%s1] sm:$0xf]
  %v21 = vld [vmem:[%s1 + $0x4] sm:$0xf]
  %v22 = vld [vmem:[%s1 + $0x8] sm:$0xf]
  %v23 = vld [vmem:[%s1 + $0xc] sm:$0xf]
  %v24 = vld [vmem:[%s1 + $0x10] sm:$0xf]
  %v25 = vld [vmem:[%s1 + $0x14] sm:$0xf]
  %v26 = vld [vmem:[%s1 + $0x18] sm:$0xf]
  %v27 = vld [vmem:[%s1 + $0x1c] sm:$0xf]
  %v28 = vld [vmem:[%s1 + $0x20] sm:$0xf]
  %v29 = vld [vmem:[%s1 + $0x24] sm:$0xf]
  %v30 = vld [vmem:[%s1 + $0x28] sm:$0xf]
  %v31 = vld [vmem:[%s1 + $0x2c] sm:$0xf]
  %v32 = vld [vmem:[%s1 + $0x30] sm:$0xf]
  %v33 = vld [vmem:[%s1 + $0x34] sm:$0xf]
  %v34 = vld [vmem:[%s1 + $0x38] sm:$0xf]
  %v35 = vld [vmem:[%s1 + $0x3c] sm:$0xf]
  %v36 = vld [vmem:[%s1 + $0x40] sm:$0xf]
  %v37 = vld [vmem:[%s1 + $0x44] sm:$0xf]
  %v38 = vld [vmem:[%s1 + $0x48] sm:$0xf]
  %v39 = vld [vmem:[%s1 + $0x4c] sm:$0xf]
  %v40 = vld [vmem:[%s1 + $0x50] sm:$0xf]
  %v41 = vld [vmem:[%s1 + $0x54] sm:$0xf]
  %v42 = vld [vmem:[%s1 + $0x58] sm:$0xf]
  %v43 = vld [vmem:[%s1 + $0x5c] sm:$0xf]
  %v44 = vld [vmem:[%s1 + $0x60] sm:$0xf]
  %v45 = vld [vmem:[%s1 + $0x64] sm:$0xf]
  %v46 = vld [vmem:[%s1 + $0x68] sm:$0xf]
  %v47 = vld [vmem:[%s1 + $0x6c] sm:$0xf]
  %v48 = vld [vmem:[%s1 + $0x70] sm:$0xf]
  %v49 = vld [vmem:[%s1 + $0x74] sm:$0xf]
  %v50 = vld [vmem:[%s1 + $0x78] sm:$0xf]
  %v51 = vld [vmem:[%s1 + $0x7c] sm:$0xf]
  %v52 = vld [vmem:[%s1 + $0x80] sm:$0xf]
  %v53 = vld [vmem:[%s1 + $0x84] sm:$0xf]
  %v54 = vld [vmem:[%s1 + $0x88] sm:$0xf]
  %v55 = vld [vmem:[%s1 + $0x8c] sm:$0xf]
  %v64 = vunpack.c.l.b16 %v12
  %v65 = vunpack.c.h.b16 %v12
  %v66 = vunpack.c.l.b16 %v13
  %v67 = vunpack.c.l.b16 %v14
  %v68 = vunpack.c.h.b16 %v14
  %v69 = vunpack.c.l.b16 %v15
  %v70 = vunpack.c.l.b16 %v16
  %v71 = vunpack.c.h.b16 %v16
  %v72 = vunpack.c.l.b16 %v17
  %v73 = vunpack.c.l.b16 %v18
  %v74 = vunpack.c.h.b16 %v18
  %v75 = vunpack.c.l.b16 %v19
  %v76 = vpack.c.b16 %v67, %v64
  %v77 = vpack.c.b16 %v68, %v65
  %v78 = vpack.c.b16 %v69, %v66
  %v79 = vpack.c.b16 %v73, %v70
  %v80 = vpack.c.b16 %v74, %v71
  %v81 = vpack.c.b16 %v75, %v72
  %v122 = vunpack.c.l.b16 %v20
  %v123 = vunpack.c.l.b16 %v21
  %v124 = vunpack.c.l.b16 %v22
  %v125 = vunpack.c.l.b16 %v23
  %v126 = vunpack.c.l.b16 %v24
  %v127 = vunpack.c.l.b16 %v25
  %v128 = vunpack.c.l.b16 %v26
  %v129 = vunpack.c.l.b16 %v27
  %v130 = vunpack.c.l.b16 %v28
  %v131 = vunpack.c.l.b16 %v29
  %v132 = vunpack.c.l.b16 %v30
  %v133 = vunpack.c.l.b16 %v31
  %v134 = vunpack.c.l.b16 %v32
  %v135 = vunpack.c.l.b16 %v33
  %v136 = vunpack.c.l.b16 %v34
  %v137 = vunpack.c.l.b16 %v35
  %v138 = vunpack.c.l.b16 %v36
  %v139 = vunpack.c.l.b16 %v37
  %v140 = vunpack.c.l.b16 %v38
  %v141 = vunpack.c.l.b16 %v39
  %v142 = vunpack.c.l.b16 %v40
  %v143 = vunpack.c.l.b16 %v41
  %v144 = vunpack.c.l.b16 %v42
  %v145 = vunpack.c.l.b16 %v43
  %v146 = vunpack.c.l.b16 %v44
  %v147 = vunpack.c.l.b16 %v45
  %v148 = vunpack.c.l.b16 %v46
  %v149 = vunpack.c.l.b16 %v47
  %v150 = vunpack.c.l.b16 %v48
  %v151 = vunpack.c.l.b16 %v49
  %v152 = vunpack.c.l.b16 %v50
  %v153 = vunpack.c.l.b16 %v51
  %v154 = vunpack.c.l.b16 %v52
  %v155 = vunpack.c.l.b16 %v53
  %v156 = vunpack.c.l.b16 %v54
  %v157 = vunpack.c.l.b16 %v55
  %v158 = vpack.c.b16 %v123, %v122
  %v159 = vpack.c.b16 %v125, %v124
  %v160 = vpack.c.b16 %v127, %v126
  %v161 = vpack.c.b16 %v129, %v128
  %v162 = vpack.c.b16 %v131, %v130
  %v163 = vpack.c.b16 %v133, %v132
  %v164 = vpack.c.b16 %v135, %v134
  %v165 = vpack.c.b16 %v137, %v136
  %v166 = vpack.c.b16 %v139, %v138
  %v167 = vpack.c.b16 %v141, %v140
  %v168 = vpack.c.b16 %v143, %v142
  %v169 = vpack.c.b16 %v145, %v144
  %v170 = vpack.c.b16 %v147, %v146
  %v171 = vpack.c.b16 %v149, %v148
  %v172 = vpack.c.b16 %v151, %v150
  %v173 = vpack.c.b16 %v153, %v152
  %v174 = vpack.c.b16 %v155, %v154
  %v175 = vpack.c.b16 %v157, %v156
  %vm194 = vcmask 261120
  %v196 = vsel %vm194, %v78, 0
  %v199 = vsel %vm194, %v81, 0
  %201 = vmatpush.bf16.msra.mxu0 %v165
  %202 = vmatpush.bf16.msra.mxu0 %v164
  %203 = vmatpush.bf16.msra.mxu0 %v163
  %204 = vmatpush.bf16.msra.mxu0 %v162
  %205 = vmatpush.bf16.msra.mxu0 %v161
  %206 = vmatpush.bf16.msra.mxu0 %v160
  %207 = vmatpush.bf16.msra.mxu0 %v159
  %208 = vmatpush.bf16.msra.mxu0 %v158
  %209 = vmatmul.bf16.gmra.mxu0 %v76
  %v210 = vpop.f32.mrf.mxu0
  %v211 = vadd.f32 0.0, %v210
  %v212 = vpop.f32.mrf.mxu0
  %v213 = vadd.f32 0.0, %v212
  %214 = vmatmul.bf16.gmra.mxu0 %v79
  %v215 = vpop.f32.mrf.mxu0
  %v216 = vadd.f32 0.0, %v215
  %v217 = vpop.f32.mrf.mxu0
  %v218 = vadd.f32 0.0, %v217
  %219 = vdwg.mxu0
  %220 = vmatpush.bf16.msra.mxu0 %v173
  %221 = vmatpush.bf16.msra.mxu0 %v172
  %222 = vmatpush.bf16.msra.mxu0 %v171
  %223 = vmatpush.bf16.msra.mxu0 %v170
  %224 = vmatpush.bf16.msra.mxu0 %v169
  %225 = vmatpush.bf16.msra.mxu0 %v168
  %226 = vmatpush.bf16.msra.mxu0 %v167
  %227 = vmatpush.bf16.msra.mxu0 %v166
  %228 = vmatmul.bf16.gmra.mxu0 %v77
  %v229 = vpop.f32.mrf.mxu0
  %v230 = vadd.f32 %v211, %v229
  %v231 = vpop.f32.mrf.mxu0
  %v232 = vadd.f32 %v213, %v231
  %233 = vmatmul.bf16.gmra.mxu0 %v80
  %v234 = vpop.f32.mrf.mxu0
  %v235 = vadd.f32 %v216, %v234
  %v236 = vpop.f32.mrf.mxu0
  %v237 = vadd.f32 %v218, %v236
  %238 = vdwg.mxu0
  %239 = vmatpush.bf16.msra.mxu0 0
  %240 = vmatpush.bf16.msra.mxu0 0
  %241 = vmatpush.bf16.msra.mxu0 0
  %242 = vmatpush.bf16.msra.mxu0 0
  %243 = vmatpush.bf16.msra.mxu0 0
  %244 = vmatpush.bf16.msra.mxu0 0
  %245 = vmatpush.bf16.msra.mxu0 %v175
  %246 = vmatpush.bf16.msra.mxu0 %v174
  %247 = vmatmul.bf16.gmra.mxu0 %v196
  %v248 = vpop.f32.mrf.mxu0
  %v249 = vadd.f32 %v230, %v248
  %v250 = vpop.f32.mrf.mxu0
  %v251 = vadd.f32 %v232, %v250
  %252 = vmatmul.bf16.gmra.mxu0 %v199
  %v253 = vpop.f32.mrf.mxu0
  %v254 = vadd.f32 %v235, %v253
  %v255 = vpop.f32.mrf.mxu0
  %v256 = vadd.f32 %v237, %v255
  %257 = vdwg.mxu0
  %v258 = vpack.c.bf16 %v249, %v249
  %v259 = vpack.c.bf16 %v251, %v251
  %v260 = vpack.c.bf16 %v254, %v254
  %v261 = vpack.c.bf16 %v256, %v256
  %262 = vst [vmem:[%s2] sm:$0xf] %v258
  %263 = vst [vmem:[%s2 + $0x4] sm:$0xf] %v259
  %264 = vst [vmem:[%s2 + $0x8] sm:$0xf] %v260
  %265 = vst [vmem:[%s2 + $0xc] sm:$0xf] %v261
  // Predicated region
  $region10: #{image_encoder_forward.40} parent=0 // pred_check
    _
  $region11: #{image_encoder_forward.40} parent=0 // pred_check_branch
    %267 = sbr.rel (0) target = $region13
  $region12: #{image_encoder_forward.40} parent=0 // pred_region
    _
  $region13: #{image_encoder_forward.40} parent=0 // pred_fallthru
    _
  // Predicated region
  $region14: #{image_encoder_forward.40} parent=0 // pred_check
    _
  $region15: #{image_encoder_forward.40} parent=0 // pred_check_branch
    %269 = sbr.rel (0) target = $region17
  $region16: #{image_encoder_forward.40} parent=0 // pred_region
    _
  $region17: #{image_encoder_forward.40} parent=0 // pred_fallthru
    _

// kernel: image_encoder_forward.44
$region0: #{image_encoder_forward.44}
  #allocation0 [shape = 'u32[]', space=smem, size = 0x4, offset = 0x4, fixed_abs, tag = 'smem constant byte address 0x4 - core index']
  #allocation1 [shape = 'u32[72,128]{1,0:T(1,128)}', space=vmem, size = 0x9000, scoped, tag = 'internal scratch']
  %s0 = inlined_call_operand.vmem [shape: bf16[4,2,2,32], index: 0, kind: input, shape index: {}]
  %s1 = inlined_call_operand.vmem [shape: bf16[4,2,16], index: 1, kind: output, shape index: {}]
  %s2 = sld [smem:[#allocation0]]
  $region14: #{image_encoder_forward.44} parent=0
    _
  %s4 = ssub.s32 1, %s2
  %s5 = scalar_select 0, %s4, %s2
  // Predicated region
  $region2: #{image_encoder_forward.44} parent=0 // pred_check
    _
  $region3: #{image_encoder_forward.44} parent=0 // pred_check_branch
    %7 = sbr.rel (0) target = $region5
  $region4: #{image_encoder_forward.44} parent=0 // pred_region
    _
  $region5: #{image_encoder_forward.44} parent=0 // pred_fallthru
    _
  %v8 = vld [vmem:[%s0] sm:$0x1]
  %v9 = vld [vmem:[%s0 + $0x1] sm:$0x1]
  %v10 = vld [vmem:[%s0 + $0x2] sm:$0x1]
  %v11 = vld [vmem:[%s0 + $0x3] sm:$0x1]
  %v12 = vld [vmem:[%s0 + $0x4] sm:$0x1]
  %v13 = vld [vmem:[%s0 + $0x5] sm:$0x1]
  %v14 = vld [vmem:[%s0 + $0x6] sm:$0x1]
  %v15 = vld [vmem:[%s0 + $0x7] sm:$0x1]
  %v16 = vunpack.c.l.bf16 %v8
  %v17 = vunpack.c.l.bf16 %v9
  %v18 = vunpack.c.l.bf16 %v10
  %v19 = vunpack.c.l.bf16 %v11
  %v20 = vunpack.c.l.bf16 %v12
  %v21 = vunpack.c.l.bf16 %v13
  %v22 = vunpack.c.l.bf16 %v14
  %v23 = vunpack.c.l.bf16 %v15
  %v24 = vadd.f32 %v16, %v17
  %v25 = vadd.f32 %v18, %v19
  %v26 = vadd.f32 %v20, %v21
  %v27 = vadd.f32 %v22, %v23
  %32 = vrot.lane.b32.xlu0 %v24, 112
  %v33 = vpop.permute.xlu0 %32
  %34 = vrot.lane.b32.xlu0 %v25, 112
  %v35 = vpop.permute.xlu0 %34
  %36 = vrot.lane.b32.xlu0 %v26, 112
  %v37 = vpop.permute.xlu0 %36
  %38 = vrot.lane.b32.xlu0 %v27, 112
  %v39 = vpop.permute.xlu0 %38
  %v44 = vadd.f32 %v24, %v33
  %v45 = vadd.f32 %v25, %v35
  %v46 = vadd.f32 %v26, %v37
  %v47 = vadd.f32 %v27, %v39
  %v48 = vmul.f32 %v44, 0.25
  %v49 = vmul.f32 %v45, 0.25
  %v50 = vmul.f32 %v46, 0.25
  %v51 = vmul.f32 %v47, 0.25
  %v52 = vpack.c.bf16 %v48, %v48
  %v53 = vpack.c.bf16 %v49, %v49
  %v54 = vpack.c.bf16 %v50, %v50
  %v55 = vpack.c.bf16 %v51, %v51
  %vm56 = vcmask 122880
  %57 = vst.msk [vmem:[%s1] sm:$0x1] %vm56, %v52
  %58 = vst.msk [vmem:[%s1 + $0x1] sm:$0x1] %vm56, %v53
  %59 = vst.msk [vmem:[%s1 + $0x2] sm:$0x1] %vm56, %v54
  %60 = vst.msk [vmem:[%s1 + $0x3] sm:$0x1] %vm56, %v55
  // Predicated region
  $region6: #{image_encoder_forward.44} parent=0 // pred_check
    _
  $region7: #{image_encoder_forward.44} parent=0 // pred_check_branch
    %62 = sbr.rel (0) target = $region9
  $region8: #{image_encoder_forward.44} parent=0 // pred_region
    _
  $region9: #{image_encoder_forward.44} parent=0 // pred_fallthru
    _
  // Predicated region
  $region10: #{image_encoder_forward.44} parent=0 // pred_check
    _
  $region11: #{image_encoder_forward.44} parent=0 // pred_check_branch
    %64 = sbr.rel (0) target = $region13
  $region12: #{image_encoder_forward.44} parent=0 // pred_region
    _
  $region13: #{image_encoder_forward.44} parent=0 // pred_fallthru
    _

// kernel: image_encoder_forward.43
$region0: #{image_encoder_forward.43}
  #allocation0 [shape = 'u32[]', space=smem, size = 0x4, offset = 0x4, fixed_abs, tag = 'smem constant byte address 0x4 - core index']
  #allocation1 [shape = 'u32[72,128]{1,0:T(1,128)}', space=vmem, size = 0x9000, scoped, tag = 'internal scratch']
  %s0 = inlined_call_operand.vmem [shape: bf16[32,32], index: 0, kind: input, shape index: {}]
  %s1 = inlined_call_operand.vmem [shape: bf16[32,128], index: 1, kind: input, shape index: {}]
  %s2 = inlined_call_operand.vmem [shape: f32[1,32], index: 2, kind: input, shape index: {}]
  %s3 = inlined_call_operand.vmem [shape: f32[1,32], index: 3, kind: input, shape index: {}]
  %s4 = inlined_call_operand.vmem [shape: bf16[32,128], index: 4, kind: output, shape index: {}]
  %s5 = sld [smem:[#allocation0]]
  $region26: #{image_encoder_forward.43} parent=0
    _
  %s7 = ssub.s32 1, %s5
  %s8 = scalar_select 0, %s7, %s5
  // Predicated region
  $region2: #{image_encoder_forward.43} parent=0 // pred_check
    _
  $region3: #{image_encoder_forward.43} parent=0 // pred_check_branch
    %10 = sbr.rel (0) target = $region5
  $region4: #{image_encoder_forward.43} parent=0 // pred_region
    _
  $region5: #{image_encoder_forward.43} parent=0 // pred_fallthru
    _
  // Predicated region
  $region6: #{image_encoder_forward.43} parent=0 // pred_check
    _
  $region7: #{image_encoder_forward.43} parent=0 // pred_check_branch
    %12 = sbr.rel (0) target = $region9
  $region8: #{image_encoder_forward.43} parent=0 // pred_region
    _
  $region9: #{image_encoder_forward.43} parent=0 // pred_fallthru
    _
  // Predicated region
  $region10: #{image_encoder_forward.43} parent=0 // pred_check
    _
  $region11: #{image_encoder_forward.43} parent=0 // pred_check_branch
    %14 = sbr.rel (0) target = $region13
  $region12: #{image_encoder_forward.43} parent=0 // pred_region
    _
  $region13: #{image_encoder_forward.43} parent=0 // pred_fallthru
    _
  // Predicated region
  $region14: #{image_encoder_forward.43} parent=0 // pred_check
    _
  $region15: #{image_encoder_forward.43} parent=0 // pred_check_branch
    %16 = sbr.rel (0) target = $region17
  $region16: #{image_encoder_forward.43} parent=0 // pred_region
    _
  $region17: #{image_encoder_forward.43} parent=0 // pred_fallthru
    _
  %v18 = vld [vmem:[%s0] sm:$0xf]
  %v19 = vld [vmem:[%s0 + $0x4] sm:$0xf]
  %v20 = vld [vmem:[%s0 + $0x8] sm:$0xf]
  %v21 = vld [vmem:[%s0 + $0xc] sm:$0xf]
  %v22 = vunpack.c.l.bf16 %v18
  %v23 = vunpack.c.l.bf16 %v19
  %v24 = vunpack.c.l.bf16 %v20
  %v25 = vunpack.c.l.bf16 %v21
  %v26 = vld [vmem:[%s2] sm:$0x1]
  %v28 = vperm.slane %v26, 0
  %v30 = vmul.f32 %v22, %v28
  %v31 = vmul.f32 %v23, %v28
  %v32 = vmul.f32 %v24, %v28
  %v33 = vmul.f32 %v25, %v28
  %v34 = vld [vmem:[%s3] sm:$0x1]
  %v36 = vperm.slane %v34, 0
  %v38 = vadd.f32 %v30, %v36
  %v39 = vadd.f32 %v31, %v36
  %v40 = vadd.f32 %v32, %v36
  %v41 = vadd.f32 %v33, %v36
  %v42 = vmax.f32 %v38, 0.0
  %v43 = vmax.f32 %v39, 0.0
  %v44 = vmax.f32 %v40, 0.0
  %v45 = vmax.f32 %v41, 0.0
  %v46 = vpack.c.bf16 %v43, %v42
  %v47 = vpack.c.bf16 %v45, %v44
  %v48 = vld [vmem:[%s1] sm:$0xf]
  %v49 = vld [vmem:[%s1 + $0x4] sm:$0xf]
  %v50 = vld [vmem:[%s1 + $0x8] sm:$0xf]
  %v51 = vld [vmem:[%s1 + $0xc] sm:$0xf]
  %v56 = vunpack.c.l.b16 %v48
  %v57 = vunpack.c.l.b16 %v49
  %v58 = vunpack.c.l.b16 %v50
  %v59 = vunpack.c.l.b16 %v51
  %v60 = vpack.c.b16 %v57, %v56
  %v61 = vpack.c.b16 %v59, %v58
  %vm64 = vcmask 261120
  %v66 = vsel %vm64, %v46, 0
  %v69 = vsel %vm64, %v47, 0
  %71 = vmatpush.bf16.msra.mxu0 0
  %72 = vmatpush.bf16.msra.mxu0 0
  %73 = vmatpush.bf16.msra.mxu0 0
  %74 = vmatpush.bf16.msra.mxu0 0
  %75 = vmatpush.bf16.msra.mxu0 0
  %76 = vmatpush.bf16.msra.mxu0 0
  %77 = vmatpush.bf16.msra.mxu0 %v61
  %78 = vmatpush.bf16.msra.mxu0 %v60
  %79 = vmatmul.bf16.gmra.mxu0 %v66
  %v80 = vpop.f32.mrf.mxu0
  %v81 = vadd.f32 0.0, %v80
  %v82 = vpop.f32.mrf.mxu0
  %v83 = vadd.f32 0.0, %v82
  %84 = vmatmul.bf16.gmra.mxu0 %v69
  %v85 = vpop.f32.mrf.mxu0
  %v86 = vadd.f32 0.0, %v85
  %v87 = vpop.f32.mrf.mxu0
  %v88 = vadd.f32 0.0, %v87
  %89 = vdwg.mxu0
  %v90 = vpack.c.bf16 %v81, %v81
  %v91 = vpack.c.bf16 %v83, %v83
  %v92 = vpack.c.bf16 %v86, %v86
  %v93 = vpack.c.bf16 %v88, %v88
  %94 = vst [vmem:[%s4] sm:$0xf] %v90
  %95 = vst [vmem:[%s4 + $0x4] sm:$0xf] %v91
  %96 = vst [vmem:[%s4 + $0x8] sm:$0xf] %v92
  %97 = vst [vmem:[%s4 + $0xc] sm:$0xf] %v93
  // Predicated region
  $region18: #{image_encoder_forward.43} parent=0 // pred_check
    _
  $region19: #{image_encoder_forward.43} parent=0 // pred_check_branch
    %99 = sbr.rel (0) target = $region21
  $region20: #{image_encoder_forward.43} parent=0 // pred_region
    _
  $region21: #{image_encoder_forward.43} parent=0 // pred_fallthru
    _
  // Predicated region
  $region22: #{image_encoder_forward.43} parent=0 // pred_check
    _
  $region23: #{image_encoder_forward.43} parent=0 // pred_check_branch
    %101 = sbr.rel (0) target = $region25
  $region24: #{image_encoder_forward.43} parent=0 // pred_region
    _
  $region25: #{image_encoder_forward.43} parent=0 // pred_fallthru
    _

// kernel: image_encoder_forward.45
$region0: #{image_encoder_forward.45}
  #allocation0 [shape = 'u32[]', space=smem, size = 0x4, offset = 0x4, fixed_abs, tag = 'smem constant byte address 0x4 - core index']
  #allocation1 [shape = 'u32[72,128]{1,0:T(1,128)}', space=vmem, size = 0x9000, scoped, tag = 'internal scratch']
  %s0 = inlined_call_operand.vmem [shape: bf16[8,16], index: 0, kind: input, shape index: {}]
  %s1 = inlined_call_operand.vmem [shape: bf16[16,128], index: 1, kind: input, shape index: {}]
  %s2 = inlined_call_operand.vmem [shape: f32[1,16], index: 2, kind: input, shape index: {}]
  %s3 = inlined_call_operand.vmem [shape: f32[1,16], index: 3, kind: input, shape index: {}]
  %s4 = inlined_call_operand.vmem [shape: f32[1,128], index: 4, kind: input, shape index: {}]
  %s5 = inlined_call_operand.vmem [shape: f32[1,128], index: 5, kind: input, shape index: {}]
  %s6 = inlined_call_operand.vmem [shape: bf16[8,128], index: 6, kind: output, shape index: {}]
  %s7 = sld [smem:[#allocation0]]
  $region34: #{image_encoder_forward.45} parent=0
    _
  %s9 = ssub.s32 1, %s7
  %s10 = scalar_select 0, %s9, %s7
  // Predicated region
  $region2: #{image_encoder_forward.45} parent=0 // pred_check
    _
  $region3: #{image_encoder_forward.45} parent=0 // pred_check_branch
    %12 = sbr.rel (0) target = $region5
  $region4: #{image_encoder_forward.45} parent=0 // pred_region
    _
  $region5: #{image_encoder_forward.45} parent=0 // pred_fallthru
    _
  // Predicated region
  $region6: #{image_encoder_forward.45} parent=0 // pred_check
    _
  $region7: #{image_encoder_forward.45} parent=0 // pred_check_branch
    %14 = sbr.rel (0) target = $region9
  $region8: #{image_encoder_forward.45} parent=0 // pred_region
    _
  $region9: #{image_encoder_forward.45} parent=0 // pred_fallthru
    _
  // Predicated region
  $region10: #{image_encoder_forward.45} parent=0 // pred_check
    _
  $region11: #{image_encoder_forward.45} parent=0 // pred_check_branch
    %16 = sbr.rel (0) target = $region13
  $region12: #{image_encoder_forward.45} parent=0 // pred_region
    _
  $region13: #{image_encoder_forward.45} parent=0 // pred_fallthru
    _
  // Predicated region
  $region14: #{image_encoder_forward.45} parent=0 // pred_check
    _
  $region15: #{image_encoder_forward.45} parent=0 // pred_check_branch
    %18 = sbr.rel (0) target = $region17
  $region16: #{image_encoder_forward.45} parent=0 // pred_region
    _
  $region17: #{image_encoder_forward.45} parent=0 // pred_fallthru
    _
  // Predicated region
  $region18: #{image_encoder_forward.45} parent=0 // pred_check
    _
  $region19: #{image_encoder_forward.45} parent=0 // pred_check_branch
    %20 = sbr.rel (0) target = $region21
  $region20: #{image_encoder_forward.45} parent=0 // pred_region
    _
  $region21: #{image_encoder_forward.45} parent=0 // pred_fallthru
    _
  // Predicated region
  $region22: #{image_encoder_forward.45} parent=0 // pred_check
    _
  $region23: #{image_encoder_forward.45} parent=0 // pred_check_branch
    %22 = sbr.rel (0) target = $region25
  $region24: #{image_encoder_forward.45} parent=0 // pred_region
    _
  $region25: #{image_encoder_forward.45} parent=0 // pred_fallthru
    _
  %v24 = vld [vmem:[%s0] sm:$0xf]
  %v25 = vunpack.c.l.bf16 %v24
  %v26 = vld [vmem:[%s2] sm:$0x1]
  %v28 = vperm.slane %v26, 0
  %v30 = vmul.f32 %v25, %v28
  %v31 = vld [vmem:[%s3] sm:$0x1]
  %v33 = vperm.slane %v31, 0
  %v35 = vadd.f32 %v30, %v33
  %v36 = vmax.f32 %v35, 0.0
  %v37 = vpack.c.bf16 %v36, %v36
  %v38 = vld [vmem:[%s1] sm:$0xf]
  %v39 = vld [vmem:[%s1 + $0x4] sm:$0xf]
  %v42 = vunpack.c.l.b16 %v38
  %v43 = vunpack.c.l.b16 %v39
  %v44 = vpack.c.b16 %v43, %v42
  %vm46 = vcmask 130048
  %v48 = vsel %vm46, %v37, 0
  %50 = vmatpush.bf16.msra.mxu0 0
  %51 = vmatpush.bf16.msra.mxu0 0
  %52 = vmatpush.bf16.msra.mxu0 0
  %53 = vmatpush.bf16.msra.mxu0 0
  %54 = vmatpush.bf16.msra.mxu0 0
  %55 = vmatpush.bf16.msra.mxu0 0
  %56 = vmatpush.bf16.msra.mxu0 0
  %57 = vmatpush.bf16.msra.mxu0 %v44
  %58 = vmatmul.bf16.gmra.mxu0 %v48
  %v59 = vpop.f32.mrf.mxu0
  %v60 = vadd.f32 0.0, %v59
  %v61 = vpop.f32.mrf.mxu0
  %62 = vdwg.mxu0
  %v63 = vld [vmem:[%s4] sm:$0x1]
  %v65 = vperm.slane %v63, 0
  %v67 = vmul.f32 %v60, %v65
  %v68 = vld [vmem:[%s5] sm:$0x1]
  %v70 = vperm.slane %v68, 0
  %v72 = vadd.f32 %v67, %v70
  %v73 = vmax.f32 %v72, 0.0
  %v74 = vpack.c.bf16 %v73, %v73
  %75 = vst [vmem:[%s6] sm:$0xf] %v74
  // Predicated region
  $region26: #{image_encoder_forward.45} parent=0 // pred_check
    _
  $region27: #{image_encoder_forward.45} parent=0 // pred_check_branch
    %77 = sbr.rel (0) target = $region29
  $region28: #{image_encoder_forward.45} parent=0 // pred_region
    _
  $region29: #{image_encoder_forward.45} parent=0 // pred_fallthru
    _
  // Predicated region
  $region30: #{image_encoder_forward.45} parent=0 // pred_check
    _
  $region31: #{image_encoder_forward.45} parent=0 // pred_check_branch
    %79 = sbr.rel (0) target = $region33
  $region32: #{image_encoder_forward.45} parent=0 // pred_region
    _
  $region33: #{image_encoder_forward.45} parent=0 // pred_fallthru
    _

// kernel: tile.18
$region0: #{tile.18}
  #allocation0 [shape = 's32[1]{0}', space=sflag, size = 0x4, scoped, tag = 'scoped memory for tile.18']
  %s0 = inlined_call_operand.vmem [shape: f32[32], index: 0, kind: input, shape index: {}]
  %s1 = inlined_call_operand.vmem [shape: f32[2,32], index: 1, kind: output, shape index: {}]
  // Predicated region
  $region2: #{tile.18} parent=0 // pred_check
    _
  $region3: #{tile.18} parent=0 // pred_check_branch
    %3 = sbr.rel (0) target = $region5
  $region4: #{tile.18} parent=0 // pred_region
    _
  $region5: #{tile.18} parent=0 // pred_fallthru
    _
  %v4 = vld [vmem:[%s0] ss:$0 sm:$0xff]
  %5 = vst [vmem:[%s1] sm:$0x3] %v4

// kernel: tile.19
$region0: #{tile.19}
  %s0 = inlined_call_operand.vmem [shape: f32[2,32], index: 0, kind: input, shape index: {}]
  %s1 = inlined_call_operand.vmem [shape: f32[64], index: 1, kind: output, shape index: {}]
  $region1: #{tile.19} parent=0
    #allocation0 [shape = 'u8[4096]{0}', space=vmem, size = 0x1000, scoped, tag = 'scoped mem for output reshape']
    #allocation1 [shape = 'u8[4096]{0}', space=vmem, size = 0x1000, scoped, tag = 'scoped mem for input reshape']
    %s3 = ssub.s32 4, 1
    %v4 = vld [vmem:[%s0] sm:%s3]
    %5 = vst [vmem:[#allocation1] sm:%s3] %v4
    %v6 = vld [vmem:[#allocation1] sm:$0x1]
    %vm7 = vcmask 261120
    %8 = vst.msk [vmem:[#allocation0] sm:$0x1] %vm7, %v6
    %s9 = scalar_lea.vmem [#allocation1], 1
    %v10 = vld [vmem:[%s9] sm:$0x1]
    %11 = vrot.lane.b32.xlu0 %v10, 32
    %v12 = vpop.permute.xlu0 %11
    %vm13 = vcmask 523520
    %14 = vst.msk [vmem:[#allocation0] sm:$0x1] %vm13, %v12
    %s16 = ssub.s32 2, 1
    %v17 = vld [vmem:[#allocation0] sm:%s16]
    %s19 = ssub.s32 2, 1
    %20 = vst [vmem:[%s1] sm:%s19] %v17

// kernel: image_encoder_forward.46
$region0: #{image_encoder_forward.46}
  #allocation0 [shape = 'u32[]', space=smem, size = 0x4, offset = 0x4, fixed_abs, tag = 'smem constant byte address 0x4 - core index']
  #allocation1 [shape = 'u32[72,128]{1,0:T(1,128)}', space=vmem, size = 0x9000, scoped, tag = 'internal scratch']
  %s0 = inlined_call_operand.vmem [shape: bf16[8,288], index: 0, kind: input, shape index: {}]
  %s1 = inlined_call_operand.vmem [shape: bf16[288,128], index: 1, kind: input, shape index: {}]
  %s2 = inlined_call_operand.vmem [shape: bf16[8,128], index: 2, kind: output, shape index: {}]
  %s3 = sld [smem:[#allocation0]]
  $region18: #{image_encoder_forward.46} parent=0
    _
  %s5 = ssub.s32 1, %s3
  %s6 = scalar_select 0, %s5, %s3
  // Predicated region
  $region2: #{image_encoder_forward.46} parent=0 // pred_check
    _
  $region3: #{image_encoder_forward.46} parent=0 // pred_check_branch
    %8 = sbr.rel (0) target = $region5
  $region4: #{image_encoder_forward.46} parent=0 // pred_region
    _
  $region5: #{image_encoder_forward.46} parent=0 // pred_fallthru
    _
  // Predicated region
  $region6: #{image_encoder_forward.46} parent=0 // pred_check
    _
  $region7: #{image_encoder_forward.46} parent=0 // pred_check_branch
    %10 = sbr.rel (0) target = $region9
  $region8: #{image_encoder_forward.46} parent=0 // pred_region
    _
  $region9: #{image_encoder_forward.46} parent=0 // pred_fallthru
    _
  %v12 = vld [vmem:[%s0] sm:$0xff]
  %v13 = vld [vmem:[%s0 + $0x8] sm:$0xf]
  %v14 = vld [vmem:[%s1] sm:$0xf]
  %v15 = vld [vmem:[%s1 + $0x4] sm:$0xf]
  %v16 = vld [vmem:[%s1 + $0x8] sm:$0xf]
  %v17 = vld [vmem:[%s1 + $0xc] sm:$0xf]
  %v18 = vld [vmem:[%s1 + $0x10] sm:$0xf]
  %v19 = vld [vmem:[%s1 + $0x14] sm:$0xf]
  %v20 = vld [vmem:[%s1 + $0x18] sm:$0xf]
  %v21 = vld [vmem:[%s1 + $0x1c] sm:$0xf]
  %v22 = vld [vmem:[%s1 + $0x20] sm:$0xf]
  %v23 = vld [vmem:[%s1 + $0x24] sm:$0xf]
  %v24 = vld [vmem:[%s1 + $0x28] sm:$0xf]
  %v25 = vld [vmem:[%s1 + $0x2c] sm:$0xf]
  %v26 = vld [vmem:[%s1 + $0x30] sm:$0xf]
  %v27 = vld [vmem:[%s1 + $0x34] sm:$0xf]
  %v28 = vld [vmem:[%s1 + $0x38] sm:$0xf]
  %v29 = vld [vmem:[%s1 + $0x3c] sm:$0xf]
  %v30 = vld [vmem:[%s1 + $0x40] sm:$0xf]
  %v31 = vld [vmem:[%s1 + $0x44] sm:$0xf]
  %v32 = vld [vmem:[%s1 + $0x48] sm:$0xf]
  %v33 = vld [vmem:[%s1 + $0x4c] sm:$0xf]
  %v34 = vld [vmem:[%s1 + $0x50] sm:$0xf]
  %v35 = vld [vmem:[%s1 + $0x54] sm:$0xf]
  %v36 = vld [vmem:[%s1 + $0x58] sm:$0xf]
  %v37 = vld [vmem:[%s1 + $0x5c] sm:$0xf]
  %v38 = vld [vmem:[%s1 + $0x60] sm:$0xf]
  %v39 = vld [vmem:[%s1 + $0x64] sm:$0xf]
  %v40 = vld [vmem:[%s1 + $0x68] sm:$0xf]
  %v41 = vld [vmem:[%s1 + $0x6c] sm:$0xf]
  %v42 = vld [vmem:[%s1 + $0x70] sm:$0xf]
  %v43 = vld [vmem:[%s1 + $0x74] sm:$0xf]
  %v44 = vld [vmem:[%s1 + $0x78] sm:$0xf]
  %v45 = vld [vmem:[%s1 + $0x7c] sm:$0xf]
  %v46 = vld [vmem:[%s1 + $0x80] sm:$0xf]
  %v47 = vld [vmem:[%s1 + $0x84] sm:$0xf]
  %v48 = vld [vmem:[%s1 + $0x88] sm:$0xf]
  %v49 = vld [vmem:[%s1 + $0x8c] sm:$0xf]
  %v52 = vunpack.c.l.b16 %v12
  %v53 = vunpack.c.h.b16 %v12
  %v54 = vunpack.c.l.b16 %v13
  %v55 = vpack.c.b16 %v52, %v52
  %v56 = vpack.c.b16 %v53, %v53
  %v57 = vpack.c.b16 %v54, %v54
  %v96 = vunpack.c.l.b16 %v14
  %v97 = vunpack.c.l.b16 %v15
  %v98 = vunpack.c.l.b16 %v16
  %v99 = vunpack.c.l.b16 %v17
  %v100 = vunpack.c.l.b16 %v18
  %v101 = vunpack.c.l.b16 %v19
  %v102 = vunpack.c.l.b16 %v20
  %v103 = vunpack.c.l.b16 %v21
  %v104 = vunpack.c.l.b16 %v22
  %v105 = vunpack.c.l.b16 %v23
  %v106 = vunpack.c.l.b16 %v24
  %v107 = vunpack.c.l.b16 %v25
  %v108 = vunpack.c.l.b16 %v26
  %v109 = vunpack.c.l.b16 %v27
  %v110 = vunpack.c.l.b16 %v28
  %v111 = vunpack.c.l.b16 %v29
  %v112 = vunpack.c.l.b16 %v30
  %v113 = vunpack.c.l.b16 %v31
  %v114 = vunpack.c.l.b16 %v32
  %v115 = vunpack.c.l.b16 %v33
  %v116 = vunpack.c.l.b16 %v34
  %v117 = vunpack.c.l.b16 %v35
  %v118 = vunpack.c.l.b16 %v36
  %v119 = vunpack.c.l.b16 %v37
  %v120 = vunpack.c.l.b16 %v38
  %v121 = vunpack.c.l.b16 %v39
  %v122 = vunpack.c.l.b16 %v40
  %v123 = vunpack.c.l.b16 %v41
  %v124 = vunpack.c.l.b16 %v42
  %v125 = vunpack.c.l.b16 %v43
  %v126 = vunpack.c.l.b16 %v44
  %v127 = vunpack.c.l.b16 %v45
  %v128 = vunpack.c.l.b16 %v46
  %v129 = vunpack.c.l.b16 %v47
  %v130 = vunpack.c.l.b16 %v48
  %v131 = vunpack.c.l.b16 %v49
  %v132 = vpack.c.b16 %v97, %v96
  %v133 = vpack.c.b16 %v99, %v98
  %v134 = vpack.c.b16 %v101, %v100
  %v135 = vpack.c.b16 %v103, %v102
  %v136 = vpack.c.b16 %v105, %v104
  %v137 = vpack.c.b16 %v107, %v106
  %v138 = vpack.c.b16 %v109, %v108
  %v139 = vpack.c.b16 %v111, %v110
  %v140 = vpack.c.b16 %v113, %v112
  %v141 = vpack.c.b16 %v115, %v114
  %v142 = vpack.c.b16 %v117, %v116
  %v143 = vpack.c.b16 %v119, %v118
  %v144 = vpack.c.b16 %v121, %v120
  %v145 = vpack.c.b16 %v123, %v122
  %v146 = vpack.c.b16 %v125, %v124
  %v147 = vpack.c.b16 %v127, %v126
  %v148 = vpack.c.b16 %v129, %v128
  %v149 = vpack.c.b16 %v131, %v130
  %vm168 = vcmask 261120
  %v170 = vsel %vm168, %v57, 0
  %172 = vmatpush.bf16.msra.mxu0 %v139
  %173 = vmatpush.bf16.msra.mxu0 %v138
  %174 = vmatpush.bf16.msra.mxu0 %v137
  %175 = vmatpush.bf16.msra.mxu0 %v136
  %176 = vmatpush.bf16.msra.mxu0 %v135
  %177 = vmatpush.bf16.msra.mxu0 %v134
  %178 = vmatpush.bf16.msra.mxu0 %v133
  %179 = vmatpush.bf16.msra.mxu0 %v132
  %180 = vmatmul.bf16.gmra.mxu0 %v55
  %v181 = vpop.f32.mrf.mxu0
  %v182 = vadd.f32 0.0, %v181
  %v183 = vpop.f32.mrf.mxu0
  %184 = vdwg.mxu0
  %185 = vmatpush.bf16.msra.mxu0 %v147
  %186 = vmatpush.bf16.msra.mxu0 %v146
  %187 = vmatpush.bf16.msra.mxu0 %v145
  %188 = vmatpush.bf16.msra.mxu0 %v144
  %189 = vmatpush.bf16.msra.mxu0 %v143
  %190 = vmatpush.bf16.msra.mxu0 %v142
  %191 = vmatpush.bf16.msra.mxu0 %v141
  %192 = vmatpush.bf16.msra.mxu0 %v140
  %193 = vmatmul.bf16.gmra.mxu0 %v56
  %v194 = vpop.f32.mrf.mxu0
  %v195 = vadd.f32 %v182, %v194
  %v196 = vpop.f32.mrf.mxu0
  %197 = vdwg.mxu0
  %198 = vmatpush.bf16.msra.mxu0 0
  %199 = vmatpush.bf16.msra.mxu0 0
  %200 = vmatpush.bf16.msra.mxu0 0
  %201 = vmatpush.bf16.msra.mxu0 0
  %202 = vmatpush.bf16.msra.mxu0 0
  %203 = vmatpush.bf16.msra.mxu0 0
  %204 = vmatpush.bf16.msra.mxu0 %v149
  %205 = vmatpush.bf16.msra.mxu0 %v148
  %206 = vmatmul.bf16.gmra.mxu0 %v170
  %v207 = vpop.f32.mrf.mxu0
  %v208 = vadd.f32 %v195, %v207
  %v209 = vpop.f32.mrf.mxu0
  %210 = vdwg.mxu0
  %v211 = vpack.c.bf16 %v208, %v208
  %212 = vst [vmem:[%s2] sm:$0xf] %v211
  // Predicated region
  $region10: #{image_encoder_forward.46} parent=0 // pred_check
    _
  $region11: #{image_encoder_forward.46} parent=0 // pred_check_branch
    %214 = sbr.rel (0) target = $region13
  $region12: #{image_encoder_forward.46} parent=0 // pred_region
    _
  $region13: #{image_encoder_forward.46} parent=0 // pred_fallthru
    _
  // Predicated region
  $region14: #{image_encoder_forward.46} parent=0 // pred_check
    _
  $region15: #{image_encoder_forward.46} parent=0 // pred_check_branch
    %216 = sbr.rel (0) target = $region17
  $region16: #{image_encoder_forward.46} parent=0 // pred_region
    _
  $region17: #{image_encoder_forward.46} parent=0 // pred_fallthru
    _

// kernel: image_encoder_forward.47
$region0: #{image_encoder_forward.47}
  #allocation0 [shape = 'u32[]', space=smem, size = 0x4, offset = 0x4, fixed_abs, tag = 'smem constant byte address 0x4 - core index']
  #allocation1 [shape = 'u32[72,128]{1,0:T(1,128)}', space=vmem, size = 0x9000, scoped, tag = 'internal scratch']
  %s0 = inlined_call_operand.vmem [shape: bf16[8,24], index: 0, kind: input, shape index: {}]
  %s1 = inlined_call_operand.vmem [shape: bf16[24,128], index: 1, kind: input, shape index: {}]
  %s2 = inlined_call_operand.vmem [shape: f32[1,24], index: 2, kind: input, shape index: {}]
  %s3 = inlined_call_operand.vmem [shape: f32[1,24], index: 3, kind: input, shape index: {}]
  %s4 = inlined_call_operand.vmem [shape: f32[1,128], index: 4, kind: input, shape index: {}]
  %s5 = inlined_call_operand.vmem [shape: f32[1,128], index: 5, kind: input, shape index: {}]
  %s6 = inlined_call_operand.vmem [shape: bf16[8,128], index: 6, kind: output, shape index: {}]
  %s7 = sld [smem:[#allocation0]]
  $region34: #{image_encoder_forward.47} parent=0
    _
  %s9 = ssub.s32 1, %s7
  %s10 = scalar_select 0, %s9, %s7
  // Predicated region
  $region2: #{image_encoder_forward.47} parent=0 // pred_check
    _
  $region3: #{image_encoder_forward.47} parent=0 // pred_check_branch
    %12 = sbr.rel (0) target = $region5
  $region4: #{image_encoder_forward.47} parent=0 // pred_region
    _
  $region5: #{image_encoder_forward.47} parent=0 // pred_fallthru
    _
  // Predicated region
  $region6: #{image_encoder_forward.47} parent=0 // pred_check
    _
  $region7: #{image_encoder_forward.47} parent=0 // pred_check_branch
    %14 = sbr.rel (0) target = $region9
  $region8: #{image_encoder_forward.47} parent=0 // pred_region
    _
  $region9: #{image_encoder_forward.47} parent=0 // pred_fallthru
    _
  // Predicated region
  $region10: #{image_encoder_forward.47} parent=0 // pred_check
    _
  $region11: #{image_encoder_forward.47} parent=0 // pred_check_branch
    %16 = sbr.rel (0) target = $region13
  $region12: #{image_encoder_forward.47} parent=0 // pred_region
    _
  $region13: #{image_encoder_forward.47} parent=0 // pred_fallthru
    _
  // Predicated region
  $region14: #{image_encoder_forward.47} parent=0 // pred_check
    _
  $region15: #{image_encoder_forward.47} parent=0 // pred_check_branch
    %18 = sbr.rel (0) target = $region17
  $region16: #{image_encoder_forward.47} parent=0 // pred_region
    _
  $region17: #{image_encoder_forward.47} parent=0 // pred_fallthru
    _
  // Predicated region
  $region18: #{image_encoder_forward.47} parent=0 // pred_check
    _
  $region19: #{image_encoder_forward.47} parent=0 // pred_check_branch
    %20 = sbr.rel (0) target = $region21
  $region20: #{image_encoder_forward.47} parent=0 // pred_region
    _
  $region21: #{image_encoder_forward.47} parent=0 // pred_fallthru
    _
  // Predicated region
  $region22: #{image_encoder_forward.47} parent=0 // pred_check
    _
  $region23: #{image_encoder_forward.47} parent=0 // pred_check_branch
    %22 = sbr.rel (0) target = $region25
  $region24: #{image_encoder_forward.47} parent=0 // pred_region
    _
  $region25: #{image_encoder_forward.47} parent=0 // pred_fallthru
    _
  %v24 = vld [vmem:[%s0] sm:$0xf]
  %v25 = vunpack.c.l.bf16 %v24
  %v26 = vld [vmem:[%s2] sm:$0x1]
  %v28 = vperm.slane %v26, 0
  %v30 = vmul.f32 %v25, %v28
  %v31 = vld [vmem:[%s3] sm:$0x1]
  %v33 = vperm.slane %v31, 0
  %v35 = vadd.f32 %v30, %v33
  %v36 = vmax.f32 %v35, 0.0
  %v37 = vpack.c.bf16 %v36, %v36
  %v38 = vld [vmem:[%s1] sm:$0xf]
  %v39 = vld [vmem:[%s1 + $0x4] sm:$0xf]
  %v40 = vld [vmem:[%s1 + $0x8] sm:$0xf]
  %v44 = vunpack.c.l.b16 %v38
  %v45 = vunpack.c.l.b16 %v39
  %v46 = vunpack.c.l.b16 %v40
  %v47 = vpack.c.b16 %v45, %v44
  %v48 = vpack.c.b16 %v46, %v46
  %vm50 = vcmask 195584
  %v52 = vsel %vm50, %v37, 0
  %vm54 = vcmask 1043456
  %v56 = vsel %vm54, %v48, 0
  %58 = vmatpush.bf16.msra.mxu0 0
  %59 = vmatpush.bf16.msra.mxu0 0
  %60 = vmatpush.bf16.msra.mxu0 0
  %61 = vmatpush.bf16.msra.mxu0 0
  %62 = vmatpush.bf16.msra.mxu0 0
  %63 = vmatpush.bf16.msra.mxu0 0
  %64 = vmatpush.bf16.msra.mxu0 %v56
  %65 = vmatpush.bf16.msra.mxu0 %v47
  %66 = vmatmul.bf16.gmra.mxu0 %v52
  %v67 = vpop.f32.mrf.mxu0
  %v68 = vadd.f32 0.0, %v67
  %v69 = vpop.f32.mrf.mxu0
  %70 = vdwg.mxu0
  %v71 = vld [vmem:[%s4] sm:$0x1]
  %v73 = vperm.slane %v71, 0
  %v75 = vmul.f32 %v68, %v73
  %v76 = vld [vmem:[%s5] sm:$0x1]
  %v78 = vperm.slane %v76, 0
  %v80 = vadd.f32 %v75, %v78
  %v81 = vmax.f32 %v80, 0.0
  %v82 = vpack.c.bf16 %v81, %v81
  %83 = vst [vmem:[%s6] sm:$0xf] %v82
  // Predicated region
  $region26: #{image_encoder_forward.47} parent=0 // pred_check
    _
  $region27: #{image_encoder_forward.47} parent=0 // pred_check_branch
    %85 = sbr.rel (0) target = $region29
  $region28: #{image_encoder_forward.47} parent=0 // pred_region
    _
  $region29: #{image_encoder_forward.47} parent=0 // pred_fallthru
    _
  // Predicated region
  $region30: #{image_encoder_forward.47} parent=0 // pred_check
    _
  $region31: #{image_encoder_forward.47} parent=0 // pred_check_branch
    %87 = sbr.rel (0) target = $region33
  $region32: #{image_encoder_forward.47} parent=0 // pred_region
    _
  $region33: #{image_encoder_forward.47} parent=0 // pred_fallthru
    _

// kernel: image_encoder_forward.49
$region0: #{image_encoder_forward.49}
  #allocation0 [shape = 'u32[]', space=smem, size = 0x4, offset = 0x4, fixed_abs, tag = 'smem constant byte address 0x4 - core index']
  #allocation1 [shape = 'u32[72,128]{1,0:T(1,128)}', space=vmem, size = 0x9000, scoped, tag = 'internal scratch']
  %s0 = inlined_call_operand.vmem [shape: f32[16,4], index: 0, kind: input, shape index: {}]
  %s1 = inlined_call_operand.vmem [shape: bf16[4,128], index: 1, kind: input, shape index: {}]
  %s2 = inlined_call_operand.vmem [shape: f32[1,128], index: 2, kind: input, shape index: {}]
  %s3 = inlined_call_operand.vmem [shape: f32[1,128], index: 3, kind: input, shape index: {}]
  %s4 = inlined_call_operand.vmem [shape: f32[16,128], index: 4, kind: output, shape index: {}]
  %s5 = sld [smem:[#allocation0]]
  $region26: #{image_encoder_forward.49} parent=0
    _
  %s7 = ssub.s32 1, %s5
  %s8 = scalar_select 0, %s7, %s5
  // Predicated region
  $region2: #{image_encoder_forward.49} parent=0 // pred_check
    _
  $region3: #{image_encoder_forward.49} parent=0 // pred_check_branch
    %10 = sbr.rel (0) target = $region5
  $region4: #{image_encoder_forward.49} parent=0 // pred_region
    _
  $region5: #{image_encoder_forward.49} parent=0 // pred_fallthru
    _
  // Predicated region
  $region6: #{image_encoder_forward.49} parent=0 // pred_check
    _
  $region7: #{image_encoder_forward.49} parent=0 // pred_check_branch
    %12 = sbr.rel (0) target = $region9
  $region8: #{image_encoder_forward.49} parent=0 // pred_region
    _
  $region9: #{image_encoder_forward.49} parent=0 // pred_fallthru
    _
  // Predicated region
  $region10: #{image_encoder_forward.49} parent=0 // pred_check
    _
  $region11: #{image_encoder_forward.49} parent=0 // pred_check_branch
    %14 = sbr.rel (0) target = $region13
  $region12: #{image_encoder_forward.49} parent=0 // pred_region
    _
  $region13: #{image_encoder_forward.49} parent=0 // pred_fallthru
    _
  // Predicated region
  $region14: #{image_encoder_forward.49} parent=0 // pred_check
    _
  $region15: #{image_encoder_forward.49} parent=0 // pred_check_branch
    %16 = sbr.rel (0) target = $region17
  $region16: #{image_encoder_forward.49} parent=0 // pred_region
    _
  $region17: #{image_encoder_forward.49} parent=0 // pred_fallthru
    _
  %v18 = vld [vmem:[%s0] sm:$0xff]
  %v19 = vld [vmem:[%s0 + $0x8] sm:$0xff]
  %v20 = vpack.c.bf16 %v19, %v18
  %v21 = vld [vmem:[%s1] sm:$0x3]
  %vm22 = vcmask 31744
  %v24 = vsel %vm22, %v20, 0
  %vm26 = vcmask 1041408
  %v28 = vsel %vm26, %v21, 0
  %30 = vmatpush.bf16.msra.mxu0 0
  %31 = vmatpush.bf16.msra.mxu0 0
  %32 = vmatpush.bf16.msra.mxu0 0
  %33 = vmatpush.bf16.msra.mxu0 0
  %34 = vmatpush.bf16.msra.mxu0 0
  %35 = vmatpush.bf16.msra.mxu0 0
  %36 = vmatpush.bf16.msra.mxu0 0
  %37 = vmatpush.bf16.msra.mxu0 %v28
  %38 = vmatmul.bf16.gmra.mxu0 %v24
  %v39 = vpop.f32.mrf.mxu0
  %v40 = vadd.f32 0.0, %v39
  %v41 = vpop.f32.mrf.mxu0
  %v42 = vadd.f32 0.0, %v41
  %43 = vdwg.mxu0
  %v44 = vld [vmem:[%s2] sm:$0x1]
  %v46 = vperm.slane %v44, 0
  %v48 = vmul.f32 %v40, %v46
  %v49 = vmul.f32 %v42, %v46
  %v50 = vld [vmem:[%s3] sm:$0x1]
  %v52 = vperm.slane %v50, 0
  %v54 = vadd.f32 %v48, %v52
  %v55 = vadd.f32 %v49, %v52
  %56 = vst [vmem:[%s4] sm:$0xff] %v54
  %57 = vst [vmem:[%s4 + $0x8] sm:$0xff] %v55
  // Predicated region
  $region18: #{image_encoder_forward.49} parent=0 // pred_check
    _
  $region19: #{image_encoder_forward.49} parent=0 // pred_check_branch
    %59 = sbr.rel (0) target = $region21
  $region20: #{image_encoder_forward.49} parent=0 // pred_region
    _
  $region21: #{image_encoder_forward.49} parent=0 // pred_fallthru
    _
  // Predicated region
  $region22: #{image_encoder_forward.49} parent=0 // pred_check
    _
  $region23: #{image_encoder_forward.49} parent=0 // pred_check_branch
    %61 = sbr.rel (0) target = $region25
  $region24: #{image_encoder_forward.49} parent=0 // pred_region
    _
  $region25: #{image_encoder_forward.49} parent=0 // pred_fallthru
    _

</llo_original>
